<compile_context>
chip_gen: v5e
topology: v5e:2x2
jax: 0.10.0
libtpu: 0.0.40
codegen_flags: <defaults>
</compile_context>

<pallas_src>
import functools
import math

import jax
import jax.numpy as jnp
from jax.experimental import pallas as pl
from jax.experimental.pallas import tpu as pltpu


# ----------------------------------------------------------------------------
# Pallas kernel: ALL encoder layers for one batch element (grid = (B, L)).
# The activation is carried across the layer axis in an f32 VMEM scratch.
# ----------------------------------------------------------------------------
def fused_encoder_kernel(
    x_ref,
    wq_ref, bq_ref, wk_ref, bk_ref, wv_ref, bv_ref, wo_ref, bo_ref,
    g1_ref, be1_ref,
    w1_ref, bf1_ref, w2_ref, bf2_ref,
    g2_ref, be2_ref,
    o_ref,
    act_ref,
    *, num_heads,
):
    layer = pl.program_id(1)
    n_layers = pl.num_programs(1)

    # Layer 0: load the embedded input tile into the resident f32 activation.
    @pl.when(layer == 0)
    def _():
        act_ref[...] = x_ref[0].astype(jnp.float32)

    x = act_ref[...]                         # (S, D) f32 residual
    xb = x.astype(jnp.bfloat16)
    S, D = x.shape
    H = num_heads
    dh = D // H
    inv_sqrt_dh = 1.0 / math.sqrt(dh)

    # --- Multi-head self-attention (q = k = v = x, mask=None) ---------------
    # Full-D-contraction 2-D matmuls (MXU), f32 accumulation.
    q = jnp.dot(xb, wq_ref[0], preferred_element_type=jnp.float32) + bq_ref[0]
    k = jnp.dot(xb, wk_ref[0], preferred_element_type=jnp.float32) + bk_ref[0]
    v = jnp.dot(xb, wv_ref[0], preferred_element_type=jnp.float32) + bv_ref[0]

    # Fold 1/sqrt(dh) into q (f32, before the bf16 cast): TS*D muls instead of
    # H*TS*S muls on the scores.
    q = q * inv_sqrt_dh

    qb = q.astype(jnp.bfloat16)
    kb = k.astype(jnp.bfloat16)
    vb = v.astype(jnp.bfloat16)

    # Per-head attention on static lane slices (dh is a multiple of 128, so
    # slices are zero-cost lane views; no head-major transposes).
    # TODO(synk): attention mask path not implemented (forward uses mask=None).
    ctx_heads = []
    for h in range(H):
        sl = slice(h * dh, (h + 1) * dh)
        s = jax.lax.dot_general(
            qb[:, sl], kb[:, sl],
            (((1,), (1,)), ((), ())),            # contract head dims: Q @ K^T
            preferred_element_type=jnp.float32)  # (S, S) f32, lane-dense
        s = s - jnp.max(s, axis=-1, keepdims=True)
        p = jnp.exp(s)
        p = p * pl.reciprocal(jnp.sum(p, axis=-1, keepdims=True), approx=True)
        ctx_heads.append(
            jnp.dot(p.astype(jnp.bfloat16), vb[:, sl],
                    preferred_element_type=jnp.float32).astype(jnp.bfloat16))
    ctx = jnp.concatenate(ctx_heads, axis=-1)    # (S, D) bf16, lane-aligned

    attn = jnp.dot(ctx, wo_ref[0], preferred_element_type=jnp.float32) + bo_ref[0]

    # --- Residual + LayerNorm 1 (f32 statistics) -----------------------------
    h1 = x + attn                                # dropout = identity (eval)
    mu1 = jnp.mean(h1, axis=-1, keepdims=True)
    var1 = jnp.mean(jnp.square(h1 - mu1), axis=-1, keepdims=True)
    h1n = (h1 - mu1) * jax.lax.rsqrt(var1 + 1e-5) * g1_ref[0] + be1_ref[0]

    # --- Position-wise FFN (Linear -> ReLU -> Linear) ------------------------
    # d_ff is modest here; the (S, d_ff) intermediate fits comfortably in
    # VMEM/vregs, so no chunking loop is needed.
    h1b = h1n.astype(jnp.bfloat16)
    ff = jnp.dot(h1b, w1_ref[0], preferred_element_type=jnp.float32) + bf1_ref[0]
    ff = jnp.maximum(ff, 0.0).astype(jnp.bfloat16)
    ff = jnp.dot(ff, w2_ref[0], preferred_element_type=jnp.float32) + bf2_ref[0]

    # --- Residual + LayerNorm 2 ----------------------------------------------
    h2 = h1n + ff                                # dropout = identity (eval)
    mu2 = jnp.mean(h2, axis=-1, keepdims=True)
    var2 = jnp.mean(jnp.square(h2 - mu2), axis=-1, keepdims=True)
    out = (h2 - mu2) * jax.lax.rsqrt(var2 + 1e-5) * g2_ref[0] + be2_ref[0]

    # Carry to the next layer; flush to HBM only after the last layer.
    act_ref[...] = out

    @pl.when(layer == n_layers - 1)
    def _():
        o_ref[0] = out.astype(o_ref.dtype)


def encoder_pallas(x, stacked, num_heads):
    """x: (B, S, D) bf16 embedded+PE input. stacked: dict of (L, ...) weights."""
    B, S, D = x.shape
    L = stacked["wq"].shape[0]
    d_ff = stacked["w1"].shape[2]
    assert D % num_heads == 0, "d_model must be divisible by num_heads"

    weights = [
        stacked["wq"], stacked["bq"], stacked["wk"], stacked["bk"],
        stacked["wv"], stacked["bv"], stacked["wo"], stacked["bo"],
        stacked["g1"], stacked["be1"],
        stacked["w1"], stacked["bf1"], stacked["w2"], stacked["bf2"],
        stacked["g2"], stacked["be2"],
    ]

    def wspec(shape):
        # Layer-indexed weight block: DMA'd once per layer, pipelined behind
        # the previous layer's compute.
        return pl.BlockSpec((1,) + shape[1:], lambda b, l: (l, 0, 0))

    in_specs = [pl.BlockSpec((1, S, D), lambda b, l: (b, 0, 0))]   # activations
    in_specs += [wspec(w.shape) for w in weights]

    kernel = functools.partial(fused_encoder_kernel, num_heads=num_heads)

    return pl.pallas_call(
        kernel,
        out_shape=jax.ShapeDtypeStruct((B, S, D), jnp.bfloat16),
        grid=(B, L),
        in_specs=in_specs,
        out_specs=pl.BlockSpec((1, S, D), lambda b, l: (b, 0, 0)),
        scratch_shapes=[pltpu.VMEM((S, D), jnp.float32)],
        compiler_params=pltpu.CompilerParams(
            # Batch axis is independent -> megacore shardable; layer axis
            # carries the resident activation -> must stay "arbitrary".
            dimension_semantics=("parallel", "arbitrary"),
            # Explicit scoped-VMEM budget (fits v5e's 16 MiB default and
            # v7x's 64 MiB physical with headroom).
            vmem_limit_bytes=48 * 1024 * 1024,
        ),
    )(x, *weights)


# ----------------------------------------------------------------------------
# Parameter init (deterministic, synthetic) and host-side glue
# ----------------------------------------------------------------------------
def sinusoidal_positional_encoding(max_len, d_model):
    pos = jnp.arange(max_len, dtype=jnp.float32)[:, None]
    i = jnp.arange(0, d_model, 2, dtype=jnp.float32)[None, :]
    angle = pos / jnp.power(10000.0, i / d_model)
    pe = jnp.zeros((max_len, d_model), dtype=jnp.float32)
    pe = pe.at[:, 0::2].set(jnp.sin(angle))
    pe = pe.at[:, 1::2].set(jnp.cos(angle))
    return pe


def init_encoder_params(key, num_layers, d_model, d_ff, vocab_size):
    ek, lk = jax.random.split(key)
    embedding = jax.random.normal(ek, (vocab_size, d_model), jnp.float32)

    def w(k, shape, s=0.02):
        # bf16 weights feed the MXU directly; halves DMA bytes and VMEM.
        return (s * jax.random.normal(k, shape, jnp.float32)).astype(jnp.bfloat16)

    def stack(fn):
        return jnp.stack([fn(l) for l in range(num_layers)], axis=0)

    keys = [jax.random.split(jax.random.fold_in(lk, l), 6) for l in range(num_layers)]

    stacked = dict(
        wq=stack(lambda l: w(keys[l][0], (d_model, d_model))),
        bq=jnp.zeros((num_layers, 1, d_model), jnp.float32),
        wk=stack(lambda l: w(keys[l][1], (d_model, d_model))),
        bk=jnp.zeros((num_layers, 1, d_model), jnp.float32),
        wv=stack(lambda l: w(keys[l][2], (d_model, d_model))),
        bv=jnp.zeros((num_layers, 1, d_model), jnp.float32),
        wo=stack(lambda l: w(keys[l][3], (d_model, d_model))),
        bo=jnp.zeros((num_layers, 1, d_model), jnp.float32),
        g1=jnp.ones((num_layers, 1, d_model), jnp.float32),
        be1=jnp.zeros((num_layers, 1, d_model), jnp.float32),
        w1=stack(lambda l: w(keys[l][4], (d_model, d_ff))),
        bf1=jnp.zeros((num_layers, 1, d_ff), jnp.float32),
        w2=stack(lambda l: w(keys[l][5], (d_ff, d_model))),
        bf2=jnp.zeros((num_layers, 1, d_model), jnp.float32),
        g2=jnp.ones((num_layers, 1, d_model), jnp.float32),
        be2=jnp.zeros((num_layers, 1, d_model), jnp.float32),
    )
    return embedding, stacked


def encoder_forward(token_ids, embedding, pe, stacked, num_heads):
    B, S = token_ids.shape
    d_model = embedding.shape[1]
    # Embedding gather + scale + positional encoding: plain JAX glue (the
    # data-dependent gather has no clean BlockSpec expression).
    x = embedding[token_ids] * math.sqrt(d_model) + pe[:S][None, :, :]
    x = x.astype(jnp.bfloat16)           # dropout = identity (eval mode)
    return encoder_pallas(x, stacked, num_heads)


# ----------------------------------------------------------------------------
if __name__ == "__main__":
    num_layers = 2
    d_model = 256       # multiple of 128 -> lane-dense activations & stores
    num_heads = 2       # head dim 128 = one full lane tile
    d_ff = 512
    vocab_size = 100
    max_len = 256
    B, S = 2, 128       # S = MXU M dim (>= 128); B >= 2 -> 2 parallel steps

    key = jax.random.PRNGKey(0)
    pk, xk = jax.random.split(key)

    embedding, stacked = init_encoder_params(
        pk, num_layers, d_model, d_ff, vocab_size)
    pe = sinusoidal_positional_encoding(max_len, d_model)

    token_ids = jax.random.randint(xk, (B, S), 0, vocab_size, dtype=jnp.int32)

    out = encoder_forward(token_ids, embedding, pe, stacked, num_heads)
    jax.block_until_ready(out)
    assert out.shape == (B, S, d_model)
    print("KERNEL_OK")
</pallas_src>

<mosaic_0001>
module attributes {stable_mosaic.version = 11 : i64} {
  func.func @fused_encoder_kernel(%arg0: i32, %arg1: i32, %arg2: memref<1x128x256xbf16, #tpu.memory_space<vmem>>, %arg3: memref<1x256x256xbf16, #tpu.memory_space<vmem>>, %arg4: memref<1x1x256xf32, #tpu.memory_space<vmem>>, %arg5: memref<1x256x256xbf16, #tpu.memory_space<vmem>>, %arg6: memref<1x1x256xf32, #tpu.memory_space<vmem>>, %arg7: memref<1x256x256xbf16, #tpu.memory_space<vmem>>, %arg8: memref<1x1x256xf32, #tpu.memory_space<vmem>>, %arg9: memref<1x256x256xbf16, #tpu.memory_space<vmem>>, %arg10: memref<1x1x256xf32, #tpu.memory_space<vmem>>, %arg11: memref<1x1x256xf32, #tpu.memory_space<vmem>>, %arg12: memref<1x1x256xf32, #tpu.memory_space<vmem>>, %arg13: memref<1x256x512xbf16, #tpu.memory_space<vmem>>, %arg14: memref<1x1x512xf32, #tpu.memory_space<vmem>>, %arg15: memref<1x512x256xbf16, #tpu.memory_space<vmem>>, %arg16: memref<1x1x256xf32, #tpu.memory_space<vmem>>, %arg17: memref<1x1x256xf32, #tpu.memory_space<vmem>>, %arg18: memref<1x1x256xf32, #tpu.memory_space<vmem>>, %arg19: memref<1x128x256xbf16, #tpu.memory_space<vmem>>, %arg20: memref<128x256xf32, #tpu.memory_space<vmem>>) attributes {dimension_semantics = [#tpu.dimension_semantics<parallel>, #tpu.dimension_semantics<arbitrary>], iteration_bounds = array<i64: 2, 2>, scalar_prefetch = 0 : i64, scratch_operands = 1 : i64, tpu.core_type = #tpu.core_type<tc>, window_params = [{transform_indices = @transform_0, window_bounds = array<i64: 1, 128, 256>}, {transform_indices = @transform_1, window_bounds = array<i64: 1, 256, 256>}, {transform_indices = @transform_2, window_bounds = array<i64: 1, 1, 256>}, {transform_indices = @transform_3, window_bounds = array<i64: 1, 256, 256>}, {transform_indices = @transform_4, window_bounds = array<i64: 1, 1, 256>}, {transform_indices = @transform_5, window_bounds = array<i64: 1, 256, 256>}, {transform_indices = @transform_6, window_bounds = array<i64: 1, 1, 256>}, {transform_indices = @transform_7, window_bounds = array<i64: 1, 256, 256>}, {transform_indices = @transform_8, window_bounds = array<i64: 1, 1, 256>}, {transform_indices = @transform_9, window_bounds = array<i64: 1, 1, 256>}, {transform_indices = @transform_10, window_bounds = array<i64: 1, 1, 256>}, {transform_indices = @transform_11, window_bounds = array<i64: 1, 256, 512>}, {transform_indices = @transform_12, window_bounds = array<i64: 1, 1, 512>}, {transform_indices = @transform_13, window_bounds = array<i64: 1, 512, 256>}, {transform_indices = @transform_14, window_bounds = array<i64: 1, 1, 256>}, {transform_indices = @transform_15, window_bounds = array<i64: 1, 1, 256>}, {transform_indices = @transform_16, window_bounds = array<i64: 1, 1, 256>}, {transform_indices = @transform_17, window_bounds = array<i64: 1, 128, 256>}]} {
    %c0_i32 = arith.constant 0 : i32
    %0 = arith.cmpi eq, %arg1, %c0_i32 : i32
    %1 = arith.extui %0 : i1 to i32
    %c0_i32_0 = arith.constant 0 : i32
    %2 = arith.cmpi ne, %1, %c0_i32_0 : i32
    scf.if %2 {
      %c0_78 = arith.constant 0 : index
      %c0_79 = arith.constant 0 : index
      %c0_80 = arith.constant 0 : index
      %149 = vector.load %arg2[%c0_78, %c0_79, %c0_80] : memref<1x128x256xbf16, #tpu.memory_space<vmem>>, vector<1x128x256xbf16>
      %150 = vector.shape_cast %149 : vector<1x128x256xbf16> to vector<128x256xbf16>
      %151 = arith.extf %150 : vector<128x256xbf16> to vector<128x256xf32>
      %c0_81 = arith.constant 0 : index
      %c0_82 = arith.constant 0 : index
      %152 = vector.load %arg20[%c0_81, %c0_82] : memref<128x256xf32, #tpu.memory_space<vmem>>, vector<128x256xf32>
      tpu.vector_store %arg20[%c0_81, %c0_82], %151 {strides = array<i32>} : memref<128x256xf32, #tpu.memory_space<vmem>>, vector<128x256xf32>,
    } else {
    }
    %c0 = arith.constant 0 : index
    %c0_1 = arith.constant 0 : index
    %3 = vector.load %arg20[%c0, %c0_1] : memref<128x256xf32, #tpu.memory_space<vmem>>, vector<128x256xf32>
    %4 = arith.truncf %3 : vector<128x256xf32> to vector<128x256xbf16>
    %c0_2 = arith.constant 0 : index
    %c0_3 = arith.constant 0 : index
    %c0_4 = arith.constant 0 : index
    %5 = vector.load %arg3[%c0_2, %c0_3, %c0_4] : memref<1x256x256xbf16, #tpu.memory_space<vmem>>, vector<1x256x256xbf16>
    %6 = vector.shape_cast %5 : vector<1x256x256xbf16> to vector<256x256xbf16>
    %cst = arith.constant dense<0.000000e+00> : vector<128x256xf32>
    %7 = tpu.matmul %4, %6, %cst {dimension_numbers = #tpu.dot_dimension_numbers<[1], [0], [0], [1], [0, 0, 1, 1], [], []>} : vector<128x256xbf16>, vector<256x256xbf16>, vector<128x256xf32> -> vector<128x256xf32>
    %c0_5 = arith.constant 0 : index
    %c0_6 = arith.constant 0 : index
    %c0_7 = arith.constant 0 : index
    %8 = vector.load %arg4[%c0_5, %c0_6, %c0_7] : memref<1x1x256xf32, #tpu.memory_space<vmem>>, vector<1x1x256xf32>
    %9 = vector.shape_cast %8 : vector<1x1x256xf32> to vector<1x256xf32>
    %10 = vector.broadcast %9 : vector<1x256xf32> to vector<128x256xf32>
    %11 = arith.addf %7, %10 : vector<128x256xf32>
    %c0_8 = arith.constant 0 : index
    %c0_9 = arith.constant 0 : index
    %c0_10 = arith.constant 0 : index
    %12 = vector.load %arg5[%c0_8, %c0_9, %c0_10] : memref<1x256x256xbf16, #tpu.memory_space<vmem>>, vector<1x256x256xbf16>
    %13 = vector.shape_cast %12 : vector<1x256x256xbf16> to vector<256x256xbf16>
    %cst_11 = arith.constant dense<0.000000e+00> : vector<128x256xf32>
    %14 = tpu.matmul %4, %13, %cst_11 {dimension_numbers = #tpu.dot_dimension_numbers<[1], [0], [0], [1], [0, 0, 1, 1], [], []>} : vector<128x256xbf16>, vector<256x256xbf16>, vector<128x256xf32> -> vector<128x256xf32>
    %c0_12 = arith.constant 0 : index
    %c0_13 = arith.constant 0 : index
    %c0_14 = arith.constant 0 : index
    %15 = vector.load %arg6[%c0_12, %c0_13, %c0_14] : memref<1x1x256xf32, #tpu.memory_space<vmem>>, vector<1x1x256xf32>
    %16 = vector.shape_cast %15 : vector<1x1x256xf32> to vector<1x256xf32>
    %17 = vector.broadcast %16 : vector<1x256xf32> to vector<128x256xf32>
    %18 = arith.addf %14, %17 : vector<128x256xf32>
    %c0_15 = arith.constant 0 : index
    %c0_16 = arith.constant 0 : index
    %c0_17 = arith.constant 0 : index
    %19 = vector.load %arg7[%c0_15, %c0_16, %c0_17] : memref<1x256x256xbf16, #tpu.memory_space<vmem>>, vector<1x256x256xbf16>
    %20 = vector.shape_cast %19 : vector<1x256x256xbf16> to vector<256x256xbf16>
    %cst_18 = arith.constant dense<0.000000e+00> : vector<128x256xf32>
    %21 = tpu.matmul %4, %20, %cst_18 {dimension_numbers = #tpu.dot_dimension_numbers<[1], [0], [0], [1], [0, 0, 1, 1], [], []>} : vector<128x256xbf16>, vector<256x256xbf16>, vector<128x256xf32> -> vector<128x256xf32>
    %c0_19 = arith.constant 0 : index
    %c0_20 = arith.constant 0 : index
    %c0_21 = arith.constant 0 : index
    %22 = vector.load %arg8[%c0_19, %c0_20, %c0_21] : memref<1x1x256xf32, #tpu.memory_space<vmem>>, vector<1x1x256xf32>
    %23 = vector.shape_cast %22 : vector<1x1x256xf32> to vector<1x256xf32>
    %24 = vector.broadcast %23 : vector<1x256xf32> to vector<128x256xf32>
    %25 = arith.addf %21, %24 : vector<128x256xf32>
    %cst_22 = arith.constant 0.0883883461 : f32
    %26 = vector.broadcast %cst_22 : f32 to vector<128x256xf32>
    %27 = arith.mulf %11, %26 : vector<128x256xf32>
    %28 = arith.truncf %27 : vector<128x256xf32> to vector<128x256xbf16>
    %29 = arith.truncf %18 : vector<128x256xf32> to vector<128x256xbf16>
    %30 = arith.truncf %25 : vector<128x256xf32> to vector<128x256xbf16>
    %31 = vector.extract_strided_slice %28 {offsets = [0, 0], sizes = [128, 128], strides = [1, 1]} : vector<128x256xbf16> to vector<128x128xbf16>
    %32 = vector.extract_strided_slice %29 {offsets = [0, 0], sizes = [128, 128], strides = [1, 1]} : vector<128x256xbf16> to vector<128x128xbf16>
    %cst_23 = arith.constant dense<0.000000e+00> : vector<128x128xf32>
    %33 = tpu.matmul %31, %32, %cst_23 {dimension_numbers = #tpu.dot_dimension_numbers<[1], [1], [0], [0], [0, 0, 1, 0], [], []>} : vector<128x128xbf16>, vector<128x128xbf16>, vector<128x128xf32> -> vector<128x128xf32>
    %cst_24 = arith.constant dense<0xFF800000> : vector<128xf32>
    %34 = vector.multi_reduction <maximumf>, %33, %cst_24 [1] : vector<128x128xf32> to vector<128xf32>
    %35 = vector.shape_cast %34 : vector<128xf32> to vector<128x1xf32>
    %36 = vector.broadcast %35 : vector<128x1xf32> to vector<128x128xf32>
    %37 = arith.subf %33, %36 : vector<128x128xf32>
    %38 = math.exp %37 : vector<128x128xf32>
    %cst_25 = arith.constant dense<0.000000e+00> : vector<128xf32>
    %39 = vector.multi_reduction <add>, %38, %cst_25 [1] : vector<128x128xf32> to vector<128xf32>
    %40 = vector.shape_cast %39 : vector<128xf32> to vector<128x1xf32>
    %41 = tpu.reciprocal %40 {approx = true} : vector<128x1xf32> -> vector<128x1xf32>
    %42 = vector.broadcast %41 : vector<128x1xf32> to vector<128x128xf32>
    %43 = arith.mulf %38, %42 : vector<128x128xf32>
    %44 = arith.truncf %43 : vector<128x128xf32> to vector<128x128xbf16>
    %45 = vector.extract_strided_slice %30 {offsets = [0, 0], sizes = [128, 128], strides = [1, 1]} : vector<128x256xbf16> to vector<128x128xbf16>
    %cst_26 = arith.constant dense<0.000000e+00> : vector<128x128xf32>
    %46 = tpu.matmul %44, %45, %cst_26 {dimension_numbers = #tpu.dot_dimension_numbers<[1], [0], [0], [1], [0, 0, 1, 1], [], []>} : vector<128x128xbf16>, vector<128x128xbf16>, vector<128x128xf32> -> vector<128x128xf32>
    %47 = arith.truncf %46 : vector<128x128xf32> to vector<128x128xbf16>
    %48 = vector.extract_strided_slice %28 {offsets = [0, 128], sizes = [128, 128], strides = [1, 1]} : vector<128x256xbf16> to vector<128x128xbf16>
    %49 = vector.extract_strided_slice %29 {offsets = [0, 128], sizes = [128, 128], strides = [1, 1]} : vector<128x256xbf16> to vector<128x128xbf16>
    %cst_27 = arith.constant dense<0.000000e+00> : vector<128x128xf32>
    %50 = tpu.matmul %48, %49, %cst_27 {dimension_numbers = #tpu.dot_dimension_numbers<[1], [1], [0], [0], [0, 0, 1, 0], [], []>} : vector<128x128xbf16>, vector<128x128xbf16>, vector<128x128xf32> -> vector<128x128xf32>
    %cst_28 = arith.constant dense<0xFF800000> : vector<128xf32>
    %51 = vector.multi_reduction <maximumf>, %50, %cst_28 [1] : vector<128x128xf32> to vector<128xf32>
    %52 = vector.shape_cast %51 : vector<128xf32> to vector<128x1xf32>
    %53 = vector.broadcast %52 : vector<128x1xf32> to vector<128x128xf32>
    %54 = arith.subf %50, %53 : vector<128x128xf32>
    %55 = math.exp %54 : vector<128x128xf32>
    %cst_29 = arith.constant dense<0.000000e+00> : vector<128xf32>
    %56 = vector.multi_reduction <add>, %55, %cst_29 [1] : vector<128x128xf32> to vector<128xf32>
    %57 = vector.shape_cast %56 : vector<128xf32> to vector<128x1xf32>
    %58 = tpu.reciprocal %57 {approx = true} : vector<128x1xf32> -> vector<128x1xf32>
    %59 = vector.broadcast %58 : vector<128x1xf32> to vector<128x128xf32>
    %60 = arith.mulf %55, %59 : vector<128x128xf32>
    %61 = arith.truncf %60 : vector<128x128xf32> to vector<128x128xbf16>
    %62 = vector.extract_strided_slice %30 {offsets = [0, 128], sizes = [128, 128], strides = [1, 1]} : vector<128x256xbf16> to vector<128x128xbf16>
    %cst_30 = arith.constant dense<0.000000e+00> : vector<128x128xf32>
    %63 = tpu.matmul %61, %62, %cst_30 {dimension_numbers = #tpu.dot_dimension_numbers<[1], [0], [0], [1], [0, 0, 1, 1], [], []>} : vector<128x128xbf16>, vector<128x128xbf16>, vector<128x128xf32> -> vector<128x128xf32>
    %64 = arith.truncf %63 : vector<128x128xf32> to vector<128x128xbf16>
    %65 = tpu.concatenate %47, %64 in 1 : vector<128x128xbf16>, vector<128x128xbf16> -> vector<128x256xbf16>
    %c0_31 = arith.constant 0 : index
    %c0_32 = arith.constant 0 : index
    %c0_33 = arith.constant 0 : index
    %66 = vector.load %arg9[%c0_31, %c0_32, %c0_33] : memref<1x256x256xbf16, #tpu.memory_space<vmem>>, vector<1x256x256xbf16>
    %67 = vector.shape_cast %66 : vector<1x256x256xbf16> to vector<256x256xbf16>
    %cst_34 = arith.constant dense<0.000000e+00> : vector<128x256xf32>
    %68 = tpu.matmul %65, %67, %cst_34 {dimension_numbers = #tpu.dot_dimension_numbers<[1], [0], [0], [1], [0, 0, 1, 1], [], []>} : vector<128x256xbf16>, vector<256x256xbf16>, vector<128x256xf32> -> vector<128x256xf32>
    %c0_35 = arith.constant 0 : index
    %c0_36 = arith.constant 0 : index
    %c0_37 = arith.constant 0 : index
    %69 = vector.load %arg10[%c0_35, %c0_36, %c0_37] : memref<1x1x256xf32, #tpu.memory_space<vmem>>, vector<1x1x256xf32>
    %70 = vector.shape_cast %69 : vector<1x1x256xf32> to vector<1x256xf32>
    %71 = vector.broadcast %70 : vector<1x256xf32> to vector<128x256xf32>
    %72 = arith.addf %68, %71 : vector<128x256xf32>
    %73 = arith.addf %3, %72 : vector<128x256xf32>
    %cst_38 = arith.constant dense<0.000000e+00> : vector<128xf32>
    %74 = vector.multi_reduction <add>, %73, %cst_38 [1] : vector<128x256xf32> to vector<128xf32>
    %75 = vector.shape_cast %74 : vector<128xf32> to vector<128x1xf32>
    %cst_39 = arith.constant 2.560000e+02 : f32
    %76 = vector.broadcast %cst_39 : f32 to vector<128x1xf32>
    %77 = arith.divf %75, %76 : vector<128x1xf32>
    %78 = vector.broadcast %77 : vector<128x1xf32> to vector<128x256xf32>
    %79 = arith.subf %73, %78 : vector<128x256xf32>
    %80 = arith.mulf %79, %79 : vector<128x256xf32>
    %cst_40 = arith.constant dense<0.000000e+00> : vector<128xf32>
    %81 = vector.multi_reduction <add>, %80, %cst_40 [1] : vector<128x256xf32> to vector<128xf32>
    %82 = vector.shape_cast %81 : vector<128xf32> to vector<128x1xf32>
    %cst_41 = arith.constant 2.560000e+02 : f32
    %83 = vector.broadcast %cst_41 : f32 to vector<128x1xf32>
    %84 = arith.divf %82, %83 : vector<128x1xf32>
    %85 = vector.broadcast %77 : vector<128x1xf32> to vector<128x256xf32>
    %86 = arith.subf %73, %85 : vector<128x256xf32>
    %cst_42 = arith.constant 9.99999974E-6 : f32
    %87 = vector.broadcast %cst_42 : f32 to vector<128x1xf32>
    %88 = arith.addf %84, %87 : vector<128x1xf32>
    %89 = math.rsqrt %88 : vector<128x1xf32>
    %90 = vector.broadcast %89 : vector<128x1xf32> to vector<128x256xf32>
    %91 = arith.mulf %86, %90 : vector<128x256xf32>
    %c0_43 = arith.constant 0 : index
    %c0_44 = arith.constant 0 : index
    %c0_45 = arith.constant 0 : index
    %92 = vector.load %arg11[%c0_43, %c0_44, %c0_45] : memref<1x1x256xf32, #tpu.memory_space<vmem>>, vector<1x1x256xf32>
    %93 = vector.shape_cast %92 : vector<1x1x256xf32> to vector<1x256xf32>
    %94 = vector.broadcast %93 : vector<1x256xf32> to vector<128x256xf32>
    %95 = arith.mulf %91, %94 : vector<128x256xf32>
    %c0_46 = arith.constant 0 : index
    %c0_47 = arith.constant 0 : index
    %c0_48 = arith.constant 0 : index
    %96 = vector.load %arg12[%c0_46, %c0_47, %c0_48] : memref<1x1x256xf32, #tpu.memory_space<vmem>>, vector<1x1x256xf32>
    %97 = vector.shape_cast %96 : vector<1x1x256xf32> to vector<1x256xf32>
    %98 = vector.broadcast %97 : vector<1x256xf32> to vector<128x256xf32>
    %99 = arith.addf %95, %98 : vector<128x256xf32>
    %100 = arith.truncf %99 : vector<128x256xf32> to vector<128x256xbf16>
    %c0_49 = arith.constant 0 : index
    %c0_50 = arith.constant 0 : index
    %c0_51 = arith.constant 0 : index
    %101 = vector.load %arg13[%c0_49, %c0_50, %c0_51] : memref<1x256x512xbf16, #tpu.memory_space<vmem>>, vector<1x256x512xbf16>
    %102 = vector.shape_cast %101 : vector<1x256x512xbf16> to vector<256x512xbf16>
    %cst_52 = arith.constant dense<0.000000e+00> : vector<128x512xf32>
    %103 = tpu.matmul %100, %102, %cst_52 {dimension_numbers = #tpu.dot_dimension_numbers<[1], [0], [0], [1], [0, 0, 1, 1], [], []>} : vector<128x256xbf16>, vector<256x512xbf16>, vector<128x512xf32> -> vector<128x512xf32>
    %c0_53 = arith.constant 0 : index
    %c0_54 = arith.constant 0 : index
    %c0_55 = arith.constant 0 : index
    %104 = vector.load %arg14[%c0_53, %c0_54, %c0_55] : memref<1x1x512xf32, #tpu.memory_space<vmem>>, vector<1x1x512xf32>
    %105 = vector.shape_cast %104 : vector<1x1x512xf32> to vector<1x512xf32>
    %106 = vector.broadcast %105 : vector<1x512xf32> to vector<128x512xf32>
    %107 = arith.addf %103, %106 : vector<128x512xf32>
    %cst_56 = arith.constant 0.000000e+00 : f32
    %108 = vector.broadcast %cst_56 : f32 to vector<128x512xf32>
    %109 = arith.maximumf %107, %108 : vector<128x512xf32>
    %110 = arith.truncf %109 : vector<128x512xf32> to vector<128x512xbf16>
    %c0_57 = arith.constant 0 : index
    %c0_58 = arith.constant 0 : index
    %c0_59 = arith.constant 0 : index
    %111 = vector.load %arg15[%c0_57, %c0_58, %c0_59] : memref<1x512x256xbf16, #tpu.memory_space<vmem>>, vector<1x512x256xbf16>
    %112 = vector.shape_cast %111 : vector<1x512x256xbf16> to vector<512x256xbf16>
    %cst_60 = arith.constant dense<0.000000e+00> : vector<128x256xf32>
    %113 = tpu.matmul %110, %112, %cst_60 {dimension_numbers = #tpu.dot_dimension_numbers<[1], [0], [0], [1], [0, 0, 1, 1], [], []>} : vector<128x512xbf16>, vector<512x256xbf16>, vector<128x256xf32> -> vector<128x256xf32>
    %c0_61 = arith.constant 0 : index
    %c0_62 = arith.constant 0 : index
    %c0_63 = arith.constant 0 : index
    %114 = vector.load %arg16[%c0_61, %c0_62, %c0_63] : memref<1x1x256xf32, #tpu.memory_space<vmem>>, vector<1x1x256xf32>
    %115 = vector.shape_cast %114 : vector<1x1x256xf32> to vector<1x256xf32>
    %116 = vector.broadcast %115 : vector<1x256xf32> to vector<128x256xf32>
    %117 = arith.addf %113, %116 : vector<128x256xf32>
    %118 = arith.addf %99, %117 : vector<128x256xf32>
    %cst_64 = arith.constant dense<0.000000e+00> : vector<128xf32>
    %119 = vector.multi_reduction <add>, %118, %cst_64 [1] : vector<128x256xf32> to vector<128xf32>
    %120 = vector.shape_cast %119 : vector<128xf32> to vector<128x1xf32>
    %cst_65 = arith.constant 2.560000e+02 : f32
    %121 = vector.broadcast %cst_65 : f32 to vector<128x1xf32>
    %122 = arith.divf %120, %121 : vector<128x1xf32>
    %123 = vector.broadcast %122 : vector<128x1xf32> to vector<128x256xf32>
    %124 = arith.subf %118, %123 : vector<128x256xf32>
    %125 = arith.mulf %124, %124 : vector<128x256xf32>
    %cst_66 = arith.constant dense<0.000000e+00> : vector<128xf32>
    %126 = vector.multi_reduction <add>, %125, %cst_66 [1] : vector<128x256xf32> to vector<128xf32>
    %127 = vector.shape_cast %126 : vector<128xf32> to vector<128x1xf32>
    %cst_67 = arith.constant 2.560000e+02 : f32
    %128 = vector.broadcast %cst_67 : f32 to vector<128x1xf32>
    %129 = arith.divf %127, %128 : vector<128x1xf32>
    %130 = vector.broadcast %122 : vector<128x1xf32> to vector<128x256xf32>
    %131 = arith.subf %118, %130 : vector<128x256xf32>
    %cst_68 = arith.constant 9.99999974E-6 : f32
    %132 = vector.broadcast %cst_68 : f32 to vector<128x1xf32>
    %133 = arith.addf %129, %132 : vector<128x1xf32>
    %134 = math.rsqrt %133 : vector<128x1xf32>
    %135 = vector.broadcast %134 : vector<128x1xf32> to vector<128x256xf32>
    %136 = arith.mulf %131, %135 : vector<128x256xf32>
    %c0_69 = arith.constant 0 : index
    %c0_70 = arith.constant 0 : index
    %c0_71 = arith.constant 0 : index
    %137 = vector.load %arg17[%c0_69, %c0_70, %c0_71] : memref<1x1x256xf32, #tpu.memory_space<vmem>>, vector<1x1x256xf32>
    %138 = vector.shape_cast %137 : vector<1x1x256xf32> to vector<1x256xf32>
    %139 = vector.broadcast %138 : vector<1x256xf32> to vector<128x256xf32>
    %140 = arith.mulf %136, %139 : vector<128x256xf32>
    %c0_72 = arith.constant 0 : index
    %c0_73 = arith.constant 0 : index
    %c0_74 = arith.constant 0 : index
    %141 = vector.load %arg18[%c0_72, %c0_73, %c0_74] : memref<1x1x256xf32, #tpu.memory_space<vmem>>, vector<1x1x256xf32>
    %142 = vector.shape_cast %141 : vector<1x1x256xf32> to vector<1x256xf32>
    %143 = vector.broadcast %142 : vector<1x256xf32> to vector<128x256xf32>
    %144 = arith.addf %140, %143 : vector<128x256xf32>
    %c0_75 = arith.constant 0 : index
    %c0_76 = arith.constant 0 : index
    %145 = vector.load %arg20[%c0_75, %c0_76] : memref<128x256xf32, #tpu.memory_space<vmem>>, vector<128x256xf32>
    tpu.vector_store %arg20[%c0_75, %c0_76], %144 {strides = array<i32>} : memref<128x256xf32, #tpu.memory_space<vmem>>, vector<128x256xf32>,
    %c1_i32 = arith.constant 1 : i32
    %146 = arith.cmpi eq, %arg1, %c1_i32 : i32
    %147 = arith.extui %146 : i1 to i32
    %c0_i32_77 = arith.constant 0 : i32
    %148 = arith.cmpi ne, %147, %c0_i32_77 : i32
    scf.if %148 {
      %149 = arith.truncf %144 : vector<128x256xf32> to vector<128x256xbf16>
      %c0_78 = arith.constant 0 : index
      %c0_79 = arith.constant 0 : index
      %c0_80 = arith.constant 0 : index
      %150 = vector.load %arg19[%c0_78, %c0_79, %c0_80] : memref<1x128x256xbf16, #tpu.memory_space<vmem>>, vector<1x128x256xbf16>
      %151 = vector.shape_cast %150 : vector<1x128x256xbf16> to vector<128x256xbf16>
      %152 = vector.shape_cast %149 : vector<128x256xbf16> to vector<1x128x256xbf16>
      tpu.vector_store %arg19[%c0_78, %c0_79, %c0_80], %152 {strides = array<i32>} : memref<1x128x256xbf16, #tpu.memory_space<vmem>>, vector<1x128x256xbf16>,
    } else {
    }
    return
  }
  func.func @transform_0(%arg0: i32, %arg1: i32) -> (i32, i32, i32) {
    %c0_i32 = arith.constant 0 : i32
    %c0_i32_0 = arith.constant 0 : i32
    %c0_i32_1 = arith.constant 0 : i32
    return %arg0, %c0_i32, %c0_i32_0 : i32, i32, i32
  }
  func.func @transform_1(%arg0: i32, %arg1: i32) -> (i32, i32, i32) {
    %c0_i32 = arith.constant 0 : i32
    %c0_i32_0 = arith.constant 0 : i32
    %c0_i32_1 = arith.constant 0 : i32
    return %arg1, %c0_i32, %c0_i32_0 : i32, i32, i32
  }
  func.func @transform_2(%arg0: i32, %arg1: i32) -> (i32, i32, i32) {
    %c0_i32 = arith.constant 0 : i32
    %c0_i32_0 = arith.constant 0 : i32
    %c0_i32_1 = arith.constant 0 : i32
    return %arg1, %c0_i32, %c0_i32_0 : i32, i32, i32
  }
  func.func @transform_3(%arg0: i32, %arg1: i32) -> (i32, i32, i32) {
    %c0_i32 = arith.constant 0 : i32
    %c0_i32_0 = arith.constant 0 : i32
    %c0_i32_1 = arith.constant 0 : i32
    return %arg1, %c0_i32, %c0_i32_0 : i32, i32, i32
  }
  func.func @transform_4(%arg0: i32, %arg1: i32) -> (i32, i32, i32) {
    %c0_i32 = arith.constant 0 : i32
    %c0_i32_0 = arith.constant 0 : i32
    %c0_i32_1 = arith.constant 0 : i32
    return %arg1, %c0_i32, %c0_i32_0 : i32, i32, i32
  }
  func.func @transform_5(%arg0: i32, %arg1: i32) -> (i32, i32, i32) {
    %c0_i32 = arith.constant 0 : i32
    %c0_i32_0 = arith.constant 0 : i32
    %c0_i32_1 = arith.constant 0 : i32
    return %arg1, %c0_i32, %c0_i32_0 : i32, i32, i32
  }
  func.func @transform_6(%arg0: i32, %arg1: i32) -> (i32, i32, i32) {
    %c0_i32 = arith.constant 0 : i32
    %c0_i32_0 = arith.constant 0 : i32
    %c0_i32_1 = arith.constant 0 : i32
    return %arg1, %c0_i32, %c0_i32_0 : i32, i32, i32
  }
  func.func @transform_7(%arg0: i32, %arg1: i32) -> (i32, i32, i32) {
    %c0_i32 = arith.constant 0 : i32
    %c0_i32_0 = arith.constant 0 : i32
    %c0_i32_1 = arith.constant 0 : i32
    return %arg1, %c0_i32, %c0_i32_0 : i32, i32, i32
  }
  func.func @transform_8(%arg0: i32, %arg1: i32) -> (i32, i32, i32) {
    %c0_i32 = arith.constant 0 : i32
    %c0_i32_0 = arith.constant 0 : i32
    %c0_i32_1 = arith.constant 0 : i32
    return %arg1, %c0_i32, %c0_i32_0 : i32, i32, i32
  }
  func.func @transform_9(%arg0: i32, %arg1: i32) -> (i32, i32, i32) {
    %c0_i32 = arith.constant 0 : i32
    %c0_i32_0 = arith.constant 0 : i32
    %c0_i32_1 = arith.constant 0 : i32
    return %arg1, %c0_i32, %c0_i32_0 : i32, i32, i32
  }
  func.func @transform_10(%arg0: i32, %arg1: i32) -> (i32, i32, i32) {
    %c0_i32 = arith.constant 0 : i32
    %c0_i32_0 = arith.constant 0 : i32
    %c0_i32_1 = arith.constant 0 : i32
    return %arg1, %c0_i32, %c0_i32_0 : i32, i32, i32
  }
  func.func @transform_11(%arg0: i32, %arg1: i32) -> (i32, i32, i32) {
    %c0_i32 = arith.constant 0 : i32
    %c0_i32_0 = arith.constant 0 : i32
    %c0_i32_1 = arith.constant 0 : i32
    return %arg1, %c0_i32, %c0_i32_0 : i32, i32, i32
  }
  func.func @transform_12(%arg0: i32, %arg1: i32) -> (i32, i32, i32) {
    %c0_i32 = arith.constant 0 : i32
    %c0_i32_0 = arith.constant 0 : i32
    %c0_i32_1 = arith.constant 0 : i32
    return %arg1, %c0_i32, %c0_i32_0 : i32, i32, i32
  }
  func.func @transform_13(%arg0: i32, %arg1: i32) -> (i32, i32, i32) {
    %c0_i32 = arith.constant 0 : i32
    %c0_i32_0 = arith.constant 0 : i32
    %c0_i32_1 = arith.constant 0 : i32
    return %arg1, %c0_i32, %c0_i32_0 : i32, i32, i32
  }
  func.func @transform_14(%arg0: i32, %arg1: i32) -> (i32, i32, i32) {
    %c0_i32 = arith.constant 0 : i32
    %c0_i32_0 = arith.constant 0 : i32
    %c0_i32_1 = arith.constant 0 : i32
    return %arg1, %c0_i32, %c0_i32_0 : i32, i32, i32
  }
  func.func @transform_15(%arg0: i32, %arg1: i32) -> (i32, i32, i32) {
    %c0_i32 = arith.constant 0 : i32
    %c0_i32_0 = arith.constant 0 : i32
    %c0_i32_1 = arith.constant 0 : i32
    return %arg1, %c0_i32, %c0_i32_0 : i32, i32, i32
  }
  func.func @transform_16(%arg0: i32, %arg1: i32) -> (i32, i32, i32) {
    %c0_i32 = arith.constant 0 : i32
    %c0_i32_0 = arith.constant 0 : i32
    %c0_i32_1 = arith.constant 0 : i32
    return %arg1, %c0_i32, %c0_i32_0 : i32, i32, i32
  }
  func.func @transform_17(%arg0: i32, %arg1: i32) -> (i32, i32, i32) {
    %c0_i32 = arith.constant 0 : i32
    %c0_i32_0 = arith.constant 0 : i32
    %c0_i32_1 = arith.constant 0 : i32
    return %arg0, %c0_i32, %c0_i32_0 : i32, i32, i32
  }
}

</mosaic_0001>

<llo_original>
// kernel: tpu_custom_call.1
$region0: #{tpu_custom_call.1}
  #allocation0 [shape = 'u32[]', space=smem, size = 0x4, offset = 0x4, fixed_abs, tag = 'smem constant byte address 0x4 - core index']
  #allocation1 [shape = 'u32[72,128]{1,0:T(1,128)}', space=vmem, size = 0x9000, scoped, tag = 'internal scratch']
  #allocation2 [shape = 'f32[128,256]{1,0:T(8,128)}', space=vmem, size = 0x20000, scoped, tag = 'scratch operand']
  %s0 = inlined_call_operand.hbm [shape: bf16[2,128,256], index: 0, kind: input, shape index: {}]
  %s1 = inlined_call_operand.hbm [shape: bf16[2,256,256], index: 1, kind: input, shape index: {}]
  %s2 = inlined_call_operand.hbm [shape: f32[2,1,256], index: 2, kind: input, shape index: {}]
  %s3 = inlined_call_operand.hbm [shape: bf16[2,256,256], index: 3, kind: input, shape index: {}]
  %s4 = inlined_call_operand.hbm [shape: f32[2,1,256], index: 4, kind: input, shape index: {}]
  %s5 = inlined_call_operand.hbm [shape: bf16[2,256,256], index: 5, kind: input, shape index: {}]
  %s6 = inlined_call_operand.hbm [shape: f32[2,1,256], index: 6, kind: input, shape index: {}]
  %s7 = inlined_call_operand.hbm [shape: bf16[2,256,256], index: 7, kind: input, shape index: {}]
  %s8 = inlined_call_operand.hbm [shape: f32[2,1,256], index: 8, kind: input, shape index: {}]
  %s9 = inlined_call_operand.hbm [shape: f32[2,1,256], index: 9, kind: input, shape index: {}]
  %s10 = inlined_call_operand.hbm [shape: f32[2,1,256], index: 10, kind: input, shape index: {}]
  %s11 = inlined_call_operand.hbm [shape: bf16[2,256,512], index: 11, kind: input, shape index: {}]
  %s12 = inlined_call_operand.vmem [shape: f32[2,1,512], index: 12, kind: input, shape index: {}]
  %s13 = inlined_call_operand.hbm [shape: bf16[2,512,256], index: 13, kind: input, shape index: {}]
  %s14 = inlined_call_operand.vmem [shape: f32[2,1,256], index: 14, kind: input, shape index: {}]
  %s15 = inlined_call_operand.hbm [shape: f32[2,1,256], index: 15, kind: input, shape index: {}]
  %s16 = inlined_call_operand.hbm [shape: f32[2,1,256], index: 16, kind: input, shape index: {}]
  %s17 = inlined_call_operand.hbm [shape: bf16[2,128,256], index: 17, kind: output, shape index: {}]
  %s18 = sld [smem:[#allocation0]]
  $region169: #{tpu_custom_call.1} parent=0
    _
  %s20 = ssub.s32 1, %s18
  %s21 = scalar_select 0, %s20, %s18
  $region1: #{tpu_custom_call.1} parent=0
    #allocation3 [shape = 'u8[131072]{0}', space=vmem, size = 0x20000, scoped, tag = 'input window, operand 0']
    #allocation4 [shape = 's32[2]{0}', space=sflag, size = 0x8, scoped, tag = 'scoped memory for tpu_custom_call.1']
    #allocation5 [shape = 's32[2]{0}', space=sflag, size = 0x8, scoped, tag = 'scoped memory for tpu_custom_call.1']
    #allocation6 [shape = 'u8[262144]{0}', space=vmem, size = 0x40000, scoped, tag = 'input window, operand 1']
    #allocation7 [shape = 's32[2]{0}', space=sflag, size = 0x8, scoped, tag = 'scoped memory for tpu_custom_call.1']
    #allocation8 [shape = 'u8[2048]{0}', space=vmem, size = 0x800, scoped, tag = 'input window, operand 2']
    #allocation9 [shape = 'u8[262144]{0}', space=vmem, size = 0x40000, scoped, tag = 'input window, operand 3']
    #allocation10 [shape = 's32[2]{0}', space=sflag, size = 0x8, scoped, tag = 'scoped memory for tpu_custom_call.1']
    #allocation11 [shape = 'u8[2048]{0}', space=vmem, size = 0x800, scoped, tag = 'input window, operand 4']
    #allocation12 [shape = 'u8[262144]{0}', space=vmem, size = 0x40000, scoped, tag = 'input window, operand 5']
    #allocation13 [shape = 's32[2]{0}', space=sflag, size = 0x8, scoped, tag = 'scoped memory for tpu_custom_call.1']
    #allocation14 [shape = 'u8[2048]{0}', space=vmem, size = 0x800, scoped, tag = 'input window, operand 6']
    #allocation15 [shape = 'u8[262144]{0}', space=vmem, size = 0x40000, scoped, tag = 'input window, operand 7']
    #allocation16 [shape = 's32[2]{0}', space=sflag, size = 0x8, scoped, tag = 'scoped memory for tpu_custom_call.1']
    #allocation17 [shape = 'u8[2048]{0}', space=vmem, size = 0x800, scoped, tag = 'input window, operand 8']
    #allocation18 [shape = 'u8[2048]{0}', space=vmem, size = 0x800, scoped, tag = 'input window, operand 9']
    #allocation19 [shape = 's32[2]{0}', space=sflag, size = 0x8, scoped, tag = 'scoped memory for tpu_custom_call.1']
    #allocation20 [shape = 'u8[2048]{0}', space=vmem, size = 0x800, scoped, tag = 'input window, operand 10']
    #allocation21 [shape = 'u8[524288]{0}', space=vmem, size = 0x80000, scoped, tag = 'input window, operand 11']
    #allocation22 [shape = 's32[2]{0}', space=sflag, size = 0x8, scoped, tag = 'scoped memory for tpu_custom_call.1']
    #allocation23 [shape = 'u8[524288]{0}', space=vmem, size = 0x80000, scoped, tag = 'input window, operand 13']
    #allocation24 [shape = 'u8[2048]{0}', space=vmem, size = 0x800, scoped, tag = 'input window, operand 15']
    #allocation25 [shape = 's32[2]{0}', space=sflag, size = 0x8, scoped, tag = 'scoped memory for tpu_custom_call.1']
    #allocation26 [shape = 'u8[2048]{0}', space=vmem, size = 0x800, scoped, tag = 'input window, operand 16']
    #allocation27 [shape = 'u8[131072]{0}', space=vmem, size = 0x20000, scoped, tag = 'output window, operand 0']
    %22 = vsyncpa [#allocation4], 0
    %s23 = scalar_lea.sflag [#allocation4], 1
    %24 = vsyncpa %s23, 0
    %25 = vsyncpa [#allocation7], 0
    %s26 = scalar_lea.sflag [#allocation7], 1
    %27 = vsyncpa %s26, 0
    %28 = vsyncpa [#allocation10], 0
    %s29 = scalar_lea.sflag [#allocation10], 1
    %30 = vsyncpa %s29, 0
    %31 = vsyncpa [#allocation13], 0
    %s32 = scalar_lea.sflag [#allocation13], 1
    %33 = vsyncpa %s32, 0
    %34 = vsyncpa [#allocation16], 0
    %s35 = scalar_lea.sflag [#allocation16], 1
    %36 = vsyncpa %s35, 0
    %37 = vsyncpa [#allocation19], 0
    %s38 = scalar_lea.sflag [#allocation19], 1
    %39 = vsyncpa %s38, 0
    %40 = vsyncpa [#allocation22], 0
    %s41 = scalar_lea.sflag [#allocation22], 1
    %42 = vsyncpa %s41, 0
    %43 = vsyncpa [#allocation25], 0
    %s44 = scalar_lea.sflag [#allocation25], 1
    %45 = vsyncpa %s44, 0
    %46 = vsyncpa [#allocation5], 0
    %s47 = scalar_lea.sflag [#allocation5], 1
    %48 = vsyncpa %s47, 0
    loop: start=0, step=1, limit=6
    $region2: #{tpu_custom_call.1} parent=1 // loop_pre_header
      _
    $region3: #{tpu_custom_call.1} parent=1 // loop_header
      %s50 = sphi 0, %s54
      %p51 = scmp.ge.s32.totalorder %s50, 6
      %s57 = sphi 0, %s69
      %s58 = sphi 0, %s65
      %s59 = sphi 0, %s57
      %s60 = sphi 0, %s58
      %s61 = sphi 0, %s59
      %s62 = sphi 0, %s60
      %s72 = sphi 0, %s74
      %s75 = sphi 0, %s72
      %s76 = sphi 0, %s75
      %s92 = sphi 0, %s76
      %s98 = sphi 0, %s100
      %s101 = sphi 0, %s98
      %s102 = sphi 0, %s101
      %s118 = sphi 0, %s102
      %s124 = sphi 0, %s126
      %s127 = sphi 0, %s124
      %s128 = sphi 0, %s127
      %s144 = sphi 0, %s128
      %s150 = sphi 0, %s152
      %s153 = sphi 0, %s150
      %s154 = sphi 0, %s153
      %s170 = sphi 0, %s154
      %s176 = sphi 0, %s178
      %s179 = sphi 0, %s176
      %s180 = sphi 0, %s179
      %s196 = sphi 0, %s180
      %s202 = sphi 0, %s204
      %s205 = sphi 0, %s202
      %s206 = sphi 0, %s205
      %s222 = sphi 0, %s206
      %s228 = sphi 0, %s230
      %s231 = sphi 0, %s228
      %s232 = sphi 0, %s231
      %s248 = sphi 0, %s232
      %s254 = sphi 0, %s256
      %s257 = sphi 0, %s254
      %s258 = sphi 0, %s257
      %s274 = sphi 0, %s258
      %s280 = sphi 0, %s282
      %s283 = sphi 0, %s280
      %s284 = sphi 0, %s283
      %s300 = sphi 0, %s284
      %s306 = sphi 0, %s308
      %s309 = sphi 0, %s306
      %s310 = sphi 0, %s309
      %s326 = sphi 0, %s310
      %s332 = sphi 0, %s334
      %s335 = sphi 0, %s332
      %s336 = sphi 0, %s335
      %s352 = sphi 0, %s336
      %s358 = sphi 0, %s360
      %s361 = sphi 0, %s358
      %s362 = sphi 0, %s361
      %s378 = sphi 0, %s362
      %s384 = sphi 0, %s386
      %s387 = sphi 0, %s384
      %s388 = sphi 0, %s387
      %s404 = sphi 0, %s388
      %s410 = sphi 0, %s412
      %s413 = sphi 0, %s410
      %s414 = sphi 0, %s413
      %s430 = sphi 0, %s414
      %s436 = sphi 0, %s438
      %s439 = sphi 0, %s436
      %s440 = sphi 0, %s439
      %s456 = sphi 0, %s440
      %s462 = sphi 0, %s464
      %s465 = sphi 0, %s462
      %s466 = sphi 0, %s465
      %s482 = sphi 0, %s466
      %s488 = sphi 0, %s490
      %s491 = sphi 0, %s488
      %s492 = sphi 0, %s491
      %s508 = sphi 0, %s492
      %s514 = sphi 0, %s516
      %s517 = sphi 0, %s514
      %s518 = sphi 0, %s517
      %s534 = sphi 0, %s518
    $region4: #{tpu_custom_call.1} parent=1 // loop_header_branch
      %53 = sbr.rel (%p51) target = $region8
    $region5: #{tpu_custom_call.1} parent=1 // loop_body
      %s55 = ssub.s32 %s50, 1
      %s56 = ssub.s32 %s50, 2
      %s63 = sadd.s32 1, %s58
      %p64 = scmp.ge.s32.totalorder %s63, 2
      %s65 = scalar_select %p64, 0, %s63
      %s66 = sadd.s32 1, %s57
      %s67 = scalar_select %p64, %s66, %s57
      %p68 = scmp.ge.s32.totalorder %s67, 2
      %s69 = scalar_select %p68, 0, %s67
      %s70 = ssub.s32 %s57, %s69
      %p71 = scmp.eq.s32.totalorder %s70, 0
      %s73 = sadd.s32 %s72, 1
      %s74 = scalar_select %p71, %s72, %s73
      %p77 = pneg %p71
      %p78 = scmp.eq.s32.totalorder %s50, 3
      %p79 = por %p77, %p78
      %p80 = scmp.ne.s32.totalorder %s72, %s75
      %p81 = scmp.eq.s32.totalorder %s50, 0
      %p82 = por %p80, %p81
      %p83 = scmp.ne.s32.totalorder %s72, %s75
      %p84 = scmp.eq.s32.totalorder %s55, 3
      %p85 = por %p83, %p84
      %p86 = scmp.ne.s32.totalorder %s75, %s76
      %p87 = scmp.eq.s32.totalorder %s55, 0
      %p88 = por %p86, %p87
      %p89 = scmp.ne.s32.totalorder %s75, %s76
      %p90 = scmp.eq.s32.totalorder %s56, 3
      %p91 = por %p89, %p90
      %p93 = scmp.ne.s32.totalorder %s76, %s92
      %p94 = scmp.eq.s32.totalorder %s56, 0
      %p95 = por %p93, %p94
      %s96 = ssub.s32 %s58, %s65
      %p97 = scmp.eq.s32.totalorder %s96, 0
      %s99 = sadd.s32 %s98, 1
      %s100 = scalar_select %p97, %s98, %s99
      %p103 = pneg %p97
      %p104 = scmp.eq.s32.totalorder %s50, 3
      %p105 = por %p103, %p104
      %p106 = scmp.ne.s32.totalorder %s98, %s101
      %p107 = scmp.eq.s32.totalorder %s50, 0
      %p108 = por %p106, %p107
      %p109 = scmp.ne.s32.totalorder %s98, %s101
      %p110 = scmp.eq.s32.totalorder %s55, 3
      %p111 = por %p109, %p110
      %p112 = scmp.ne.s32.totalorder %s101, %s102
      %p113 = scmp.eq.s32.totalorder %s55, 0
      %p114 = por %p112, %p113
      %p115 = scmp.ne.s32.totalorder %s101, %s102
      %p116 = scmp.eq.s32.totalorder %s56, 3
      %p117 = por %p115, %p116
      %p119 = scmp.ne.s32.totalorder %s102, %s118
      %p120 = scmp.eq.s32.totalorder %s56, 0
      %p121 = por %p119, %p120
      %s122 = ssub.s32 %s58, %s65
      %p123 = scmp.eq.s32.totalorder %s122, 0
      %s125 = sadd.s32 %s124, 1
      %s126 = scalar_select %p123, %s124, %s125
      %p129 = pneg %p123
      %p130 = scmp.eq.s32.totalorder %s50, 3
      %p131 = por %p129, %p130
      %p132 = scmp.ne.s32.totalorder %s124, %s127
      %p133 = scmp.eq.s32.totalorder %s50, 0
      %p134 = por %p132, %p133
      %p135 = scmp.ne.s32.totalorder %s124, %s127
      %p136 = scmp.eq.s32.totalorder %s55, 3
      %p137 = por %p135, %p136
      %p138 = scmp.ne.s32.totalorder %s127, %s128
      %p139 = scmp.eq.s32.totalorder %s55, 0
      %p140 = por %p138, %p139
      %p141 = scmp.ne.s32.totalorder %s127, %s128
      %p142 = scmp.eq.s32.totalorder %s56, 3
      %p143 = por %p141, %p142
      %p145 = scmp.ne.s32.totalorder %s128, %s144
      %p146 = scmp.eq.s32.totalorder %s56, 0
      %p147 = por %p145, %p146
      %s148 = ssub.s32 %s58, %s65
      %p149 = scmp.eq.s32.totalorder %s148, 0
      %s151 = sadd.s32 %s150, 1
      %s152 = scalar_select %p149, %s150, %s151
      %p155 = pneg %p149
      %p156 = scmp.eq.s32.totalorder %s50, 3
      %p157 = por %p155, %p156
      %p158 = scmp.ne.s32.totalorder %s150, %s153
      %p159 = scmp.eq.s32.totalorder %s50, 0
      %p160 = por %p158, %p159
      %p161 = scmp.ne.s32.totalorder %s150, %s153
      %p162 = scmp.eq.s32.totalorder %s55, 3
      %p163 = por %p161, %p162
      %p164 = scmp.ne.s32.totalorder %s153, %s154
      %p165 = scmp.eq.s32.totalorder %s55, 0
      %p166 = por %p164, %p165
      %p167 = scmp.ne.s32.totalorder %s153, %s154
      %p168 = scmp.eq.s32.totalorder %s56, 3
      %p169 = por %p167, %p168
      %p171 = scmp.ne.s32.totalorder %s154, %s170
      %p172 = scmp.eq.s32.totalorder %s56, 0
      %p173 = por %p171, %p172
      %s174 = ssub.s32 %s58, %s65
      %p175 = scmp.eq.s32.totalorder %s174, 0
      %s177 = sadd.s32 %s176, 1
      %s178 = scalar_select %p175, %s176, %s177
      %p181 = pneg %p175
      %p182 = scmp.eq.s32.totalorder %s50, 3
      %p183 = por %p181, %p182
      %p184 = scmp.ne.s32.totalorder %s176, %s179
      %p185 = scmp.eq.s32.totalorder %s50, 0
      %p186 = por %p184, %p185
      %p187 = scmp.ne.s32.totalorder %s176, %s179
      %p188 = scmp.eq.s32.totalorder %s55, 3
      %p189 = por %p187, %p188
      %p190 = scmp.ne.s32.totalorder %s179, %s180
      %p191 = scmp.eq.s32.totalorder %s55, 0
      %p192 = por %p190, %p191
      %p193 = scmp.ne.s32.totalorder %s179, %s180
      %p194 = scmp.eq.s32.totalorder %s56, 3
      %p195 = por %p193, %p194
      %p197 = scmp.ne.s32.totalorder %s180, %s196
      %p198 = scmp.eq.s32.totalorder %s56, 0
      %p199 = por %p197, %p198
      %s200 = ssub.s32 %s58, %s65
      %p201 = scmp.eq.s32.totalorder %s200, 0
      %s203 = sadd.s32 %s202, 1
      %s204 = scalar_select %p201, %s202, %s203
      %p207 = pneg %p201
      %p208 = scmp.eq.s32.totalorder %s50, 3
      %p209 = por %p207, %p208
      %p210 = scmp.ne.s32.totalorder %s202, %s205
      %p211 = scmp.eq.s32.totalorder %s50, 0
      %p212 = por %p210, %p211
      %p213 = scmp.ne.s32.totalorder %s202, %s205
      %p214 = scmp.eq.s32.totalorder %s55, 3
      %p215 = por %p213, %p214
      %p216 = scmp.ne.s32.totalorder %s205, %s206
      %p217 = scmp.eq.s32.totalorder %s55, 0
      %p218 = por %p216, %p217
      %p219 = scmp.ne.s32.totalorder %s205, %s206
      %p220 = scmp.eq.s32.totalorder %s56, 3
      %p221 = por %p219, %p220
      %p223 = scmp.ne.s32.totalorder %s206, %s222
      %p224 = scmp.eq.s32.totalorder %s56, 0
      %p225 = por %p223, %p224
      %s226 = ssub.s32 %s58, %s65
      %p227 = scmp.eq.s32.totalorder %s226, 0
      %s229 = sadd.s32 %s228, 1
      %s230 = scalar_select %p227, %s228, %s229
      %p233 = pneg %p227
      %p234 = scmp.eq.s32.totalorder %s50, 3
      %p235 = por %p233, %p234
      %p236 = scmp.ne.s32.totalorder %s228, %s231
      %p237 = scmp.eq.s32.totalorder %s50, 0
      %p238 = por %p236, %p237
      %p239 = scmp.ne.s32.totalorder %s228, %s231
      %p240 = scmp.eq.s32.totalorder %s55, 3
      %p241 = por %p239, %p240
      %p242 = scmp.ne.s32.totalorder %s231, %s232
      %p243 = scmp.eq.s32.totalorder %s55, 0
      %p244 = por %p242, %p243
      %p245 = scmp.ne.s32.totalorder %s231, %s232
      %p246 = scmp.eq.s32.totalorder %s56, 3
      %p247 = por %p245, %p246
      %p249 = scmp.ne.s32.totalorder %s232, %s248
      %p250 = scmp.eq.s32.totalorder %s56, 0
      %p251 = por %p249, %p250
      %s252 = ssub.s32 %s58, %s65
      %p253 = scmp.eq.s32.totalorder %s252, 0
      %s255 = sadd.s32 %s254, 1
      %s256 = scalar_select %p253, %s254, %s255
      %p259 = pneg %p253
      %p260 = scmp.eq.s32.totalorder %s50, 3
      %p261 = por %p259, %p260
      %p262 = scmp.ne.s32.totalorder %s254, %s257
      %p263 = scmp.eq.s32.totalorder %s50, 0
      %p264 = por %p262, %p263
      %p265 = scmp.ne.s32.totalorder %s254, %s257
      %p266 = scmp.eq.s32.totalorder %s55, 3
      %p267 = por %p265, %p266
      %p268 = scmp.ne.s32.totalorder %s257, %s258
      %p269 = scmp.eq.s32.totalorder %s55, 0
      %p270 = por %p268, %p269
      %p271 = scmp.ne.s32.totalorder %s257, %s258
      %p272 = scmp.eq.s32.totalorder %s56, 3
      %p273 = por %p271, %p272
      %p275 = scmp.ne.s32.totalorder %s258, %s274
      %p276 = scmp.eq.s32.totalorder %s56, 0
      %p277 = por %p275, %p276
      %s278 = ssub.s32 %s58, %s65
      %p279 = scmp.eq.s32.totalorder %s278, 0
      %s281 = sadd.s32 %s280, 1
      %s282 = scalar_select %p279, %s280, %s281
      %p285 = pneg %p279
      %p286 = scmp.eq.s32.totalorder %s50, 3
      %p287 = por %p285, %p286
      %p288 = scmp.ne.s32.totalorder %s280, %s283
      %p289 = scmp.eq.s32.totalorder %s50, 0
      %p290 = por %p288, %p289
      %p291 = scmp.ne.s32.totalorder %s280, %s283
      %p292 = scmp.eq.s32.totalorder %s55, 3
      %p293 = por %p291, %p292
      %p294 = scmp.ne.s32.totalorder %s283, %s284
      %p295 = scmp.eq.s32.totalorder %s55, 0
      %p296 = por %p294, %p295
      %p297 = scmp.ne.s32.totalorder %s283, %s284
      %p298 = scmp.eq.s32.totalorder %s56, 3
      %p299 = por %p297, %p298
      %p301 = scmp.ne.s32.totalorder %s284, %s300
      %p302 = scmp.eq.s32.totalorder %s56, 0
      %p303 = por %p301, %p302
      %s304 = ssub.s32 %s58, %s65
      %p305 = scmp.eq.s32.totalorder %s304, 0
      %s307 = sadd.s32 %s306, 1
      %s308 = scalar_select %p305, %s306, %s307
      %p311 = pneg %p305
      %p312 = scmp.eq.s32.totalorder %s50, 3
      %p313 = por %p311, %p312
      %p314 = scmp.ne.s32.totalorder %s306, %s309
      %p315 = scmp.eq.s32.totalorder %s50, 0
      %p316 = por %p314, %p315
      %p317 = scmp.ne.s32.totalorder %s306, %s309
      %p318 = scmp.eq.s32.totalorder %s55, 3
      %p319 = por %p317, %p318
      %p320 = scmp.ne.s32.totalorder %s309, %s310
      %p321 = scmp.eq.s32.totalorder %s55, 0
      %p322 = por %p320, %p321
      %p323 = scmp.ne.s32.totalorder %s309, %s310
      %p324 = scmp.eq.s32.totalorder %s56, 3
      %p325 = por %p323, %p324
      %p327 = scmp.ne.s32.totalorder %s310, %s326
      %p328 = scmp.eq.s32.totalorder %s56, 0
      %p329 = por %p327, %p328
      %s330 = ssub.s32 %s58, %s65
      %p331 = scmp.eq.s32.totalorder %s330, 0
      %s333 = sadd.s32 %s332, 1
      %s334 = scalar_select %p331, %s332, %s333
      %p337 = pneg %p331
      %p338 = scmp.eq.s32.totalorder %s50, 3
      %p339 = por %p337, %p338
      %p340 = scmp.ne.s32.totalorder %s332, %s335
      %p341 = scmp.eq.s32.totalorder %s50, 0
      %p342 = por %p340, %p341
      %p343 = scmp.ne.s32.totalorder %s332, %s335
      %p344 = scmp.eq.s32.totalorder %s55, 3
      %p345 = por %p343, %p344
      %p346 = scmp.ne.s32.totalorder %s335, %s336
      %p347 = scmp.eq.s32.totalorder %s55, 0
      %p348 = por %p346, %p347
      %p349 = scmp.ne.s32.totalorder %s335, %s336
      %p350 = scmp.eq.s32.totalorder %s56, 3
      %p351 = por %p349, %p350
      %p353 = scmp.ne.s32.totalorder %s336, %s352
      %p354 = scmp.eq.s32.totalorder %s56, 0
      %p355 = por %p353, %p354
      %s356 = ssub.s32 %s58, %s65
      %p357 = scmp.eq.s32.totalorder %s356, 0
      %s359 = sadd.s32 %s358, 1
      %s360 = scalar_select %p357, %s358, %s359
      %p363 = pneg %p357
      %p364 = scmp.eq.s32.totalorder %s50, 3
      %p365 = por %p363, %p364
      %p366 = scmp.ne.s32.totalorder %s358, %s361
      %p367 = scmp.eq.s32.totalorder %s50, 0
      %p368 = por %p366, %p367
      %p369 = scmp.ne.s32.totalorder %s358, %s361
      %p370 = scmp.eq.s32.totalorder %s55, 3
      %p371 = por %p369, %p370
      %p372 = scmp.ne.s32.totalorder %s361, %s362
      %p373 = scmp.eq.s32.totalorder %s55, 0
      %p374 = por %p372, %p373
      %p375 = scmp.ne.s32.totalorder %s361, %s362
      %p376 = scmp.eq.s32.totalorder %s56, 3
      %p377 = por %p375, %p376
      %p379 = scmp.ne.s32.totalorder %s362, %s378
      %p380 = scmp.eq.s32.totalorder %s56, 0
      %p381 = por %p379, %p380
      %s382 = ssub.s32 %s58, %s65
      %p383 = scmp.eq.s32.totalorder %s382, 0
      %s385 = sadd.s32 %s384, 1
      %s386 = scalar_select %p383, %s384, %s385
      %p389 = pneg %p383
      %p390 = scmp.eq.s32.totalorder %s50, 3
      %p391 = por %p389, %p390
      %p392 = scmp.ne.s32.totalorder %s384, %s387
      %p393 = scmp.eq.s32.totalorder %s50, 0
      %p394 = por %p392, %p393
      %p395 = scmp.ne.s32.totalorder %s384, %s387
      %p396 = scmp.eq.s32.totalorder %s55, 3
      %p397 = por %p395, %p396
      %p398 = scmp.ne.s32.totalorder %s387, %s388
      %p399 = scmp.eq.s32.totalorder %s55, 0
      %p400 = por %p398, %p399
      %p401 = scmp.ne.s32.totalorder %s387, %s388
      %p402 = scmp.eq.s32.totalorder %s56, 3
      %p403 = por %p401, %p402
      %p405 = scmp.ne.s32.totalorder %s388, %s404
      %p406 = scmp.eq.s32.totalorder %s56, 0
      %p407 = por %p405, %p406
      %s408 = ssub.s32 %s58, %s65
      %p409 = scmp.eq.s32.totalorder %s408, 0
      %s411 = sadd.s32 %s410, 1
      %s412 = scalar_select %p409, %s410, %s411
      %p415 = pneg %p409
      %p416 = scmp.eq.s32.totalorder %s50, 3
      %p417 = por %p415, %p416
      %p418 = scmp.ne.s32.totalorder %s410, %s413
      %p419 = scmp.eq.s32.totalorder %s50, 0
      %p420 = por %p418, %p419
      %p421 = scmp.ne.s32.totalorder %s410, %s413
      %p422 = scmp.eq.s32.totalorder %s55, 3
      %p423 = por %p421, %p422
      %p424 = scmp.ne.s32.totalorder %s413, %s414
      %p425 = scmp.eq.s32.totalorder %s55, 0
      %p426 = por %p424, %p425
      %p427 = scmp.ne.s32.totalorder %s413, %s414
      %p428 = scmp.eq.s32.totalorder %s56, 3
      %p429 = por %p427, %p428
      %p431 = scmp.ne.s32.totalorder %s414, %s430
      %p432 = scmp.eq.s32.totalorder %s56, 0
      %p433 = por %p431, %p432
      %s434 = ssub.s32 %s58, %s65
      %p435 = scmp.eq.s32.totalorder %s434, 0
      %s437 = sadd.s32 %s436, 1
      %s438 = scalar_select %p435, %s436, %s437
      %p441 = pneg %p435
      %p442 = scmp.eq.s32.totalorder %s50, 3
      %p443 = por %p441, %p442
      %p444 = scmp.ne.s32.totalorder %s436, %s439
      %p445 = scmp.eq.s32.totalorder %s50, 0
      %p446 = por %p444, %p445
      %p447 = scmp.ne.s32.totalorder %s436, %s439
      %p448 = scmp.eq.s32.totalorder %s55, 3
      %p449 = por %p447, %p448
      %p450 = scmp.ne.s32.totalorder %s439, %s440
      %p451 = scmp.eq.s32.totalorder %s55, 0
      %p452 = por %p450, %p451
      %p453 = scmp.ne.s32.totalorder %s439, %s440
      %p454 = scmp.eq.s32.totalorder %s56, 3
      %p455 = por %p453, %p454
      %p457 = scmp.ne.s32.totalorder %s440, %s456
      %p458 = scmp.eq.s32.totalorder %s56, 0
      %p459 = por %p457, %p458
      %s460 = ssub.s32 %s58, %s65
      %p461 = scmp.eq.s32.totalorder %s460, 0
      %s463 = sadd.s32 %s462, 1
      %s464 = scalar_select %p461, %s462, %s463
      %p467 = pneg %p461
      %p468 = scmp.eq.s32.totalorder %s50, 3
      %p469 = por %p467, %p468
      %p470 = scmp.ne.s32.totalorder %s462, %s465
      %p471 = scmp.eq.s32.totalorder %s50, 0
      %p472 = por %p470, %p471
      %p473 = scmp.ne.s32.totalorder %s462, %s465
      %p474 = scmp.eq.s32.totalorder %s55, 3
      %p475 = por %p473, %p474
      %p476 = scmp.ne.s32.totalorder %s465, %s466
      %p477 = scmp.eq.s32.totalorder %s55, 0
      %p478 = por %p476, %p477
      %p479 = scmp.ne.s32.totalorder %s465, %s466
      %p480 = scmp.eq.s32.totalorder %s56, 3
      %p481 = por %p479, %p480
      %p483 = scmp.ne.s32.totalorder %s466, %s482
      %p484 = scmp.eq.s32.totalorder %s56, 0
      %p485 = por %p483, %p484
      %s486 = ssub.s32 %s58, %s65
      %p487 = scmp.eq.s32.totalorder %s486, 0
      %s489 = sadd.s32 %s488, 1
      %s490 = scalar_select %p487, %s488, %s489
      %p493 = pneg %p487
      %p494 = scmp.eq.s32.totalorder %s50, 3
      %p495 = por %p493, %p494
      %p496 = scmp.ne.s32.totalorder %s488, %s491
      %p497 = scmp.eq.s32.totalorder %s50, 0
      %p498 = por %p496, %p497
      %p499 = scmp.ne.s32.totalorder %s488, %s491
      %p500 = scmp.eq.s32.totalorder %s55, 3
      %p501 = por %p499, %p500
      %p502 = scmp.ne.s32.totalorder %s491, %s492
      %p503 = scmp.eq.s32.totalorder %s55, 0
      %p504 = por %p502, %p503
      %p505 = scmp.ne.s32.totalorder %s491, %s492
      %p506 = scmp.eq.s32.totalorder %s56, 3
      %p507 = por %p505, %p506
      %p509 = scmp.ne.s32.totalorder %s492, %s508
      %p510 = scmp.eq.s32.totalorder %s56, 0
      %p511 = por %p509, %p510
      %s512 = ssub.s32 %s57, %s69
      %p513 = scmp.eq.s32.totalorder %s512, 0
      %s515 = sadd.s32 %s514, 1
      %s516 = scalar_select %p513, %s514, %s515
      %p519 = pneg %p513
      %p520 = scmp.eq.s32.totalorder %s50, 3
      %p521 = por %p519, %p520
      %p522 = scmp.ne.s32.totalorder %s514, %s517
      %p523 = scmp.eq.s32.totalorder %s50, 0
      %p524 = por %p522, %p523
      %p525 = scmp.ne.s32.totalorder %s514, %s517
      %p526 = scmp.eq.s32.totalorder %s55, 3
      %p527 = por %p525, %p526
      %p528 = scmp.ne.s32.totalorder %s517, %s518
      %p529 = scmp.eq.s32.totalorder %s55, 0
      %p530 = por %p528, %p529
      %p531 = scmp.ne.s32.totalorder %s517, %s518
      %p532 = scmp.eq.s32.totalorder %s56, 3
      %p533 = por %p531, %p532
      %p535 = scmp.ne.s32.totalorder %s518, %s534
      %p536 = scmp.eq.s32.totalorder %s56, 0
      %p537 = por %p535, %p536
      %p538 = scmp.le.s32.totalorder 1, %s50
      %p539 = scmp.lt.s32.totalorder %s50, 5
      %p540 = pnand %p538, %p539
      %p541 = pneg %p540
      // Predicated region
      $region9: #{tpu_custom_call.1} parent=5 // pred_check
        _
      $region10: #{tpu_custom_call.1} parent=5 // pred_check_branch
        %543 = sbr.rel (%p540) target = $region12
      $region11: #{tpu_custom_call.1} parent=5 // pred_region
        %s544 = ssub.s32 %s50, 1
      $region12: #{tpu_custom_call.1} parent=5 // pred_fallthru
        _
      %p545 = scmp.lt.s32.totalorder %s50, 4
      // Predicated region
      $region13: #{tpu_custom_call.1} parent=5 // pred_check
        %p546 = pneg %p545
      $region14: #{tpu_custom_call.1} parent=5 // pred_check_branch
        %548 = sbr.rel (%p546) target = $region16
      $region15: #{tpu_custom_call.1} parent=5 // pred_region
        // Predicated region
        $region17: #{tpu_custom_call.1} parent=15 // pred_check
          %p549 = pneg %p82
        $region18: #{tpu_custom_call.1} parent=15 // pred_check_branch
          %551 = sbr.rel (%p549) target = $region20
        $region19: #{tpu_custom_call.1} parent=15 // pred_region
          %s552 = sand.u32 %s72, 1
          %s553 = scalar_lea.sflag [#allocation4], %s552
          %s554 = sand.u32 %s72, 1
          %s555 = smul.addr %s554, 128
          %s556 = scalar_lea.vmem [#allocation3], %s555
          %558 = vsyncadd %s553, 0
          %s559 = smul.addr %s57, 32
          %s560 = smul.addr %s559, 4
          %s561 = scalar_lea.hbm %s0, %s560
          %s562 = sshll.u32 %s561, 4
          %s563 = int_to_ptr.hbm [resolvable:$true] %s562
          %s564 = sshll.u32 %s556, 4
          %s565 = int_to_ptr.vmem [resolvable:$true] %s564
          %570 = dma.hbm_to_vmem [thread:$0]  %s563, 2048, %s565, %s553, 128, 128, 8
        $region20: #{tpu_custom_call.1} parent=15 // pred_fallthru
          _
        // Predicated region
        $region21: #{tpu_custom_call.1} parent=15 // pred_check
          %p571 = pneg %p108
        $region22: #{tpu_custom_call.1} parent=15 // pred_check_branch
          %573 = sbr.rel (%p571) target = $region24
        $region23: #{tpu_custom_call.1} parent=15 // pred_region
          %s574 = sand.u32 %s50, 1
          %s575 = scalar_lea.sflag [#allocation7], %s574
          %s576 = sand.u32 %s98, 1
          %s577 = smul.addr %s576, 256
          %s578 = scalar_lea.vmem [#allocation6], %s577
          %580 = vsyncadd %s575, 0
          %s581 = smul.addr %s58, 64
          %s582 = smul.addr %s581, 4
          %s583 = scalar_lea.hbm %s1, %s582
          %s584 = sshll.u32 %s583, 4
          %s585 = int_to_ptr.hbm [resolvable:$true] %s584
          %s586 = sshll.u32 %s578, 4
          %s587 = int_to_ptr.vmem [resolvable:$true] %s586
          %592 = dma.hbm_to_vmem [thread:$0]  %s585, 4096, %s587, %s575, 128, 128, 8
        $region24: #{tpu_custom_call.1} parent=15 // pred_fallthru
          _
        // Predicated region
        $region25: #{tpu_custom_call.1} parent=15 // pred_check
          %p593 = pneg %p134
        $region26: #{tpu_custom_call.1} parent=15 // pred_check_branch
          %595 = sbr.rel (%p593) target = $region28
        $region27: #{tpu_custom_call.1} parent=15 // pred_region
          %s596 = sand.u32 %s50, 1
          %s597 = scalar_lea.sflag [#allocation7], %s596
          %s598 = sand.u32 %s124, 1
          %s599 = smul.addr %s598, 2
          %s600 = scalar_lea.vmem [#allocation8], %s599
          %602 = vsyncadd %s597, 0
          %s603 = smul.addr %s58, 2
          %s604 = scalar_lea.hbm %s2, %s603
          %s606 = sshll.u32 %s604, 4
          %s607 = int_to_ptr.hbm [resolvable:$true] %s606
          %s608 = sshll.u32 %s600, 4
          %s609 = int_to_ptr.vmem [resolvable:$true] %s608
          %611 = dma.hbm_to_vmem [thread:$0]  %s607, 32, %s609, %s597
        $region28: #{tpu_custom_call.1} parent=15 // pred_fallthru
          _
        // Predicated region
        $region29: #{tpu_custom_call.1} parent=15 // pred_check
          %p612 = pneg %p160
        $region30: #{tpu_custom_call.1} parent=15 // pred_check_branch
          %614 = sbr.rel (%p612) target = $region32
        $region31: #{tpu_custom_call.1} parent=15 // pred_region
          %s615 = sand.u32 %s50, 1
          %s616 = scalar_lea.sflag [#allocation10], %s615
          %s617 = sand.u32 %s150, 1
          %s618 = smul.addr %s617, 256
          %s619 = scalar_lea.vmem [#allocation9], %s618
          %621 = vsyncadd %s616, 0
          %s622 = smul.addr %s58, 64
          %s623 = smul.addr %s622, 4
          %s624 = scalar_lea.hbm %s3, %s623
          %s625 = sshll.u32 %s624, 4
          %s626 = int_to_ptr.hbm [resolvable:$true] %s625
          %s627 = sshll.u32 %s619, 4
          %s628 = int_to_ptr.vmem [resolvable:$true] %s627
          %633 = dma.hbm_to_vmem [thread:$0]  %s626, 4096, %s628, %s616, 128, 128, 8
        $region32: #{tpu_custom_call.1} parent=15 // pred_fallthru
          _
        // Predicated region
        $region33: #{tpu_custom_call.1} parent=15 // pred_check
          %p634 = pneg %p186
        $region34: #{tpu_custom_call.1} parent=15 // pred_check_branch
          %636 = sbr.rel (%p634) target = $region36
        $region35: #{tpu_custom_call.1} parent=15 // pred_region
          %s637 = sand.u32 %s50, 1
          %s638 = scalar_lea.sflag [#allocation10], %s637
          %s639 = sand.u32 %s176, 1
          %s640 = smul.addr %s639, 2
          %s641 = scalar_lea.vmem [#allocation11], %s640
          %643 = vsyncadd %s638, 0
          %s644 = smul.addr %s58, 2
          %s645 = scalar_lea.hbm %s4, %s644
          %s647 = sshll.u32 %s645, 4
          %s648 = int_to_ptr.hbm [resolvable:$true] %s647
          %s649 = sshll.u32 %s641, 4
          %s650 = int_to_ptr.vmem [resolvable:$true] %s649
          %652 = dma.hbm_to_vmem [thread:$0]  %s648, 32, %s650, %s638
        $region36: #{tpu_custom_call.1} parent=15 // pred_fallthru
          _
        // Predicated region
        $region37: #{tpu_custom_call.1} parent=15 // pred_check
          %p653 = pneg %p212
        $region38: #{tpu_custom_call.1} parent=15 // pred_check_branch
          %655 = sbr.rel (%p653) target = $region40
        $region39: #{tpu_custom_call.1} parent=15 // pred_region
          %s656 = sand.u32 %s50, 1
          %s657 = scalar_lea.sflag [#allocation13], %s656
          %s658 = sand.u32 %s202, 1
          %s659 = smul.addr %s658, 256
          %s660 = scalar_lea.vmem [#allocation12], %s659
          %662 = vsyncadd %s657, 0
          %s663 = smul.addr %s58, 64
          %s664 = smul.addr %s663, 4
          %s665 = scalar_lea.hbm %s5, %s664
          %s666 = sshll.u32 %s665, 4
          %s667 = int_to_ptr.hbm [resolvable:$true] %s666
          %s668 = sshll.u32 %s660, 4
          %s669 = int_to_ptr.vmem [resolvable:$true] %s668
          %674 = dma.hbm_to_vmem [thread:$0]  %s667, 4096, %s669, %s657, 128, 128, 8
        $region40: #{tpu_custom_call.1} parent=15 // pred_fallthru
          _
        // Predicated region
        $region41: #{tpu_custom_call.1} parent=15 // pred_check
          %p675 = pneg %p238
        $region42: #{tpu_custom_call.1} parent=15 // pred_check_branch
          %677 = sbr.rel (%p675) target = $region44
        $region43: #{tpu_custom_call.1} parent=15 // pred_region
          %s678 = sand.u32 %s50, 1
          %s679 = scalar_lea.sflag [#allocation13], %s678
          %s680 = sand.u32 %s228, 1
          %s681 = smul.addr %s680, 2
          %s682 = scalar_lea.vmem [#allocation14], %s681
          %684 = vsyncadd %s679, 0
          %s685 = smul.addr %s58, 2
          %s686 = scalar_lea.hbm %s6, %s685
          %s688 = sshll.u32 %s686, 4
          %s689 = int_to_ptr.hbm [resolvable:$true] %s688
          %s690 = sshll.u32 %s682, 4
          %s691 = int_to_ptr.vmem [resolvable:$true] %s690
          %693 = dma.hbm_to_vmem [thread:$0]  %s689, 32, %s691, %s679
        $region44: #{tpu_custom_call.1} parent=15 // pred_fallthru
          _
        // Predicated region
        $region45: #{tpu_custom_call.1} parent=15 // pred_check
          %p694 = pneg %p264
        $region46: #{tpu_custom_call.1} parent=15 // pred_check_branch
          %696 = sbr.rel (%p694) target = $region48
        $region47: #{tpu_custom_call.1} parent=15 // pred_region
          %s697 = sand.u32 %s50, 1
          %s698 = scalar_lea.sflag [#allocation16], %s697
          %s699 = sand.u32 %s254, 1
          %s700 = smul.addr %s699, 256
          %s701 = scalar_lea.vmem [#allocation15], %s700
          %703 = vsyncadd %s698, 0
          %s704 = smul.addr %s58, 64
          %s705 = smul.addr %s704, 4
          %s706 = scalar_lea.hbm %s7, %s705
          %s707 = sshll.u32 %s706, 4
          %s708 = int_to_ptr.hbm [resolvable:$true] %s707
          %s709 = sshll.u32 %s701, 4
          %s710 = int_to_ptr.vmem [resolvable:$true] %s709
          %715 = dma.hbm_to_vmem [thread:$0]  %s708, 4096, %s710, %s698, 128, 128, 8
        $region48: #{tpu_custom_call.1} parent=15 // pred_fallthru
          _
        // Predicated region
        $region49: #{tpu_custom_call.1} parent=15 // pred_check
          %p716 = pneg %p290
        $region50: #{tpu_custom_call.1} parent=15 // pred_check_branch
          %718 = sbr.rel (%p716) target = $region52
        $region51: #{tpu_custom_call.1} parent=15 // pred_region
          %s719 = sand.u32 %s50, 1
          %s720 = scalar_lea.sflag [#allocation16], %s719
          %s721 = sand.u32 %s280, 1
          %s722 = smul.addr %s721, 2
          %s723 = scalar_lea.vmem [#allocation17], %s722
          %725 = vsyncadd %s720, 0
          %s726 = smul.addr %s58, 2
          %s727 = scalar_lea.hbm %s8, %s726
          %s729 = sshll.u32 %s727, 4
          %s730 = int_to_ptr.hbm [resolvable:$true] %s729
          %s731 = sshll.u32 %s723, 4
          %s732 = int_to_ptr.vmem [resolvable:$true] %s731
          %734 = dma.hbm_to_vmem [thread:$0]  %s730, 32, %s732, %s720
        $region52: #{tpu_custom_call.1} parent=15 // pred_fallthru
          _
        // Predicated region
        $region53: #{tpu_custom_call.1} parent=15 // pred_check
          %p735 = pneg %p316
        $region54: #{tpu_custom_call.1} parent=15 // pred_check_branch
          %737 = sbr.rel (%p735) target = $region56
        $region55: #{tpu_custom_call.1} parent=15 // pred_region
          %s738 = sand.u32 %s50, 1
          %s739 = scalar_lea.sflag [#allocation19], %s738
          %s740 = sand.u32 %s306, 1
          %s741 = smul.addr %s740, 2
          %s742 = scalar_lea.vmem [#allocation18], %s741
          %744 = vsyncadd %s739, 0
          %s745 = smul.addr %s58, 2
          %s746 = scalar_lea.hbm %s9, %s745
          %s748 = sshll.u32 %s746, 4
          %s749 = int_to_ptr.hbm [resolvable:$true] %s748
          %s750 = sshll.u32 %s742, 4
          %s751 = int_to_ptr.vmem [resolvable:$true] %s750
          %753 = dma.hbm_to_vmem [thread:$0]  %s749, 32, %s751, %s739
        $region56: #{tpu_custom_call.1} parent=15 // pred_fallthru
          _
        // Predicated region
        $region57: #{tpu_custom_call.1} parent=15 // pred_check
          %p754 = pneg %p342
        $region58: #{tpu_custom_call.1} parent=15 // pred_check_branch
          %756 = sbr.rel (%p754) target = $region60
        $region59: #{tpu_custom_call.1} parent=15 // pred_region
          %s757 = sand.u32 %s50, 1
          %s758 = scalar_lea.sflag [#allocation19], %s757
          %s759 = sand.u32 %s332, 1
          %s760 = smul.addr %s759, 2
          %s761 = scalar_lea.vmem [#allocation20], %s760
          %763 = vsyncadd %s758, 0
          %s764 = smul.addr %s58, 2
          %s765 = scalar_lea.hbm %s10, %s764
          %s767 = sshll.u32 %s765, 4
          %s768 = int_to_ptr.hbm [resolvable:$true] %s767
          %s769 = sshll.u32 %s761, 4
          %s770 = int_to_ptr.vmem [resolvable:$true] %s769
          %772 = dma.hbm_to_vmem [thread:$0]  %s768, 32, %s770, %s758
        $region60: #{tpu_custom_call.1} parent=15 // pred_fallthru
          _
        // Predicated region
        $region61: #{tpu_custom_call.1} parent=15 // pred_check
          %p773 = pneg %p368
        $region62: #{tpu_custom_call.1} parent=15 // pred_check_branch
          %775 = sbr.rel (%p773) target = $region64
        $region63: #{tpu_custom_call.1} parent=15 // pred_region
          %s776 = sand.u32 %s50, 1
          %s777 = scalar_lea.sflag [#allocation22], %s776
          %s778 = sand.u32 %s358, 1
          %s779 = smul.addr %s778, 512
          %s780 = scalar_lea.vmem [#allocation21], %s779
          %782 = vsyncadd %s777, 0
          %s783 = smul.addr %s58, 128
          %s784 = smul.addr %s783, 4
          %s785 = scalar_lea.hbm %s11, %s784
          %s786 = sshll.u32 %s785, 4
          %s787 = int_to_ptr.hbm [resolvable:$true] %s786
          %s788 = sshll.u32 %s780, 4
          %s789 = int_to_ptr.vmem [resolvable:$true] %s788
          %794 = dma.hbm_to_vmem [thread:$0]  %s787, 8192, %s789, %s777, 256, 256, 16
        $region64: #{tpu_custom_call.1} parent=15 // pred_fallthru
          _
        // Predicated region
        $region65: #{tpu_custom_call.1} parent=15 // pred_check
          %p795 = pneg %p394
        $region66: #{tpu_custom_call.1} parent=15 // pred_check_branch
          %797 = sbr.rel (%p795) target = $region68
        $region67: #{tpu_custom_call.1} parent=15 // pred_region
          %p798 = scmp.lt.s32.totalorder %s58, 1
          %s799 = scalar_select %p798, %s58, 1
          %s800 = smul.addr %s799, 4
          %s801 = scalar_lea.vmem %s12, %s800
        $region68: #{tpu_custom_call.1} parent=15 // pred_fallthru
          _
        // Predicated region
        $region69: #{tpu_custom_call.1} parent=15 // pred_check
          %p802 = pneg %p420
        $region70: #{tpu_custom_call.1} parent=15 // pred_check_branch
          %804 = sbr.rel (%p802) target = $region72
        $region71: #{tpu_custom_call.1} parent=15 // pred_region
          %s805 = sand.u32 %s50, 1
          %s806 = scalar_lea.sflag [#allocation22], %s805
          %s807 = sand.u32 %s410, 1
          %s808 = smul.addr %s807, 512
          %s809 = scalar_lea.vmem [#allocation23], %s808
          %811 = vsyncadd %s806, 0
          %s812 = smul.addr %s58, 128
          %s813 = smul.addr %s812, 4
          %s814 = scalar_lea.hbm %s13, %s813
          %s815 = sshll.u32 %s814, 4
          %s816 = int_to_ptr.hbm [resolvable:$true] %s815
          %s817 = sshll.u32 %s809, 4
          %s818 = int_to_ptr.vmem [resolvable:$true] %s817
          %823 = dma.hbm_to_vmem [thread:$0]  %s816, 8192, %s818, %s806, 128, 128, 8
        $region72: #{tpu_custom_call.1} parent=15 // pred_fallthru
          _
        // Predicated region
        $region73: #{tpu_custom_call.1} parent=15 // pred_check
          %p824 = pneg %p446
        $region74: #{tpu_custom_call.1} parent=15 // pred_check_branch
          %826 = sbr.rel (%p824) target = $region76
        $region75: #{tpu_custom_call.1} parent=15 // pred_region
          %p827 = scmp.lt.s32.totalorder %s58, 1
          %s828 = scalar_select %p827, %s58, 1
          %s829 = smul.addr %s828, 2
          %s830 = scalar_lea.vmem %s14, %s829
        $region76: #{tpu_custom_call.1} parent=15 // pred_fallthru
          _
        // Predicated region
        $region77: #{tpu_custom_call.1} parent=15 // pred_check
          %p831 = pneg %p472
        $region78: #{tpu_custom_call.1} parent=15 // pred_check_branch
          %833 = sbr.rel (%p831) target = $region80
        $region79: #{tpu_custom_call.1} parent=15 // pred_region
          %s834 = sand.u32 %s50, 1
          %s835 = scalar_lea.sflag [#allocation25], %s834
          %s836 = sand.u32 %s462, 1
          %s837 = smul.addr %s836, 2
          %s838 = scalar_lea.vmem [#allocation24], %s837
          %840 = vsyncadd %s835, 0
          %s841 = smul.addr %s58, 2
          %s842 = scalar_lea.hbm %s15, %s841
          %s844 = sshll.u32 %s842, 4
          %s845 = int_to_ptr.hbm [resolvable:$true] %s844
          %s846 = sshll.u32 %s838, 4
          %s847 = int_to_ptr.vmem [resolvable:$true] %s846
          %849 = dma.hbm_to_vmem [thread:$0]  %s845, 32, %s847, %s835
        $region80: #{tpu_custom_call.1} parent=15 // pred_fallthru
          _
        // Predicated region
        $region81: #{tpu_custom_call.1} parent=15 // pred_check
          %p850 = pneg %p498
        $region82: #{tpu_custom_call.1} parent=15 // pred_check_branch
          %852 = sbr.rel (%p850) target = $region84
        $region83: #{tpu_custom_call.1} parent=15 // pred_region
          %s853 = sand.u32 %s50, 1
          %s854 = scalar_lea.sflag [#allocation25], %s853
          %s855 = sand.u32 %s488, 1
          %s856 = smul.addr %s855, 2
          %s857 = scalar_lea.vmem [#allocation26], %s856
          %859 = vsyncadd %s854, 0
          %s860 = smul.addr %s58, 2
          %s861 = scalar_lea.hbm %s16, %s860
          %s863 = sshll.u32 %s861, 4
          %s864 = int_to_ptr.hbm [resolvable:$true] %s863
          %s865 = sshll.u32 %s857, 4
          %s866 = int_to_ptr.vmem [resolvable:$true] %s865
          %868 = dma.hbm_to_vmem [thread:$0]  %s864, 32, %s866, %s854
        $region84: #{tpu_custom_call.1} parent=15 // pred_fallthru
          _
      $region16: #{tpu_custom_call.1} parent=5 // pred_fallthru
        _
      %p869 = scmp.le.s32.totalorder 1, %s50
      %p870 = scmp.lt.s32.totalorder %s50, 5
      %p871 = pnand %p869, %p870
      %p872 = pneg %p871
      // Predicated region
      $region85: #{tpu_custom_call.1} parent=5 // pred_check
        _
      $region86: #{tpu_custom_call.1} parent=5 // pred_check_branch
        %874 = sbr.rel (%p871) target = $region88
      $region87: #{tpu_custom_call.1} parent=5 // pred_region
        %s875 = ssub.s32 %s50, 1
        %s876 = sand.u32 %s75, 1
        %s877 = scalar_lea.sflag [#allocation4], %s876
        %s878 = sand.u32 %s75, 1
        %s879 = smul.addr %s878, 128
        %s880 = scalar_lea.vmem [#allocation3], %s879
        // Predicated region
        $region89: #{tpu_custom_call.1} parent=87 // pred_check
          %p881 = pneg %p88
        $region90: #{tpu_custom_call.1} parent=87 // pred_check_branch
          %883 = sbr.rel (%p881) target = $region92
        $region91: #{tpu_custom_call.1} parent=87 // pred_region
          %885 = dma.done %s877, 2048
        $region92: #{tpu_custom_call.1} parent=87 // pred_fallthru
          _
        %s886 = sand.u32 %s55, 1
        %s887 = scalar_lea.sflag [#allocation7], %s886
        %s888 = sand.u32 %s101, 1
        %s889 = smul.addr %s888, 256
        %s890 = scalar_lea.vmem [#allocation6], %s889
        // Predicated region
        $region93: #{tpu_custom_call.1} parent=87 // pred_check
          %p891 = pneg %p114
        $region94: #{tpu_custom_call.1} parent=87 // pred_check_branch
          %893 = sbr.rel (%p891) target = $region96
        $region95: #{tpu_custom_call.1} parent=87 // pred_region
          %895 = dma.done %s887, 4096
        $region96: #{tpu_custom_call.1} parent=87 // pred_fallthru
          _
        %s896 = sand.u32 %s55, 1
        %s897 = scalar_lea.sflag [#allocation7], %s896
        %s898 = sand.u32 %s127, 1
        %s899 = smul.addr %s898, 2
        %s900 = scalar_lea.vmem [#allocation8], %s899
        // Predicated region
        $region97: #{tpu_custom_call.1} parent=87 // pred_check
          %p901 = pneg %p140
        $region98: #{tpu_custom_call.1} parent=87 // pred_check_branch
          %903 = sbr.rel (%p901) target = $region100
        $region99: #{tpu_custom_call.1} parent=87 // pred_region
          %905 = dma.done %s897, 32
        $region100: #{tpu_custom_call.1} parent=87 // pred_fallthru
          _
        %s906 = sand.u32 %s55, 1
        %s907 = scalar_lea.sflag [#allocation10], %s906
        %s908 = sand.u32 %s153, 1
        %s909 = smul.addr %s908, 256
        %s910 = scalar_lea.vmem [#allocation9], %s909
        // Predicated region
        $region101: #{tpu_custom_call.1} parent=87 // pred_check
          %p911 = pneg %p166
        $region102: #{tpu_custom_call.1} parent=87 // pred_check_branch
          %913 = sbr.rel (%p911) target = $region104
        $region103: #{tpu_custom_call.1} parent=87 // pred_region
          %915 = dma.done %s907, 4096
        $region104: #{tpu_custom_call.1} parent=87 // pred_fallthru
          _
        %s916 = sand.u32 %s55, 1
        %s917 = scalar_lea.sflag [#allocation10], %s916
        %s918 = sand.u32 %s179, 1
        %s919 = smul.addr %s918, 2
        %s920 = scalar_lea.vmem [#allocation11], %s919
        // Predicated region
        $region105: #{tpu_custom_call.1} parent=87 // pred_check
          %p921 = pneg %p192
        $region106: #{tpu_custom_call.1} parent=87 // pred_check_branch
          %923 = sbr.rel (%p921) target = $region108
        $region107: #{tpu_custom_call.1} parent=87 // pred_region
          %925 = dma.done %s917, 32
        $region108: #{tpu_custom_call.1} parent=87 // pred_fallthru
          _
        %s926 = sand.u32 %s55, 1
        %s927 = scalar_lea.sflag [#allocation13], %s926
        %s928 = sand.u32 %s205, 1
        %s929 = smul.addr %s928, 256
        %s930 = scalar_lea.vmem [#allocation12], %s929
        // Predicated region
        $region109: #{tpu_custom_call.1} parent=87 // pred_check
          %p931 = pneg %p218
        $region110: #{tpu_custom_call.1} parent=87 // pred_check_branch
          %933 = sbr.rel (%p931) target = $region112
        $region111: #{tpu_custom_call.1} parent=87 // pred_region
          %935 = dma.done %s927, 4096
        $region112: #{tpu_custom_call.1} parent=87 // pred_fallthru
          _
        %s936 = sand.u32 %s55, 1
        %s937 = scalar_lea.sflag [#allocation13], %s936
        %s938 = sand.u32 %s231, 1
        %s939 = smul.addr %s938, 2
        %s940 = scalar_lea.vmem [#allocation14], %s939
        // Predicated region
        $region113: #{tpu_custom_call.1} parent=87 // pred_check
          %p941 = pneg %p244
        $region114: #{tpu_custom_call.1} parent=87 // pred_check_branch
          %943 = sbr.rel (%p941) target = $region116
        $region115: #{tpu_custom_call.1} parent=87 // pred_region
          %945 = dma.done %s937, 32
        $region116: #{tpu_custom_call.1} parent=87 // pred_fallthru
          _
        %s946 = sand.u32 %s55, 1
        %s947 = scalar_lea.sflag [#allocation16], %s946
        %s948 = sand.u32 %s257, 1
        %s949 = smul.addr %s948, 256
        %s950 = scalar_lea.vmem [#allocation15], %s949
        // Predicated region
        $region117: #{tpu_custom_call.1} parent=87 // pred_check
          %p951 = pneg %p270
        $region118: #{tpu_custom_call.1} parent=87 // pred_check_branch
          %953 = sbr.rel (%p951) target = $region120
        $region119: #{tpu_custom_call.1} parent=87 // pred_region
          %955 = dma.done %s947, 4096
        $region120: #{tpu_custom_call.1} parent=87 // pred_fallthru
          _
        %s956 = sand.u32 %s55, 1
        %s957 = scalar_lea.sflag [#allocation16], %s956
        %s958 = sand.u32 %s283, 1
        %s959 = smul.addr %s958, 2
        %s960 = scalar_lea.vmem [#allocation17], %s959
        // Predicated region
        $region121: #{tpu_custom_call.1} parent=87 // pred_check
          %p961 = pneg %p296
        $region122: #{tpu_custom_call.1} parent=87 // pred_check_branch
          %963 = sbr.rel (%p961) target = $region124
        $region123: #{tpu_custom_call.1} parent=87 // pred_region
          %965 = dma.done %s957, 32
        $region124: #{tpu_custom_call.1} parent=87 // pred_fallthru
          _
        %s966 = sand.u32 %s55, 1
        %s967 = scalar_lea.sflag [#allocation19], %s966
        %s968 = sand.u32 %s309, 1
        %s969 = smul.addr %s968, 2
        %s970 = scalar_lea.vmem [#allocation18], %s969
        // Predicated region
        $region125: #{tpu_custom_call.1} parent=87 // pred_check
          %p971 = pneg %p322
        $region126: #{tpu_custom_call.1} parent=87 // pred_check_branch
          %973 = sbr.rel (%p971) target = $region128
        $region127: #{tpu_custom_call.1} parent=87 // pred_region
          %975 = dma.done %s967, 32
        $region128: #{tpu_custom_call.1} parent=87 // pred_fallthru
          _
        %s976 = sand.u32 %s55, 1
        %s977 = scalar_lea.sflag [#allocation19], %s976
        %s978 = sand.u32 %s335, 1
        %s979 = smul.addr %s978, 2
        %s980 = scalar_lea.vmem [#allocation20], %s979
        // Predicated region
        $region129: #{tpu_custom_call.1} parent=87 // pred_check
          %p981 = pneg %p348
        $region130: #{tpu_custom_call.1} parent=87 // pred_check_branch
          %983 = sbr.rel (%p981) target = $region132
        $region131: #{tpu_custom_call.1} parent=87 // pred_region
          %985 = dma.done %s977, 32
        $region132: #{tpu_custom_call.1} parent=87 // pred_fallthru
          _
        %s986 = sand.u32 %s55, 1
        %s987 = scalar_lea.sflag [#allocation22], %s986
        %s988 = sand.u32 %s361, 1
        %s989 = smul.addr %s988, 512
        %s990 = scalar_lea.vmem [#allocation21], %s989
        // Predicated region
        $region133: #{tpu_custom_call.1} parent=87 // pred_check
          %p991 = pneg %p374
        $region134: #{tpu_custom_call.1} parent=87 // pred_check_branch
          %993 = sbr.rel (%p991) target = $region136
        $region135: #{tpu_custom_call.1} parent=87 // pred_region
          %995 = dma.done %s987, 8192
        $region136: #{tpu_custom_call.1} parent=87 // pred_fallthru
          _
        %s996 = sand.u32 %s55, 1
        %s997 = scalar_lea.sflag [#allocation22], %s996
        %s998 = sand.u32 %s413, 1
        %s999 = smul.addr %s998, 512
        %s1000 = scalar_lea.vmem [#allocation23], %s999
        // Predicated region
        $region137: #{tpu_custom_call.1} parent=87 // pred_check
          %p1001 = pneg %p426
        $region138: #{tpu_custom_call.1} parent=87 // pred_check_branch
          %1003 = sbr.rel (%p1001) target = $region140
        $region139: #{tpu_custom_call.1} parent=87 // pred_region
          %1005 = dma.done %s997, 8192
        $region140: #{tpu_custom_call.1} parent=87 // pred_fallthru
          _
        %s1006 = sand.u32 %s55, 1
        %s1007 = scalar_lea.sflag [#allocation25], %s1006
        %s1008 = sand.u32 %s465, 1
        %s1009 = smul.addr %s1008, 2
        %s1010 = scalar_lea.vmem [#allocation24], %s1009
        // Predicated region
        $region141: #{tpu_custom_call.1} parent=87 // pred_check
          %p1011 = pneg %p478
        $region142: #{tpu_custom_call.1} parent=87 // pred_check_branch
          %1013 = sbr.rel (%p1011) target = $region144
        $region143: #{tpu_custom_call.1} parent=87 // pred_region
          %1015 = dma.done %s1007, 32
        $region144: #{tpu_custom_call.1} parent=87 // pred_fallthru
          _
        %s1016 = sand.u32 %s55, 1
        %s1017 = scalar_lea.sflag [#allocation25], %s1016
        %s1018 = sand.u32 %s491, 1
        %s1019 = smul.addr %s1018, 2
        %s1020 = scalar_lea.vmem [#allocation26], %s1019
        // Predicated region
        $region145: #{tpu_custom_call.1} parent=87 // pred_check
          %p1021 = pneg %p504
        $region146: #{tpu_custom_call.1} parent=87 // pred_check_branch
          %1023 = sbr.rel (%p1021) target = $region148
        $region147: #{tpu_custom_call.1} parent=87 // pred_region
          %1025 = dma.done %s1017, 32
        $region148: #{tpu_custom_call.1} parent=87 // pred_fallthru
          _
        %s1026 = sand.u32 %s75, 1
        %s1027 = scalar_lea.sflag [#allocation4], %s1026
        %s1028 = sand.u32 %s75, 1
        %s1029 = smul.addr %s1028, 128
        %s1030 = scalar_lea.vmem [#allocation3], %s1029
        %p1031 = pneg %p88
        %p1032 = pneg %p85
        %s1033 = sand.u32 %s55, 1
        %s1034 = scalar_lea.sflag [#allocation7], %s1033
        %s1035 = sand.u32 %s101, 1
        %s1036 = smul.addr %s1035, 256
        %s1037 = scalar_lea.vmem [#allocation6], %s1036
        %p1038 = pneg %p114
        %p1039 = pneg %p111
        %s1040 = sand.u32 %s55, 1
        %s1041 = scalar_lea.sflag [#allocation7], %s1040
        %s1042 = sand.u32 %s127, 1
        %s1043 = smul.addr %s1042, 2
        %s1044 = scalar_lea.vmem [#allocation8], %s1043
        %p1045 = pneg %p140
        %p1046 = pneg %p137
        %s1047 = sand.u32 %s55, 1
        %s1048 = scalar_lea.sflag [#allocation10], %s1047
        %s1049 = sand.u32 %s153, 1
        %s1050 = smul.addr %s1049, 256
        %s1051 = scalar_lea.vmem [#allocation9], %s1050
        %p1052 = pneg %p166
        %p1053 = pneg %p163
        %s1054 = sand.u32 %s55, 1
        %s1055 = scalar_lea.sflag [#allocation10], %s1054
        %s1056 = sand.u32 %s179, 1
        %s1057 = smul.addr %s1056, 2
        %s1058 = scalar_lea.vmem [#allocation11], %s1057
        %p1059 = pneg %p192
        %p1060 = pneg %p189
        %s1061 = sand.u32 %s55, 1
        %s1062 = scalar_lea.sflag [#allocation13], %s1061
        %s1063 = sand.u32 %s205, 1
        %s1064 = smul.addr %s1063, 256
        %s1065 = scalar_lea.vmem [#allocation12], %s1064
        %p1066 = pneg %p218
        %p1067 = pneg %p215
        %s1068 = sand.u32 %s55, 1
        %s1069 = scalar_lea.sflag [#allocation13], %s1068
        %s1070 = sand.u32 %s231, 1
        %s1071 = smul.addr %s1070, 2
        %s1072 = scalar_lea.vmem [#allocation14], %s1071
        %p1073 = pneg %p244
        %p1074 = pneg %p241
        %s1075 = sand.u32 %s55, 1
        %s1076 = scalar_lea.sflag [#allocation16], %s1075
        %s1077 = sand.u32 %s257, 1
        %s1078 = smul.addr %s1077, 256
        %s1079 = scalar_lea.vmem [#allocation15], %s1078
        %p1080 = pneg %p270
        %p1081 = pneg %p267
        %s1082 = sand.u32 %s55, 1
        %s1083 = scalar_lea.sflag [#allocation16], %s1082
        %s1084 = sand.u32 %s283, 1
        %s1085 = smul.addr %s1084, 2
        %s1086 = scalar_lea.vmem [#allocation17], %s1085
        %p1087 = pneg %p296
        %p1088 = pneg %p293
        %s1089 = sand.u32 %s55, 1
        %s1090 = scalar_lea.sflag [#allocation19], %s1089
        %s1091 = sand.u32 %s309, 1
        %s1092 = smul.addr %s1091, 2
        %s1093 = scalar_lea.vmem [#allocation18], %s1092
        %p1094 = pneg %p322
        %p1095 = pneg %p319
        %s1096 = sand.u32 %s55, 1
        %s1097 = scalar_lea.sflag [#allocation19], %s1096
        %s1098 = sand.u32 %s335, 1
        %s1099 = smul.addr %s1098, 2
        %s1100 = scalar_lea.vmem [#allocation20], %s1099
        %p1101 = pneg %p348
        %p1102 = pneg %p345
        %s1103 = sand.u32 %s55, 1
        %s1104 = scalar_lea.sflag [#allocation22], %s1103
        %s1105 = sand.u32 %s361, 1
        %s1106 = smul.addr %s1105, 512
        %s1107 = scalar_lea.vmem [#allocation21], %s1106
        %p1108 = pneg %p374
        %p1109 = pneg %p371
        %p1110 = scmp.lt.s32.totalorder %s60, 1
        %s1111 = scalar_select %p1110, %s60, 1
        %s1112 = smul.addr %s1111, 4
        %s1113 = scalar_lea.vmem %s12, %s1112
        %p1114 = pneg %p400
        %p1115 = pneg %p397
        %s1116 = sand.u32 %s55, 1
        %s1117 = scalar_lea.sflag [#allocation22], %s1116
        %s1118 = sand.u32 %s413, 1
        %s1119 = smul.addr %s1118, 512
        %s1120 = scalar_lea.vmem [#allocation23], %s1119
        %p1121 = pneg %p426
        %p1122 = pneg %p423
        %p1123 = scmp.lt.s32.totalorder %s60, 1
        %s1124 = scalar_select %p1123, %s60, 1
        %s1125 = smul.addr %s1124, 2
        %s1126 = scalar_lea.vmem %s14, %s1125
        %p1127 = pneg %p452
        %p1128 = pneg %p449
        %s1129 = sand.u32 %s55, 1
        %s1130 = scalar_lea.sflag [#allocation25], %s1129
        %s1131 = sand.u32 %s465, 1
        %s1132 = smul.addr %s1131, 2
        %s1133 = scalar_lea.vmem [#allocation24], %s1132
        %p1134 = pneg %p478
        %p1135 = pneg %p475
        %s1136 = sand.u32 %s55, 1
        %s1137 = scalar_lea.sflag [#allocation25], %s1136
        %s1138 = sand.u32 %s491, 1
        %s1139 = smul.addr %s1138, 2
        %s1140 = scalar_lea.vmem [#allocation26], %s1139
        %p1141 = pneg %p504
        %p1142 = pneg %p501
        %p1143 = pneg %p530
        %p1144 = pneg %p527
        %s1145 = sand.u32 %s517, 1
        %s1146 = scalar_lea.sflag [#allocation5], %s1145
        %s1147 = sand.u32 %s517, 1
        %s1148 = smul.addr %s1147, 128
        %s1149 = scalar_lea.vmem [#allocation27], %s1148
        %p1150 = scmp.lt.s32.totalorder %s60, 1
        %s1151 = scalar_select %p1150, %s60, 1
        %s1152 = smul.addr %s1151, 4
        %s1153 = scalar_lea.vmem %s12, %s1152
        %p1154 = scmp.lt.s32.totalorder %s60, 1
        %s1155 = scalar_select %p1154, %s60, 1
        %s1156 = smul.addr %s1155, 2
        %s1157 = scalar_lea.vmem %s14, %s1156
        %p1158 = scmp.eq.s32.totalorder %s60, 0
        // Predicated region
        $region149: #{tpu_custom_call.1} parent=87 // pred_check
          %p1159 = pneg %p1158
        $region150: #{tpu_custom_call.1} parent=87 // pred_check_branch
          %1161 = sbr.rel (%p1159) target = $region152
        $region151: #{tpu_custom_call.1} parent=87 // pred_region
          %v1162 = vld [vmem:[%s880] sm:$0xff]
          %v1163 = vld [vmem:[%s880 + $0x8] sm:$0xff]
          %v1164 = vld [vmem:[%s880 + $0x10] sm:$0xff]
          %v1165 = vld [vmem:[%s880 + $0x18] sm:$0xff]
          %v1166 = vld [vmem:[%s880 + $0x20] sm:$0xff]
          %v1167 = vld [vmem:[%s880 + $0x28] sm:$0xff]
          %v1168 = vld [vmem:[%s880 + $0x30] sm:$0xff]
          %v1169 = vld [vmem:[%s880 + $0x38] sm:$0xff]
          %v1170 = vld [vmem:[%s880 + $0x40] sm:$0xff]
          %v1171 = vld [vmem:[%s880 + $0x48] sm:$0xff]
          %v1172 = vld [vmem:[%s880 + $0x50] sm:$0xff]
          %v1173 = vld [vmem:[%s880 + $0x58] sm:$0xff]
          %v1174 = vld [vmem:[%s880 + $0x60] sm:$0xff]
          %v1175 = vld [vmem:[%s880 + $0x68] sm:$0xff]
          %v1176 = vld [vmem:[%s880 + $0x70] sm:$0xff]
          %v1177 = vld [vmem:[%s880 + $0x78] sm:$0xff]
          %v1178 = vunpack.c.l.bf16 %v1162
          %v1179 = vunpack.c.h.bf16 %v1162
          %v1180 = vunpack.c.l.bf16 %v1163
          %v1181 = vunpack.c.h.bf16 %v1163
          %v1182 = vunpack.c.l.bf16 %v1164
          %v1183 = vunpack.c.h.bf16 %v1164
          %v1184 = vunpack.c.l.bf16 %v1165
          %v1185 = vunpack.c.h.bf16 %v1165
          %v1186 = vunpack.c.l.bf16 %v1166
          %v1187 = vunpack.c.h.bf16 %v1166
          %v1188 = vunpack.c.l.bf16 %v1167
          %v1189 = vunpack.c.h.bf16 %v1167
          %v1190 = vunpack.c.l.bf16 %v1168
          %v1191 = vunpack.c.h.bf16 %v1168
          %v1192 = vunpack.c.l.bf16 %v1169
          %v1193 = vunpack.c.h.bf16 %v1169
          %v1194 = vunpack.c.l.bf16 %v1170
          %v1195 = vunpack.c.h.bf16 %v1170
          %v1196 = vunpack.c.l.bf16 %v1171
          %v1197 = vunpack.c.h.bf16 %v1171
          %v1198 = vunpack.c.l.bf16 %v1172
          %v1199 = vunpack.c.h.bf16 %v1172
          %v1200 = vunpack.c.l.bf16 %v1173
          %v1201 = vunpack.c.h.bf16 %v1173
          %v1202 = vunpack.c.l.bf16 %v1174
          %v1203 = vunpack.c.h.bf16 %v1174
          %v1204 = vunpack.c.l.bf16 %v1175
          %v1205 = vunpack.c.h.bf16 %v1175
          %v1206 = vunpack.c.l.bf16 %v1176
          %v1207 = vunpack.c.h.bf16 %v1176
          %v1208 = vunpack.c.l.bf16 %v1177
          %v1209 = vunpack.c.h.bf16 %v1177
          %1210 = vst [vmem:[#allocation2] sm:$0xff] %v1178
          %1211 = vst [vmem:[#allocation2 + $0x8] sm:$0xff] %v1179
          %1212 = vst [vmem:[#allocation2 + $0x10] sm:$0xff] %v1180
          %1213 = vst [vmem:[#allocation2 + $0x18] sm:$0xff] %v1181
          %1214 = vst [vmem:[#allocation2 + $0x20] sm:$0xff] %v1182
          %1215 = vst [vmem:[#allocation2 + $0x28] sm:$0xff] %v1183
          %1216 = vst [vmem:[#allocation2 + $0x30] sm:$0xff] %v1184
          %1217 = vst [vmem:[#allocation2 + $0x38] sm:$0xff] %v1185
          %1218 = vst [vmem:[#allocation2 + $0x40] sm:$0xff] %v1186
          %1219 = vst [vmem:[#allocation2 + $0x48] sm:$0xff] %v1187
          %1220 = vst [vmem:[#allocation2 + $0x50] sm:$0xff] %v1188
          %1221 = vst [vmem:[#allocation2 + $0x58] sm:$0xff] %v1189
          %1222 = vst [vmem:[#allocation2 + $0x60] sm:$0xff] %v1190
          %1223 = vst [vmem:[#allocation2 + $0x68] sm:$0xff] %v1191
          %1224 = vst [vmem:[#allocation2 + $0x70] sm:$0xff] %v1192
          %1225 = vst [vmem:[#allocation2 + $0x78] sm:$0xff] %v1193
          %1226 = vst [vmem:[#allocation2 + $0x80] sm:$0xff] %v1194
          %1227 = vst [vmem:[#allocation2 + $0x88] sm:$0xff] %v1195
          %1228 = vst [vmem:[#allocation2 + $0x90] sm:$0xff] %v1196
          %1229 = vst [vmem:[#allocation2 + $0x98] sm:$0xff] %v1197
          %1230 = vst [vmem:[#allocation2 + $0xa0] sm:$0xff] %v1198
          %1231 = vst [vmem:[#allocation2 + $0xa8] sm:$0xff] %v1199
          %1232 = vst [vmem:[#allocation2 + $0xb0] sm:$0xff] %v1200
          %1233 = vst [vmem:[#allocation2 + $0xb8] sm:$0xff] %v1201
          %1234 = vst [vmem:[#allocation2 + $0xc0] sm:$0xff] %v1202
          %1235 = vst [vmem:[#allocation2 + $0xc8] sm:$0xff] %v1203
          %1236 = vst [vmem:[#allocation2 + $0xd0] sm:$0xff] %v1204
          %1237 = vst [vmem:[#allocation2 + $0xd8] sm:$0xff] %v1205
          %1238 = vst [vmem:[#allocation2 + $0xe0] sm:$0xff] %v1206
          %1239 = vst [vmem:[#allocation2 + $0xe8] sm:$0xff] %v1207
          %1240 = vst [vmem:[#allocation2 + $0xf0] sm:$0xff] %v1208
          %1241 = vst [vmem:[#allocation2 + $0xf8] sm:$0xff] %v1209
        $region152: #{tpu_custom_call.1} parent=87 // pred_fallthru
          _
        %v1242 = vld [vmem:[#allocation2] sm:$0xff]
        %v1243 = vld [vmem:[#allocation2 + $0x8] sm:$0xff]
        %v1244 = vld [vmem:[#allocation2 + $0x10] sm:$0xff]
        %v1245 = vld [vmem:[#allocation2 + $0x18] sm:$0xff]
        %v1246 = vld [vmem:[#allocation2 + $0x20] sm:$0xff]
        %v1247 = vld [vmem:[#allocation2 + $0x28] sm:$0xff]
        %v1248 = vld [vmem:[#allocation2 + $0x30] sm:$0xff]
        %v1249 = vld [vmem:[#allocation2 + $0x38] sm:$0xff]
        %v1250 = vld [vmem:[#allocation2 + $0x40] sm:$0xff]
        %v1251 = vld [vmem:[#allocation2 + $0x48] sm:$0xff]
        %v1252 = vld [vmem:[#allocation2 + $0x50] sm:$0xff]
        %v1253 = vld [vmem:[#allocation2 + $0x58] sm:$0xff]
        %v1254 = vld [vmem:[#allocation2 + $0x60] sm:$0xff]
        %v1255 = vld [vmem:[#allocation2 + $0x68] sm:$0xff]
        %v1256 = vld [vmem:[#allocation2 + $0x70] sm:$0xff]
        %v1257 = vld [vmem:[#allocation2 + $0x78] sm:$0xff]
        %v1258 = vld [vmem:[#allocation2 + $0x80] sm:$0xff]
        %v1259 = vld [vmem:[#allocation2 + $0x88] sm:$0xff]
        %v1260 = vld [vmem:[#allocation2 + $0x90] sm:$0xff]
        %v1261 = vld [vmem:[#allocation2 + $0x98] sm:$0xff]
        %v1262 = vld [vmem:[#allocation2 + $0xa0] sm:$0xff]
        %v1263 = vld [vmem:[#allocation2 + $0xa8] sm:$0xff]
        %v1264 = vld [vmem:[#allocation2 + $0xb0] sm:$0xff]
        %v1265 = vld [vmem:[#allocation2 + $0xb8] sm:$0xff]
        %v1266 = vld [vmem:[#allocation2 + $0xc0] sm:$0xff]
        %v1267 = vld [vmem:[#allocation2 + $0xc8] sm:$0xff]
        %v1268 = vld [vmem:[#allocation2 + $0xd0] sm:$0xff]
        %v1269 = vld [vmem:[#allocation2 + $0xd8] sm:$0xff]
        %v1270 = vld [vmem:[#allocation2 + $0xe0] sm:$0xff]
        %v1271 = vld [vmem:[#allocation2 + $0xe8] sm:$0xff]
        %v1272 = vld [vmem:[#allocation2 + $0xf0] sm:$0xff]
        %v1273 = vld [vmem:[#allocation2 + $0xf8] sm:$0xff]
        %v1274 = vpack.c.bf16 %v1244, %v1242
        %v1275 = vpack.c.bf16 %v1245, %v1243
        %v1276 = vpack.c.bf16 %v1248, %v1246
        %v1277 = vpack.c.bf16 %v1249, %v1247
        %v1278 = vpack.c.bf16 %v1252, %v1250
        %v1279 = vpack.c.bf16 %v1253, %v1251
        %v1280 = vpack.c.bf16 %v1256, %v1254
        %v1281 = vpack.c.bf16 %v1257, %v1255
        %v1282 = vpack.c.bf16 %v1260, %v1258
        %v1283 = vpack.c.bf16 %v1261, %v1259
        %v1284 = vpack.c.bf16 %v1264, %v1262
        %v1285 = vpack.c.bf16 %v1265, %v1263
        %v1286 = vpack.c.bf16 %v1268, %v1266
        %v1287 = vpack.c.bf16 %v1269, %v1267
        %v1288 = vpack.c.bf16 %v1272, %v1270
        %v1289 = vpack.c.bf16 %v1273, %v1271
        %v1290 = vld [vmem:[%s890] sm:$0xff]
        %v1291 = vld [vmem:[%s890 + $0x8] sm:$0xff]
        %v1292 = vld [vmem:[%s890 + $0x10] sm:$0xff]
        %v1293 = vld [vmem:[%s890 + $0x18] sm:$0xff]
        %v1294 = vld [vmem:[%s890 + $0x20] sm:$0xff]
        %v1295 = vld [vmem:[%s890 + $0x28] sm:$0xff]
        %v1296 = vld [vmem:[%s890 + $0x30] sm:$0xff]
        %v1297 = vld [vmem:[%s890 + $0x38] sm:$0xff]
        %v1298 = vld [vmem:[%s890 + $0x40] sm:$0xff]
        %v1299 = vld [vmem:[%s890 + $0x48] sm:$0xff]
        %v1300 = vld [vmem:[%s890 + $0x50] sm:$0xff]
        %v1301 = vld [vmem:[%s890 + $0x58] sm:$0xff]
        %v1302 = vld [vmem:[%s890 + $0x60] sm:$0xff]
        %v1303 = vld [vmem:[%s890 + $0x68] sm:$0xff]
        %v1304 = vld [vmem:[%s890 + $0x70] sm:$0xff]
        %v1305 = vld [vmem:[%s890 + $0x78] sm:$0xff]
        %v1306 = vld [vmem:[%s890 + $0x80] sm:$0xff]
        %v1307 = vld [vmem:[%s890 + $0x88] sm:$0xff]
        %v1308 = vld [vmem:[%s890 + $0x90] sm:$0xff]
        %v1309 = vld [vmem:[%s890 + $0x98] sm:$0xff]
        %v1310 = vld [vmem:[%s890 + $0xa0] sm:$0xff]
        %v1311 = vld [vmem:[%s890 + $0xa8] sm:$0xff]
        %v1312 = vld [vmem:[%s890 + $0xb0] sm:$0xff]
        %v1313 = vld [vmem:[%s890 + $0xb8] sm:$0xff]
        %v1314 = vld [vmem:[%s890 + $0xc0] sm:$0xff]
        %v1315 = vld [vmem:[%s890 + $0xc8] sm:$0xff]
        %v1316 = vld [vmem:[%s890 + $0xd0] sm:$0xff]
        %v1317 = vld [vmem:[%s890 + $0xd8] sm:$0xff]
        %v1318 = vld [vmem:[%s890 + $0xe0] sm:$0xff]
        %v1319 = vld [vmem:[%s890 + $0xe8] sm:$0xff]
        %v1320 = vld [vmem:[%s890 + $0xf0] sm:$0xff]
        %v1321 = vld [vmem:[%s890 + $0xf8] sm:$0xff]
        %v1322 = vld [vmem:[%s900] sm:$0x3]
        %v1324 = vperm.slane %v1322, 0
        %v1325 = vperm.slane %v1322, 1
        %v1360 = vunpack.c.l.b16 %v1290
        %v1361 = vunpack.c.h.b16 %v1290
        %v1362 = vunpack.c.l.b16 %v1291
        %v1363 = vunpack.c.h.b16 %v1291
        %v1364 = vunpack.c.l.b16 %v1292
        %v1365 = vunpack.c.h.b16 %v1292
        %v1366 = vunpack.c.l.b16 %v1293
        %v1367 = vunpack.c.h.b16 %v1293
        %v1368 = vunpack.c.l.b16 %v1294
        %v1369 = vunpack.c.h.b16 %v1294
        %v1370 = vunpack.c.l.b16 %v1295
        %v1371 = vunpack.c.h.b16 %v1295
        %v1372 = vunpack.c.l.b16 %v1296
        %v1373 = vunpack.c.h.b16 %v1296
        %v1374 = vunpack.c.l.b16 %v1297
        %v1375 = vunpack.c.h.b16 %v1297
        %v1376 = vunpack.c.l.b16 %v1298
        %v1377 = vunpack.c.h.b16 %v1298
        %v1378 = vunpack.c.l.b16 %v1299
        %v1379 = vunpack.c.h.b16 %v1299
        %v1380 = vunpack.c.l.b16 %v1300
        %v1381 = vunpack.c.h.b16 %v1300
        %v1382 = vunpack.c.l.b16 %v1301
        %v1383 = vunpack.c.h.b16 %v1301
        %v1384 = vunpack.c.l.b16 %v1302
        %v1385 = vunpack.c.h.b16 %v1302
        %v1386 = vunpack.c.l.b16 %v1303
        %v1387 = vunpack.c.h.b16 %v1303
        %v1388 = vunpack.c.l.b16 %v1304
        %v1389 = vunpack.c.h.b16 %v1304
        %v1390 = vunpack.c.l.b16 %v1305
        %v1391 = vunpack.c.h.b16 %v1305
        %v1392 = vunpack.c.l.b16 %v1306
        %v1393 = vunpack.c.h.b16 %v1306
        %v1394 = vunpack.c.l.b16 %v1307
        %v1395 = vunpack.c.h.b16 %v1307
        %v1396 = vunpack.c.l.b16 %v1308
        %v1397 = vunpack.c.h.b16 %v1308
        %v1398 = vunpack.c.l.b16 %v1309
        %v1399 = vunpack.c.h.b16 %v1309
        %v1400 = vunpack.c.l.b16 %v1310
        %v1401 = vunpack.c.h.b16 %v1310
        %v1402 = vunpack.c.l.b16 %v1311
        %v1403 = vunpack.c.h.b16 %v1311
        %v1404 = vunpack.c.l.b16 %v1312
        %v1405 = vunpack.c.h.b16 %v1312
        %v1406 = vunpack.c.l.b16 %v1313
        %v1407 = vunpack.c.h.b16 %v1313
        %v1408 = vunpack.c.l.b16 %v1314
        %v1409 = vunpack.c.h.b16 %v1314
        %v1410 = vunpack.c.l.b16 %v1315
        %v1411 = vunpack.c.h.b16 %v1315
        %v1412 = vunpack.c.l.b16 %v1316
        %v1413 = vunpack.c.h.b16 %v1316
        %v1414 = vunpack.c.l.b16 %v1317
        %v1415 = vunpack.c.h.b16 %v1317
        %v1416 = vunpack.c.l.b16 %v1318
        %v1417 = vunpack.c.h.b16 %v1318
        %v1418 = vunpack.c.l.b16 %v1319
        %v1419 = vunpack.c.h.b16 %v1319
        %v1420 = vunpack.c.l.b16 %v1320
        %v1421 = vunpack.c.h.b16 %v1320
        %v1422 = vunpack.c.l.b16 %v1321
        %v1423 = vunpack.c.h.b16 %v1321
        %v1424 = vpack.c.b16 %v1362, %v1360
        %v1425 = vpack.c.b16 %v1363, %v1361
        %v1426 = vpack.c.b16 %v1366, %v1364
        %v1427 = vpack.c.b16 %v1367, %v1365
        %v1428 = vpack.c.b16 %v1370, %v1368
        %v1429 = vpack.c.b16 %v1371, %v1369
        %v1430 = vpack.c.b16 %v1374, %v1372
        %v1431 = vpack.c.b16 %v1375, %v1373
        %v1432 = vpack.c.b16 %v1378, %v1376
        %v1433 = vpack.c.b16 %v1379, %v1377
        %v1434 = vpack.c.b16 %v1382, %v1380
        %v1435 = vpack.c.b16 %v1383, %v1381
        %v1436 = vpack.c.b16 %v1386, %v1384
        %v1437 = vpack.c.b16 %v1387, %v1385
        %v1438 = vpack.c.b16 %v1390, %v1388
        %v1439 = vpack.c.b16 %v1391, %v1389
        %v1440 = vpack.c.b16 %v1394, %v1392
        %v1441 = vpack.c.b16 %v1395, %v1393
        %v1442 = vpack.c.b16 %v1398, %v1396
        %v1443 = vpack.c.b16 %v1399, %v1397
        %v1444 = vpack.c.b16 %v1402, %v1400
        %v1445 = vpack.c.b16 %v1403, %v1401
        %v1446 = vpack.c.b16 %v1406, %v1404
        %v1447 = vpack.c.b16 %v1407, %v1405
        %v1448 = vpack.c.b16 %v1410, %v1408
        %v1449 = vpack.c.b16 %v1411, %v1409
        %v1450 = vpack.c.b16 %v1414, %v1412
        %v1451 = vpack.c.b16 %v1415, %v1413
        %v1452 = vpack.c.b16 %v1418, %v1416
        %v1453 = vpack.c.b16 %v1419, %v1417
        %v1454 = vpack.c.b16 %v1422, %v1420
        %v1455 = vpack.c.b16 %v1423, %v1421
        %1488 = vmatpush.bf16.msra.mxu0 %v1438
        %1489 = vmatpush.bf16.msra.mxu0 %v1436
        %1490 = vmatpush.bf16.msra.mxu0 %v1434
        %1491 = vmatpush.bf16.msra.mxu0 %v1432
        %1492 = vmatpush.bf16.msra.mxu0 %v1430
        %1493 = vmatpush.bf16.msra.mxu0 %v1428
        %1494 = vmatpush.bf16.msra.mxu0 %v1426
        %1495 = vmatpush.bf16.msra.mxu0 %v1424
        %1496 = vmatmul.bf16.gmra.mxu0 %v1274
        %v1497 = vpop.f32.mrf.mxu0
        %v1498 = vadd.f32 %v1324, %v1497
        %v1499 = vpop.f32.mrf.mxu0
        %v1500 = vadd.f32 %v1324, %v1499
        %1501 = vmatmul.bf16.gmra.mxu0 %v1276
        %v1502 = vpop.f32.mrf.mxu0
        %v1503 = vadd.f32 %v1324, %v1502
        %v1504 = vpop.f32.mrf.mxu0
        %v1505 = vadd.f32 %v1324, %v1504
        %1506 = vmatmul.bf16.gmra.mxu0 %v1278
        %v1507 = vpop.f32.mrf.mxu0
        %v1508 = vadd.f32 %v1324, %v1507
        %v1509 = vpop.f32.mrf.mxu0
        %v1510 = vadd.f32 %v1324, %v1509
        %1511 = vmatmul.bf16.gmra.mxu0 %v1280
        %v1512 = vpop.f32.mrf.mxu0
        %v1513 = vadd.f32 %v1324, %v1512
        %v1514 = vpop.f32.mrf.mxu0
        %v1515 = vadd.f32 %v1324, %v1514
        %1516 = vmatmul.bf16.gmra.mxu0 %v1282
        %v1517 = vpop.f32.mrf.mxu0
        %v1518 = vadd.f32 %v1324, %v1517
        %v1519 = vpop.f32.mrf.mxu0
        %v1520 = vadd.f32 %v1324, %v1519
        %1521 = vmatmul.bf16.gmra.mxu0 %v1284
        %v1522 = vpop.f32.mrf.mxu0
        %v1523 = vadd.f32 %v1324, %v1522
        %v1524 = vpop.f32.mrf.mxu0
        %v1525 = vadd.f32 %v1324, %v1524
        %1526 = vmatmul.bf16.gmra.mxu0 %v1286
        %v1527 = vpop.f32.mrf.mxu0
        %v1528 = vadd.f32 %v1324, %v1527
        %v1529 = vpop.f32.mrf.mxu0
        %v1530 = vadd.f32 %v1324, %v1529
        %1531 = vmatmul.bf16.gmra.mxu0 %v1288
        %v1532 = vpop.f32.mrf.mxu0
        %v1533 = vadd.f32 %v1324, %v1532
        %v1534 = vpop.f32.mrf.mxu0
        %v1535 = vadd.f32 %v1324, %v1534
        %1536 = vdwg.mxu0
        %1537 = vmatpush.bf16.msra.mxu0 %v1454
        %1538 = vmatpush.bf16.msra.mxu0 %v1452
        %1539 = vmatpush.bf16.msra.mxu0 %v1450
        %1540 = vmatpush.bf16.msra.mxu0 %v1448
        %1541 = vmatpush.bf16.msra.mxu0 %v1446
        %1542 = vmatpush.bf16.msra.mxu0 %v1444
        %1543 = vmatpush.bf16.msra.mxu0 %v1442
        %1544 = vmatpush.bf16.msra.mxu0 %v1440
        %1545 = vmatmul.bf16.gmra.mxu0 %v1275
        %v1546 = vpop.f32.mrf.mxu0
        %v1547 = vadd.f32 %v1498, %v1546
        %v1548 = vpop.f32.mrf.mxu0
        %v1549 = vadd.f32 %v1500, %v1548
        %1550 = vmatmul.bf16.gmra.mxu0 %v1277
        %v1551 = vpop.f32.mrf.mxu0
        %v1552 = vadd.f32 %v1503, %v1551
        %v1553 = vpop.f32.mrf.mxu0
        %v1554 = vadd.f32 %v1505, %v1553
        %1555 = vmatmul.bf16.gmra.mxu0 %v1279
        %v1556 = vpop.f32.mrf.mxu0
        %v1557 = vadd.f32 %v1508, %v1556
        %v1558 = vpop.f32.mrf.mxu0
        %v1559 = vadd.f32 %v1510, %v1558
        %1560 = vmatmul.bf16.gmra.mxu0 %v1281
        %v1561 = vpop.f32.mrf.mxu0
        %v1562 = vadd.f32 %v1513, %v1561
        %v1563 = vpop.f32.mrf.mxu0
        %v1564 = vadd.f32 %v1515, %v1563
        %1565 = vmatmul.bf16.gmra.mxu0 %v1283
        %v1566 = vpop.f32.mrf.mxu0
        %v1567 = vadd.f32 %v1518, %v1566
        %v1568 = vpop.f32.mrf.mxu0
        %v1569 = vadd.f32 %v1520, %v1568
        %1570 = vmatmul.bf16.gmra.mxu0 %v1285
        %v1571 = vpop.f32.mrf.mxu0
        %v1572 = vadd.f32 %v1523, %v1571
        %v1573 = vpop.f32.mrf.mxu0
        %v1574 = vadd.f32 %v1525, %v1573
        %1575 = vmatmul.bf16.gmra.mxu0 %v1287
        %v1576 = vpop.f32.mrf.mxu0
        %v1577 = vadd.f32 %v1528, %v1576
        %v1578 = vpop.f32.mrf.mxu0
        %v1579 = vadd.f32 %v1530, %v1578
        %1580 = vmatmul.bf16.gmra.mxu0 %v1289
        %v1581 = vpop.f32.mrf.mxu0
        %v1582 = vadd.f32 %v1533, %v1581
        %v1583 = vpop.f32.mrf.mxu0
        %v1584 = vadd.f32 %v1535, %v1583
        %1585 = vdwg.mxu0
        %1586 = vmatpush.bf16.msra.mxu0 %v1439
        %1587 = vmatpush.bf16.msra.mxu0 %v1437
        %1588 = vmatpush.bf16.msra.mxu0 %v1435
        %1589 = vmatpush.bf16.msra.mxu0 %v1433
        %1590 = vmatpush.bf16.msra.mxu0 %v1431
        %1591 = vmatpush.bf16.msra.mxu0 %v1429
        %1592 = vmatpush.bf16.msra.mxu0 %v1427
        %1593 = vmatpush.bf16.msra.mxu0 %v1425
        %1594 = vmatmul.bf16.gmra.mxu0 %v1274
        %v1595 = vpop.f32.mrf.mxu0
        %v1596 = vadd.f32 %v1325, %v1595
        %v1597 = vpop.f32.mrf.mxu0
        %v1598 = vadd.f32 %v1325, %v1597
        %1599 = vmatmul.bf16.gmra.mxu0 %v1276
        %v1600 = vpop.f32.mrf.mxu0
        %v1601 = vadd.f32 %v1325, %v1600
        %v1602 = vpop.f32.mrf.mxu0
        %v1603 = vadd.f32 %v1325, %v1602
        %1604 = vmatmul.bf16.gmra.mxu0 %v1278
        %v1605 = vpop.f32.mrf.mxu0
        %v1606 = vadd.f32 %v1325, %v1605
        %v1607 = vpop.f32.mrf.mxu0
        %v1608 = vadd.f32 %v1325, %v1607
        %1609 = vmatmul.bf16.gmra.mxu0 %v1280
        %v1610 = vpop.f32.mrf.mxu0
        %v1611 = vadd.f32 %v1325, %v1610
        %v1612 = vpop.f32.mrf.mxu0
        %v1613 = vadd.f32 %v1325, %v1612
        %1614 = vmatmul.bf16.gmra.mxu0 %v1282
        %v1615 = vpop.f32.mrf.mxu0
        %v1616 = vadd.f32 %v1325, %v1615
        %v1617 = vpop.f32.mrf.mxu0
        %v1618 = vadd.f32 %v1325, %v1617
        %1619 = vmatmul.bf16.gmra.mxu0 %v1284
        %v1620 = vpop.f32.mrf.mxu0
        %v1621 = vadd.f32 %v1325, %v1620
        %v1622 = vpop.f32.mrf.mxu0
        %v1623 = vadd.f32 %v1325, %v1622
        %1624 = vmatmul.bf16.gmra.mxu0 %v1286
        %v1625 = vpop.f32.mrf.mxu0
        %v1626 = vadd.f32 %v1325, %v1625
        %v1627 = vpop.f32.mrf.mxu0
        %v1628 = vadd.f32 %v1325, %v1627
        %1629 = vmatmul.bf16.gmra.mxu0 %v1288
        %v1630 = vpop.f32.mrf.mxu0
        %v1631 = vadd.f32 %v1325, %v1630
        %v1632 = vpop.f32.mrf.mxu0
        %v1633 = vadd.f32 %v1325, %v1632
        %1634 = vdwg.mxu0
        %1635 = vmatpush.bf16.msra.mxu0 %v1455
        %1636 = vmatpush.bf16.msra.mxu0 %v1453
        %1637 = vmatpush.bf16.msra.mxu0 %v1451
        %1638 = vmatpush.bf16.msra.mxu0 %v1449
        %1639 = vmatpush.bf16.msra.mxu0 %v1447
        %1640 = vmatpush.bf16.msra.mxu0 %v1445
        %1641 = vmatpush.bf16.msra.mxu0 %v1443
        %1642 = vmatpush.bf16.msra.mxu0 %v1441
        %1643 = vmatmul.bf16.gmra.mxu0 %v1275
        %v1644 = vpop.f32.mrf.mxu0
        %v1645 = vadd.f32 %v1596, %v1644
        %v1646 = vpop.f32.mrf.mxu0
        %v1647 = vadd.f32 %v1598, %v1646
        %1648 = vmatmul.bf16.gmra.mxu0 %v1277
        %v1649 = vpop.f32.mrf.mxu0
        %v1650 = vadd.f32 %v1601, %v1649
        %v1651 = vpop.f32.mrf.mxu0
        %v1652 = vadd.f32 %v1603, %v1651
        %1653 = vmatmul.bf16.gmra.mxu0 %v1279
        %v1654 = vpop.f32.mrf.mxu0
        %v1655 = vadd.f32 %v1606, %v1654
        %v1656 = vpop.f32.mrf.mxu0
        %v1657 = vadd.f32 %v1608, %v1656
        %1658 = vmatmul.bf16.gmra.mxu0 %v1281
        %v1659 = vpop.f32.mrf.mxu0
        %v1660 = vadd.f32 %v1611, %v1659
        %v1661 = vpop.f32.mrf.mxu0
        %v1662 = vadd.f32 %v1613, %v1661
        %1663 = vmatmul.bf16.gmra.mxu0 %v1283
        %v1664 = vpop.f32.mrf.mxu0
        %v1665 = vadd.f32 %v1616, %v1664
        %v1666 = vpop.f32.mrf.mxu0
        %v1667 = vadd.f32 %v1618, %v1666
        %1668 = vmatmul.bf16.gmra.mxu0 %v1285
        %v1669 = vpop.f32.mrf.mxu0
        %v1670 = vadd.f32 %v1621, %v1669
        %v1671 = vpop.f32.mrf.mxu0
        %v1672 = vadd.f32 %v1623, %v1671
        %1673 = vmatmul.bf16.gmra.mxu0 %v1287
        %v1674 = vpop.f32.mrf.mxu0
        %v1675 = vadd.f32 %v1626, %v1674
        %v1676 = vpop.f32.mrf.mxu0
        %v1677 = vadd.f32 %v1628, %v1676
        %1678 = vmatmul.bf16.gmra.mxu0 %v1289
        %v1679 = vpop.f32.mrf.mxu0
        %v1680 = vadd.f32 %v1631, %v1679
        %v1681 = vpop.f32.mrf.mxu0
        %v1682 = vadd.f32 %v1633, %v1681
        %1683 = vdwg.mxu0
        %v1684 = vld [vmem:[%s910] sm:$0xff]
        %v1685 = vld [vmem:[%s910 + $0x8] sm:$0xff]
        %v1686 = vld [vmem:[%s910 + $0x10] sm:$0xff]
        %v1687 = vld [vmem:[%s910 + $0x18] sm:$0xff]
        %v1688 = vld [vmem:[%s910 + $0x20] sm:$0xff]
        %v1689 = vld [vmem:[%s910 + $0x28] sm:$0xff]
        %v1690 = vld [vmem:[%s910 + $0x30] sm:$0xff]
        %v1691 = vld [vmem:[%s910 + $0x38] sm:$0xff]
        %v1692 = vld [vmem:[%s910 + $0x40] sm:$0xff]
        %v1693 = vld [vmem:[%s910 + $0x48] sm:$0xff]
        %v1694 = vld [vmem:[%s910 + $0x50] sm:$0xff]
        %v1695 = vld [vmem:[%s910 + $0x58] sm:$0xff]
        %v1696 = vld [vmem:[%s910 + $0x60] sm:$0xff]
        %v1697 = vld [vmem:[%s910 + $0x68] sm:$0xff]
        %v1698 = vld [vmem:[%s910 + $0x70] sm:$0xff]
        %v1699 = vld [vmem:[%s910 + $0x78] sm:$0xff]
        %v1700 = vld [vmem:[%s910 + $0x80] sm:$0xff]
        %v1701 = vld [vmem:[%s910 + $0x88] sm:$0xff]
        %v1702 = vld [vmem:[%s910 + $0x90] sm:$0xff]
        %v1703 = vld [vmem:[%s910 + $0x98] sm:$0xff]
        %v1704 = vld [vmem:[%s910 + $0xa0] sm:$0xff]
        %v1705 = vld [vmem:[%s910 + $0xa8] sm:$0xff]
        %v1706 = vld [vmem:[%s910 + $0xb0] sm:$0xff]
        %v1707 = vld [vmem:[%s910 + $0xb8] sm:$0xff]
        %v1708 = vld [vmem:[%s910 + $0xc0] sm:$0xff]
        %v1709 = vld [vmem:[%s910 + $0xc8] sm:$0xff]
        %v1710 = vld [vmem:[%s910 + $0xd0] sm:$0xff]
        %v1711 = vld [vmem:[%s910 + $0xd8] sm:$0xff]
        %v1712 = vld [vmem:[%s910 + $0xe0] sm:$0xff]
        %v1713 = vld [vmem:[%s910 + $0xe8] sm:$0xff]
        %v1714 = vld [vmem:[%s910 + $0xf0] sm:$0xff]
        %v1715 = vld [vmem:[%s910 + $0xf8] sm:$0xff]
        %v1716 = vld [vmem:[%s920] sm:$0x3]
        %v1718 = vperm.slane %v1716, 0
        %v1719 = vperm.slane %v1716, 1
        %v1754 = vunpack.c.l.b16 %v1684
        %v1755 = vunpack.c.h.b16 %v1684
        %v1756 = vunpack.c.l.b16 %v1685
        %v1757 = vunpack.c.h.b16 %v1685
        %v1758 = vunpack.c.l.b16 %v1686
        %v1759 = vunpack.c.h.b16 %v1686
        %v1760 = vunpack.c.l.b16 %v1687
        %v1761 = vunpack.c.h.b16 %v1687
        %v1762 = vunpack.c.l.b16 %v1688
        %v1763 = vunpack.c.h.b16 %v1688
        %v1764 = vunpack.c.l.b16 %v1689
        %v1765 = vunpack.c.h.b16 %v1689
        %v1766 = vunpack.c.l.b16 %v1690
        %v1767 = vunpack.c.h.b16 %v1690
        %v1768 = vunpack.c.l.b16 %v1691
        %v1769 = vunpack.c.h.b16 %v1691
        %v1770 = vunpack.c.l.b16 %v1692
        %v1771 = vunpack.c.h.b16 %v1692
        %v1772 = vunpack.c.l.b16 %v1693
        %v1773 = vunpack.c.h.b16 %v1693
        %v1774 = vunpack.c.l.b16 %v1694
        %v1775 = vunpack.c.h.b16 %v1694
        %v1776 = vunpack.c.l.b16 %v1695
        %v1777 = vunpack.c.h.b16 %v1695
        %v1778 = vunpack.c.l.b16 %v1696
        %v1779 = vunpack.c.h.b16 %v1696
        %v1780 = vunpack.c.l.b16 %v1697
        %v1781 = vunpack.c.h.b16 %v1697
        %v1782 = vunpack.c.l.b16 %v1698
        %v1783 = vunpack.c.h.b16 %v1698
        %v1784 = vunpack.c.l.b16 %v1699
        %v1785 = vunpack.c.h.b16 %v1699
        %v1786 = vunpack.c.l.b16 %v1700
        %v1787 = vunpack.c.h.b16 %v1700
        %v1788 = vunpack.c.l.b16 %v1701
        %v1789 = vunpack.c.h.b16 %v1701
        %v1790 = vunpack.c.l.b16 %v1702
        %v1791 = vunpack.c.h.b16 %v1702
        %v1792 = vunpack.c.l.b16 %v1703
        %v1793 = vunpack.c.h.b16 %v1703
        %v1794 = vunpack.c.l.b16 %v1704
        %v1795 = vunpack.c.h.b16 %v1704
        %v1796 = vunpack.c.l.b16 %v1705
        %v1797 = vunpack.c.h.b16 %v1705
        %v1798 = vunpack.c.l.b16 %v1706
        %v1799 = vunpack.c.h.b16 %v1706
        %v1800 = vunpack.c.l.b16 %v1707
        %v1801 = vunpack.c.h.b16 %v1707
        %v1802 = vunpack.c.l.b16 %v1708
        %v1803 = vunpack.c.h.b16 %v1708
        %v1804 = vunpack.c.l.b16 %v1709
        %v1805 = vunpack.c.h.b16 %v1709
        %v1806 = vunpack.c.l.b16 %v1710
        %v1807 = vunpack.c.h.b16 %v1710
        %v1808 = vunpack.c.l.b16 %v1711
        %v1809 = vunpack.c.h.b16 %v1711
        %v1810 = vunpack.c.l.b16 %v1712
        %v1811 = vunpack.c.h.b16 %v1712
        %v1812 = vunpack.c.l.b16 %v1713
        %v1813 = vunpack.c.h.b16 %v1713
        %v1814 = vunpack.c.l.b16 %v1714
        %v1815 = vunpack.c.h.b16 %v1714
        %v1816 = vunpack.c.l.b16 %v1715
        %v1817 = vunpack.c.h.b16 %v1715
        %v1818 = vpack.c.b16 %v1756, %v1754
        %v1819 = vpack.c.b16 %v1757, %v1755
        %v1820 = vpack.c.b16 %v1760, %v1758
        %v1821 = vpack.c.b16 %v1761, %v1759
        %v1822 = vpack.c.b16 %v1764, %v1762
        %v1823 = vpack.c.b16 %v1765, %v1763
        %v1824 = vpack.c.b16 %v1768, %v1766
        %v1825 = vpack.c.b16 %v1769, %v1767
        %v1826 = vpack.c.b16 %v1772, %v1770
        %v1827 = vpack.c.b16 %v1773, %v1771
        %v1828 = vpack.c.b16 %v1776, %v1774
        %v1829 = vpack.c.b16 %v1777, %v1775
        %v1830 = vpack.c.b16 %v1780, %v1778
        %v1831 = vpack.c.b16 %v1781, %v1779
        %v1832 = vpack.c.b16 %v1784, %v1782
        %v1833 = vpack.c.b16 %v1785, %v1783
        %v1834 = vpack.c.b16 %v1788, %v1786
        %v1835 = vpack.c.b16 %v1789, %v1787
        %v1836 = vpack.c.b16 %v1792, %v1790
        %v1837 = vpack.c.b16 %v1793, %v1791
        %v1838 = vpack.c.b16 %v1796, %v1794
        %v1839 = vpack.c.b16 %v1797, %v1795
        %v1840 = vpack.c.b16 %v1800, %v1798
        %v1841 = vpack.c.b16 %v1801, %v1799
        %v1842 = vpack.c.b16 %v1804, %v1802
        %v1843 = vpack.c.b16 %v1805, %v1803
        %v1844 = vpack.c.b16 %v1808, %v1806
        %v1845 = vpack.c.b16 %v1809, %v1807
        %v1846 = vpack.c.b16 %v1812, %v1810
        %v1847 = vpack.c.b16 %v1813, %v1811
        %v1848 = vpack.c.b16 %v1816, %v1814
        %v1849 = vpack.c.b16 %v1817, %v1815
        %1882 = vmatpush.bf16.msra.mxu0 %v1832
        %1883 = vmatpush.bf16.msra.mxu0 %v1830
        %1884 = vmatpush.bf16.msra.mxu0 %v1828
        %1885 = vmatpush.bf16.msra.mxu0 %v1826
        %1886 = vmatpush.bf16.msra.mxu0 %v1824
        %1887 = vmatpush.bf16.msra.mxu0 %v1822
        %1888 = vmatpush.bf16.msra.mxu0 %v1820
        %1889 = vmatpush.bf16.msra.mxu0 %v1818
        %1890 = vmatmul.bf16.gmra.mxu0 %v1274
        %v1891 = vpop.f32.mrf.mxu0
        %v1892 = vadd.f32 %v1718, %v1891
        %v1893 = vpop.f32.mrf.mxu0
        %v1894 = vadd.f32 %v1718, %v1893
        %1895 = vmatmul.bf16.gmra.mxu0 %v1276
        %v1896 = vpop.f32.mrf.mxu0
        %v1897 = vadd.f32 %v1718, %v1896
        %v1898 = vpop.f32.mrf.mxu0
        %v1899 = vadd.f32 %v1718, %v1898
        %1900 = vmatmul.bf16.gmra.mxu0 %v1278
        %v1901 = vpop.f32.mrf.mxu0
        %v1902 = vadd.f32 %v1718, %v1901
        %v1903 = vpop.f32.mrf.mxu0
        %v1904 = vadd.f32 %v1718, %v1903
        %1905 = vmatmul.bf16.gmra.mxu0 %v1280
        %v1906 = vpop.f32.mrf.mxu0
        %v1907 = vadd.f32 %v1718, %v1906
        %v1908 = vpop.f32.mrf.mxu0
        %v1909 = vadd.f32 %v1718, %v1908
        %1910 = vmatmul.bf16.gmra.mxu0 %v1282
        %v1911 = vpop.f32.mrf.mxu0
        %v1912 = vadd.f32 %v1718, %v1911
        %v1913 = vpop.f32.mrf.mxu0
        %v1914 = vadd.f32 %v1718, %v1913
        %1915 = vmatmul.bf16.gmra.mxu0 %v1284
        %v1916 = vpop.f32.mrf.mxu0
        %v1917 = vadd.f32 %v1718, %v1916
        %v1918 = vpop.f32.mrf.mxu0
        %v1919 = vadd.f32 %v1718, %v1918
        %1920 = vmatmul.bf16.gmra.mxu0 %v1286
        %v1921 = vpop.f32.mrf.mxu0
        %v1922 = vadd.f32 %v1718, %v1921
        %v1923 = vpop.f32.mrf.mxu0
        %v1924 = vadd.f32 %v1718, %v1923
        %1925 = vmatmul.bf16.gmra.mxu0 %v1288
        %v1926 = vpop.f32.mrf.mxu0
        %v1927 = vadd.f32 %v1718, %v1926
        %v1928 = vpop.f32.mrf.mxu0
        %v1929 = vadd.f32 %v1718, %v1928
        %1930 = vdwg.mxu0
        %1931 = vmatpush.bf16.msra.mxu0 %v1848
        %1932 = vmatpush.bf16.msra.mxu0 %v1846
        %1933 = vmatpush.bf16.msra.mxu0 %v1844
        %1934 = vmatpush.bf16.msra.mxu0 %v1842
        %1935 = vmatpush.bf16.msra.mxu0 %v1840
        %1936 = vmatpush.bf16.msra.mxu0 %v1838
        %1937 = vmatpush.bf16.msra.mxu0 %v1836
        %1938 = vmatpush.bf16.msra.mxu0 %v1834
        %1939 = vmatmul.bf16.gmra.mxu0 %v1275
        %v1940 = vpop.f32.mrf.mxu0
        %v1941 = vadd.f32 %v1892, %v1940
        %v1942 = vpop.f32.mrf.mxu0
        %v1943 = vadd.f32 %v1894, %v1942
        %1944 = vmatmul.bf16.gmra.mxu0 %v1277
        %v1945 = vpop.f32.mrf.mxu0
        %v1946 = vadd.f32 %v1897, %v1945
        %v1947 = vpop.f32.mrf.mxu0
        %v1948 = vadd.f32 %v1899, %v1947
        %1949 = vmatmul.bf16.gmra.mxu0 %v1279
        %v1950 = vpop.f32.mrf.mxu0
        %v1951 = vadd.f32 %v1902, %v1950
        %v1952 = vpop.f32.mrf.mxu0
        %v1953 = vadd.f32 %v1904, %v1952
        %1954 = vmatmul.bf16.gmra.mxu0 %v1281
        %v1955 = vpop.f32.mrf.mxu0
        %v1956 = vadd.f32 %v1907, %v1955
        %v1957 = vpop.f32.mrf.mxu0
        %v1958 = vadd.f32 %v1909, %v1957
        %1959 = vmatmul.bf16.gmra.mxu0 %v1283
        %v1960 = vpop.f32.mrf.mxu0
        %v1961 = vadd.f32 %v1912, %v1960
        %v1962 = vpop.f32.mrf.mxu0
        %v1963 = vadd.f32 %v1914, %v1962
        %1964 = vmatmul.bf16.gmra.mxu0 %v1285
        %v1965 = vpop.f32.mrf.mxu0
        %v1966 = vadd.f32 %v1917, %v1965
        %v1967 = vpop.f32.mrf.mxu0
        %v1968 = vadd.f32 %v1919, %v1967
        %1969 = vmatmul.bf16.gmra.mxu0 %v1287
        %v1970 = vpop.f32.mrf.mxu0
        %v1971 = vadd.f32 %v1922, %v1970
        %v1972 = vpop.f32.mrf.mxu0
        %v1973 = vadd.f32 %v1924, %v1972
        %1974 = vmatmul.bf16.gmra.mxu0 %v1289
        %v1975 = vpop.f32.mrf.mxu0
        %v1976 = vadd.f32 %v1927, %v1975
        %v1977 = vpop.f32.mrf.mxu0
        %v1978 = vadd.f32 %v1929, %v1977
        %1979 = vdwg.mxu0
        %1980 = vmatpush.bf16.msra.mxu0 %v1833
        %1981 = vmatpush.bf16.msra.mxu0 %v1831
        %1982 = vmatpush.bf16.msra.mxu0 %v1829
        %1983 = vmatpush.bf16.msra.mxu0 %v1827
        %1984 = vmatpush.bf16.msra.mxu0 %v1825
        %1985 = vmatpush.bf16.msra.mxu0 %v1823
        %1986 = vmatpush.bf16.msra.mxu0 %v1821
        %1987 = vmatpush.bf16.msra.mxu0 %v1819
        %1988 = vmatmul.bf16.gmra.mxu0 %v1274
        %v1989 = vpop.f32.mrf.mxu0
        %v1990 = vadd.f32 %v1719, %v1989
        %v1991 = vpop.f32.mrf.mxu0
        %v1992 = vadd.f32 %v1719, %v1991
        %1993 = vmatmul.bf16.gmra.mxu0 %v1276
        %v1994 = vpop.f32.mrf.mxu0
        %v1995 = vadd.f32 %v1719, %v1994
        %v1996 = vpop.f32.mrf.mxu0
        %v1997 = vadd.f32 %v1719, %v1996
        %1998 = vmatmul.bf16.gmra.mxu0 %v1278
        %v1999 = vpop.f32.mrf.mxu0
        %v2000 = vadd.f32 %v1719, %v1999
        %v2001 = vpop.f32.mrf.mxu0
        %v2002 = vadd.f32 %v1719, %v2001
        %2003 = vmatmul.bf16.gmra.mxu0 %v1280
        %v2004 = vpop.f32.mrf.mxu0
        %v2005 = vadd.f32 %v1719, %v2004
        %v2006 = vpop.f32.mrf.mxu0
        %v2007 = vadd.f32 %v1719, %v2006
        %2008 = vmatmul.bf16.gmra.mxu0 %v1282
        %v2009 = vpop.f32.mrf.mxu0
        %v2010 = vadd.f32 %v1719, %v2009
        %v2011 = vpop.f32.mrf.mxu0
        %v2012 = vadd.f32 %v1719, %v2011
        %2013 = vmatmul.bf16.gmra.mxu0 %v1284
        %v2014 = vpop.f32.mrf.mxu0
        %v2015 = vadd.f32 %v1719, %v2014
        %v2016 = vpop.f32.mrf.mxu0
        %v2017 = vadd.f32 %v1719, %v2016
        %2018 = vmatmul.bf16.gmra.mxu0 %v1286
        %v2019 = vpop.f32.mrf.mxu0
        %v2020 = vadd.f32 %v1719, %v2019
        %v2021 = vpop.f32.mrf.mxu0
        %v2022 = vadd.f32 %v1719, %v2021
        %2023 = vmatmul.bf16.gmra.mxu0 %v1288
        %v2024 = vpop.f32.mrf.mxu0
        %v2025 = vadd.f32 %v1719, %v2024
        %v2026 = vpop.f32.mrf.mxu0
        %v2027 = vadd.f32 %v1719, %v2026
        %2028 = vdwg.mxu0
        %2029 = vmatpush.bf16.msra.mxu0 %v1849
        %2030 = vmatpush.bf16.msra.mxu0 %v1847
        %2031 = vmatpush.bf16.msra.mxu0 %v1845
        %2032 = vmatpush.bf16.msra.mxu0 %v1843
        %2033 = vmatpush.bf16.msra.mxu0 %v1841
        %2034 = vmatpush.bf16.msra.mxu0 %v1839
        %2035 = vmatpush.bf16.msra.mxu0 %v1837
        %2036 = vmatpush.bf16.msra.mxu0 %v1835
        %2037 = vmatmul.bf16.gmra.mxu0 %v1275
        %v2038 = vpop.f32.mrf.mxu0
        %v2039 = vadd.f32 %v1990, %v2038
        %v2040 = vpop.f32.mrf.mxu0
        %v2041 = vadd.f32 %v1992, %v2040
        %2042 = vmatmul.bf16.gmra.mxu0 %v1277
        %v2043 = vpop.f32.mrf.mxu0
        %v2044 = vadd.f32 %v1995, %v2043
        %v2045 = vpop.f32.mrf.mxu0
        %v2046 = vadd.f32 %v1997, %v2045
        %2047 = vmatmul.bf16.gmra.mxu0 %v1279
        %v2048 = vpop.f32.mrf.mxu0
        %v2049 = vadd.f32 %v2000, %v2048
        %v2050 = vpop.f32.mrf.mxu0
        %v2051 = vadd.f32 %v2002, %v2050
        %2052 = vmatmul.bf16.gmra.mxu0 %v1281
        %v2053 = vpop.f32.mrf.mxu0
        %v2054 = vadd.f32 %v2005, %v2053
        %v2055 = vpop.f32.mrf.mxu0
        %v2056 = vadd.f32 %v2007, %v2055
        %2057 = vmatmul.bf16.gmra.mxu0 %v1283
        %v2058 = vpop.f32.mrf.mxu0
        %v2059 = vadd.f32 %v2010, %v2058
        %v2060 = vpop.f32.mrf.mxu0
        %v2061 = vadd.f32 %v2012, %v2060
        %2062 = vmatmul.bf16.gmra.mxu0 %v1285
        %v2063 = vpop.f32.mrf.mxu0
        %v2064 = vadd.f32 %v2015, %v2063
        %v2065 = vpop.f32.mrf.mxu0
        %v2066 = vadd.f32 %v2017, %v2065
        %2067 = vmatmul.bf16.gmra.mxu0 %v1287
        %v2068 = vpop.f32.mrf.mxu0
        %v2069 = vadd.f32 %v2020, %v2068
        %v2070 = vpop.f32.mrf.mxu0
        %v2071 = vadd.f32 %v2022, %v2070
        %2072 = vmatmul.bf16.gmra.mxu0 %v1289
        %v2073 = vpop.f32.mrf.mxu0
        %v2074 = vadd.f32 %v2025, %v2073
        %v2075 = vpop.f32.mrf.mxu0
        %v2076 = vadd.f32 %v2027, %v2075
        %2077 = vdwg.mxu0
        %v2078 = vld [vmem:[%s930] sm:$0xff]
        %v2079 = vld [vmem:[%s930 + $0x8] sm:$0xff]
        %v2080 = vld [vmem:[%s930 + $0x10] sm:$0xff]
        %v2081 = vld [vmem:[%s930 + $0x18] sm:$0xff]
        %v2082 = vld [vmem:[%s930 + $0x20] sm:$0xff]
        %v2083 = vld [vmem:[%s930 + $0x28] sm:$0xff]
        %v2084 = vld [vmem:[%s930 + $0x30] sm:$0xff]
        %v2085 = vld [vmem:[%s930 + $0x38] sm:$0xff]
        %v2086 = vld [vmem:[%s930 + $0x40] sm:$0xff]
        %v2087 = vld [vmem:[%s930 + $0x48] sm:$0xff]
        %v2088 = vld [vmem:[%s930 + $0x50] sm:$0xff]
        %v2089 = vld [vmem:[%s930 + $0x58] sm:$0xff]
        %v2090 = vld [vmem:[%s930 + $0x60] sm:$0xff]
        %v2091 = vld [vmem:[%s930 + $0x68] sm:$0xff]
        %v2092 = vld [vmem:[%s930 + $0x70] sm:$0xff]
        %v2093 = vld [vmem:[%s930 + $0x78] sm:$0xff]
        %v2094 = vld [vmem:[%s930 + $0x80] sm:$0xff]
        %v2095 = vld [vmem:[%s930 + $0x88] sm:$0xff]
        %v2096 = vld [vmem:[%s930 + $0x90] sm:$0xff]
        %v2097 = vld [vmem:[%s930 + $0x98] sm:$0xff]
        %v2098 = vld [vmem:[%s930 + $0xa0] sm:$0xff]
        %v2099 = vld [vmem:[%s930 + $0xa8] sm:$0xff]
        %v2100 = vld [vmem:[%s930 + $0xb0] sm:$0xff]
        %v2101 = vld [vmem:[%s930 + $0xb8] sm:$0xff]
        %v2102 = vld [vmem:[%s930 + $0xc0] sm:$0xff]
        %v2103 = vld [vmem:[%s930 + $0xc8] sm:$0xff]
        %v2104 = vld [vmem:[%s930 + $0xd0] sm:$0xff]
        %v2105 = vld [vmem:[%s930 + $0xd8] sm:$0xff]
        %v2106 = vld [vmem:[%s930 + $0xe0] sm:$0xff]
        %v2107 = vld [vmem:[%s930 + $0xe8] sm:$0xff]
        %v2108 = vld [vmem:[%s930 + $0xf0] sm:$0xff]
        %v2109 = vld [vmem:[%s930 + $0xf8] sm:$0xff]
        %v2110 = vld [vmem:[%s940] sm:$0x3]
        %v2112 = vperm.slane %v2110, 0
        %v2113 = vperm.slane %v2110, 1
        %v2148 = vunpack.c.l.b16 %v2078
        %v2149 = vunpack.c.h.b16 %v2078
        %v2150 = vunpack.c.l.b16 %v2079
        %v2151 = vunpack.c.h.b16 %v2079
        %v2152 = vunpack.c.l.b16 %v2080
        %v2153 = vunpack.c.h.b16 %v2080
        %v2154 = vunpack.c.l.b16 %v2081
        %v2155 = vunpack.c.h.b16 %v2081
        %v2156 = vunpack.c.l.b16 %v2082
        %v2157 = vunpack.c.h.b16 %v2082
        %v2158 = vunpack.c.l.b16 %v2083
        %v2159 = vunpack.c.h.b16 %v2083
        %v2160 = vunpack.c.l.b16 %v2084
        %v2161 = vunpack.c.h.b16 %v2084
        %v2162 = vunpack.c.l.b16 %v2085
        %v2163 = vunpack.c.h.b16 %v2085
        %v2164 = vunpack.c.l.b16 %v2086
        %v2165 = vunpack.c.h.b16 %v2086
        %v2166 = vunpack.c.l.b16 %v2087
        %v2167 = vunpack.c.h.b16 %v2087
        %v2168 = vunpack.c.l.b16 %v2088
        %v2169 = vunpack.c.h.b16 %v2088
        %v2170 = vunpack.c.l.b16 %v2089
        %v2171 = vunpack.c.h.b16 %v2089
        %v2172 = vunpack.c.l.b16 %v2090
        %v2173 = vunpack.c.h.b16 %v2090
        %v2174 = vunpack.c.l.b16 %v2091
        %v2175 = vunpack.c.h.b16 %v2091
        %v2176 = vunpack.c.l.b16 %v2092
        %v2177 = vunpack.c.h.b16 %v2092
        %v2178 = vunpack.c.l.b16 %v2093
        %v2179 = vunpack.c.h.b16 %v2093
        %v2180 = vunpack.c.l.b16 %v2094
        %v2181 = vunpack.c.h.b16 %v2094
        %v2182 = vunpack.c.l.b16 %v2095
        %v2183 = vunpack.c.h.b16 %v2095
        %v2184 = vunpack.c.l.b16 %v2096
        %v2185 = vunpack.c.h.b16 %v2096
        %v2186 = vunpack.c.l.b16 %v2097
        %v2187 = vunpack.c.h.b16 %v2097
        %v2188 = vunpack.c.l.b16 %v2098
        %v2189 = vunpack.c.h.b16 %v2098
        %v2190 = vunpack.c.l.b16 %v2099
        %v2191 = vunpack.c.h.b16 %v2099
        %v2192 = vunpack.c.l.b16 %v2100
        %v2193 = vunpack.c.h.b16 %v2100
        %v2194 = vunpack.c.l.b16 %v2101
        %v2195 = vunpack.c.h.b16 %v2101
        %v2196 = vunpack.c.l.b16 %v2102
        %v2197 = vunpack.c.h.b16 %v2102
        %v2198 = vunpack.c.l.b16 %v2103
        %v2199 = vunpack.c.h.b16 %v2103
        %v2200 = vunpack.c.l.b16 %v2104
        %v2201 = vunpack.c.h.b16 %v2104
        %v2202 = vunpack.c.l.b16 %v2105
        %v2203 = vunpack.c.h.b16 %v2105
        %v2204 = vunpack.c.l.b16 %v2106
        %v2205 = vunpack.c.h.b16 %v2106
        %v2206 = vunpack.c.l.b16 %v2107
        %v2207 = vunpack.c.h.b16 %v2107
        %v2208 = vunpack.c.l.b16 %v2108
        %v2209 = vunpack.c.h.b16 %v2108
        %v2210 = vunpack.c.l.b16 %v2109
        %v2211 = vunpack.c.h.b16 %v2109
        %v2212 = vpack.c.b16 %v2150, %v2148
        %v2213 = vpack.c.b16 %v2151, %v2149
        %v2214 = vpack.c.b16 %v2154, %v2152
        %v2215 = vpack.c.b16 %v2155, %v2153
        %v2216 = vpack.c.b16 %v2158, %v2156
        %v2217 = vpack.c.b16 %v2159, %v2157
        %v2218 = vpack.c.b16 %v2162, %v2160
        %v2219 = vpack.c.b16 %v2163, %v2161
        %v2220 = vpack.c.b16 %v2166, %v2164
        %v2221 = vpack.c.b16 %v2167, %v2165
        %v2222 = vpack.c.b16 %v2170, %v2168
        %v2223 = vpack.c.b16 %v2171, %v2169
        %v2224 = vpack.c.b16 %v2174, %v2172
        %v2225 = vpack.c.b16 %v2175, %v2173
        %v2226 = vpack.c.b16 %v2178, %v2176
        %v2227 = vpack.c.b16 %v2179, %v2177
        %v2228 = vpack.c.b16 %v2182, %v2180
        %v2229 = vpack.c.b16 %v2183, %v2181
        %v2230 = vpack.c.b16 %v2186, %v2184
        %v2231 = vpack.c.b16 %v2187, %v2185
        %v2232 = vpack.c.b16 %v2190, %v2188
        %v2233 = vpack.c.b16 %v2191, %v2189
        %v2234 = vpack.c.b16 %v2194, %v2192
        %v2235 = vpack.c.b16 %v2195, %v2193
        %v2236 = vpack.c.b16 %v2198, %v2196
        %v2237 = vpack.c.b16 %v2199, %v2197
        %v2238 = vpack.c.b16 %v2202, %v2200
        %v2239 = vpack.c.b16 %v2203, %v2201
        %v2240 = vpack.c.b16 %v2206, %v2204
        %v2241 = vpack.c.b16 %v2207, %v2205
        %v2242 = vpack.c.b16 %v2210, %v2208
        %v2243 = vpack.c.b16 %v2211, %v2209
        %2276 = vmatpush.bf16.msra.mxu0 %v2226
        %2277 = vmatpush.bf16.msra.mxu0 %v2224
        %2278 = vmatpush.bf16.msra.mxu0 %v2222
        %2279 = vmatpush.bf16.msra.mxu0 %v2220
        %2280 = vmatpush.bf16.msra.mxu0 %v2218
        %2281 = vmatpush.bf16.msra.mxu0 %v2216
        %2282 = vmatpush.bf16.msra.mxu0 %v2214
        %2283 = vmatpush.bf16.msra.mxu0 %v2212
        %2284 = vmatmul.bf16.gmra.mxu0 %v1274
        %v2285 = vpop.f32.mrf.mxu0
        %v2286 = vadd.f32 %v2112, %v2285
        %v2287 = vpop.f32.mrf.mxu0
        %v2288 = vadd.f32 %v2112, %v2287
        %2289 = vmatmul.bf16.gmra.mxu0 %v1276
        %v2290 = vpop.f32.mrf.mxu0
        %v2291 = vadd.f32 %v2112, %v2290
        %v2292 = vpop.f32.mrf.mxu0
        %v2293 = vadd.f32 %v2112, %v2292
        %2294 = vmatmul.bf16.gmra.mxu0 %v1278
        %v2295 = vpop.f32.mrf.mxu0
        %v2296 = vadd.f32 %v2112, %v2295
        %v2297 = vpop.f32.mrf.mxu0
        %v2298 = vadd.f32 %v2112, %v2297
        %2299 = vmatmul.bf16.gmra.mxu0 %v1280
        %v2300 = vpop.f32.mrf.mxu0
        %v2301 = vadd.f32 %v2112, %v2300
        %v2302 = vpop.f32.mrf.mxu0
        %v2303 = vadd.f32 %v2112, %v2302
        %2304 = vmatmul.bf16.gmra.mxu0 %v1282
        %v2305 = vpop.f32.mrf.mxu0
        %v2306 = vadd.f32 %v2112, %v2305
        %v2307 = vpop.f32.mrf.mxu0
        %v2308 = vadd.f32 %v2112, %v2307
        %2309 = vmatmul.bf16.gmra.mxu0 %v1284
        %v2310 = vpop.f32.mrf.mxu0
        %v2311 = vadd.f32 %v2112, %v2310
        %v2312 = vpop.f32.mrf.mxu0
        %v2313 = vadd.f32 %v2112, %v2312
        %2314 = vmatmul.bf16.gmra.mxu0 %v1286
        %v2315 = vpop.f32.mrf.mxu0
        %v2316 = vadd.f32 %v2112, %v2315
        %v2317 = vpop.f32.mrf.mxu0
        %v2318 = vadd.f32 %v2112, %v2317
        %2319 = vmatmul.bf16.gmra.mxu0 %v1288
        %v2320 = vpop.f32.mrf.mxu0
        %v2321 = vadd.f32 %v2112, %v2320
        %v2322 = vpop.f32.mrf.mxu0
        %v2323 = vadd.f32 %v2112, %v2322
        %2324 = vdwg.mxu0
        %2325 = vmatpush.bf16.msra.mxu0 %v2242
        %2326 = vmatpush.bf16.msra.mxu0 %v2240
        %2327 = vmatpush.bf16.msra.mxu0 %v2238
        %2328 = vmatpush.bf16.msra.mxu0 %v2236
        %2329 = vmatpush.bf16.msra.mxu0 %v2234
        %2330 = vmatpush.bf16.msra.mxu0 %v2232
        %2331 = vmatpush.bf16.msra.mxu0 %v2230
        %2332 = vmatpush.bf16.msra.mxu0 %v2228
        %2333 = vmatmul.bf16.gmra.mxu0 %v1275
        %v2334 = vpop.f32.mrf.mxu0
        %v2335 = vadd.f32 %v2286, %v2334
        %v2336 = vpop.f32.mrf.mxu0
        %v2337 = vadd.f32 %v2288, %v2336
        %2338 = vmatmul.bf16.gmra.mxu0 %v1277
        %v2339 = vpop.f32.mrf.mxu0
        %v2340 = vadd.f32 %v2291, %v2339
        %v2341 = vpop.f32.mrf.mxu0
        %v2342 = vadd.f32 %v2293, %v2341
        %2343 = vmatmul.bf16.gmra.mxu0 %v1279
        %v2344 = vpop.f32.mrf.mxu0
        %v2345 = vadd.f32 %v2296, %v2344
        %v2346 = vpop.f32.mrf.mxu0
        %v2347 = vadd.f32 %v2298, %v2346
        %2348 = vmatmul.bf16.gmra.mxu0 %v1281
        %v2349 = vpop.f32.mrf.mxu0
        %v2350 = vadd.f32 %v2301, %v2349
        %v2351 = vpop.f32.mrf.mxu0
        %v2352 = vadd.f32 %v2303, %v2351
        %2353 = vmatmul.bf16.gmra.mxu0 %v1283
        %v2354 = vpop.f32.mrf.mxu0
        %v2355 = vadd.f32 %v2306, %v2354
        %v2356 = vpop.f32.mrf.mxu0
        %v2357 = vadd.f32 %v2308, %v2356
        %2358 = vmatmul.bf16.gmra.mxu0 %v1285
        %v2359 = vpop.f32.mrf.mxu0
        %v2360 = vadd.f32 %v2311, %v2359
        %v2361 = vpop.f32.mrf.mxu0
        %v2362 = vadd.f32 %v2313, %v2361
        %2363 = vmatmul.bf16.gmra.mxu0 %v1287
        %v2364 = vpop.f32.mrf.mxu0
        %v2365 = vadd.f32 %v2316, %v2364
        %v2366 = vpop.f32.mrf.mxu0
        %v2367 = vadd.f32 %v2318, %v2366
        %2368 = vmatmul.bf16.gmra.mxu0 %v1289
        %v2369 = vpop.f32.mrf.mxu0
        %v2370 = vadd.f32 %v2321, %v2369
        %v2371 = vpop.f32.mrf.mxu0
        %v2372 = vadd.f32 %v2323, %v2371
        %2373 = vdwg.mxu0
        %2374 = vmatpush.bf16.msra.mxu0 %v2227
        %2375 = vmatpush.bf16.msra.mxu0 %v2225
        %2376 = vmatpush.bf16.msra.mxu0 %v2223
        %2377 = vmatpush.bf16.msra.mxu0 %v2221
        %2378 = vmatpush.bf16.msra.mxu0 %v2219
        %2379 = vmatpush.bf16.msra.mxu0 %v2217
        %2380 = vmatpush.bf16.msra.mxu0 %v2215
        %2381 = vmatpush.bf16.msra.mxu0 %v2213
        %2382 = vmatmul.bf16.gmra.mxu0 %v1274
        %v2383 = vpop.f32.mrf.mxu0
        %v2384 = vadd.f32 %v2113, %v2383
        %v2385 = vpop.f32.mrf.mxu0
        %v2386 = vadd.f32 %v2113, %v2385
        %2387 = vmatmul.bf16.gmra.mxu0 %v1276
        %v2388 = vpop.f32.mrf.mxu0
        %v2389 = vadd.f32 %v2113, %v2388
        %v2390 = vpop.f32.mrf.mxu0
        %v2391 = vadd.f32 %v2113, %v2390
        %2392 = vmatmul.bf16.gmra.mxu0 %v1278
        %v2393 = vpop.f32.mrf.mxu0
        %v2394 = vadd.f32 %v2113, %v2393
        %v2395 = vpop.f32.mrf.mxu0
        %v2396 = vadd.f32 %v2113, %v2395
        %2397 = vmatmul.bf16.gmra.mxu0 %v1280
        %v2398 = vpop.f32.mrf.mxu0
        %v2399 = vadd.f32 %v2113, %v2398
        %v2400 = vpop.f32.mrf.mxu0
        %v2401 = vadd.f32 %v2113, %v2400
        %2402 = vmatmul.bf16.gmra.mxu0 %v1282
        %v2403 = vpop.f32.mrf.mxu0
        %v2404 = vadd.f32 %v2113, %v2403
        %v2405 = vpop.f32.mrf.mxu0
        %v2406 = vadd.f32 %v2113, %v2405
        %2407 = vmatmul.bf16.gmra.mxu0 %v1284
        %v2408 = vpop.f32.mrf.mxu0
        %v2409 = vadd.f32 %v2113, %v2408
        %v2410 = vpop.f32.mrf.mxu0
        %v2411 = vadd.f32 %v2113, %v2410
        %2412 = vmatmul.bf16.gmra.mxu0 %v1286
        %v2413 = vpop.f32.mrf.mxu0
        %v2414 = vadd.f32 %v2113, %v2413
        %v2415 = vpop.f32.mrf.mxu0
        %v2416 = vadd.f32 %v2113, %v2415
        %2417 = vmatmul.bf16.gmra.mxu0 %v1288
        %v2418 = vpop.f32.mrf.mxu0
        %v2419 = vadd.f32 %v2113, %v2418
        %v2420 = vpop.f32.mrf.mxu0
        %v2421 = vadd.f32 %v2113, %v2420
        %2422 = vdwg.mxu0
        %2423 = vmatpush.bf16.msra.mxu0 %v2243
        %2424 = vmatpush.bf16.msra.mxu0 %v2241
        %2425 = vmatpush.bf16.msra.mxu0 %v2239
        %2426 = vmatpush.bf16.msra.mxu0 %v2237
        %2427 = vmatpush.bf16.msra.mxu0 %v2235
        %2428 = vmatpush.bf16.msra.mxu0 %v2233
        %2429 = vmatpush.bf16.msra.mxu0 %v2231
        %2430 = vmatpush.bf16.msra.mxu0 %v2229
        %2431 = vmatmul.bf16.gmra.mxu0 %v1275
        %v2432 = vpop.f32.mrf.mxu0
        %v2433 = vadd.f32 %v2384, %v2432
        %v2434 = vpop.f32.mrf.mxu0
        %v2435 = vadd.f32 %v2386, %v2434
        %2436 = vmatmul.bf16.gmra.mxu0 %v1277
        %v2437 = vpop.f32.mrf.mxu0
        %v2438 = vadd.f32 %v2389, %v2437
        %v2439 = vpop.f32.mrf.mxu0
        %v2440 = vadd.f32 %v2391, %v2439
        %2441 = vmatmul.bf16.gmra.mxu0 %v1279
        %v2442 = vpop.f32.mrf.mxu0
        %v2443 = vadd.f32 %v2394, %v2442
        %v2444 = vpop.f32.mrf.mxu0
        %v2445 = vadd.f32 %v2396, %v2444
        %2446 = vmatmul.bf16.gmra.mxu0 %v1281
        %v2447 = vpop.f32.mrf.mxu0
        %v2448 = vadd.f32 %v2399, %v2447
        %v2449 = vpop.f32.mrf.mxu0
        %v2450 = vadd.f32 %v2401, %v2449
        %2451 = vmatmul.bf16.gmra.mxu0 %v1283
        %v2452 = vpop.f32.mrf.mxu0
        %v2453 = vadd.f32 %v2404, %v2452
        %v2454 = vpop.f32.mrf.mxu0
        %v2455 = vadd.f32 %v2406, %v2454
        %2456 = vmatmul.bf16.gmra.mxu0 %v1285
        %v2457 = vpop.f32.mrf.mxu0
        %v2458 = vadd.f32 %v2409, %v2457
        %v2459 = vpop.f32.mrf.mxu0
        %v2460 = vadd.f32 %v2411, %v2459
        %2461 = vmatmul.bf16.gmra.mxu0 %v1287
        %v2462 = vpop.f32.mrf.mxu0
        %v2463 = vadd.f32 %v2414, %v2462
        %v2464 = vpop.f32.mrf.mxu0
        %v2465 = vadd.f32 %v2416, %v2464
        %2466 = vmatmul.bf16.gmra.mxu0 %v1289
        %v2467 = vpop.f32.mrf.mxu0
        %v2468 = vadd.f32 %v2419, %v2467
        %v2469 = vpop.f32.mrf.mxu0
        %v2470 = vadd.f32 %v2421, %v2469
        %2471 = vdwg.mxu0
        %v2472 = vmul.f32 %v1547, 0.088388346
        %v2473 = vmul.f32 %v1645, 0.088388346
        %v2474 = vmul.f32 %v1549, 0.088388346
        %v2475 = vmul.f32 %v1647, 0.088388346
        %v2476 = vmul.f32 %v1552, 0.088388346
        %v2477 = vmul.f32 %v1650, 0.088388346
        %v2478 = vmul.f32 %v1554, 0.088388346
        %v2479 = vmul.f32 %v1652, 0.088388346
        %v2480 = vmul.f32 %v1557, 0.088388346
        %v2481 = vmul.f32 %v1655, 0.088388346
        %v2482 = vmul.f32 %v1559, 0.088388346
        %v2483 = vmul.f32 %v1657, 0.088388346
        %v2484 = vmul.f32 %v1562, 0.088388346
        %v2485 = vmul.f32 %v1660, 0.088388346
        %v2486 = vmul.f32 %v1564, 0.088388346
        %v2487 = vmul.f32 %v1662, 0.088388346
        %v2488 = vmul.f32 %v1567, 0.088388346
        %v2489 = vmul.f32 %v1665, 0.088388346
        %v2490 = vmul.f32 %v1569, 0.088388346
        %v2491 = vmul.f32 %v1667, 0.088388346
        %v2492 = vmul.f32 %v1572, 0.088388346
        %v2493 = vmul.f32 %v1670, 0.088388346
        %v2494 = vmul.f32 %v1574, 0.088388346
        %v2495 = vmul.f32 %v1672, 0.088388346
        %v2496 = vmul.f32 %v1577, 0.088388346
        %v2497 = vmul.f32 %v1675, 0.088388346
        %v2498 = vmul.f32 %v1579, 0.088388346
        %v2499 = vmul.f32 %v1677, 0.088388346
        %v2500 = vmul.f32 %v1582, 0.088388346
        %v2501 = vmul.f32 %v1680, 0.088388346
        %v2502 = vmul.f32 %v1584, 0.088388346
        %v2503 = vmul.f32 %v1682, 0.088388346
        %v2504 = vpack.c.bf16 %v2473, %v2472
        %v2505 = vpack.c.bf16 %v2475, %v2474
        %v2506 = vpack.c.bf16 %v2477, %v2476
        %v2507 = vpack.c.bf16 %v2479, %v2478
        %v2508 = vpack.c.bf16 %v2481, %v2480
        %v2509 = vpack.c.bf16 %v2483, %v2482
        %v2510 = vpack.c.bf16 %v2485, %v2484
        %v2511 = vpack.c.bf16 %v2487, %v2486
        %v2512 = vpack.c.bf16 %v2489, %v2488
        %v2513 = vpack.c.bf16 %v2491, %v2490
        %v2514 = vpack.c.bf16 %v2493, %v2492
        %v2515 = vpack.c.bf16 %v2495, %v2494
        %v2516 = vpack.c.bf16 %v2497, %v2496
        %v2517 = vpack.c.bf16 %v2499, %v2498
        %v2518 = vpack.c.bf16 %v2501, %v2500
        %v2519 = vpack.c.bf16 %v2503, %v2502
        %v2520 = vpack.c.bf16 %v2039, %v1941
        %v2521 = vpack.c.bf16 %v2041, %v1943
        %v2522 = vpack.c.bf16 %v2044, %v1946
        %v2523 = vpack.c.bf16 %v2046, %v1948
        %v2524 = vpack.c.bf16 %v2049, %v1951
        %v2525 = vpack.c.bf16 %v2051, %v1953
        %v2526 = vpack.c.bf16 %v2054, %v1956
        %v2527 = vpack.c.bf16 %v2056, %v1958
        %v2528 = vpack.c.bf16 %v2059, %v1961
        %v2529 = vpack.c.bf16 %v2061, %v1963
        %v2530 = vpack.c.bf16 %v2064, %v1966
        %v2531 = vpack.c.bf16 %v2066, %v1968
        %v2532 = vpack.c.bf16 %v2069, %v1971
        %v2533 = vpack.c.bf16 %v2071, %v1973
        %v2534 = vpack.c.bf16 %v2074, %v1976
        %v2535 = vpack.c.bf16 %v2076, %v1978
        %v2536 = vpack.c.bf16 %v2433, %v2335
        %v2537 = vpack.c.bf16 %v2435, %v2337
        %v2538 = vpack.c.bf16 %v2438, %v2340
        %v2539 = vpack.c.bf16 %v2440, %v2342
        %v2540 = vpack.c.bf16 %v2443, %v2345
        %v2541 = vpack.c.bf16 %v2445, %v2347
        %v2542 = vpack.c.bf16 %v2448, %v2350
        %v2543 = vpack.c.bf16 %v2450, %v2352
        %v2544 = vpack.c.bf16 %v2453, %v2355
        %v2545 = vpack.c.bf16 %v2455, %v2357
        %v2546 = vpack.c.bf16 %v2458, %v2360
        %v2547 = vpack.c.bf16 %v2460, %v2362
        %v2548 = vpack.c.bf16 %v2463, %v2365
        %v2549 = vpack.c.bf16 %v2465, %v2367
        %v2550 = vpack.c.bf16 %v2468, %v2370
        %v2551 = vpack.c.bf16 %v2470, %v2372
        %v2568 = vunpack.c.l.b16 %v2504
        %v2569 = vunpack.c.l.b16 %v2505
        %v2570 = vunpack.c.l.b16 %v2506
        %v2571 = vunpack.c.l.b16 %v2507
        %v2572 = vunpack.c.l.b16 %v2508
        %v2573 = vunpack.c.l.b16 %v2509
        %v2574 = vunpack.c.l.b16 %v2510
        %v2575 = vunpack.c.l.b16 %v2511
        %v2576 = vunpack.c.l.b16 %v2512
        %v2577 = vunpack.c.l.b16 %v2513
        %v2578 = vunpack.c.l.b16 %v2514
        %v2579 = vunpack.c.l.b16 %v2515
        %v2580 = vunpack.c.l.b16 %v2516
        %v2581 = vunpack.c.l.b16 %v2517
        %v2582 = vunpack.c.l.b16 %v2518
        %v2583 = vunpack.c.l.b16 %v2519
        %v2584 = vpack.c.b16 %v2569, %v2568
        %v2585 = vpack.c.b16 %v2571, %v2570
        %v2586 = vpack.c.b16 %v2573, %v2572
        %v2587 = vpack.c.b16 %v2575, %v2574
        %v2588 = vpack.c.b16 %v2577, %v2576
        %v2589 = vpack.c.b16 %v2579, %v2578
        %v2590 = vpack.c.b16 %v2581, %v2580
        %v2591 = vpack.c.b16 %v2583, %v2582
        %v2616 = vunpack.c.l.b16 %v2520
        %v2617 = vunpack.c.l.b16 %v2521
        %v2618 = vunpack.c.l.b16 %v2522
        %v2619 = vunpack.c.l.b16 %v2523
        %v2620 = vunpack.c.l.b16 %v2524
        %v2621 = vunpack.c.l.b16 %v2525
        %v2622 = vunpack.c.l.b16 %v2526
        %v2623 = vunpack.c.l.b16 %v2527
        %v2624 = vunpack.c.l.b16 %v2528
        %v2625 = vunpack.c.l.b16 %v2529
        %v2626 = vunpack.c.l.b16 %v2530
        %v2627 = vunpack.c.l.b16 %v2531
        %v2628 = vunpack.c.l.b16 %v2532
        %v2629 = vunpack.c.l.b16 %v2533
        %v2630 = vunpack.c.l.b16 %v2534
        %v2631 = vunpack.c.l.b16 %v2535
        %v2632 = vpack.c.b16 %v2617, %v2616
        %v2633 = vpack.c.b16 %v2619, %v2618
        %v2634 = vpack.c.b16 %v2621, %v2620
        %v2635 = vpack.c.b16 %v2623, %v2622
        %v2636 = vpack.c.b16 %v2625, %v2624
        %v2637 = vpack.c.b16 %v2627, %v2626
        %v2638 = vpack.c.b16 %v2629, %v2628
        %v2639 = vpack.c.b16 %v2631, %v2630
        %2648 = vmatpush.bf16.xpose.msra.mxu0 %v2639
        %2649 = vmatpush.bf16.xpose.msra.mxu0 %v2638
        %2650 = vmatpush.bf16.xpose.msra.mxu0 %v2637
        %2651 = vmatpush.bf16.xpose.msra.mxu0 %v2636
        %2652 = vmatpush.bf16.xpose.msra.mxu0 %v2635
        %2653 = vmatpush.bf16.xpose.msra.mxu0 %v2634
        %2654 = vmatpush.bf16.xpose.msra.mxu0 %v2633
        %2655 = vmatpush.bf16.xpose.msra.mxu0 %v2632
        %2656 = vmatmul.bf16.gmra.mxu0 %v2584
        %v2657 = vpop.f32.mrf.mxu0
        %v2658 = vadd.f32 0.0, %v2657
        %v2659 = vpop.f32.mrf.mxu0
        %v2660 = vadd.f32 0.0, %v2659
        %2661 = vmatmul.bf16.gmra.mxu0 %v2585
        %v2662 = vpop.f32.mrf.mxu0
        %v2663 = vadd.f32 0.0, %v2662
        %v2664 = vpop.f32.mrf.mxu0
        %v2665 = vadd.f32 0.0, %v2664
        %2666 = vmatmul.bf16.gmra.mxu0 %v2586
        %v2667 = vpop.f32.mrf.mxu0
        %v2668 = vadd.f32 0.0, %v2667
        %v2669 = vpop.f32.mrf.mxu0
        %v2670 = vadd.f32 0.0, %v2669
        %2671 = vmatmul.bf16.gmra.mxu0 %v2587
        %v2672 = vpop.f32.mrf.mxu0
        %v2673 = vadd.f32 0.0, %v2672
        %v2674 = vpop.f32.mrf.mxu0
        %v2675 = vadd.f32 0.0, %v2674
        %2676 = vmatmul.bf16.gmra.mxu0 %v2588
        %v2677 = vpop.f32.mrf.mxu0
        %v2678 = vadd.f32 0.0, %v2677
        %v2679 = vpop.f32.mrf.mxu0
        %v2680 = vadd.f32 0.0, %v2679
        %2681 = vmatmul.bf16.gmra.mxu0 %v2589
        %v2682 = vpop.f32.mrf.mxu0
        %v2683 = vadd.f32 0.0, %v2682
        %v2684 = vpop.f32.mrf.mxu0
        %v2685 = vadd.f32 0.0, %v2684
        %2686 = vmatmul.bf16.gmra.mxu0 %v2590
        %v2687 = vpop.f32.mrf.mxu0
        %v2688 = vadd.f32 0.0, %v2687
        %v2689 = vpop.f32.mrf.mxu0
        %v2690 = vadd.f32 0.0, %v2689
        %2691 = vmatmul.bf16.gmra.mxu0 %v2591
        %v2692 = vpop.f32.mrf.mxu0
        %v2693 = vadd.f32 0.0, %v2692
        %v2694 = vpop.f32.mrf.mxu0
        %v2695 = vadd.f32 0.0, %v2694
        %2696 = vdwg.mxu0
        %2697 = vmax.xlane.f32.xlu0 %v2658
        %v2698 = vpop.xlane.xlu0 %2697
        %2699 = vmax.xlane.f32.xlu0 %v2660
        %v2700 = vpop.xlane.xlu0 %2699
        %2701 = vmax.xlane.f32.xlu0 %v2663
        %v2702 = vpop.xlane.xlu0 %2701
        %2703 = vmax.xlane.f32.xlu0 %v2665
        %v2704 = vpop.xlane.xlu0 %2703
        %2705 = vmax.xlane.f32.xlu0 %v2668
        %v2706 = vpop.xlane.xlu0 %2705
        %2707 = vmax.xlane.f32.xlu0 %v2670
        %v2708 = vpop.xlane.xlu0 %2707
        %2709 = vmax.xlane.f32.xlu0 %v2673
        %v2710 = vpop.xlane.xlu0 %2709
        %2711 = vmax.xlane.f32.xlu0 %v2675
        %v2712 = vpop.xlane.xlu0 %2711
        %2713 = vmax.xlane.f32.xlu0 %v2678
        %v2714 = vpop.xlane.xlu0 %2713
        %2715 = vmax.xlane.f32.xlu0 %v2680
        %v2716 = vpop.xlane.xlu0 %2715
        %2717 = vmax.xlane.f32.xlu0 %v2683
        %v2718 = vpop.xlane.xlu0 %2717
        %2719 = vmax.xlane.f32.xlu0 %v2685
        %v2720 = vpop.xlane.xlu0 %2719
        %2721 = vmax.xlane.f32.xlu0 %v2688
        %v2722 = vpop.xlane.xlu0 %2721
        %2723 = vmax.xlane.f32.xlu0 %v2690
        %v2724 = vpop.xlane.xlu0 %2723
        %2725 = vmax.xlane.f32.xlu0 %v2693
        %v2726 = vpop.xlane.xlu0 %2725
        %2727 = vmax.xlane.f32.xlu0 %v2695
        %v2728 = vpop.xlane.xlu0 %2727
        %v2729 = vsub.f32 %v2658, %v2698
        %v2730 = vsub.f32 %v2660, %v2700
        %v2731 = vsub.f32 %v2663, %v2702
        %v2732 = vsub.f32 %v2665, %v2704
        %v2733 = vsub.f32 %v2668, %v2706
        %v2734 = vsub.f32 %v2670, %v2708
        %v2735 = vsub.f32 %v2673, %v2710
        %v2736 = vsub.f32 %v2675, %v2712
        %v2737 = vsub.f32 %v2678, %v2714
        %v2738 = vsub.f32 %v2680, %v2716
        %v2739 = vsub.f32 %v2683, %v2718
        %v2740 = vsub.f32 %v2685, %v2720
        %v2741 = vsub.f32 %v2688, %v2722
        %v2742 = vsub.f32 %v2690, %v2724
        %v2743 = vsub.f32 %v2693, %v2726
        %v2744 = vsub.f32 %v2695, %v2728
        %v2745 = vmul.f32 %v2729, 1.442695
        %v2746 = vpow.pop %v2745
        %v2747 = vmul.f32 %v2730, 1.442695
        %v2748 = vpow.pop %v2747
        %v2749 = vmul.f32 %v2731, 1.442695
        %v2750 = vpow.pop %v2749
        %v2751 = vmul.f32 %v2732, 1.442695
        %v2752 = vpow.pop %v2751
        %v2753 = vmul.f32 %v2733, 1.442695
        %v2754 = vpow.pop %v2753
        %v2755 = vmul.f32 %v2734, 1.442695
        %v2756 = vpow.pop %v2755
        %v2757 = vmul.f32 %v2735, 1.442695
        %v2758 = vpow.pop %v2757
        %v2759 = vmul.f32 %v2736, 1.442695
        %v2760 = vpow.pop %v2759
        %v2761 = vmul.f32 %v2737, 1.442695
        %v2762 = vpow.pop %v2761
        %v2763 = vmul.f32 %v2738, 1.442695
        %v2764 = vpow.pop %v2763
        %v2765 = vmul.f32 %v2739, 1.442695
        %v2766 = vpow.pop %v2765
        %v2767 = vmul.f32 %v2740, 1.442695
        %v2768 = vpow.pop %v2767
        %v2769 = vmul.f32 %v2741, 1.442695
        %v2770 = vpow.pop %v2769
        %v2771 = vmul.f32 %v2742, 1.442695
        %v2772 = vpow.pop %v2771
        %v2773 = vmul.f32 %v2743, 1.442695
        %v2774 = vpow.pop %v2773
        %v2775 = vmul.f32 %v2744, 1.442695
        %v2776 = vpow.pop %v2775
        %2777 = vadd.xlane.f32.xlu0 %v2746
        %v2778 = vpop.xlane.xlu0 %2777
        %2779 = vadd.xlane.f32.xlu0 %v2748
        %v2780 = vpop.xlane.xlu0 %2779
        %2781 = vadd.xlane.f32.xlu0 %v2750
        %v2782 = vpop.xlane.xlu0 %2781
        %2783 = vadd.xlane.f32.xlu0 %v2752
        %v2784 = vpop.xlane.xlu0 %2783
        %2785 = vadd.xlane.f32.xlu0 %v2754
        %v2786 = vpop.xlane.xlu0 %2785
        %2787 = vadd.xlane.f32.xlu0 %v2756
        %v2788 = vpop.xlane.xlu0 %2787
        %2789 = vadd.xlane.f32.xlu0 %v2758
        %v2790 = vpop.xlane.xlu0 %2789
        %2791 = vadd.xlane.f32.xlu0 %v2760
        %v2792 = vpop.xlane.xlu0 %2791
        %2793 = vadd.xlane.f32.xlu0 %v2762
        %v2794 = vpop.xlane.xlu0 %2793
        %2795 = vadd.xlane.f32.xlu0 %v2764
        %v2796 = vpop.xlane.xlu0 %2795
        %2797 = vadd.xlane.f32.xlu0 %v2766
        %v2798 = vpop.xlane.xlu0 %2797
        %2799 = vadd.xlane.f32.xlu0 %v2768
        %v2800 = vpop.xlane.xlu0 %2799
        %2801 = vadd.xlane.f32.xlu0 %v2770
        %v2802 = vpop.xlane.xlu0 %2801
        %2803 = vadd.xlane.f32.xlu0 %v2772
        %v2804 = vpop.xlane.xlu0 %2803
        %2805 = vadd.xlane.f32.xlu0 %v2774
        %v2806 = vpop.xlane.xlu0 %2805
        %2807 = vadd.xlane.f32.xlu0 %v2776
        %v2808 = vpop.xlane.xlu0 %2807
        %v2809 = vrcp.pop %v2778
        %v2810 = vrcp.pop %v2780
        %v2811 = vrcp.pop %v2782
        %v2812 = vrcp.pop %v2784
        %v2813 = vrcp.pop %v2786
        %v2814 = vrcp.pop %v2788
        %v2815 = vrcp.pop %v2790
        %v2816 = vrcp.pop %v2792
        %v2817 = vrcp.pop %v2794
        %v2818 = vrcp.pop %v2796
        %v2819 = vrcp.pop %v2798
        %v2820 = vrcp.pop %v2800
        %v2821 = vrcp.pop %v2802
        %v2822 = vrcp.pop %v2804
        %v2823 = vrcp.pop %v2806
        %v2824 = vrcp.pop %v2808
        %v2825 = vmul.f32 %v2746, %v2809
        %v2826 = vmul.f32 %v2748, %v2810
        %v2827 = vmul.f32 %v2750, %v2811
        %v2828 = vmul.f32 %v2752, %v2812
        %v2829 = vmul.f32 %v2754, %v2813
        %v2830 = vmul.f32 %v2756, %v2814
        %v2831 = vmul.f32 %v2758, %v2815
        %v2832 = vmul.f32 %v2760, %v2816
        %v2833 = vmul.f32 %v2762, %v2817
        %v2834 = vmul.f32 %v2764, %v2818
        %v2835 = vmul.f32 %v2766, %v2819
        %v2836 = vmul.f32 %v2768, %v2820
        %v2837 = vmul.f32 %v2770, %v2821
        %v2838 = vmul.f32 %v2772, %v2822
        %v2839 = vmul.f32 %v2774, %v2823
        %v2840 = vmul.f32 %v2776, %v2824
        %v2841 = vpack.c.bf16 %v2826, %v2825
        %v2842 = vpack.c.bf16 %v2828, %v2827
        %v2843 = vpack.c.bf16 %v2830, %v2829
        %v2844 = vpack.c.bf16 %v2832, %v2831
        %v2845 = vpack.c.bf16 %v2834, %v2833
        %v2846 = vpack.c.bf16 %v2836, %v2835
        %v2847 = vpack.c.bf16 %v2838, %v2837
        %v2848 = vpack.c.bf16 %v2840, %v2839
        %v2865 = vunpack.c.l.b16 %v2536
        %v2866 = vunpack.c.l.b16 %v2537
        %v2867 = vunpack.c.l.b16 %v2538
        %v2868 = vunpack.c.l.b16 %v2539
        %v2869 = vunpack.c.l.b16 %v2540
        %v2870 = vunpack.c.l.b16 %v2541
        %v2871 = vunpack.c.l.b16 %v2542
        %v2872 = vunpack.c.l.b16 %v2543
        %v2873 = vunpack.c.l.b16 %v2544
        %v2874 = vunpack.c.l.b16 %v2545
        %v2875 = vunpack.c.l.b16 %v2546
        %v2876 = vunpack.c.l.b16 %v2547
        %v2877 = vunpack.c.l.b16 %v2548
        %v2878 = vunpack.c.l.b16 %v2549
        %v2879 = vunpack.c.l.b16 %v2550
        %v2880 = vunpack.c.l.b16 %v2551
        %v2881 = vpack.c.b16 %v2866, %v2865
        %v2882 = vpack.c.b16 %v2868, %v2867
        %v2883 = vpack.c.b16 %v2870, %v2869
        %v2884 = vpack.c.b16 %v2872, %v2871
        %v2885 = vpack.c.b16 %v2874, %v2873
        %v2886 = vpack.c.b16 %v2876, %v2875
        %v2887 = vpack.c.b16 %v2878, %v2877
        %v2888 = vpack.c.b16 %v2880, %v2879
        %2897 = vmatpush.bf16.msra.mxu0 %v2888
        %2898 = vmatpush.bf16.msra.mxu0 %v2887
        %2899 = vmatpush.bf16.msra.mxu0 %v2886
        %2900 = vmatpush.bf16.msra.mxu0 %v2885
        %2901 = vmatpush.bf16.msra.mxu0 %v2884
        %2902 = vmatpush.bf16.msra.mxu0 %v2883
        %2903 = vmatpush.bf16.msra.mxu0 %v2882
        %2904 = vmatpush.bf16.msra.mxu0 %v2881
        %2905 = vmatmul.bf16.gmra.mxu0 %v2841
        %v2906 = vpop.f32.mrf.mxu0
        %v2907 = vadd.f32 0.0, %v2906
        %v2908 = vpop.f32.mrf.mxu0
        %v2909 = vadd.f32 0.0, %v2908
        %2910 = vmatmul.bf16.gmra.mxu0 %v2842
        %v2911 = vpop.f32.mrf.mxu0
        %v2912 = vadd.f32 0.0, %v2911
        %v2913 = vpop.f32.mrf.mxu0
        %v2914 = vadd.f32 0.0, %v2913
        %2915 = vmatmul.bf16.gmra.mxu0 %v2843
        %v2916 = vpop.f32.mrf.mxu0
        %v2917 = vadd.f32 0.0, %v2916
        %v2918 = vpop.f32.mrf.mxu0
        %v2919 = vadd.f32 0.0, %v2918
        %2920 = vmatmul.bf16.gmra.mxu0 %v2844
        %v2921 = vpop.f32.mrf.mxu0
        %v2922 = vadd.f32 0.0, %v2921
        %v2923 = vpop.f32.mrf.mxu0
        %v2924 = vadd.f32 0.0, %v2923
        %2925 = vmatmul.bf16.gmra.mxu0 %v2845
        %v2926 = vpop.f32.mrf.mxu0
        %v2927 = vadd.f32 0.0, %v2926
        %v2928 = vpop.f32.mrf.mxu0
        %v2929 = vadd.f32 0.0, %v2928
        %2930 = vmatmul.bf16.gmra.mxu0 %v2846
        %v2931 = vpop.f32.mrf.mxu0
        %v2932 = vadd.f32 0.0, %v2931
        %v2933 = vpop.f32.mrf.mxu0
        %v2934 = vadd.f32 0.0, %v2933
        %2935 = vmatmul.bf16.gmra.mxu0 %v2847
        %v2936 = vpop.f32.mrf.mxu0
        %v2937 = vadd.f32 0.0, %v2936
        %v2938 = vpop.f32.mrf.mxu0
        %v2939 = vadd.f32 0.0, %v2938
        %2940 = vmatmul.bf16.gmra.mxu0 %v2848
        %v2941 = vpop.f32.mrf.mxu0
        %v2942 = vadd.f32 0.0, %v2941
        %v2943 = vpop.f32.mrf.mxu0
        %v2944 = vadd.f32 0.0, %v2943
        %2945 = vdwg.mxu0
        %v2946 = vpack.c.bf16 %v2907, %v2907
        %v2947 = vpack.c.bf16 %v2909, %v2909
        %v2948 = vpack.c.bf16 %v2912, %v2912
        %v2949 = vpack.c.bf16 %v2914, %v2914
        %v2950 = vpack.c.bf16 %v2917, %v2917
        %v2951 = vpack.c.bf16 %v2919, %v2919
        %v2952 = vpack.c.bf16 %v2922, %v2922
        %v2953 = vpack.c.bf16 %v2924, %v2924
        %v2954 = vpack.c.bf16 %v2927, %v2927
        %v2955 = vpack.c.bf16 %v2929, %v2929
        %v2956 = vpack.c.bf16 %v2932, %v2932
        %v2957 = vpack.c.bf16 %v2934, %v2934
        %v2958 = vpack.c.bf16 %v2937, %v2937
        %v2959 = vpack.c.bf16 %v2939, %v2939
        %v2960 = vpack.c.bf16 %v2942, %v2942
        %v2961 = vpack.c.bf16 %v2944, %v2944
        %v2962 = vunpack.c.h.b16 %v2504
        %v2963 = vunpack.c.h.b16 %v2505
        %v2964 = vunpack.c.h.b16 %v2506
        %v2965 = vunpack.c.h.b16 %v2507
        %v2966 = vunpack.c.h.b16 %v2508
        %v2967 = vunpack.c.h.b16 %v2509
        %v2968 = vunpack.c.h.b16 %v2510
        %v2969 = vunpack.c.h.b16 %v2511
        %v2970 = vunpack.c.h.b16 %v2512
        %v2971 = vunpack.c.h.b16 %v2513
        %v2972 = vunpack.c.h.b16 %v2514
        %v2973 = vunpack.c.h.b16 %v2515
        %v2974 = vunpack.c.h.b16 %v2516
        %v2975 = vunpack.c.h.b16 %v2517
        %v2976 = vunpack.c.h.b16 %v2518
        %v2977 = vunpack.c.h.b16 %v2519
        %v2978 = vpack.c.b16 %v2963, %v2962
        %v2979 = vpack.c.b16 %v2965, %v2964
        %v2980 = vpack.c.b16 %v2967, %v2966
        %v2981 = vpack.c.b16 %v2969, %v2968
        %v2982 = vpack.c.b16 %v2971, %v2970
        %v2983 = vpack.c.b16 %v2973, %v2972
        %v2984 = vpack.c.b16 %v2975, %v2974
        %v2985 = vpack.c.b16 %v2977, %v2976
        %v2994 = vunpack.c.h.b16 %v2520
        %v2995 = vunpack.c.h.b16 %v2521
        %v2996 = vunpack.c.h.b16 %v2522
        %v2997 = vunpack.c.h.b16 %v2523
        %v2998 = vunpack.c.h.b16 %v2524
        %v2999 = vunpack.c.h.b16 %v2525
        %v3000 = vunpack.c.h.b16 %v2526
        %v3001 = vunpack.c.h.b16 %v2527
        %v3002 = vunpack.c.h.b16 %v2528
        %v3003 = vunpack.c.h.b16 %v2529
        %v3004 = vunpack.c.h.b16 %v2530
        %v3005 = vunpack.c.h.b16 %v2531
        %v3006 = vunpack.c.h.b16 %v2532
        %v3007 = vunpack.c.h.b16 %v2533
        %v3008 = vunpack.c.h.b16 %v2534
        %v3009 = vunpack.c.h.b16 %v2535
        %v3010 = vpack.c.b16 %v2995, %v2994
        %v3011 = vpack.c.b16 %v2997, %v2996
        %v3012 = vpack.c.b16 %v2999, %v2998
        %v3013 = vpack.c.b16 %v3001, %v3000
        %v3014 = vpack.c.b16 %v3003, %v3002
        %v3015 = vpack.c.b16 %v3005, %v3004
        %v3016 = vpack.c.b16 %v3007, %v3006
        %v3017 = vpack.c.b16 %v3009, %v3008
        %3026 = vmatpush.bf16.xpose.msra.mxu0 %v3017
        %3027 = vmatpush.bf16.xpose.msra.mxu0 %v3016
        %3028 = vmatpush.bf16.xpose.msra.mxu0 %v3015
        %3029 = vmatpush.bf16.xpose.msra.mxu0 %v3014
        %3030 = vmatpush.bf16.xpose.msra.mxu0 %v3013
        %3031 = vmatpush.bf16.xpose.msra.mxu0 %v3012
        %3032 = vmatpush.bf16.xpose.msra.mxu0 %v3011
        %3033 = vmatpush.bf16.xpose.msra.mxu0 %v3010
        %3034 = vmatmul.bf16.gmra.mxu0 %v2978
        %v3035 = vpop.f32.mrf.mxu0
        %v3036 = vadd.f32 0.0, %v3035
        %v3037 = vpop.f32.mrf.mxu0
        %v3038 = vadd.f32 0.0, %v3037
        %3039 = vmatmul.bf16.gmra.mxu0 %v2979
        %v3040 = vpop.f32.mrf.mxu0
        %v3041 = vadd.f32 0.0, %v3040
        %v3042 = vpop.f32.mrf.mxu0
        %v3043 = vadd.f32 0.0, %v3042
        %3044 = vmatmul.bf16.gmra.mxu0 %v2980
        %v3045 = vpop.f32.mrf.mxu0
        %v3046 = vadd.f32 0.0, %v3045
        %v3047 = vpop.f32.mrf.mxu0
        %v3048 = vadd.f32 0.0, %v3047
        %3049 = vmatmul.bf16.gmra.mxu0 %v2981
        %v3050 = vpop.f32.mrf.mxu0
        %v3051 = vadd.f32 0.0, %v3050
        %v3052 = vpop.f32.mrf.mxu0
        %v3053 = vadd.f32 0.0, %v3052
        %3054 = vmatmul.bf16.gmra.mxu0 %v2982
        %v3055 = vpop.f32.mrf.mxu0
        %v3056 = vadd.f32 0.0, %v3055
        %v3057 = vpop.f32.mrf.mxu0
        %v3058 = vadd.f32 0.0, %v3057
        %3059 = vmatmul.bf16.gmra.mxu0 %v2983
        %v3060 = vpop.f32.mrf.mxu0
        %v3061 = vadd.f32 0.0, %v3060
        %v3062 = vpop.f32.mrf.mxu0
        %v3063 = vadd.f32 0.0, %v3062
        %3064 = vmatmul.bf16.gmra.mxu0 %v2984
        %v3065 = vpop.f32.mrf.mxu0
        %v3066 = vadd.f32 0.0, %v3065
        %v3067 = vpop.f32.mrf.mxu0
        %v3068 = vadd.f32 0.0, %v3067
        %3069 = vmatmul.bf16.gmra.mxu0 %v2985
        %v3070 = vpop.f32.mrf.mxu0
        %v3071 = vadd.f32 0.0, %v3070
        %v3072 = vpop.f32.mrf.mxu0
        %v3073 = vadd.f32 0.0, %v3072
        %3074 = vdwg.mxu0
        %3075 = vmax.xlane.f32.xlu0 %v3036
        %v3076 = vpop.xlane.xlu0 %3075
        %3077 = vmax.xlane.f32.xlu0 %v3038
        %v3078 = vpop.xlane.xlu0 %3077
        %3079 = vmax.xlane.f32.xlu0 %v3041
        %v3080 = vpop.xlane.xlu0 %3079
        %3081 = vmax.xlane.f32.xlu0 %v3043
        %v3082 = vpop.xlane.xlu0 %3081
        %3083 = vmax.xlane.f32.xlu0 %v3046
        %v3084 = vpop.xlane.xlu0 %3083
        %3085 = vmax.xlane.f32.xlu0 %v3048
        %v3086 = vpop.xlane.xlu0 %3085
        %3087 = vmax.xlane.f32.xlu0 %v3051
        %v3088 = vpop.xlane.xlu0 %3087
        %3089 = vmax.xlane.f32.xlu0 %v3053
        %v3090 = vpop.xlane.xlu0 %3089
        %3091 = vmax.xlane.f32.xlu0 %v3056
        %v3092 = vpop.xlane.xlu0 %3091
        %3093 = vmax.xlane.f32.xlu0 %v3058
        %v3094 = vpop.xlane.xlu0 %3093
        %3095 = vmax.xlane.f32.xlu0 %v3061
        %v3096 = vpop.xlane.xlu0 %3095
        %3097 = vmax.xlane.f32.xlu0 %v3063
        %v3098 = vpop.xlane.xlu0 %3097
        %3099 = vmax.xlane.f32.xlu0 %v3066
        %v3100 = vpop.xlane.xlu0 %3099
        %3101 = vmax.xlane.f32.xlu0 %v3068
        %v3102 = vpop.xlane.xlu0 %3101
        %3103 = vmax.xlane.f32.xlu0 %v3071
        %v3104 = vpop.xlane.xlu0 %3103
        %3105 = vmax.xlane.f32.xlu0 %v3073
        %v3106 = vpop.xlane.xlu0 %3105
        %v3107 = vsub.f32 %v3036, %v3076
        %v3108 = vsub.f32 %v3038, %v3078
        %v3109 = vsub.f32 %v3041, %v3080
        %v3110 = vsub.f32 %v3043, %v3082
        %v3111 = vsub.f32 %v3046, %v3084
        %v3112 = vsub.f32 %v3048, %v3086
        %v3113 = vsub.f32 %v3051, %v3088
        %v3114 = vsub.f32 %v3053, %v3090
        %v3115 = vsub.f32 %v3056, %v3092
        %v3116 = vsub.f32 %v3058, %v3094
        %v3117 = vsub.f32 %v3061, %v3096
        %v3118 = vsub.f32 %v3063, %v3098
        %v3119 = vsub.f32 %v3066, %v3100
        %v3120 = vsub.f32 %v3068, %v3102
        %v3121 = vsub.f32 %v3071, %v3104
        %v3122 = vsub.f32 %v3073, %v3106
        %v3123 = vmul.f32 %v3107, 1.442695
        %v3124 = vpow.pop %v3123
        %v3125 = vmul.f32 %v3108, 1.442695
        %v3126 = vpow.pop %v3125
        %v3127 = vmul.f32 %v3109, 1.442695
        %v3128 = vpow.pop %v3127
        %v3129 = vmul.f32 %v3110, 1.442695
        %v3130 = vpow.pop %v3129
        %v3131 = vmul.f32 %v3111, 1.442695
        %v3132 = vpow.pop %v3131
        %v3133 = vmul.f32 %v3112, 1.442695
        %v3134 = vpow.pop %v3133
        %v3135 = vmul.f32 %v3113, 1.442695
        %v3136 = vpow.pop %v3135
        %v3137 = vmul.f32 %v3114, 1.442695
        %v3138 = vpow.pop %v3137
        %v3139 = vmul.f32 %v3115, 1.442695
        %v3140 = vpow.pop %v3139
        %v3141 = vmul.f32 %v3116, 1.442695
        %v3142 = vpow.pop %v3141
        %v3143 = vmul.f32 %v3117, 1.442695
        %v3144 = vpow.pop %v3143
        %v3145 = vmul.f32 %v3118, 1.442695
        %v3146 = vpow.pop %v3145
        %v3147 = vmul.f32 %v3119, 1.442695
        %v3148 = vpow.pop %v3147
        %v3149 = vmul.f32 %v3120, 1.442695
        %v3150 = vpow.pop %v3149
        %v3151 = vmul.f32 %v3121, 1.442695
        %v3152 = vpow.pop %v3151
        %v3153 = vmul.f32 %v3122, 1.442695
        %v3154 = vpow.pop %v3153
        %3155 = vadd.xlane.f32.xlu0 %v3124
        %v3156 = vpop.xlane.xlu0 %3155
        %3157 = vadd.xlane.f32.xlu0 %v3126
        %v3158 = vpop.xlane.xlu0 %3157
        %3159 = vadd.xlane.f32.xlu0 %v3128
        %v3160 = vpop.xlane.xlu0 %3159
        %3161 = vadd.xlane.f32.xlu0 %v3130
        %v3162 = vpop.xlane.xlu0 %3161
        %3163 = vadd.xlane.f32.xlu0 %v3132
        %v3164 = vpop.xlane.xlu0 %3163
        %3165 = vadd.xlane.f32.xlu0 %v3134
        %v3166 = vpop.xlane.xlu0 %3165
        %3167 = vadd.xlane.f32.xlu0 %v3136
        %v3168 = vpop.xlane.xlu0 %3167
        %3169 = vadd.xlane.f32.xlu0 %v3138
        %v3170 = vpop.xlane.xlu0 %3169
        %3171 = vadd.xlane.f32.xlu0 %v3140
        %v3172 = vpop.xlane.xlu0 %3171
        %3173 = vadd.xlane.f32.xlu0 %v3142
        %v3174 = vpop.xlane.xlu0 %3173
        %3175 = vadd.xlane.f32.xlu0 %v3144
        %v3176 = vpop.xlane.xlu0 %3175
        %3177 = vadd.xlane.f32.xlu0 %v3146
        %v3178 = vpop.xlane.xlu0 %3177
        %3179 = vadd.xlane.f32.xlu0 %v3148
        %v3180 = vpop.xlane.xlu0 %3179
        %3181 = vadd.xlane.f32.xlu0 %v3150
        %v3182 = vpop.xlane.xlu0 %3181
        %3183 = vadd.xlane.f32.xlu0 %v3152
        %v3184 = vpop.xlane.xlu0 %3183
        %3185 = vadd.xlane.f32.xlu0 %v3154
        %v3186 = vpop.xlane.xlu0 %3185
        %v3187 = vrcp.pop %v3156
        %v3188 = vrcp.pop %v3158
        %v3189 = vrcp.pop %v3160
        %v3190 = vrcp.pop %v3162
        %v3191 = vrcp.pop %v3164
        %v3192 = vrcp.pop %v3166
        %v3193 = vrcp.pop %v3168
        %v3194 = vrcp.pop %v3170
        %v3195 = vrcp.pop %v3172
        %v3196 = vrcp.pop %v3174
        %v3197 = vrcp.pop %v3176
        %v3198 = vrcp.pop %v3178
        %v3199 = vrcp.pop %v3180
        %v3200 = vrcp.pop %v3182
        %v3201 = vrcp.pop %v3184
        %v3202 = vrcp.pop %v3186
        %v3203 = vmul.f32 %v3124, %v3187
        %v3204 = vmul.f32 %v3126, %v3188
        %v3205 = vmul.f32 %v3128, %v3189
        %v3206 = vmul.f32 %v3130, %v3190
        %v3207 = vmul.f32 %v3132, %v3191
        %v3208 = vmul.f32 %v3134, %v3192
        %v3209 = vmul.f32 %v3136, %v3193
        %v3210 = vmul.f32 %v3138, %v3194
        %v3211 = vmul.f32 %v3140, %v3195
        %v3212 = vmul.f32 %v3142, %v3196
        %v3213 = vmul.f32 %v3144, %v3197
        %v3214 = vmul.f32 %v3146, %v3198
        %v3215 = vmul.f32 %v3148, %v3199
        %v3216 = vmul.f32 %v3150, %v3200
        %v3217 = vmul.f32 %v3152, %v3201
        %v3218 = vmul.f32 %v3154, %v3202
        %v3219 = vpack.c.bf16 %v3204, %v3203
        %v3220 = vpack.c.bf16 %v3206, %v3205
        %v3221 = vpack.c.bf16 %v3208, %v3207
        %v3222 = vpack.c.bf16 %v3210, %v3209
        %v3223 = vpack.c.bf16 %v3212, %v3211
        %v3224 = vpack.c.bf16 %v3214, %v3213
        %v3225 = vpack.c.bf16 %v3216, %v3215
        %v3226 = vpack.c.bf16 %v3218, %v3217
        %v3227 = vunpack.c.h.b16 %v2536
        %v3228 = vunpack.c.h.b16 %v2537
        %v3229 = vunpack.c.h.b16 %v2538
        %v3230 = vunpack.c.h.b16 %v2539
        %v3231 = vunpack.c.h.b16 %v2540
        %v3232 = vunpack.c.h.b16 %v2541
        %v3233 = vunpack.c.h.b16 %v2542
        %v3234 = vunpack.c.h.b16 %v2543
        %v3235 = vunpack.c.h.b16 %v2544
        %v3236 = vunpack.c.h.b16 %v2545
        %v3237 = vunpack.c.h.b16 %v2546
        %v3238 = vunpack.c.h.b16 %v2547
        %v3239 = vunpack.c.h.b16 %v2548
        %v3240 = vunpack.c.h.b16 %v2549
        %v3241 = vunpack.c.h.b16 %v2550
        %v3242 = vunpack.c.h.b16 %v2551
        %v3243 = vpack.c.b16 %v3228, %v3227
        %v3244 = vpack.c.b16 %v3230, %v3229
        %v3245 = vpack.c.b16 %v3232, %v3231
        %v3246 = vpack.c.b16 %v3234, %v3233
        %v3247 = vpack.c.b16 %v3236, %v3235
        %v3248 = vpack.c.b16 %v3238, %v3237
        %v3249 = vpack.c.b16 %v3240, %v3239
        %v3250 = vpack.c.b16 %v3242, %v3241
        %3259 = vmatpush.bf16.msra.mxu0 %v3250
        %3260 = vmatpush.bf16.msra.mxu0 %v3249
        %3261 = vmatpush.bf16.msra.mxu0 %v3248
        %3262 = vmatpush.bf16.msra.mxu0 %v3247
        %3263 = vmatpush.bf16.msra.mxu0 %v3246
        %3264 = vmatpush.bf16.msra.mxu0 %v3245
        %3265 = vmatpush.bf16.msra.mxu0 %v3244
        %3266 = vmatpush.bf16.msra.mxu0 %v3243
        %3267 = vmatmul.bf16.gmra.mxu0 %v3219
        %v3268 = vpop.f32.mrf.mxu0
        %v3269 = vadd.f32 0.0, %v3268
        %v3270 = vpop.f32.mrf.mxu0
        %v3271 = vadd.f32 0.0, %v3270
        %3272 = vmatmul.bf16.gmra.mxu0 %v3220
        %v3273 = vpop.f32.mrf.mxu0
        %v3274 = vadd.f32 0.0, %v3273
        %v3275 = vpop.f32.mrf.mxu0
        %v3276 = vadd.f32 0.0, %v3275
        %3277 = vmatmul.bf16.gmra.mxu0 %v3221
        %v3278 = vpop.f32.mrf.mxu0
        %v3279 = vadd.f32 0.0, %v3278
        %v3280 = vpop.f32.mrf.mxu0
        %v3281 = vadd.f32 0.0, %v3280
        %3282 = vmatmul.bf16.gmra.mxu0 %v3222
        %v3283 = vpop.f32.mrf.mxu0
        %v3284 = vadd.f32 0.0, %v3283
        %v3285 = vpop.f32.mrf.mxu0
        %v3286 = vadd.f32 0.0, %v3285
        %3287 = vmatmul.bf16.gmra.mxu0 %v3223
        %v3288 = vpop.f32.mrf.mxu0
        %v3289 = vadd.f32 0.0, %v3288
        %v3290 = vpop.f32.mrf.mxu0
        %v3291 = vadd.f32 0.0, %v3290
        %3292 = vmatmul.bf16.gmra.mxu0 %v3224
        %v3293 = vpop.f32.mrf.mxu0
        %v3294 = vadd.f32 0.0, %v3293
        %v3295 = vpop.f32.mrf.mxu0
        %v3296 = vadd.f32 0.0, %v3295
        %3297 = vmatmul.bf16.gmra.mxu0 %v3225
        %v3298 = vpop.f32.mrf.mxu0
        %v3299 = vadd.f32 0.0, %v3298
        %v3300 = vpop.f32.mrf.mxu0
        %v3301 = vadd.f32 0.0, %v3300
        %3302 = vmatmul.bf16.gmra.mxu0 %v3226
        %v3303 = vpop.f32.mrf.mxu0
        %v3304 = vadd.f32 0.0, %v3303
        %v3305 = vpop.f32.mrf.mxu0
        %v3306 = vadd.f32 0.0, %v3305
        %3307 = vdwg.mxu0
        %v3308 = vpack.c.bf16 %v3269, %v3269
        %v3309 = vpack.c.bf16 %v3271, %v3271
        %v3310 = vpack.c.bf16 %v3274, %v3274
        %v3311 = vpack.c.bf16 %v3276, %v3276
        %v3312 = vpack.c.bf16 %v3279, %v3279
        %v3313 = vpack.c.bf16 %v3281, %v3281
        %v3314 = vpack.c.bf16 %v3284, %v3284
        %v3315 = vpack.c.bf16 %v3286, %v3286
        %v3316 = vpack.c.bf16 %v3289, %v3289
        %v3317 = vpack.c.bf16 %v3291, %v3291
        %v3318 = vpack.c.bf16 %v3294, %v3294
        %v3319 = vpack.c.bf16 %v3296, %v3296
        %v3320 = vpack.c.bf16 %v3299, %v3299
        %v3321 = vpack.c.bf16 %v3301, %v3301
        %v3322 = vpack.c.bf16 %v3304, %v3304
        %v3323 = vpack.c.bf16 %v3306, %v3306
        %v3340 = vunpack.c.l.b16 %v2946
        %v3341 = vunpack.c.l.b16 %v2947
        %v3342 = vunpack.c.l.b16 %v2948
        %v3343 = vunpack.c.l.b16 %v2949
        %v3344 = vunpack.c.l.b16 %v2950
        %v3345 = vunpack.c.l.b16 %v2951
        %v3346 = vunpack.c.l.b16 %v2952
        %v3347 = vunpack.c.l.b16 %v2953
        %v3348 = vunpack.c.l.b16 %v2954
        %v3349 = vunpack.c.l.b16 %v2955
        %v3350 = vunpack.c.l.b16 %v2956
        %v3351 = vunpack.c.l.b16 %v2957
        %v3352 = vunpack.c.l.b16 %v2958
        %v3353 = vunpack.c.l.b16 %v2959
        %v3354 = vunpack.c.l.b16 %v2960
        %v3355 = vunpack.c.l.b16 %v2961
        %v3356 = vpack.c.b16 %v3341, %v3340
        %v3357 = vpack.c.b16 %v3343, %v3342
        %v3358 = vpack.c.b16 %v3345, %v3344
        %v3359 = vpack.c.b16 %v3347, %v3346
        %v3360 = vpack.c.b16 %v3349, %v3348
        %v3361 = vpack.c.b16 %v3351, %v3350
        %v3362 = vpack.c.b16 %v3353, %v3352
        %v3363 = vpack.c.b16 %v3355, %v3354
        %v3388 = vunpack.c.l.b16 %v3308
        %v3389 = vunpack.c.l.b16 %v3309
        %v3390 = vunpack.c.l.b16 %v3310
        %v3391 = vunpack.c.l.b16 %v3311
        %v3392 = vunpack.c.l.b16 %v3312
        %v3393 = vunpack.c.l.b16 %v3313
        %v3394 = vunpack.c.l.b16 %v3314
        %v3395 = vunpack.c.l.b16 %v3315
        %v3396 = vunpack.c.l.b16 %v3316
        %v3397 = vunpack.c.l.b16 %v3317
        %v3398 = vunpack.c.l.b16 %v3318
        %v3399 = vunpack.c.l.b16 %v3319
        %v3400 = vunpack.c.l.b16 %v3320
        %v3401 = vunpack.c.l.b16 %v3321
        %v3402 = vunpack.c.l.b16 %v3322
        %v3403 = vunpack.c.l.b16 %v3323
        %v3404 = vpack.c.b16 %v3389, %v3388
        %v3405 = vpack.c.b16 %v3391, %v3390
        %v3406 = vpack.c.b16 %v3393, %v3392
        %v3407 = vpack.c.b16 %v3395, %v3394
        %v3408 = vpack.c.b16 %v3397, %v3396
        %v3409 = vpack.c.b16 %v3399, %v3398
        %v3410 = vpack.c.b16 %v3401, %v3400
        %v3411 = vpack.c.b16 %v3403, %v3402
        %v3420 = vld [vmem:[%s950] sm:$0xff]
        %v3421 = vld [vmem:[%s950 + $0x8] sm:$0xff]
        %v3422 = vld [vmem:[%s950 + $0x10] sm:$0xff]
        %v3423 = vld [vmem:[%s950 + $0x18] sm:$0xff]
        %v3424 = vld [vmem:[%s950 + $0x20] sm:$0xff]
        %v3425 = vld [vmem:[%s950 + $0x28] sm:$0xff]
        %v3426 = vld [vmem:[%s950 + $0x30] sm:$0xff]
        %v3427 = vld [vmem:[%s950 + $0x38] sm:$0xff]
        %v3428 = vld [vmem:[%s950 + $0x40] sm:$0xff]
        %v3429 = vld [vmem:[%s950 + $0x48] sm:$0xff]
        %v3430 = vld [vmem:[%s950 + $0x50] sm:$0xff]
        %v3431 = vld [vmem:[%s950 + $0x58] sm:$0xff]
        %v3432 = vld [vmem:[%s950 + $0x60] sm:$0xff]
        %v3433 = vld [vmem:[%s950 + $0x68] sm:$0xff]
        %v3434 = vld [vmem:[%s950 + $0x70] sm:$0xff]
        %v3435 = vld [vmem:[%s950 + $0x78] sm:$0xff]
        %v3436 = vld [vmem:[%s950 + $0x80] sm:$0xff]
        %v3437 = vld [vmem:[%s950 + $0x88] sm:$0xff]
        %v3438 = vld [vmem:[%s950 + $0x90] sm:$0xff]
        %v3439 = vld [vmem:[%s950 + $0x98] sm:$0xff]
        %v3440 = vld [vmem:[%s950 + $0xa0] sm:$0xff]
        %v3441 = vld [vmem:[%s950 + $0xa8] sm:$0xff]
        %v3442 = vld [vmem:[%s950 + $0xb0] sm:$0xff]
        %v3443 = vld [vmem:[%s950 + $0xb8] sm:$0xff]
        %v3444 = vld [vmem:[%s950 + $0xc0] sm:$0xff]
        %v3445 = vld [vmem:[%s950 + $0xc8] sm:$0xff]
        %v3446 = vld [vmem:[%s950 + $0xd0] sm:$0xff]
        %v3447 = vld [vmem:[%s950 + $0xd8] sm:$0xff]
        %v3448 = vld [vmem:[%s950 + $0xe0] sm:$0xff]
        %v3449 = vld [vmem:[%s950 + $0xe8] sm:$0xff]
        %v3450 = vld [vmem:[%s950 + $0xf0] sm:$0xff]
        %v3451 = vld [vmem:[%s950 + $0xf8] sm:$0xff]
        %v3452 = vld [vmem:[%s960] sm:$0x3]
        %v3454 = vperm.slane %v3452, 0
        %v3455 = vperm.slane %v3452, 1
        %v3490 = vunpack.c.l.b16 %v3420
        %v3491 = vunpack.c.h.b16 %v3420
        %v3492 = vunpack.c.l.b16 %v3421
        %v3493 = vunpack.c.h.b16 %v3421
        %v3494 = vunpack.c.l.b16 %v3422
        %v3495 = vunpack.c.h.b16 %v3422
        %v3496 = vunpack.c.l.b16 %v3423
        %v3497 = vunpack.c.h.b16 %v3423
        %v3498 = vunpack.c.l.b16 %v3424
        %v3499 = vunpack.c.h.b16 %v3424
        %v3500 = vunpack.c.l.b16 %v3425
        %v3501 = vunpack.c.h.b16 %v3425
        %v3502 = vunpack.c.l.b16 %v3426
        %v3503 = vunpack.c.h.b16 %v3426
        %v3504 = vunpack.c.l.b16 %v3427
        %v3505 = vunpack.c.h.b16 %v3427
        %v3506 = vunpack.c.l.b16 %v3428
        %v3507 = vunpack.c.h.b16 %v3428
        %v3508 = vunpack.c.l.b16 %v3429
        %v3509 = vunpack.c.h.b16 %v3429
        %v3510 = vunpack.c.l.b16 %v3430
        %v3511 = vunpack.c.h.b16 %v3430
        %v3512 = vunpack.c.l.b16 %v3431
        %v3513 = vunpack.c.h.b16 %v3431
        %v3514 = vunpack.c.l.b16 %v3432
        %v3515 = vunpack.c.h.b16 %v3432
        %v3516 = vunpack.c.l.b16 %v3433
        %v3517 = vunpack.c.h.b16 %v3433
        %v3518 = vunpack.c.l.b16 %v3434
        %v3519 = vunpack.c.h.b16 %v3434
        %v3520 = vunpack.c.l.b16 %v3435
        %v3521 = vunpack.c.h.b16 %v3435
        %v3522 = vunpack.c.l.b16 %v3436
        %v3523 = vunpack.c.h.b16 %v3436
        %v3524 = vunpack.c.l.b16 %v3437
        %v3525 = vunpack.c.h.b16 %v3437
        %v3526 = vunpack.c.l.b16 %v3438
        %v3527 = vunpack.c.h.b16 %v3438
        %v3528 = vunpack.c.l.b16 %v3439
        %v3529 = vunpack.c.h.b16 %v3439
        %v3530 = vunpack.c.l.b16 %v3440
        %v3531 = vunpack.c.h.b16 %v3440
        %v3532 = vunpack.c.l.b16 %v3441
        %v3533 = vunpack.c.h.b16 %v3441
        %v3534 = vunpack.c.l.b16 %v3442
        %v3535 = vunpack.c.h.b16 %v3442
        %v3536 = vunpack.c.l.b16 %v3443
        %v3537 = vunpack.c.h.b16 %v3443
        %v3538 = vunpack.c.l.b16 %v3444
        %v3539 = vunpack.c.h.b16 %v3444
        %v3540 = vunpack.c.l.b16 %v3445
        %v3541 = vunpack.c.h.b16 %v3445
        %v3542 = vunpack.c.l.b16 %v3446
        %v3543 = vunpack.c.h.b16 %v3446
        %v3544 = vunpack.c.l.b16 %v3447
        %v3545 = vunpack.c.h.b16 %v3447
        %v3546 = vunpack.c.l.b16 %v3448
        %v3547 = vunpack.c.h.b16 %v3448
        %v3548 = vunpack.c.l.b16 %v3449
        %v3549 = vunpack.c.h.b16 %v3449
        %v3550 = vunpack.c.l.b16 %v3450
        %v3551 = vunpack.c.h.b16 %v3450
        %v3552 = vunpack.c.l.b16 %v3451
        %v3553 = vunpack.c.h.b16 %v3451
        %v3554 = vpack.c.b16 %v3492, %v3490
        %v3555 = vpack.c.b16 %v3493, %v3491
        %v3556 = vpack.c.b16 %v3496, %v3494
        %v3557 = vpack.c.b16 %v3497, %v3495
        %v3558 = vpack.c.b16 %v3500, %v3498
        %v3559 = vpack.c.b16 %v3501, %v3499
        %v3560 = vpack.c.b16 %v3504, %v3502
        %v3561 = vpack.c.b16 %v3505, %v3503
        %v3562 = vpack.c.b16 %v3508, %v3506
        %v3563 = vpack.c.b16 %v3509, %v3507
        %v3564 = vpack.c.b16 %v3512, %v3510
        %v3565 = vpack.c.b16 %v3513, %v3511
        %v3566 = vpack.c.b16 %v3516, %v3514
        %v3567 = vpack.c.b16 %v3517, %v3515
        %v3568 = vpack.c.b16 %v3520, %v3518
        %v3569 = vpack.c.b16 %v3521, %v3519
        %v3570 = vpack.c.b16 %v3524, %v3522
        %v3571 = vpack.c.b16 %v3525, %v3523
        %v3572 = vpack.c.b16 %v3528, %v3526
        %v3573 = vpack.c.b16 %v3529, %v3527
        %v3574 = vpack.c.b16 %v3532, %v3530
        %v3575 = vpack.c.b16 %v3533, %v3531
        %v3576 = vpack.c.b16 %v3536, %v3534
        %v3577 = vpack.c.b16 %v3537, %v3535
        %v3578 = vpack.c.b16 %v3540, %v3538
        %v3579 = vpack.c.b16 %v3541, %v3539
        %v3580 = vpack.c.b16 %v3544, %v3542
        %v3581 = vpack.c.b16 %v3545, %v3543
        %v3582 = vpack.c.b16 %v3548, %v3546
        %v3583 = vpack.c.b16 %v3549, %v3547
        %v3584 = vpack.c.b16 %v3552, %v3550
        %v3585 = vpack.c.b16 %v3553, %v3551
        %3618 = vmatpush.bf16.msra.mxu0 %v3568
        %3619 = vmatpush.bf16.msra.mxu0 %v3566
        %3620 = vmatpush.bf16.msra.mxu0 %v3564
        %3621 = vmatpush.bf16.msra.mxu0 %v3562
        %3622 = vmatpush.bf16.msra.mxu0 %v3560
        %3623 = vmatpush.bf16.msra.mxu0 %v3558
        %3624 = vmatpush.bf16.msra.mxu0 %v3556
        %3625 = vmatpush.bf16.msra.mxu0 %v3554
        %3626 = vmatmul.bf16.gmra.mxu0 %v3356
        %v3627 = vpop.f32.mrf.mxu0
        %v3628 = vadd.f32 %v3454, %v3627
        %v3629 = vpop.f32.mrf.mxu0
        %v3630 = vadd.f32 %v3454, %v3629
        %3631 = vmatmul.bf16.gmra.mxu0 %v3357
        %v3632 = vpop.f32.mrf.mxu0
        %v3633 = vadd.f32 %v3454, %v3632
        %v3634 = vpop.f32.mrf.mxu0
        %v3635 = vadd.f32 %v3454, %v3634
        %3636 = vmatmul.bf16.gmra.mxu0 %v3358
        %v3637 = vpop.f32.mrf.mxu0
        %v3638 = vadd.f32 %v3454, %v3637
        %v3639 = vpop.f32.mrf.mxu0
        %v3640 = vadd.f32 %v3454, %v3639
        %3641 = vmatmul.bf16.gmra.mxu0 %v3359
        %v3642 = vpop.f32.mrf.mxu0
        %v3643 = vadd.f32 %v3454, %v3642
        %v3644 = vpop.f32.mrf.mxu0
        %v3645 = vadd.f32 %v3454, %v3644
        %3646 = vmatmul.bf16.gmra.mxu0 %v3360
        %v3647 = vpop.f32.mrf.mxu0
        %v3648 = vadd.f32 %v3454, %v3647
        %v3649 = vpop.f32.mrf.mxu0
        %v3650 = vadd.f32 %v3454, %v3649
        %3651 = vmatmul.bf16.gmra.mxu0 %v3361
        %v3652 = vpop.f32.mrf.mxu0
        %v3653 = vadd.f32 %v3454, %v3652
        %v3654 = vpop.f32.mrf.mxu0
        %v3655 = vadd.f32 %v3454, %v3654
        %3656 = vmatmul.bf16.gmra.mxu0 %v3362
        %v3657 = vpop.f32.mrf.mxu0
        %v3658 = vadd.f32 %v3454, %v3657
        %v3659 = vpop.f32.mrf.mxu0
        %v3660 = vadd.f32 %v3454, %v3659
        %3661 = vmatmul.bf16.gmra.mxu0 %v3363
        %v3662 = vpop.f32.mrf.mxu0
        %v3663 = vadd.f32 %v3454, %v3662
        %v3664 = vpop.f32.mrf.mxu0
        %v3665 = vadd.f32 %v3454, %v3664
        %3666 = vdwg.mxu0
        %3667 = vmatpush.bf16.msra.mxu0 %v3584
        %3668 = vmatpush.bf16.msra.mxu0 %v3582
        %3669 = vmatpush.bf16.msra.mxu0 %v3580
        %3670 = vmatpush.bf16.msra.mxu0 %v3578
        %3671 = vmatpush.bf16.msra.mxu0 %v3576
        %3672 = vmatpush.bf16.msra.mxu0 %v3574
        %3673 = vmatpush.bf16.msra.mxu0 %v3572
        %3674 = vmatpush.bf16.msra.mxu0 %v3570
        %3675 = vmatmul.bf16.gmra.mxu0 %v3404
        %v3676 = vpop.f32.mrf.mxu0
        %v3677 = vadd.f32 %v3628, %v3676
        %v3678 = vpop.f32.mrf.mxu0
        %v3679 = vadd.f32 %v3630, %v3678
        %3680 = vmatmul.bf16.gmra.mxu0 %v3405
        %v3681 = vpop.f32.mrf.mxu0
        %v3682 = vadd.f32 %v3633, %v3681
        %v3683 = vpop.f32.mrf.mxu0
        %v3684 = vadd.f32 %v3635, %v3683
        %3685 = vmatmul.bf16.gmra.mxu0 %v3406
        %v3686 = vpop.f32.mrf.mxu0
        %v3687 = vadd.f32 %v3638, %v3686
        %v3688 = vpop.f32.mrf.mxu0
        %v3689 = vadd.f32 %v3640, %v3688
        %3690 = vmatmul.bf16.gmra.mxu0 %v3407
        %v3691 = vpop.f32.mrf.mxu0
        %v3692 = vadd.f32 %v3643, %v3691
        %v3693 = vpop.f32.mrf.mxu0
        %v3694 = vadd.f32 %v3645, %v3693
        %3695 = vmatmul.bf16.gmra.mxu0 %v3408
        %v3696 = vpop.f32.mrf.mxu0
        %v3697 = vadd.f32 %v3648, %v3696
        %v3698 = vpop.f32.mrf.mxu0
        %v3699 = vadd.f32 %v3650, %v3698
        %3700 = vmatmul.bf16.gmra.mxu0 %v3409
        %v3701 = vpop.f32.mrf.mxu0
        %v3702 = vadd.f32 %v3653, %v3701
        %v3703 = vpop.f32.mrf.mxu0
        %v3704 = vadd.f32 %v3655, %v3703
        %3705 = vmatmul.bf16.gmra.mxu0 %v3410
        %v3706 = vpop.f32.mrf.mxu0
        %v3707 = vadd.f32 %v3658, %v3706
        %v3708 = vpop.f32.mrf.mxu0
        %v3709 = vadd.f32 %v3660, %v3708
        %3710 = vmatmul.bf16.gmra.mxu0 %v3411
        %v3711 = vpop.f32.mrf.mxu0
        %v3712 = vadd.f32 %v3663, %v3711
        %v3713 = vpop.f32.mrf.mxu0
        %v3714 = vadd.f32 %v3665, %v3713
        %3715 = vdwg.mxu0
        %3716 = vmatpush.bf16.msra.mxu0 %v3569
        %3717 = vmatpush.bf16.msra.mxu0 %v3567
        %3718 = vmatpush.bf16.msra.mxu0 %v3565
        %3719 = vmatpush.bf16.msra.mxu0 %v3563
        %3720 = vmatpush.bf16.msra.mxu0 %v3561
        %3721 = vmatpush.bf16.msra.mxu0 %v3559
        %3722 = vmatpush.bf16.msra.mxu0 %v3557
        %3723 = vmatpush.bf16.msra.mxu0 %v3555
        %3724 = vmatmul.bf16.gmra.mxu0 %v3356
        %v3725 = vpop.f32.mrf.mxu0
        %v3726 = vadd.f32 %v3455, %v3725
        %v3727 = vpop.f32.mrf.mxu0
        %v3728 = vadd.f32 %v3455, %v3727
        %3729 = vmatmul.bf16.gmra.mxu0 %v3357
        %v3730 = vpop.f32.mrf.mxu0
        %v3731 = vadd.f32 %v3455, %v3730
        %v3732 = vpop.f32.mrf.mxu0
        %v3733 = vadd.f32 %v3455, %v3732
        %3734 = vmatmul.bf16.gmra.mxu0 %v3358
        %v3735 = vpop.f32.mrf.mxu0
        %v3736 = vadd.f32 %v3455, %v3735
        %v3737 = vpop.f32.mrf.mxu0
        %v3738 = vadd.f32 %v3455, %v3737
        %3739 = vmatmul.bf16.gmra.mxu0 %v3359
        %v3740 = vpop.f32.mrf.mxu0
        %v3741 = vadd.f32 %v3455, %v3740
        %v3742 = vpop.f32.mrf.mxu0
        %v3743 = vadd.f32 %v3455, %v3742
        %3744 = vmatmul.bf16.gmra.mxu0 %v3360
        %v3745 = vpop.f32.mrf.mxu0
        %v3746 = vadd.f32 %v3455, %v3745
        %v3747 = vpop.f32.mrf.mxu0
        %v3748 = vadd.f32 %v3455, %v3747
        %3749 = vmatmul.bf16.gmra.mxu0 %v3361
        %v3750 = vpop.f32.mrf.mxu0
        %v3751 = vadd.f32 %v3455, %v3750
        %v3752 = vpop.f32.mrf.mxu0
        %v3753 = vadd.f32 %v3455, %v3752
        %3754 = vmatmul.bf16.gmra.mxu0 %v3362
        %v3755 = vpop.f32.mrf.mxu0
        %v3756 = vadd.f32 %v3455, %v3755
        %v3757 = vpop.f32.mrf.mxu0
        %v3758 = vadd.f32 %v3455, %v3757
        %3759 = vmatmul.bf16.gmra.mxu0 %v3363
        %v3760 = vpop.f32.mrf.mxu0
        %v3761 = vadd.f32 %v3455, %v3760
        %v3762 = vpop.f32.mrf.mxu0
        %v3763 = vadd.f32 %v3455, %v3762
        %3764 = vdwg.mxu0
        %3765 = vmatpush.bf16.msra.mxu0 %v3585
        %3766 = vmatpush.bf16.msra.mxu0 %v3583
        %3767 = vmatpush.bf16.msra.mxu0 %v3581
        %3768 = vmatpush.bf16.msra.mxu0 %v3579
        %3769 = vmatpush.bf16.msra.mxu0 %v3577
        %3770 = vmatpush.bf16.msra.mxu0 %v3575
        %3771 = vmatpush.bf16.msra.mxu0 %v3573
        %3772 = vmatpush.bf16.msra.mxu0 %v3571
        %3773 = vmatmul.bf16.gmra.mxu0 %v3404
        %v3774 = vpop.f32.mrf.mxu0
        %v3775 = vadd.f32 %v3726, %v3774
        %v3776 = vpop.f32.mrf.mxu0
        %v3777 = vadd.f32 %v3728, %v3776
        %3778 = vmatmul.bf16.gmra.mxu0 %v3405
        %v3779 = vpop.f32.mrf.mxu0
        %v3780 = vadd.f32 %v3731, %v3779
        %v3781 = vpop.f32.mrf.mxu0
        %v3782 = vadd.f32 %v3733, %v3781
        %3783 = vmatmul.bf16.gmra.mxu0 %v3406
        %v3784 = vpop.f32.mrf.mxu0
        %v3785 = vadd.f32 %v3736, %v3784
        %v3786 = vpop.f32.mrf.mxu0
        %v3787 = vadd.f32 %v3738, %v3786
        %3788 = vmatmul.bf16.gmra.mxu0 %v3407
        %v3789 = vpop.f32.mrf.mxu0
        %v3790 = vadd.f32 %v3741, %v3789
        %v3791 = vpop.f32.mrf.mxu0
        %v3792 = vadd.f32 %v3743, %v3791
        %3793 = vmatmul.bf16.gmra.mxu0 %v3408
        %v3794 = vpop.f32.mrf.mxu0
        %v3795 = vadd.f32 %v3746, %v3794
        %v3796 = vpop.f32.mrf.mxu0
        %v3797 = vadd.f32 %v3748, %v3796
        %3798 = vmatmul.bf16.gmra.mxu0 %v3409
        %v3799 = vpop.f32.mrf.mxu0
        %v3800 = vadd.f32 %v3751, %v3799
        %v3801 = vpop.f32.mrf.mxu0
        %v3802 = vadd.f32 %v3753, %v3801
        %3803 = vmatmul.bf16.gmra.mxu0 %v3410
        %v3804 = vpop.f32.mrf.mxu0
        %v3805 = vadd.f32 %v3756, %v3804
        %v3806 = vpop.f32.mrf.mxu0
        %v3807 = vadd.f32 %v3758, %v3806
        %3808 = vmatmul.bf16.gmra.mxu0 %v3411
        %v3809 = vpop.f32.mrf.mxu0
        %v3810 = vadd.f32 %v3761, %v3809
        %v3811 = vpop.f32.mrf.mxu0
        %v3812 = vadd.f32 %v3763, %v3811
        %3813 = vdwg.mxu0
        %v3814 = vadd.f32 %v1242, %v3677
        %v3815 = vadd.f32 %v1243, %v3775
        %v3816 = vadd.f32 %v1244, %v3679
        %v3817 = vadd.f32 %v1245, %v3777
        %v3818 = vadd.f32 %v1246, %v3682
        %v3819 = vadd.f32 %v1247, %v3780
        %v3820 = vadd.f32 %v1248, %v3684
        %v3821 = vadd.f32 %v1249, %v3782
        %v3822 = vadd.f32 %v1250, %v3687
        %v3823 = vadd.f32 %v1251, %v3785
        %v3824 = vadd.f32 %v1252, %v3689
        %v3825 = vadd.f32 %v1253, %v3787
        %v3826 = vadd.f32 %v1254, %v3692
        %v3827 = vadd.f32 %v1255, %v3790
        %v3828 = vadd.f32 %v1256, %v3694
        %v3829 = vadd.f32 %v1257, %v3792
        %v3830 = vadd.f32 %v1258, %v3697
        %v3831 = vadd.f32 %v1259, %v3795
        %v3832 = vadd.f32 %v1260, %v3699
        %v3833 = vadd.f32 %v1261, %v3797
        %v3834 = vadd.f32 %v1262, %v3702
        %v3835 = vadd.f32 %v1263, %v3800
        %v3836 = vadd.f32 %v1264, %v3704
        %v3837 = vadd.f32 %v1265, %v3802
        %v3838 = vadd.f32 %v1266, %v3707
        %v3839 = vadd.f32 %v1267, %v3805
        %v3840 = vadd.f32 %v1268, %v3709
        %v3841 = vadd.f32 %v1269, %v3807
        %v3842 = vadd.f32 %v1270, %v3712
        %v3843 = vadd.f32 %v1271, %v3810
        %v3844 = vadd.f32 %v1272, %v3714
        %v3845 = vadd.f32 %v1273, %v3812
        %v3846 = vadd.f32 %v3814, %v3815
        %3847 = vadd.xlane.f32.xlu0 %v3846
        %v3848 = vpop.xlane.xlu0 %3847
        %v3849 = vadd.f32 %v3816, %v3817
        %3850 = vadd.xlane.f32.xlu0 %v3849
        %v3851 = vpop.xlane.xlu0 %3850
        %v3852 = vadd.f32 %v3818, %v3819
        %3853 = vadd.xlane.f32.xlu0 %v3852
        %v3854 = vpop.xlane.xlu0 %3853
        %v3855 = vadd.f32 %v3820, %v3821
        %3856 = vadd.xlane.f32.xlu0 %v3855
        %v3857 = vpop.xlane.xlu0 %3856
        %v3858 = vadd.f32 %v3822, %v3823
        %3859 = vadd.xlane.f32.xlu0 %v3858
        %v3860 = vpop.xlane.xlu0 %3859
        %v3861 = vadd.f32 %v3824, %v3825
        %3862 = vadd.xlane.f32.xlu0 %v3861
        %v3863 = vpop.xlane.xlu0 %3862
        %v3864 = vadd.f32 %v3826, %v3827
        %3865 = vadd.xlane.f32.xlu0 %v3864
        %v3866 = vpop.xlane.xlu0 %3865
        %v3867 = vadd.f32 %v3828, %v3829
        %3868 = vadd.xlane.f32.xlu0 %v3867
        %v3869 = vpop.xlane.xlu0 %3868
        %v3870 = vadd.f32 %v3830, %v3831
        %3871 = vadd.xlane.f32.xlu0 %v3870
        %v3872 = vpop.xlane.xlu0 %3871
        %v3873 = vadd.f32 %v3832, %v3833
        %3874 = vadd.xlane.f32.xlu0 %v3873
        %v3875 = vpop.xlane.xlu0 %3874
        %v3876 = vadd.f32 %v3834, %v3835
        %3877 = vadd.xlane.f32.xlu0 %v3876
        %v3878 = vpop.xlane.xlu0 %3877
        %v3879 = vadd.f32 %v3836, %v3837
        %3880 = vadd.xlane.f32.xlu0 %v3879
        %v3881 = vpop.xlane.xlu0 %3880
        %v3882 = vadd.f32 %v3838, %v3839
        %3883 = vadd.xlane.f32.xlu0 %v3882
        %v3884 = vpop.xlane.xlu0 %3883
        %v3885 = vadd.f32 %v3840, %v3841
        %3886 = vadd.xlane.f32.xlu0 %v3885
        %v3887 = vpop.xlane.xlu0 %3886
        %v3888 = vadd.f32 %v3842, %v3843
        %3889 = vadd.xlane.f32.xlu0 %v3888
        %v3890 = vpop.xlane.xlu0 %3889
        %v3891 = vadd.f32 %v3844, %v3845
        %3892 = vadd.xlane.f32.xlu0 %v3891
        %v3893 = vpop.xlane.xlu0 %3892
        %v3894 = vrcp.pop 256.0
        %v3895 = vmul.f32 256.0, %v3894
        %v3896 = vsub.f32 1.0, %v3895
        %v3897 = vmul.f32 %v3894, %v3896
        %v3898 = vadd.f32 %v3894, %v3897
        %vm3899 = vweird.f32 %v3894
        %v3900 = vsel %vm3899, %v3894, %v3898
        %v3901 = vmul.f32 %v3848, %v3900
        %v3902 = vmul.f32 %v3851, %v3900
        %v3903 = vmul.f32 %v3854, %v3900
        %v3904 = vmul.f32 %v3857, %v3900
        %v3905 = vmul.f32 %v3860, %v3900
        %v3906 = vmul.f32 %v3863, %v3900
        %v3907 = vmul.f32 %v3866, %v3900
        %v3908 = vmul.f32 %v3869, %v3900
        %v3909 = vmul.f32 %v3872, %v3900
        %v3910 = vmul.f32 %v3875, %v3900
        %v3911 = vmul.f32 %v3878, %v3900
        %v3912 = vmul.f32 %v3881, %v3900
        %v3913 = vmul.f32 %v3884, %v3900
        %v3914 = vmul.f32 %v3887, %v3900
        %v3915 = vmul.f32 %v3890, %v3900
        %v3916 = vmul.f32 %v3893, %v3900
        %v3917 = vsub.f32 %v3814, %v3901
        %v3918 = vsub.f32 %v3815, %v3901
        %v3919 = vsub.f32 %v3816, %v3902
        %v3920 = vsub.f32 %v3817, %v3902
        %v3921 = vsub.f32 %v3818, %v3903
        %v3922 = vsub.f32 %v3819, %v3903
        %v3923 = vsub.f32 %v3820, %v3904
        %v3924 = vsub.f32 %v3821, %v3904
        %v3925 = vsub.f32 %v3822, %v3905
        %v3926 = vsub.f32 %v3823, %v3905
        %v3927 = vsub.f32 %v3824, %v3906
        %v3928 = vsub.f32 %v3825, %v3906
        %v3929 = vsub.f32 %v3826, %v3907
        %v3930 = vsub.f32 %v3827, %v3907
        %v3931 = vsub.f32 %v3828, %v3908
        %v3932 = vsub.f32 %v3829, %v3908
        %v3933 = vsub.f32 %v3830, %v3909
        %v3934 = vsub.f32 %v3831, %v3909
        %v3935 = vsub.f32 %v3832, %v3910
        %v3936 = vsub.f32 %v3833, %v3910
        %v3937 = vsub.f32 %v3834, %v3911
        %v3938 = vsub.f32 %v3835, %v3911
        %v3939 = vsub.f32 %v3836, %v3912
        %v3940 = vsub.f32 %v3837, %v3912
        %v3941 = vsub.f32 %v3838, %v3913
        %v3942 = vsub.f32 %v3839, %v3913
        %v3943 = vsub.f32 %v3840, %v3914
        %v3944 = vsub.f32 %v3841, %v3914
        %v3945 = vsub.f32 %v3842, %v3915
        %v3946 = vsub.f32 %v3843, %v3915
        %v3947 = vsub.f32 %v3844, %v3916
        %v3948 = vsub.f32 %v3845, %v3916
        %v3949 = vmul.f32 %v3917, %v3917
        %v3950 = vmul.f32 %v3918, %v3918
        %v3951 = vmul.f32 %v3919, %v3919
        %v3952 = vmul.f32 %v3920, %v3920
        %v3953 = vmul.f32 %v3921, %v3921
        %v3954 = vmul.f32 %v3922, %v3922
        %v3955 = vmul.f32 %v3923, %v3923
        %v3956 = vmul.f32 %v3924, %v3924
        %v3957 = vmul.f32 %v3925, %v3925
        %v3958 = vmul.f32 %v3926, %v3926
        %v3959 = vmul.f32 %v3927, %v3927
        %v3960 = vmul.f32 %v3928, %v3928
        %v3961 = vmul.f32 %v3929, %v3929
        %v3962 = vmul.f32 %v3930, %v3930
        %v3963 = vmul.f32 %v3931, %v3931
        %v3964 = vmul.f32 %v3932, %v3932
        %v3965 = vmul.f32 %v3933, %v3933
        %v3966 = vmul.f32 %v3934, %v3934
        %v3967 = vmul.f32 %v3935, %v3935
        %v3968 = vmul.f32 %v3936, %v3936
        %v3969 = vmul.f32 %v3937, %v3937
        %v3970 = vmul.f32 %v3938, %v3938
        %v3971 = vmul.f32 %v3939, %v3939
        %v3972 = vmul.f32 %v3940, %v3940
        %v3973 = vmul.f32 %v3941, %v3941
        %v3974 = vmul.f32 %v3942, %v3942
        %v3975 = vmul.f32 %v3943, %v3943
        %v3976 = vmul.f32 %v3944, %v3944
        %v3977 = vmul.f32 %v3945, %v3945
        %v3978 = vmul.f32 %v3946, %v3946
        %v3979 = vmul.f32 %v3947, %v3947
        %v3980 = vmul.f32 %v3948, %v3948
        %v3981 = vadd.f32 %v3949, %v3950
        %3982 = vadd.xlane.f32.xlu0 %v3981
        %v3983 = vpop.xlane.xlu0 %3982
        %v3984 = vadd.f32 %v3951, %v3952
        %3985 = vadd.xlane.f32.xlu0 %v3984
        %v3986 = vpop.xlane.xlu0 %3985
        %v3987 = vadd.f32 %v3953, %v3954
        %3988 = vadd.xlane.f32.xlu0 %v3987
        %v3989 = vpop.xlane.xlu0 %3988
        %v3990 = vadd.f32 %v3955, %v3956
        %3991 = vadd.xlane.f32.xlu0 %v3990
        %v3992 = vpop.xlane.xlu0 %3991
        %v3993 = vadd.f32 %v3957, %v3958
        %3994 = vadd.xlane.f32.xlu0 %v3993
        %v3995 = vpop.xlane.xlu0 %3994
        %v3996 = vadd.f32 %v3959, %v3960
        %3997 = vadd.xlane.f32.xlu0 %v3996
        %v3998 = vpop.xlane.xlu0 %3997
        %v3999 = vadd.f32 %v3961, %v3962
        %4000 = vadd.xlane.f32.xlu0 %v3999
        %v4001 = vpop.xlane.xlu0 %4000
        %v4002 = vadd.f32 %v3963, %v3964
        %4003 = vadd.xlane.f32.xlu0 %v4002
        %v4004 = vpop.xlane.xlu0 %4003
        %v4005 = vadd.f32 %v3965, %v3966
        %4006 = vadd.xlane.f32.xlu0 %v4005
        %v4007 = vpop.xlane.xlu0 %4006
        %v4008 = vadd.f32 %v3967, %v3968
        %4009 = vadd.xlane.f32.xlu0 %v4008
        %v4010 = vpop.xlane.xlu0 %4009
        %v4011 = vadd.f32 %v3969, %v3970
        %4012 = vadd.xlane.f32.xlu0 %v4011
        %v4013 = vpop.xlane.xlu0 %4012
        %v4014 = vadd.f32 %v3971, %v3972
        %4015 = vadd.xlane.f32.xlu0 %v4014
        %v4016 = vpop.xlane.xlu0 %4015
        %v4017 = vadd.f32 %v3973, %v3974
        %4018 = vadd.xlane.f32.xlu0 %v4017
        %v4019 = vpop.xlane.xlu0 %4018
        %v4020 = vadd.f32 %v3975, %v3976
        %4021 = vadd.xlane.f32.xlu0 %v4020
        %v4022 = vpop.xlane.xlu0 %4021
        %v4023 = vadd.f32 %v3977, %v3978
        %4024 = vadd.xlane.f32.xlu0 %v4023
        %v4025 = vpop.xlane.xlu0 %4024
        %v4026 = vadd.f32 %v3979, %v3980
        %4027 = vadd.xlane.f32.xlu0 %v4026
        %v4028 = vpop.xlane.xlu0 %4027
        %v4029 = vmul.f32 %v3983, %v3900
        %v4030 = vmul.f32 %v3986, %v3900
        %v4031 = vmul.f32 %v3989, %v3900
        %v4032 = vmul.f32 %v3992, %v3900
        %v4033 = vmul.f32 %v3995, %v3900
        %v4034 = vmul.f32 %v3998, %v3900
        %v4035 = vmul.f32 %v4001, %v3900
        %v4036 = vmul.f32 %v4004, %v3900
        %v4037 = vmul.f32 %v4007, %v3900
        %v4038 = vmul.f32 %v4010, %v3900
        %v4039 = vmul.f32 %v4013, %v3900
        %v4040 = vmul.f32 %v4016, %v3900
        %v4041 = vmul.f32 %v4019, %v3900
        %v4042 = vmul.f32 %v4022, %v3900
        %v4043 = vmul.f32 %v4025, %v3900
        %v4044 = vmul.f32 %v4028, %v3900
        %v4045 = vadd.f32 %v4029, 1e-05
        %v4046 = vadd.f32 %v4030, 1e-05
        %v4047 = vadd.f32 %v4031, 1e-05
        %v4048 = vadd.f32 %v4032, 1e-05
        %v4049 = vadd.f32 %v4033, 1e-05
        %v4050 = vadd.f32 %v4034, 1e-05
        %v4051 = vadd.f32 %v4035, 1e-05
        %v4052 = vadd.f32 %v4036, 1e-05
        %v4053 = vadd.f32 %v4037, 1e-05
        %v4054 = vadd.f32 %v4038, 1e-05
        %v4055 = vadd.f32 %v4039, 1e-05
        %v4056 = vadd.f32 %v4040, 1e-05
        %v4057 = vadd.f32 %v4041, 1e-05
        %v4058 = vadd.f32 %v4042, 1e-05
        %v4059 = vadd.f32 %v4043, 1e-05
        %v4060 = vadd.f32 %v4044, 1e-05
        %v4061 = vrsqrt.pop %v4045
        %v4062 = vmul.f32 %v4061, %v4045
        %v4063 = vmul.f32 %v4062, %v4061
        %v4064 = vmul.f32 0.5, %v4063
        %v4065 = vsub.f32 1.5, %v4064
        %v4066 = vmul.f32 %v4061, %v4065
        %vm4067 = vweird.f32 %v4045
        %vm4068 = vweird.f32 %v4061
        %vm4069 = vmor %vm4067, %vm4068
        %v4070 = vsel %vm4069, %v4061, %v4066
        %v4071 = vrsqrt.pop %v4046
        %v4072 = vmul.f32 %v4071, %v4046
        %v4073 = vmul.f32 %v4072, %v4071
        %v4074 = vmul.f32 0.5, %v4073
        %v4075 = vsub.f32 1.5, %v4074
        %v4076 = vmul.f32 %v4071, %v4075
        %vm4077 = vweird.f32 %v4046
        %vm4078 = vweird.f32 %v4071
        %vm4079 = vmor %vm4077, %vm4078
        %v4080 = vsel %vm4079, %v4071, %v4076
        %v4081 = vrsqrt.pop %v4047
        %v4082 = vmul.f32 %v4081, %v4047
        %v4083 = vmul.f32 %v4082, %v4081
        %v4084 = vmul.f32 0.5, %v4083
        %v4085 = vsub.f32 1.5, %v4084
        %v4086 = vmul.f32 %v4081, %v4085
        %vm4087 = vweird.f32 %v4047
        %vm4088 = vweird.f32 %v4081
        %vm4089 = vmor %vm4087, %vm4088
        %v4090 = vsel %vm4089, %v4081, %v4086
        %v4091 = vrsqrt.pop %v4048
        %v4092 = vmul.f32 %v4091, %v4048
        %v4093 = vmul.f32 %v4092, %v4091
        %v4094 = vmul.f32 0.5, %v4093
        %v4095 = vsub.f32 1.5, %v4094
        %v4096 = vmul.f32 %v4091, %v4095
        %vm4097 = vweird.f32 %v4048
        %vm4098 = vweird.f32 %v4091
        %vm4099 = vmor %vm4097, %vm4098
        %v4100 = vsel %vm4099, %v4091, %v4096
        %v4101 = vrsqrt.pop %v4049
        %v4102 = vmul.f32 %v4101, %v4049
        %v4103 = vmul.f32 %v4102, %v4101
        %v4104 = vmul.f32 0.5, %v4103
        %v4105 = vsub.f32 1.5, %v4104
        %v4106 = vmul.f32 %v4101, %v4105
        %vm4107 = vweird.f32 %v4049
        %vm4108 = vweird.f32 %v4101
        %vm4109 = vmor %vm4107, %vm4108
        %v4110 = vsel %vm4109, %v4101, %v4106
        %v4111 = vrsqrt.pop %v4050
        %v4112 = vmul.f32 %v4111, %v4050
        %v4113 = vmul.f32 %v4112, %v4111
        %v4114 = vmul.f32 0.5, %v4113
        %v4115 = vsub.f32 1.5, %v4114
        %v4116 = vmul.f32 %v4111, %v4115
        %vm4117 = vweird.f32 %v4050
        %vm4118 = vweird.f32 %v4111
        %vm4119 = vmor %vm4117, %vm4118
        %v4120 = vsel %vm4119, %v4111, %v4116
        %v4121 = vrsqrt.pop %v4051
        %v4122 = vmul.f32 %v4121, %v4051
        %v4123 = vmul.f32 %v4122, %v4121
        %v4124 = vmul.f32 0.5, %v4123
        %v4125 = vsub.f32 1.5, %v4124
        %v4126 = vmul.f32 %v4121, %v4125
        %vm4127 = vweird.f32 %v4051
        %vm4128 = vweird.f32 %v4121
        %vm4129 = vmor %vm4127, %vm4128
        %v4130 = vsel %vm4129, %v4121, %v4126
        %v4131 = vrsqrt.pop %v4052
        %v4132 = vmul.f32 %v4131, %v4052
        %v4133 = vmul.f32 %v4132, %v4131
        %v4134 = vmul.f32 0.5, %v4133
        %v4135 = vsub.f32 1.5, %v4134
        %v4136 = vmul.f32 %v4131, %v4135
        %vm4137 = vweird.f32 %v4052
        %vm4138 = vweird.f32 %v4131
        %vm4139 = vmor %vm4137, %vm4138
        %v4140 = vsel %vm4139, %v4131, %v4136
        %v4141 = vrsqrt.pop %v4053
        %v4142 = vmul.f32 %v4141, %v4053
        %v4143 = vmul.f32 %v4142, %v4141
        %v4144 = vmul.f32 0.5, %v4143
        %v4145 = vsub.f32 1.5, %v4144
        %v4146 = vmul.f32 %v4141, %v4145
        %vm4147 = vweird.f32 %v4053
        %vm4148 = vweird.f32 %v4141
        %vm4149 = vmor %vm4147, %vm4148
        %v4150 = vsel %vm4149, %v4141, %v4146
        %v4151 = vrsqrt.pop %v4054
        %v4152 = vmul.f32 %v4151, %v4054
        %v4153 = vmul.f32 %v4152, %v4151
        %v4154 = vmul.f32 0.5, %v4153
        %v4155 = vsub.f32 1.5, %v4154
        %v4156 = vmul.f32 %v4151, %v4155
        %vm4157 = vweird.f32 %v4054
        %vm4158 = vweird.f32 %v4151
        %vm4159 = vmor %vm4157, %vm4158
        %v4160 = vsel %vm4159, %v4151, %v4156
        %v4161 = vrsqrt.pop %v4055
        %v4162 = vmul.f32 %v4161, %v4055
        %v4163 = vmul.f32 %v4162, %v4161
        %v4164 = vmul.f32 0.5, %v4163
        %v4165 = vsub.f32 1.5, %v4164
        %v4166 = vmul.f32 %v4161, %v4165
        %vm4167 = vweird.f32 %v4055
        %vm4168 = vweird.f32 %v4161
        %vm4169 = vmor %vm4167, %vm4168
        %v4170 = vsel %vm4169, %v4161, %v4166
        %v4171 = vrsqrt.pop %v4056
        %v4172 = vmul.f32 %v4171, %v4056
        %v4173 = vmul.f32 %v4172, %v4171
        %v4174 = vmul.f32 0.5, %v4173
        %v4175 = vsub.f32 1.5, %v4174
        %v4176 = vmul.f32 %v4171, %v4175
        %vm4177 = vweird.f32 %v4056
        %vm4178 = vweird.f32 %v4171
        %vm4179 = vmor %vm4177, %vm4178
        %v4180 = vsel %vm4179, %v4171, %v4176
        %v4181 = vrsqrt.pop %v4057
        %v4182 = vmul.f32 %v4181, %v4057
        %v4183 = vmul.f32 %v4182, %v4181
        %v4184 = vmul.f32 0.5, %v4183
        %v4185 = vsub.f32 1.5, %v4184
        %v4186 = vmul.f32 %v4181, %v4185
        %vm4187 = vweird.f32 %v4057
        %vm4188 = vweird.f32 %v4181
        %vm4189 = vmor %vm4187, %vm4188
        %v4190 = vsel %vm4189, %v4181, %v4186
        %v4191 = vrsqrt.pop %v4058
        %v4192 = vmul.f32 %v4191, %v4058
        %v4193 = vmul.f32 %v4192, %v4191
        %v4194 = vmul.f32 0.5, %v4193
        %v4195 = vsub.f32 1.5, %v4194
        %v4196 = vmul.f32 %v4191, %v4195
        %vm4197 = vweird.f32 %v4058
        %vm4198 = vweird.f32 %v4191
        %vm4199 = vmor %vm4197, %vm4198
        %v4200 = vsel %vm4199, %v4191, %v4196
        %v4201 = vrsqrt.pop %v4059
        %v4202 = vmul.f32 %v4201, %v4059
        %v4203 = vmul.f32 %v4202, %v4201
        %v4204 = vmul.f32 0.5, %v4203
        %v4205 = vsub.f32 1.5, %v4204
        %v4206 = vmul.f32 %v4201, %v4205
        %vm4207 = vweird.f32 %v4059
        %vm4208 = vweird.f32 %v4201
        %vm4209 = vmor %vm4207, %vm4208
        %v4210 = vsel %vm4209, %v4201, %v4206
        %v4211 = vrsqrt.pop %v4060
        %v4212 = vmul.f32 %v4211, %v4060
        %v4213 = vmul.f32 %v4212, %v4211
        %v4214 = vmul.f32 0.5, %v4213
        %v4215 = vsub.f32 1.5, %v4214
        %v4216 = vmul.f32 %v4211, %v4215
        %vm4217 = vweird.f32 %v4060
        %vm4218 = vweird.f32 %v4211
        %vm4219 = vmor %vm4217, %vm4218
        %v4220 = vsel %vm4219, %v4211, %v4216
        %v4221 = vmul.f32 %v3917, %v4070
        %v4222 = vmul.f32 %v3918, %v4070
        %v4223 = vmul.f32 %v3919, %v4080
        %v4224 = vmul.f32 %v3920, %v4080
        %v4225 = vmul.f32 %v3921, %v4090
        %v4226 = vmul.f32 %v3922, %v4090
        %v4227 = vmul.f32 %v3923, %v4100
        %v4228 = vmul.f32 %v3924, %v4100
        %v4229 = vmul.f32 %v3925, %v4110
        %v4230 = vmul.f32 %v3926, %v4110
        %v4231 = vmul.f32 %v3927, %v4120
        %v4232 = vmul.f32 %v3928, %v4120
        %v4233 = vmul.f32 %v3929, %v4130
        %v4234 = vmul.f32 %v3930, %v4130
        %v4235 = vmul.f32 %v3931, %v4140
        %v4236 = vmul.f32 %v3932, %v4140
        %v4237 = vmul.f32 %v3933, %v4150
        %v4238 = vmul.f32 %v3934, %v4150
        %v4239 = vmul.f32 %v3935, %v4160
        %v4240 = vmul.f32 %v3936, %v4160
        %v4241 = vmul.f32 %v3937, %v4170
        %v4242 = vmul.f32 %v3938, %v4170
        %v4243 = vmul.f32 %v3939, %v4180
        %v4244 = vmul.f32 %v3940, %v4180
        %v4245 = vmul.f32 %v3941, %v4190
        %v4246 = vmul.f32 %v3942, %v4190
        %v4247 = vmul.f32 %v3943, %v4200
        %v4248 = vmul.f32 %v3944, %v4200
        %v4249 = vmul.f32 %v3945, %v4210
        %v4250 = vmul.f32 %v3946, %v4210
        %v4251 = vmul.f32 %v3947, %v4220
        %v4252 = vmul.f32 %v3948, %v4220
        %v4253 = vld [vmem:[%s970] sm:$0x3]
        %v4255 = vperm.slane %v4253, 0
        %v4256 = vperm.slane %v4253, 1
        %v4259 = vmul.f32 %v4221, %v4255
        %v4260 = vmul.f32 %v4222, %v4256
        %v4261 = vmul.f32 %v4223, %v4255
        %v4262 = vmul.f32 %v4224, %v4256
        %v4263 = vmul.f32 %v4225, %v4255
        %v4264 = vmul.f32 %v4226, %v4256
        %v4265 = vmul.f32 %v4227, %v4255
        %v4266 = vmul.f32 %v4228, %v4256
        %v4267 = vmul.f32 %v4229, %v4255
        %v4268 = vmul.f32 %v4230, %v4256
        %v4269 = vmul.f32 %v4231, %v4255
        %v4270 = vmul.f32 %v4232, %v4256
        %v4271 = vmul.f32 %v4233, %v4255
        %v4272 = vmul.f32 %v4234, %v4256
        %v4273 = vmul.f32 %v4235, %v4255
        %v4274 = vmul.f32 %v4236, %v4256
        %v4275 = vmul.f32 %v4237, %v4255
        %v4276 = vmul.f32 %v4238, %v4256
        %v4277 = vmul.f32 %v4239, %v4255
        %v4278 = vmul.f32 %v4240, %v4256
        %v4279 = vmul.f32 %v4241, %v4255
        %v4280 = vmul.f32 %v4242, %v4256
        %v4281 = vmul.f32 %v4243, %v4255
        %v4282 = vmul.f32 %v4244, %v4256
        %v4283 = vmul.f32 %v4245, %v4255
        %v4284 = vmul.f32 %v4246, %v4256
        %v4285 = vmul.f32 %v4247, %v4255
        %v4286 = vmul.f32 %v4248, %v4256
        %v4287 = vmul.f32 %v4249, %v4255
        %v4288 = vmul.f32 %v4250, %v4256
        %v4289 = vmul.f32 %v4251, %v4255
        %v4290 = vmul.f32 %v4252, %v4256
        %v4291 = vld [vmem:[%s980] sm:$0x3]
        %v4293 = vperm.slane %v4291, 0
        %v4294 = vperm.slane %v4291, 1
        %v4297 = vadd.f32 %v4259, %v4293
        %v4298 = vadd.f32 %v4260, %v4294
        %v4299 = vadd.f32 %v4261, %v4293
        %v4300 = vadd.f32 %v4262, %v4294
        %v4301 = vadd.f32 %v4263, %v4293
        %v4302 = vadd.f32 %v4264, %v4294
        %v4303 = vadd.f32 %v4265, %v4293
        %v4304 = vadd.f32 %v4266, %v4294
        %v4305 = vadd.f32 %v4267, %v4293
        %v4306 = vadd.f32 %v4268, %v4294
        %v4307 = vadd.f32 %v4269, %v4293
        %v4308 = vadd.f32 %v4270, %v4294
        %v4309 = vadd.f32 %v4271, %v4293
        %v4310 = vadd.f32 %v4272, %v4294
        %v4311 = vadd.f32 %v4273, %v4293
        %v4312 = vadd.f32 %v4274, %v4294
        %v4313 = vadd.f32 %v4275, %v4293
        %v4314 = vadd.f32 %v4276, %v4294
        %v4315 = vadd.f32 %v4277, %v4293
        %v4316 = vadd.f32 %v4278, %v4294
        %v4317 = vadd.f32 %v4279, %v4293
        %v4318 = vadd.f32 %v4280, %v4294
        %v4319 = vadd.f32 %v4281, %v4293
        %v4320 = vadd.f32 %v4282, %v4294
        %v4321 = vadd.f32 %v4283, %v4293
        %v4322 = vadd.f32 %v4284, %v4294
        %v4323 = vadd.f32 %v4285, %v4293
        %v4324 = vadd.f32 %v4286, %v4294
        %v4325 = vadd.f32 %v4287, %v4293
        %v4326 = vadd.f32 %v4288, %v4294
        %v4327 = vadd.f32 %v4289, %v4293
        %v4328 = vadd.f32 %v4290, %v4294
        %v4329 = vpack.c.bf16 %v4299, %v4297
        %v4330 = vpack.c.bf16 %v4300, %v4298
        %v4331 = vpack.c.bf16 %v4303, %v4301
        %v4332 = vpack.c.bf16 %v4304, %v4302
        %v4333 = vpack.c.bf16 %v4307, %v4305
        %v4334 = vpack.c.bf16 %v4308, %v4306
        %v4335 = vpack.c.bf16 %v4311, %v4309
        %v4336 = vpack.c.bf16 %v4312, %v4310
        %v4337 = vpack.c.bf16 %v4315, %v4313
        %v4338 = vpack.c.bf16 %v4316, %v4314
        %v4339 = vpack.c.bf16 %v4319, %v4317
        %v4340 = vpack.c.bf16 %v4320, %v4318
        %v4341 = vpack.c.bf16 %v4323, %v4321
        %v4342 = vpack.c.bf16 %v4324, %v4322
        %v4343 = vpack.c.bf16 %v4327, %v4325
        %v4344 = vpack.c.bf16 %v4328, %v4326
        %v4345 = vld [vmem:[%s990] sm:$0xff]
        %v4346 = vld [vmem:[%s990 + $0x8] sm:$0xff]
        %v4347 = vld [vmem:[%s990 + $0x10] sm:$0xff]
        %v4348 = vld [vmem:[%s990 + $0x18] sm:$0xff]
        %v4349 = vld [vmem:[%s990 + $0x20] sm:$0xff]
        %v4350 = vld [vmem:[%s990 + $0x28] sm:$0xff]
        %v4351 = vld [vmem:[%s990 + $0x30] sm:$0xff]
        %v4352 = vld [vmem:[%s990 + $0x38] sm:$0xff]
        %v4353 = vld [vmem:[%s990 + $0x40] sm:$0xff]
        %v4354 = vld [vmem:[%s990 + $0x48] sm:$0xff]
        %v4355 = vld [vmem:[%s990 + $0x50] sm:$0xff]
        %v4356 = vld [vmem:[%s990 + $0x58] sm:$0xff]
        %v4357 = vld [vmem:[%s990 + $0x60] sm:$0xff]
        %v4358 = vld [vmem:[%s990 + $0x68] sm:$0xff]
        %v4359 = vld [vmem:[%s990 + $0x70] sm:$0xff]
        %v4360 = vld [vmem:[%s990 + $0x78] sm:$0xff]
        %v4361 = vld [vmem:[%s990 + $0x80] sm:$0xff]
        %v4362 = vld [vmem:[%s990 + $0x88] sm:$0xff]
        %v4363 = vld [vmem:[%s990 + $0x90] sm:$0xff]
        %v4364 = vld [vmem:[%s990 + $0x98] sm:$0xff]
        %v4365 = vld [vmem:[%s990 + $0xa0] sm:$0xff]
        %v4366 = vld [vmem:[%s990 + $0xa8] sm:$0xff]
        %v4367 = vld [vmem:[%s990 + $0xb0] sm:$0xff]
        %v4368 = vld [vmem:[%s990 + $0xb8] sm:$0xff]
        %v4369 = vld [vmem:[%s990 + $0xc0] sm:$0xff]
        %v4370 = vld [vmem:[%s990 + $0xc8] sm:$0xff]
        %v4371 = vld [vmem:[%s990 + $0xd0] sm:$0xff]
        %v4372 = vld [vmem:[%s990 + $0xd8] sm:$0xff]
        %v4373 = vld [vmem:[%s990 + $0xe0] sm:$0xff]
        %v4374 = vld [vmem:[%s990 + $0xe8] sm:$0xff]
        %v4375 = vld [vmem:[%s990 + $0xf0] sm:$0xff]
        %v4376 = vld [vmem:[%s990 + $0xf8] sm:$0xff]
        %v4377 = vld [vmem:[%s990 + $0x100] sm:$0xff]
        %v4378 = vld [vmem:[%s990 + $0x108] sm:$0xff]
        %v4379 = vld [vmem:[%s990 + $0x110] sm:$0xff]
        %v4380 = vld [vmem:[%s990 + $0x118] sm:$0xff]
        %v4381 = vld [vmem:[%s990 + $0x120] sm:$0xff]
        %v4382 = vld [vmem:[%s990 + $0x128] sm:$0xff]
        %v4383 = vld [vmem:[%s990 + $0x130] sm:$0xff]
        %v4384 = vld [vmem:[%s990 + $0x138] sm:$0xff]
        %v4385 = vld [vmem:[%s990 + $0x140] sm:$0xff]
        %v4386 = vld [vmem:[%s990 + $0x148] sm:$0xff]
        %v4387 = vld [vmem:[%s990 + $0x150] sm:$0xff]
        %v4388 = vld [vmem:[%s990 + $0x158] sm:$0xff]
        %v4389 = vld [vmem:[%s990 + $0x160] sm:$0xff]
        %v4390 = vld [vmem:[%s990 + $0x168] sm:$0xff]
        %v4391 = vld [vmem:[%s990 + $0x170] sm:$0xff]
        %v4392 = vld [vmem:[%s990 + $0x178] sm:$0xff]
        %v4393 = vld [vmem:[%s990 + $0x180] sm:$0xff]
        %v4394 = vld [vmem:[%s990 + $0x188] sm:$0xff]
        %v4395 = vld [vmem:[%s990 + $0x190] sm:$0xff]
        %v4396 = vld [vmem:[%s990 + $0x198] sm:$0xff]
        %v4397 = vld [vmem:[%s990 + $0x1a0] sm:$0xff]
        %v4398 = vld [vmem:[%s990 + $0x1a8] sm:$0xff]
        %v4399 = vld [vmem:[%s990 + $0x1b0] sm:$0xff]
        %v4400 = vld [vmem:[%s990 + $0x1b8] sm:$0xff]
        %v4401 = vld [vmem:[%s990 + $0x1c0] sm:$0xff]
        %v4402 = vld [vmem:[%s990 + $0x1c8] sm:$0xff]
        %v4403 = vld [vmem:[%s990 + $0x1d0] sm:$0xff]
        %v4404 = vld [vmem:[%s990 + $0x1d8] sm:$0xff]
        %v4405 = vld [vmem:[%s990 + $0x1e0] sm:$0xff]
        %v4406 = vld [vmem:[%s990 + $0x1e8] sm:$0xff]
        %v4407 = vld [vmem:[%s990 + $0x1f0] sm:$0xff]
        %v4408 = vld [vmem:[%s990 + $0x1f8] sm:$0xff]
        %v4409 = vld [vmem:[%s1153] sm:$0xf]
        %v4411 = vperm.slane %v4409, 0
        %v4412 = vperm.slane %v4409, 1
        %v4413 = vperm.slane %v4409, 2
        %v4414 = vperm.slane %v4409, 3
        %v4483 = vunpack.c.l.b16 %v4345
        %v4484 = vunpack.c.h.b16 %v4345
        %v4485 = vunpack.c.l.b16 %v4346
        %v4486 = vunpack.c.h.b16 %v4346
        %v4487 = vunpack.c.l.b16 %v4347
        %v4488 = vunpack.c.h.b16 %v4347
        %v4489 = vunpack.c.l.b16 %v4348
        %v4490 = vunpack.c.h.b16 %v4348
        %v4491 = vunpack.c.l.b16 %v4349
        %v4492 = vunpack.c.h.b16 %v4349
        %v4493 = vunpack.c.l.b16 %v4350
        %v4494 = vunpack.c.h.b16 %v4350
        %v4495 = vunpack.c.l.b16 %v4351
        %v4496 = vunpack.c.h.b16 %v4351
        %v4497 = vunpack.c.l.b16 %v4352
        %v4498 = vunpack.c.h.b16 %v4352
        %v4499 = vunpack.c.l.b16 %v4353
        %v4500 = vunpack.c.h.b16 %v4353
        %v4501 = vunpack.c.l.b16 %v4354
        %v4502 = vunpack.c.h.b16 %v4354
        %v4503 = vunpack.c.l.b16 %v4355
        %v4504 = vunpack.c.h.b16 %v4355
        %v4505 = vunpack.c.l.b16 %v4356
        %v4506 = vunpack.c.h.b16 %v4356
        %v4507 = vunpack.c.l.b16 %v4357
        %v4508 = vunpack.c.h.b16 %v4357
        %v4509 = vunpack.c.l.b16 %v4358
        %v4510 = vunpack.c.h.b16 %v4358
        %v4511 = vunpack.c.l.b16 %v4359
        %v4512 = vunpack.c.h.b16 %v4359
        %v4513 = vunpack.c.l.b16 %v4360
        %v4514 = vunpack.c.h.b16 %v4360
        %v4515 = vunpack.c.l.b16 %v4361
        %v4516 = vunpack.c.h.b16 %v4361
        %v4517 = vunpack.c.l.b16 %v4362
        %v4518 = vunpack.c.h.b16 %v4362
        %v4519 = vunpack.c.l.b16 %v4363
        %v4520 = vunpack.c.h.b16 %v4363
        %v4521 = vunpack.c.l.b16 %v4364
        %v4522 = vunpack.c.h.b16 %v4364
        %v4523 = vunpack.c.l.b16 %v4365
        %v4524 = vunpack.c.h.b16 %v4365
        %v4525 = vunpack.c.l.b16 %v4366
        %v4526 = vunpack.c.h.b16 %v4366
        %v4527 = vunpack.c.l.b16 %v4367
        %v4528 = vunpack.c.h.b16 %v4367
        %v4529 = vunpack.c.l.b16 %v4368
        %v4530 = vunpack.c.h.b16 %v4368
        %v4531 = vunpack.c.l.b16 %v4369
        %v4532 = vunpack.c.h.b16 %v4369
        %v4533 = vunpack.c.l.b16 %v4370
        %v4534 = vunpack.c.h.b16 %v4370
        %v4535 = vunpack.c.l.b16 %v4371
        %v4536 = vunpack.c.h.b16 %v4371
        %v4537 = vunpack.c.l.b16 %v4372
        %v4538 = vunpack.c.h.b16 %v4372
        %v4539 = vunpack.c.l.b16 %v4373
        %v4540 = vunpack.c.h.b16 %v4373
        %v4541 = vunpack.c.l.b16 %v4374
        %v4542 = vunpack.c.h.b16 %v4374
        %v4543 = vunpack.c.l.b16 %v4375
        %v4544 = vunpack.c.h.b16 %v4375
        %v4545 = vunpack.c.l.b16 %v4376
        %v4546 = vunpack.c.h.b16 %v4376
        %v4547 = vunpack.c.l.b16 %v4377
        %v4548 = vunpack.c.h.b16 %v4377
        %v4549 = vunpack.c.l.b16 %v4378
        %v4550 = vunpack.c.h.b16 %v4378
        %v4551 = vunpack.c.l.b16 %v4379
        %v4552 = vunpack.c.h.b16 %v4379
        %v4553 = vunpack.c.l.b16 %v4380
        %v4554 = vunpack.c.h.b16 %v4380
        %v4555 = vunpack.c.l.b16 %v4381
        %v4556 = vunpack.c.h.b16 %v4381
        %v4557 = vunpack.c.l.b16 %v4382
        %v4558 = vunpack.c.h.b16 %v4382
        %v4559 = vunpack.c.l.b16 %v4383
        %v4560 = vunpack.c.h.b16 %v4383
        %v4561 = vunpack.c.l.b16 %v4384
        %v4562 = vunpack.c.h.b16 %v4384
        %v4563 = vunpack.c.l.b16 %v4385
        %v4564 = vunpack.c.h.b16 %v4385
        %v4565 = vunpack.c.l.b16 %v4386
        %v4566 = vunpack.c.h.b16 %v4386
        %v4567 = vunpack.c.l.b16 %v4387
        %v4568 = vunpack.c.h.b16 %v4387
        %v4569 = vunpack.c.l.b16 %v4388
        %v4570 = vunpack.c.h.b16 %v4388
        %v4571 = vunpack.c.l.b16 %v4389
        %v4572 = vunpack.c.h.b16 %v4389
        %v4573 = vunpack.c.l.b16 %v4390
        %v4574 = vunpack.c.h.b16 %v4390
        %v4575 = vunpack.c.l.b16 %v4391
        %v4576 = vunpack.c.h.b16 %v4391
        %v4577 = vunpack.c.l.b16 %v4392
        %v4578 = vunpack.c.h.b16 %v4392
        %v4579 = vunpack.c.l.b16 %v4393
        %v4580 = vunpack.c.h.b16 %v4393
        %v4581 = vunpack.c.l.b16 %v4394
        %v4582 = vunpack.c.h.b16 %v4394
        %v4583 = vunpack.c.l.b16 %v4395
        %v4584 = vunpack.c.h.b16 %v4395
        %v4585 = vunpack.c.l.b16 %v4396
        %v4586 = vunpack.c.h.b16 %v4396
        %v4587 = vunpack.c.l.b16 %v4397
        %v4588 = vunpack.c.h.b16 %v4397
        %v4589 = vunpack.c.l.b16 %v4398
        %v4590 = vunpack.c.h.b16 %v4398
        %v4591 = vunpack.c.l.b16 %v4399
        %v4592 = vunpack.c.h.b16 %v4399
        %v4593 = vunpack.c.l.b16 %v4400
        %v4594 = vunpack.c.h.b16 %v4400
        %v4595 = vunpack.c.l.b16 %v4401
        %v4596 = vunpack.c.h.b16 %v4401
        %v4597 = vunpack.c.l.b16 %v4402
        %v4598 = vunpack.c.h.b16 %v4402
        %v4599 = vunpack.c.l.b16 %v4403
        %v4600 = vunpack.c.h.b16 %v4403
        %v4601 = vunpack.c.l.b16 %v4404
        %v4602 = vunpack.c.h.b16 %v4404
        %v4603 = vunpack.c.l.b16 %v4405
        %v4604 = vunpack.c.h.b16 %v4405
        %v4605 = vunpack.c.l.b16 %v4406
        %v4606 = vunpack.c.h.b16 %v4406
        %v4607 = vunpack.c.l.b16 %v4407
        %v4608 = vunpack.c.h.b16 %v4407
        %v4609 = vunpack.c.l.b16 %v4408
        %v4610 = vunpack.c.h.b16 %v4408
        %v4611 = vpack.c.b16 %v4487, %v4483
        %v4612 = vpack.c.b16 %v4488, %v4484
        %v4613 = vpack.c.b16 %v4489, %v4485
        %v4614 = vpack.c.b16 %v4490, %v4486
        %v4615 = vpack.c.b16 %v4495, %v4491
        %v4616 = vpack.c.b16 %v4496, %v4492
        %v4617 = vpack.c.b16 %v4497, %v4493
        %v4618 = vpack.c.b16 %v4498, %v4494
        %v4619 = vpack.c.b16 %v4503, %v4499
        %v4620 = vpack.c.b16 %v4504, %v4500
        %v4621 = vpack.c.b16 %v4505, %v4501
        %v4622 = vpack.c.b16 %v4506, %v4502
        %v4623 = vpack.c.b16 %v4511, %v4507
        %v4624 = vpack.c.b16 %v4512, %v4508
        %v4625 = vpack.c.b16 %v4513, %v4509
        %v4626 = vpack.c.b16 %v4514, %v4510
        %v4627 = vpack.c.b16 %v4519, %v4515
        %v4628 = vpack.c.b16 %v4520, %v4516
        %v4629 = vpack.c.b16 %v4521, %v4517
        %v4630 = vpack.c.b16 %v4522, %v4518
        %v4631 = vpack.c.b16 %v4527, %v4523
        %v4632 = vpack.c.b16 %v4528, %v4524
        %v4633 = vpack.c.b16 %v4529, %v4525
        %v4634 = vpack.c.b16 %v4530, %v4526
        %v4635 = vpack.c.b16 %v4535, %v4531
        %v4636 = vpack.c.b16 %v4536, %v4532
        %v4637 = vpack.c.b16 %v4537, %v4533
        %v4638 = vpack.c.b16 %v4538, %v4534
        %v4639 = vpack.c.b16 %v4543, %v4539
        %v4640 = vpack.c.b16 %v4544, %v4540
        %v4641 = vpack.c.b16 %v4545, %v4541
        %v4642 = vpack.c.b16 %v4546, %v4542
        %v4643 = vpack.c.b16 %v4551, %v4547
        %v4644 = vpack.c.b16 %v4552, %v4548
        %v4645 = vpack.c.b16 %v4553, %v4549
        %v4646 = vpack.c.b16 %v4554, %v4550
        %v4647 = vpack.c.b16 %v4559, %v4555
        %v4648 = vpack.c.b16 %v4560, %v4556
        %v4649 = vpack.c.b16 %v4561, %v4557
        %v4650 = vpack.c.b16 %v4562, %v4558
        %v4651 = vpack.c.b16 %v4567, %v4563
        %v4652 = vpack.c.b16 %v4568, %v4564
        %v4653 = vpack.c.b16 %v4569, %v4565
        %v4654 = vpack.c.b16 %v4570, %v4566
        %v4655 = vpack.c.b16 %v4575, %v4571
        %v4656 = vpack.c.b16 %v4576, %v4572
        %v4657 = vpack.c.b16 %v4577, %v4573
        %v4658 = vpack.c.b16 %v4578, %v4574
        %v4659 = vpack.c.b16 %v4583, %v4579
        %v4660 = vpack.c.b16 %v4584, %v4580
        %v4661 = vpack.c.b16 %v4585, %v4581
        %v4662 = vpack.c.b16 %v4586, %v4582
        %v4663 = vpack.c.b16 %v4591, %v4587
        %v4664 = vpack.c.b16 %v4592, %v4588
        %v4665 = vpack.c.b16 %v4593, %v4589
        %v4666 = vpack.c.b16 %v4594, %v4590
        %v4667 = vpack.c.b16 %v4599, %v4595
        %v4668 = vpack.c.b16 %v4600, %v4596
        %v4669 = vpack.c.b16 %v4601, %v4597
        %v4670 = vpack.c.b16 %v4602, %v4598
        %v4671 = vpack.c.b16 %v4607, %v4603
        %v4672 = vpack.c.b16 %v4608, %v4604
        %v4673 = vpack.c.b16 %v4609, %v4605
        %v4674 = vpack.c.b16 %v4610, %v4606
        %4739 = vmatpush.bf16.msra.mxu0 %v4639
        %4740 = vmatpush.bf16.msra.mxu0 %v4635
        %4741 = vmatpush.bf16.msra.mxu0 %v4631
        %4742 = vmatpush.bf16.msra.mxu0 %v4627
        %4743 = vmatpush.bf16.msra.mxu0 %v4623
        %4744 = vmatpush.bf16.msra.mxu0 %v4619
        %4745 = vmatpush.bf16.msra.mxu0 %v4615
        %4746 = vmatpush.bf16.msra.mxu0 %v4611
        %4747 = vmatmul.bf16.gmra.mxu0 %v4329
        %v4748 = vpop.f32.mrf.mxu0
        %v4749 = vadd.f32 %v4411, %v4748
        %v4750 = vpop.f32.mrf.mxu0
        %v4751 = vadd.f32 %v4411, %v4750
        %4752 = vmatmul.bf16.gmra.mxu0 %v4331
        %v4753 = vpop.f32.mrf.mxu0
        %v4754 = vadd.f32 %v4411, %v4753
        %v4755 = vpop.f32.mrf.mxu0
        %v4756 = vadd.f32 %v4411, %v4755
        %4757 = vmatmul.bf16.gmra.mxu0 %v4333
        %v4758 = vpop.f32.mrf.mxu0
        %v4759 = vadd.f32 %v4411, %v4758
        %v4760 = vpop.f32.mrf.mxu0
        %v4761 = vadd.f32 %v4411, %v4760
        %4762 = vmatmul.bf16.gmra.mxu0 %v4335
        %v4763 = vpop.f32.mrf.mxu0
        %v4764 = vadd.f32 %v4411, %v4763
        %v4765 = vpop.f32.mrf.mxu0
        %v4766 = vadd.f32 %v4411, %v4765
        %4767 = vmatmul.bf16.gmra.mxu0 %v4337
        %v4768 = vpop.f32.mrf.mxu0
        %v4769 = vadd.f32 %v4411, %v4768
        %v4770 = vpop.f32.mrf.mxu0
        %v4771 = vadd.f32 %v4411, %v4770
        %4772 = vmatmul.bf16.gmra.mxu0 %v4339
        %v4773 = vpop.f32.mrf.mxu0
        %v4774 = vadd.f32 %v4411, %v4773
        %v4775 = vpop.f32.mrf.mxu0
        %v4776 = vadd.f32 %v4411, %v4775
        %4777 = vmatmul.bf16.gmra.mxu0 %v4341
        %v4778 = vpop.f32.mrf.mxu0
        %v4779 = vadd.f32 %v4411, %v4778
        %v4780 = vpop.f32.mrf.mxu0
        %v4781 = vadd.f32 %v4411, %v4780
        %4782 = vmatmul.bf16.gmra.mxu0 %v4343
        %v4783 = vpop.f32.mrf.mxu0
        %v4784 = vadd.f32 %v4411, %v4783
        %v4785 = vpop.f32.mrf.mxu0
        %v4786 = vadd.f32 %v4411, %v4785
        %4787 = vdwg.mxu0
        %4788 = vmatpush.bf16.msra.mxu0 %v4671
        %4789 = vmatpush.bf16.msra.mxu0 %v4667
        %4790 = vmatpush.bf16.msra.mxu0 %v4663
        %4791 = vmatpush.bf16.msra.mxu0 %v4659
        %4792 = vmatpush.bf16.msra.mxu0 %v4655
        %4793 = vmatpush.bf16.msra.mxu0 %v4651
        %4794 = vmatpush.bf16.msra.mxu0 %v4647
        %4795 = vmatpush.bf16.msra.mxu0 %v4643
        %4796 = vmatmul.bf16.gmra.mxu0 %v4330
        %v4797 = vpop.f32.mrf.mxu0
        %v4798 = vadd.f32 %v4749, %v4797
        %v4799 = vpop.f32.mrf.mxu0
        %v4800 = vadd.f32 %v4751, %v4799
        %4801 = vmatmul.bf16.gmra.mxu0 %v4332
        %v4802 = vpop.f32.mrf.mxu0
        %v4803 = vadd.f32 %v4754, %v4802
        %v4804 = vpop.f32.mrf.mxu0
        %v4805 = vadd.f32 %v4756, %v4804
        %4806 = vmatmul.bf16.gmra.mxu0 %v4334
        %v4807 = vpop.f32.mrf.mxu0
        %v4808 = vadd.f32 %v4759, %v4807
        %v4809 = vpop.f32.mrf.mxu0
        %v4810 = vadd.f32 %v4761, %v4809
        %4811 = vmatmul.bf16.gmra.mxu0 %v4336
        %v4812 = vpop.f32.mrf.mxu0
        %v4813 = vadd.f32 %v4764, %v4812
        %v4814 = vpop.f32.mrf.mxu0
        %v4815 = vadd.f32 %v4766, %v4814
        %4816 = vmatmul.bf16.gmra.mxu0 %v4338
        %v4817 = vpop.f32.mrf.mxu0
        %v4818 = vadd.f32 %v4769, %v4817
        %v4819 = vpop.f32.mrf.mxu0
        %v4820 = vadd.f32 %v4771, %v4819
        %4821 = vmatmul.bf16.gmra.mxu0 %v4340
        %v4822 = vpop.f32.mrf.mxu0
        %v4823 = vadd.f32 %v4774, %v4822
        %v4824 = vpop.f32.mrf.mxu0
        %v4825 = vadd.f32 %v4776, %v4824
        %4826 = vmatmul.bf16.gmra.mxu0 %v4342
        %v4827 = vpop.f32.mrf.mxu0
        %v4828 = vadd.f32 %v4779, %v4827
        %v4829 = vpop.f32.mrf.mxu0
        %v4830 = vadd.f32 %v4781, %v4829
        %4831 = vmatmul.bf16.gmra.mxu0 %v4344
        %v4832 = vpop.f32.mrf.mxu0
        %v4833 = vadd.f32 %v4784, %v4832
        %v4834 = vpop.f32.mrf.mxu0
        %v4835 = vadd.f32 %v4786, %v4834
        %4836 = vdwg.mxu0
        %4837 = vmatpush.bf16.msra.mxu0 %v4640
        %4838 = vmatpush.bf16.msra.mxu0 %v4636
        %4839 = vmatpush.bf16.msra.mxu0 %v4632
        %4840 = vmatpush.bf16.msra.mxu0 %v4628
        %4841 = vmatpush.bf16.msra.mxu0 %v4624
        %4842 = vmatpush.bf16.msra.mxu0 %v4620
        %4843 = vmatpush.bf16.msra.mxu0 %v4616
        %4844 = vmatpush.bf16.msra.mxu0 %v4612
        %4845 = vmatmul.bf16.gmra.mxu0 %v4329
        %v4846 = vpop.f32.mrf.mxu0
        %v4847 = vadd.f32 %v4412, %v4846
        %v4848 = vpop.f32.mrf.mxu0
        %v4849 = vadd.f32 %v4412, %v4848
        %4850 = vmatmul.bf16.gmra.mxu0 %v4331
        %v4851 = vpop.f32.mrf.mxu0
        %v4852 = vadd.f32 %v4412, %v4851
        %v4853 = vpop.f32.mrf.mxu0
        %v4854 = vadd.f32 %v4412, %v4853
        %4855 = vmatmul.bf16.gmra.mxu0 %v4333
        %v4856 = vpop.f32.mrf.mxu0
        %v4857 = vadd.f32 %v4412, %v4856
        %v4858 = vpop.f32.mrf.mxu0
        %v4859 = vadd.f32 %v4412, %v4858
        %4860 = vmatmul.bf16.gmra.mxu0 %v4335
        %v4861 = vpop.f32.mrf.mxu0
        %v4862 = vadd.f32 %v4412, %v4861
        %v4863 = vpop.f32.mrf.mxu0
        %v4864 = vadd.f32 %v4412, %v4863
        %4865 = vmatmul.bf16.gmra.mxu0 %v4337
        %v4866 = vpop.f32.mrf.mxu0
        %v4867 = vadd.f32 %v4412, %v4866
        %v4868 = vpop.f32.mrf.mxu0
        %v4869 = vadd.f32 %v4412, %v4868
        %4870 = vmatmul.bf16.gmra.mxu0 %v4339
        %v4871 = vpop.f32.mrf.mxu0
        %v4872 = vadd.f32 %v4412, %v4871
        %v4873 = vpop.f32.mrf.mxu0
        %v4874 = vadd.f32 %v4412, %v4873
        %4875 = vmatmul.bf16.gmra.mxu0 %v4341
        %v4876 = vpop.f32.mrf.mxu0
        %v4877 = vadd.f32 %v4412, %v4876
        %v4878 = vpop.f32.mrf.mxu0
        %v4879 = vadd.f32 %v4412, %v4878
        %4880 = vmatmul.bf16.gmra.mxu0 %v4343
        %v4881 = vpop.f32.mrf.mxu0
        %v4882 = vadd.f32 %v4412, %v4881
        %v4883 = vpop.f32.mrf.mxu0
        %v4884 = vadd.f32 %v4412, %v4883
        %4885 = vdwg.mxu0
        %4886 = vmatpush.bf16.msra.mxu0 %v4672
        %4887 = vmatpush.bf16.msra.mxu0 %v4668
        %4888 = vmatpush.bf16.msra.mxu0 %v4664
        %4889 = vmatpush.bf16.msra.mxu0 %v4660
        %4890 = vmatpush.bf16.msra.mxu0 %v4656
        %4891 = vmatpush.bf16.msra.mxu0 %v4652
        %4892 = vmatpush.bf16.msra.mxu0 %v4648
        %4893 = vmatpush.bf16.msra.mxu0 %v4644
        %4894 = vmatmul.bf16.gmra.mxu0 %v4330
        %v4895 = vpop.f32.mrf.mxu0
        %v4896 = vadd.f32 %v4847, %v4895
        %v4897 = vpop.f32.mrf.mxu0
        %v4898 = vadd.f32 %v4849, %v4897
        %4899 = vmatmul.bf16.gmra.mxu0 %v4332
        %v4900 = vpop.f32.mrf.mxu0
        %v4901 = vadd.f32 %v4852, %v4900
        %v4902 = vpop.f32.mrf.mxu0
        %v4903 = vadd.f32 %v4854, %v4902
        %4904 = vmatmul.bf16.gmra.mxu0 %v4334
        %v4905 = vpop.f32.mrf.mxu0
        %v4906 = vadd.f32 %v4857, %v4905
        %v4907 = vpop.f32.mrf.mxu0
        %v4908 = vadd.f32 %v4859, %v4907
        %4909 = vmatmul.bf16.gmra.mxu0 %v4336
        %v4910 = vpop.f32.mrf.mxu0
        %v4911 = vadd.f32 %v4862, %v4910
        %v4912 = vpop.f32.mrf.mxu0
        %v4913 = vadd.f32 %v4864, %v4912
        %4914 = vmatmul.bf16.gmra.mxu0 %v4338
        %v4915 = vpop.f32.mrf.mxu0
        %v4916 = vadd.f32 %v4867, %v4915
        %v4917 = vpop.f32.mrf.mxu0
        %v4918 = vadd.f32 %v4869, %v4917
        %4919 = vmatmul.bf16.gmra.mxu0 %v4340
        %v4920 = vpop.f32.mrf.mxu0
        %v4921 = vadd.f32 %v4872, %v4920
        %v4922 = vpop.f32.mrf.mxu0
        %v4923 = vadd.f32 %v4874, %v4922
        %4924 = vmatmul.bf16.gmra.mxu0 %v4342
        %v4925 = vpop.f32.mrf.mxu0
        %v4926 = vadd.f32 %v4877, %v4925
        %v4927 = vpop.f32.mrf.mxu0
        %v4928 = vadd.f32 %v4879, %v4927
        %4929 = vmatmul.bf16.gmra.mxu0 %v4344
        %v4930 = vpop.f32.mrf.mxu0
        %v4931 = vadd.f32 %v4882, %v4930
        %v4932 = vpop.f32.mrf.mxu0
        %v4933 = vadd.f32 %v4884, %v4932
        %4934 = vdwg.mxu0
        %4935 = vmatpush.bf16.msra.mxu0 %v4641
        %4936 = vmatpush.bf16.msra.mxu0 %v4637
        %4937 = vmatpush.bf16.msra.mxu0 %v4633
        %4938 = vmatpush.bf16.msra.mxu0 %v4629
        %4939 = vmatpush.bf16.msra.mxu0 %v4625
        %4940 = vmatpush.bf16.msra.mxu0 %v4621
        %4941 = vmatpush.bf16.msra.mxu0 %v4617
        %4942 = vmatpush.bf16.msra.mxu0 %v4613
        %4943 = vmatmul.bf16.gmra.mxu0 %v4329
        %v4944 = vpop.f32.mrf.mxu0
        %v4945 = vadd.f32 %v4413, %v4944
        %v4946 = vpop.f32.mrf.mxu0
        %v4947 = vadd.f32 %v4413, %v4946
        %4948 = vmatmul.bf16.gmra.mxu0 %v4331
        %v4949 = vpop.f32.mrf.mxu0
        %v4950 = vadd.f32 %v4413, %v4949
        %v4951 = vpop.f32.mrf.mxu0
        %v4952 = vadd.f32 %v4413, %v4951
        %4953 = vmatmul.bf16.gmra.mxu0 %v4333
        %v4954 = vpop.f32.mrf.mxu0
        %v4955 = vadd.f32 %v4413, %v4954
        %v4956 = vpop.f32.mrf.mxu0
        %v4957 = vadd.f32 %v4413, %v4956
        %4958 = vmatmul.bf16.gmra.mxu0 %v4335
        %v4959 = vpop.f32.mrf.mxu0
        %v4960 = vadd.f32 %v4413, %v4959
        %v4961 = vpop.f32.mrf.mxu0
        %v4962 = vadd.f32 %v4413, %v4961
        %4963 = vmatmul.bf16.gmra.mxu0 %v4337
        %v4964 = vpop.f32.mrf.mxu0
        %v4965 = vadd.f32 %v4413, %v4964
        %v4966 = vpop.f32.mrf.mxu0
        %v4967 = vadd.f32 %v4413, %v4966
        %4968 = vmatmul.bf16.gmra.mxu0 %v4339
        %v4969 = vpop.f32.mrf.mxu0
        %v4970 = vadd.f32 %v4413, %v4969
        %v4971 = vpop.f32.mrf.mxu0
        %v4972 = vadd.f32 %v4413, %v4971
        %4973 = vmatmul.bf16.gmra.mxu0 %v4341
        %v4974 = vpop.f32.mrf.mxu0
        %v4975 = vadd.f32 %v4413, %v4974
        %v4976 = vpop.f32.mrf.mxu0
        %v4977 = vadd.f32 %v4413, %v4976
        %4978 = vmatmul.bf16.gmra.mxu0 %v4343
        %v4979 = vpop.f32.mrf.mxu0
        %v4980 = vadd.f32 %v4413, %v4979
        %v4981 = vpop.f32.mrf.mxu0
        %v4982 = vadd.f32 %v4413, %v4981
        %4983 = vdwg.mxu0
        %4984 = vmatpush.bf16.msra.mxu0 %v4673
        %4985 = vmatpush.bf16.msra.mxu0 %v4669
        %4986 = vmatpush.bf16.msra.mxu0 %v4665
        %4987 = vmatpush.bf16.msra.mxu0 %v4661
        %4988 = vmatpush.bf16.msra.mxu0 %v4657
        %4989 = vmatpush.bf16.msra.mxu0 %v4653
        %4990 = vmatpush.bf16.msra.mxu0 %v4649
        %4991 = vmatpush.bf16.msra.mxu0 %v4645
        %4992 = vmatmul.bf16.gmra.mxu0 %v4330
        %v4993 = vpop.f32.mrf.mxu0
        %v4994 = vadd.f32 %v4945, %v4993
        %v4995 = vpop.f32.mrf.mxu0
        %v4996 = vadd.f32 %v4947, %v4995
        %4997 = vmatmul.bf16.gmra.mxu0 %v4332
        %v4998 = vpop.f32.mrf.mxu0
        %v4999 = vadd.f32 %v4950, %v4998
        %v5000 = vpop.f32.mrf.mxu0
        %v5001 = vadd.f32 %v4952, %v5000
        %5002 = vmatmul.bf16.gmra.mxu0 %v4334
        %v5003 = vpop.f32.mrf.mxu0
        %v5004 = vadd.f32 %v4955, %v5003
        %v5005 = vpop.f32.mrf.mxu0
        %v5006 = vadd.f32 %v4957, %v5005
        %5007 = vmatmul.bf16.gmra.mxu0 %v4336
        %v5008 = vpop.f32.mrf.mxu0
        %v5009 = vadd.f32 %v4960, %v5008
        %v5010 = vpop.f32.mrf.mxu0
        %v5011 = vadd.f32 %v4962, %v5010
        %5012 = vmatmul.bf16.gmra.mxu0 %v4338
        %v5013 = vpop.f32.mrf.mxu0
        %v5014 = vadd.f32 %v4965, %v5013
        %v5015 = vpop.f32.mrf.mxu0
        %v5016 = vadd.f32 %v4967, %v5015
        %5017 = vmatmul.bf16.gmra.mxu0 %v4340
        %v5018 = vpop.f32.mrf.mxu0
        %v5019 = vadd.f32 %v4970, %v5018
        %v5020 = vpop.f32.mrf.mxu0
        %v5021 = vadd.f32 %v4972, %v5020
        %5022 = vmatmul.bf16.gmra.mxu0 %v4342
        %v5023 = vpop.f32.mrf.mxu0
        %v5024 = vadd.f32 %v4975, %v5023
        %v5025 = vpop.f32.mrf.mxu0
        %v5026 = vadd.f32 %v4977, %v5025
        %5027 = vmatmul.bf16.gmra.mxu0 %v4344
        %v5028 = vpop.f32.mrf.mxu0
        %v5029 = vadd.f32 %v4980, %v5028
        %v5030 = vpop.f32.mrf.mxu0
        %v5031 = vadd.f32 %v4982, %v5030
        %5032 = vdwg.mxu0
        %5033 = vmatpush.bf16.msra.mxu0 %v4642
        %5034 = vmatpush.bf16.msra.mxu0 %v4638
        %5035 = vmatpush.bf16.msra.mxu0 %v4634
        %5036 = vmatpush.bf16.msra.mxu0 %v4630
        %5037 = vmatpush.bf16.msra.mxu0 %v4626
        %5038 = vmatpush.bf16.msra.mxu0 %v4622
        %5039 = vmatpush.bf16.msra.mxu0 %v4618
        %5040 = vmatpush.bf16.msra.mxu0 %v4614
        %5041 = vmatmul.bf16.gmra.mxu0 %v4329
        %v5042 = vpop.f32.mrf.mxu0
        %v5043 = vadd.f32 %v4414, %v5042
        %v5044 = vpop.f32.mrf.mxu0
        %v5045 = vadd.f32 %v4414, %v5044
        %5046 = vmatmul.bf16.gmra.mxu0 %v4331
        %v5047 = vpop.f32.mrf.mxu0
        %v5048 = vadd.f32 %v4414, %v5047
        %v5049 = vpop.f32.mrf.mxu0
        %v5050 = vadd.f32 %v4414, %v5049
        %5051 = vmatmul.bf16.gmra.mxu0 %v4333
        %v5052 = vpop.f32.mrf.mxu0
        %v5053 = vadd.f32 %v4414, %v5052
        %v5054 = vpop.f32.mrf.mxu0
        %v5055 = vadd.f32 %v4414, %v5054
        %5056 = vmatmul.bf16.gmra.mxu0 %v4335
        %v5057 = vpop.f32.mrf.mxu0
        %v5058 = vadd.f32 %v4414, %v5057
        %v5059 = vpop.f32.mrf.mxu0
        %v5060 = vadd.f32 %v4414, %v5059
        %5061 = vmatmul.bf16.gmra.mxu0 %v4337
        %v5062 = vpop.f32.mrf.mxu0
        %v5063 = vadd.f32 %v4414, %v5062
        %v5064 = vpop.f32.mrf.mxu0
        %v5065 = vadd.f32 %v4414, %v5064
        %5066 = vmatmul.bf16.gmra.mxu0 %v4339
        %v5067 = vpop.f32.mrf.mxu0
        %v5068 = vadd.f32 %v4414, %v5067
        %v5069 = vpop.f32.mrf.mxu0
        %v5070 = vadd.f32 %v4414, %v5069
        %5071 = vmatmul.bf16.gmra.mxu0 %v4341
        %v5072 = vpop.f32.mrf.mxu0
        %v5073 = vadd.f32 %v4414, %v5072
        %v5074 = vpop.f32.mrf.mxu0
        %v5075 = vadd.f32 %v4414, %v5074
        %5076 = vmatmul.bf16.gmra.mxu0 %v4343
        %v5077 = vpop.f32.mrf.mxu0
        %v5078 = vadd.f32 %v4414, %v5077
        %v5079 = vpop.f32.mrf.mxu0
        %v5080 = vadd.f32 %v4414, %v5079
        %5081 = vdwg.mxu0
        %5082 = vmatpush.bf16.msra.mxu0 %v4674
        %5083 = vmatpush.bf16.msra.mxu0 %v4670
        %5084 = vmatpush.bf16.msra.mxu0 %v4666
        %5085 = vmatpush.bf16.msra.mxu0 %v4662
        %5086 = vmatpush.bf16.msra.mxu0 %v4658
        %5087 = vmatpush.bf16.msra.mxu0 %v4654
        %5088 = vmatpush.bf16.msra.mxu0 %v4650
        %5089 = vmatpush.bf16.msra.mxu0 %v4646
        %5090 = vmatmul.bf16.gmra.mxu0 %v4330
        %v5091 = vpop.f32.mrf.mxu0
        %v5092 = vadd.f32 %v5043, %v5091
        %v5093 = vpop.f32.mrf.mxu0
        %v5094 = vadd.f32 %v5045, %v5093
        %5095 = vmatmul.bf16.gmra.mxu0 %v4332
        %v5096 = vpop.f32.mrf.mxu0
        %v5097 = vadd.f32 %v5048, %v5096
        %v5098 = vpop.f32.mrf.mxu0
        %v5099 = vadd.f32 %v5050, %v5098
        %5100 = vmatmul.bf16.gmra.mxu0 %v4334
        %v5101 = vpop.f32.mrf.mxu0
        %v5102 = vadd.f32 %v5053, %v5101
        %v5103 = vpop.f32.mrf.mxu0
        %v5104 = vadd.f32 %v5055, %v5103
        %5105 = vmatmul.bf16.gmra.mxu0 %v4336
        %v5106 = vpop.f32.mrf.mxu0
        %v5107 = vadd.f32 %v5058, %v5106
        %v5108 = vpop.f32.mrf.mxu0
        %v5109 = vadd.f32 %v5060, %v5108
        %5110 = vmatmul.bf16.gmra.mxu0 %v4338
        %v5111 = vpop.f32.mrf.mxu0
        %v5112 = vadd.f32 %v5063, %v5111
        %v5113 = vpop.f32.mrf.mxu0
        %v5114 = vadd.f32 %v5065, %v5113
        %5115 = vmatmul.bf16.gmra.mxu0 %v4340
        %v5116 = vpop.f32.mrf.mxu0
        %v5117 = vadd.f32 %v5068, %v5116
        %v5118 = vpop.f32.mrf.mxu0
        %v5119 = vadd.f32 %v5070, %v5118
        %5120 = vmatmul.bf16.gmra.mxu0 %v4342
        %v5121 = vpop.f32.mrf.mxu0
        %v5122 = vadd.f32 %v5073, %v5121
        %v5123 = vpop.f32.mrf.mxu0
        %v5124 = vadd.f32 %v5075, %v5123
        %5125 = vmatmul.bf16.gmra.mxu0 %v4344
        %v5126 = vpop.f32.mrf.mxu0
        %v5127 = vadd.f32 %v5078, %v5126
        %v5128 = vpop.f32.mrf.mxu0
        %v5129 = vadd.f32 %v5080, %v5128
        %5130 = vdwg.mxu0
        %v5131 = vmax.f32 %v4798, 0.0
        %v5132 = vmax.f32 %v4896, 0.0
        %v5133 = vmax.f32 %v4994, 0.0
        %v5134 = vmax.f32 %v5092, 0.0
        %v5135 = vmax.f32 %v4800, 0.0
        %v5136 = vmax.f32 %v4898, 0.0
        %v5137 = vmax.f32 %v4996, 0.0
        %v5138 = vmax.f32 %v5094, 0.0
        %v5139 = vmax.f32 %v4803, 0.0
        %v5140 = vmax.f32 %v4901, 0.0
        %v5141 = vmax.f32 %v4999, 0.0
        %v5142 = vmax.f32 %v5097, 0.0
        %v5143 = vmax.f32 %v4805, 0.0
        %v5144 = vmax.f32 %v4903, 0.0
        %v5145 = vmax.f32 %v5001, 0.0
        %v5146 = vmax.f32 %v5099, 0.0
        %v5147 = vmax.f32 %v4808, 0.0
        %v5148 = vmax.f32 %v4906, 0.0
        %v5149 = vmax.f32 %v5004, 0.0
        %v5150 = vmax.f32 %v5102, 0.0
        %v5151 = vmax.f32 %v4810, 0.0
        %v5152 = vmax.f32 %v4908, 0.0
        %v5153 = vmax.f32 %v5006, 0.0
        %v5154 = vmax.f32 %v5104, 0.0
        %v5155 = vmax.f32 %v4813, 0.0
        %v5156 = vmax.f32 %v4911, 0.0
        %v5157 = vmax.f32 %v5009, 0.0
        %v5158 = vmax.f32 %v5107, 0.0
        %v5159 = vmax.f32 %v4815, 0.0
        %v5160 = vmax.f32 %v4913, 0.0
        %v5161 = vmax.f32 %v5011, 0.0
        %v5162 = vmax.f32 %v5109, 0.0
        %v5163 = vmax.f32 %v4818, 0.0
        %v5164 = vmax.f32 %v4916, 0.0
        %v5165 = vmax.f32 %v5014, 0.0
        %v5166 = vmax.f32 %v5112, 0.0
        %v5167 = vmax.f32 %v4820, 0.0
        %v5168 = vmax.f32 %v4918, 0.0
        %v5169 = vmax.f32 %v5016, 0.0
        %v5170 = vmax.f32 %v5114, 0.0
        %v5171 = vmax.f32 %v4823, 0.0
        %v5172 = vmax.f32 %v4921, 0.0
        %v5173 = vmax.f32 %v5019, 0.0
        %v5174 = vmax.f32 %v5117, 0.0
        %v5175 = vmax.f32 %v4825, 0.0
        %v5176 = vmax.f32 %v4923, 0.0
        %v5177 = vmax.f32 %v5021, 0.0
        %v5178 = vmax.f32 %v5119, 0.0
        %v5179 = vmax.f32 %v4828, 0.0
        %v5180 = vmax.f32 %v4926, 0.0
        %v5181 = vmax.f32 %v5024, 0.0
        %v5182 = vmax.f32 %v5122, 0.0
        %v5183 = vmax.f32 %v4830, 0.0
        %v5184 = vmax.f32 %v4928, 0.0
        %v5185 = vmax.f32 %v5026, 0.0
        %v5186 = vmax.f32 %v5124, 0.0
        %v5187 = vmax.f32 %v4833, 0.0
        %v5188 = vmax.f32 %v4931, 0.0
        %v5189 = vmax.f32 %v5029, 0.0
        %v5190 = vmax.f32 %v5127, 0.0
        %v5191 = vmax.f32 %v4835, 0.0
        %v5192 = vmax.f32 %v4933, 0.0
        %v5193 = vmax.f32 %v5031, 0.0
        %v5194 = vmax.f32 %v5129, 0.0
        %v5195 = vpack.c.bf16 %v5135, %v5131
        %v5196 = vpack.c.bf16 %v5136, %v5132
        %v5197 = vpack.c.bf16 %v5137, %v5133
        %v5198 = vpack.c.bf16 %v5138, %v5134
        %v5199 = vpack.c.bf16 %v5143, %v5139
        %v5200 = vpack.c.bf16 %v5144, %v5140
        %v5201 = vpack.c.bf16 %v5145, %v5141
        %v5202 = vpack.c.bf16 %v5146, %v5142
        %v5203 = vpack.c.bf16 %v5151, %v5147
        %v5204 = vpack.c.bf16 %v5152, %v5148
        %v5205 = vpack.c.bf16 %v5153, %v5149
        %v5206 = vpack.c.bf16 %v5154, %v5150
        %v5207 = vpack.c.bf16 %v5159, %v5155
        %v5208 = vpack.c.bf16 %v5160, %v5156
        %v5209 = vpack.c.bf16 %v5161, %v5157
        %v5210 = vpack.c.bf16 %v5162, %v5158
        %v5211 = vpack.c.bf16 %v5167, %v5163
        %v5212 = vpack.c.bf16 %v5168, %v5164
        %v5213 = vpack.c.bf16 %v5169, %v5165
        %v5214 = vpack.c.bf16 %v5170, %v5166
        %v5215 = vpack.c.bf16 %v5175, %v5171
        %v5216 = vpack.c.bf16 %v5176, %v5172
        %v5217 = vpack.c.bf16 %v5177, %v5173
        %v5218 = vpack.c.bf16 %v5178, %v5174
        %v5219 = vpack.c.bf16 %v5183, %v5179
        %v5220 = vpack.c.bf16 %v5184, %v5180
        %v5221 = vpack.c.bf16 %v5185, %v5181
        %v5222 = vpack.c.bf16 %v5186, %v5182
        %v5223 = vpack.c.bf16 %v5191, %v5187
        %v5224 = vpack.c.bf16 %v5192, %v5188
        %v5225 = vpack.c.bf16 %v5193, %v5189
        %v5226 = vpack.c.bf16 %v5194, %v5190
        %v5227 = vld [vmem:[%s1000] sm:$0xff]
        %v5228 = vld [vmem:[%s1000 + $0x8] sm:$0xff]
        %v5229 = vld [vmem:[%s1000 + $0x10] sm:$0xff]
        %v5230 = vld [vmem:[%s1000 + $0x18] sm:$0xff]
        %v5231 = vld [vmem:[%s1000 + $0x20] sm:$0xff]
        %v5232 = vld [vmem:[%s1000 + $0x28] sm:$0xff]
        %v5233 = vld [vmem:[%s1000 + $0x30] sm:$0xff]
        %v5234 = vld [vmem:[%s1000 + $0x38] sm:$0xff]
        %v5235 = vld [vmem:[%s1000 + $0x40] sm:$0xff]
        %v5236 = vld [vmem:[%s1000 + $0x48] sm:$0xff]
        %v5237 = vld [vmem:[%s1000 + $0x50] sm:$0xff]
        %v5238 = vld [vmem:[%s1000 + $0x58] sm:$0xff]
        %v5239 = vld [vmem:[%s1000 + $0x60] sm:$0xff]
        %v5240 = vld [vmem:[%s1000 + $0x68] sm:$0xff]
        %v5241 = vld [vmem:[%s1000 + $0x70] sm:$0xff]
        %v5242 = vld [vmem:[%s1000 + $0x78] sm:$0xff]
        %v5243 = vld [vmem:[%s1000 + $0x80] sm:$0xff]
        %v5244 = vld [vmem:[%s1000 + $0x88] sm:$0xff]
        %v5245 = vld [vmem:[%s1000 + $0x90] sm:$0xff]
        %v5246 = vld [vmem:[%s1000 + $0x98] sm:$0xff]
        %v5247 = vld [vmem:[%s1000 + $0xa0] sm:$0xff]
        %v5248 = vld [vmem:[%s1000 + $0xa8] sm:$0xff]
        %v5249 = vld [vmem:[%s1000 + $0xb0] sm:$0xff]
        %v5250 = vld [vmem:[%s1000 + $0xb8] sm:$0xff]
        %v5251 = vld [vmem:[%s1000 + $0xc0] sm:$0xff]
        %v5252 = vld [vmem:[%s1000 + $0xc8] sm:$0xff]
        %v5253 = vld [vmem:[%s1000 + $0xd0] sm:$0xff]
        %v5254 = vld [vmem:[%s1000 + $0xd8] sm:$0xff]
        %v5255 = vld [vmem:[%s1000 + $0xe0] sm:$0xff]
        %v5256 = vld [vmem:[%s1000 + $0xe8] sm:$0xff]
        %v5257 = vld [vmem:[%s1000 + $0xf0] sm:$0xff]
        %v5258 = vld [vmem:[%s1000 + $0xf8] sm:$0xff]
        %v5259 = vld [vmem:[%s1000 + $0x100] sm:$0xff]
        %v5260 = vld [vmem:[%s1000 + $0x108] sm:$0xff]
        %v5261 = vld [vmem:[%s1000 + $0x110] sm:$0xff]
        %v5262 = vld [vmem:[%s1000 + $0x118] sm:$0xff]
        %v5263 = vld [vmem:[%s1000 + $0x120] sm:$0xff]
        %v5264 = vld [vmem:[%s1000 + $0x128] sm:$0xff]
        %v5265 = vld [vmem:[%s1000 + $0x130] sm:$0xff]
        %v5266 = vld [vmem:[%s1000 + $0x138] sm:$0xff]
        %v5267 = vld [vmem:[%s1000 + $0x140] sm:$0xff]
        %v5268 = vld [vmem:[%s1000 + $0x148] sm:$0xff]
        %v5269 = vld [vmem:[%s1000 + $0x150] sm:$0xff]
        %v5270 = vld [vmem:[%s1000 + $0x158] sm:$0xff]
        %v5271 = vld [vmem:[%s1000 + $0x160] sm:$0xff]
        %v5272 = vld [vmem:[%s1000 + $0x168] sm:$0xff]
        %v5273 = vld [vmem:[%s1000 + $0x170] sm:$0xff]
        %v5274 = vld [vmem:[%s1000 + $0x178] sm:$0xff]
        %v5275 = vld [vmem:[%s1000 + $0x180] sm:$0xff]
        %v5276 = vld [vmem:[%s1000 + $0x188] sm:$0xff]
        %v5277 = vld [vmem:[%s1000 + $0x190] sm:$0xff]
        %v5278 = vld [vmem:[%s1000 + $0x198] sm:$0xff]
        %v5279 = vld [vmem:[%s1000 + $0x1a0] sm:$0xff]
        %v5280 = vld [vmem:[%s1000 + $0x1a8] sm:$0xff]
        %v5281 = vld [vmem:[%s1000 + $0x1b0] sm:$0xff]
        %v5282 = vld [vmem:[%s1000 + $0x1b8] sm:$0xff]
        %v5283 = vld [vmem:[%s1000 + $0x1c0] sm:$0xff]
        %v5284 = vld [vmem:[%s1000 + $0x1c8] sm:$0xff]
        %v5285 = vld [vmem:[%s1000 + $0x1d0] sm:$0xff]
        %v5286 = vld [vmem:[%s1000 + $0x1d8] sm:$0xff]
        %v5287 = vld [vmem:[%s1000 + $0x1e0] sm:$0xff]
        %v5288 = vld [vmem:[%s1000 + $0x1e8] sm:$0xff]
        %v5289 = vld [vmem:[%s1000 + $0x1f0] sm:$0xff]
        %v5290 = vld [vmem:[%s1000 + $0x1f8] sm:$0xff]
        %v5291 = vld [vmem:[%s1157] sm:$0x3]
        %v5293 = vperm.slane %v5291, 0
        %v5294 = vperm.slane %v5291, 1
        %v5361 = vunpack.c.l.b16 %v5227
        %v5362 = vunpack.c.h.b16 %v5227
        %v5363 = vunpack.c.l.b16 %v5228
        %v5364 = vunpack.c.h.b16 %v5228
        %v5365 = vunpack.c.l.b16 %v5229
        %v5366 = vunpack.c.h.b16 %v5229
        %v5367 = vunpack.c.l.b16 %v5230
        %v5368 = vunpack.c.h.b16 %v5230
        %v5369 = vunpack.c.l.b16 %v5231
        %v5370 = vunpack.c.h.b16 %v5231
        %v5371 = vunpack.c.l.b16 %v5232
        %v5372 = vunpack.c.h.b16 %v5232
        %v5373 = vunpack.c.l.b16 %v5233
        %v5374 = vunpack.c.h.b16 %v5233
        %v5375 = vunpack.c.l.b16 %v5234
        %v5376 = vunpack.c.h.b16 %v5234
        %v5377 = vunpack.c.l.b16 %v5235
        %v5378 = vunpack.c.h.b16 %v5235
        %v5379 = vunpack.c.l.b16 %v5236
        %v5380 = vunpack.c.h.b16 %v5236
        %v5381 = vunpack.c.l.b16 %v5237
        %v5382 = vunpack.c.h.b16 %v5237
        %v5383 = vunpack.c.l.b16 %v5238
        %v5384 = vunpack.c.h.b16 %v5238
        %v5385 = vunpack.c.l.b16 %v5239
        %v5386 = vunpack.c.h.b16 %v5239
        %v5387 = vunpack.c.l.b16 %v5240
        %v5388 = vunpack.c.h.b16 %v5240
        %v5389 = vunpack.c.l.b16 %v5241
        %v5390 = vunpack.c.h.b16 %v5241
        %v5391 = vunpack.c.l.b16 %v5242
        %v5392 = vunpack.c.h.b16 %v5242
        %v5393 = vunpack.c.l.b16 %v5243
        %v5394 = vunpack.c.h.b16 %v5243
        %v5395 = vunpack.c.l.b16 %v5244
        %v5396 = vunpack.c.h.b16 %v5244
        %v5397 = vunpack.c.l.b16 %v5245
        %v5398 = vunpack.c.h.b16 %v5245
        %v5399 = vunpack.c.l.b16 %v5246
        %v5400 = vunpack.c.h.b16 %v5246
        %v5401 = vunpack.c.l.b16 %v5247
        %v5402 = vunpack.c.h.b16 %v5247
        %v5403 = vunpack.c.l.b16 %v5248
        %v5404 = vunpack.c.h.b16 %v5248
        %v5405 = vunpack.c.l.b16 %v5249
        %v5406 = vunpack.c.h.b16 %v5249
        %v5407 = vunpack.c.l.b16 %v5250
        %v5408 = vunpack.c.h.b16 %v5250
        %v5409 = vunpack.c.l.b16 %v5251
        %v5410 = vunpack.c.h.b16 %v5251
        %v5411 = vunpack.c.l.b16 %v5252
        %v5412 = vunpack.c.h.b16 %v5252
        %v5413 = vunpack.c.l.b16 %v5253
        %v5414 = vunpack.c.h.b16 %v5253
        %v5415 = vunpack.c.l.b16 %v5254
        %v5416 = vunpack.c.h.b16 %v5254
        %v5417 = vunpack.c.l.b16 %v5255
        %v5418 = vunpack.c.h.b16 %v5255
        %v5419 = vunpack.c.l.b16 %v5256
        %v5420 = vunpack.c.h.b16 %v5256
        %v5421 = vunpack.c.l.b16 %v5257
        %v5422 = vunpack.c.h.b16 %v5257
        %v5423 = vunpack.c.l.b16 %v5258
        %v5424 = vunpack.c.h.b16 %v5258
        %v5425 = vunpack.c.l.b16 %v5259
        %v5426 = vunpack.c.h.b16 %v5259
        %v5427 = vunpack.c.l.b16 %v5260
        %v5428 = vunpack.c.h.b16 %v5260
        %v5429 = vunpack.c.l.b16 %v5261
        %v5430 = vunpack.c.h.b16 %v5261
        %v5431 = vunpack.c.l.b16 %v5262
        %v5432 = vunpack.c.h.b16 %v5262
        %v5433 = vunpack.c.l.b16 %v5263
        %v5434 = vunpack.c.h.b16 %v5263
        %v5435 = vunpack.c.l.b16 %v5264
        %v5436 = vunpack.c.h.b16 %v5264
        %v5437 = vunpack.c.l.b16 %v5265
        %v5438 = vunpack.c.h.b16 %v5265
        %v5439 = vunpack.c.l.b16 %v5266
        %v5440 = vunpack.c.h.b16 %v5266
        %v5441 = vunpack.c.l.b16 %v5267
        %v5442 = vunpack.c.h.b16 %v5267
        %v5443 = vunpack.c.l.b16 %v5268
        %v5444 = vunpack.c.h.b16 %v5268
        %v5445 = vunpack.c.l.b16 %v5269
        %v5446 = vunpack.c.h.b16 %v5269
        %v5447 = vunpack.c.l.b16 %v5270
        %v5448 = vunpack.c.h.b16 %v5270
        %v5449 = vunpack.c.l.b16 %v5271
        %v5450 = vunpack.c.h.b16 %v5271
        %v5451 = vunpack.c.l.b16 %v5272
        %v5452 = vunpack.c.h.b16 %v5272
        %v5453 = vunpack.c.l.b16 %v5273
        %v5454 = vunpack.c.h.b16 %v5273
        %v5455 = vunpack.c.l.b16 %v5274
        %v5456 = vunpack.c.h.b16 %v5274
        %v5457 = vunpack.c.l.b16 %v5275
        %v5458 = vunpack.c.h.b16 %v5275
        %v5459 = vunpack.c.l.b16 %v5276
        %v5460 = vunpack.c.h.b16 %v5276
        %v5461 = vunpack.c.l.b16 %v5277
        %v5462 = vunpack.c.h.b16 %v5277
        %v5463 = vunpack.c.l.b16 %v5278
        %v5464 = vunpack.c.h.b16 %v5278
        %v5465 = vunpack.c.l.b16 %v5279
        %v5466 = vunpack.c.h.b16 %v5279
        %v5467 = vunpack.c.l.b16 %v5280
        %v5468 = vunpack.c.h.b16 %v5280
        %v5469 = vunpack.c.l.b16 %v5281
        %v5470 = vunpack.c.h.b16 %v5281
        %v5471 = vunpack.c.l.b16 %v5282
        %v5472 = vunpack.c.h.b16 %v5282
        %v5473 = vunpack.c.l.b16 %v5283
        %v5474 = vunpack.c.h.b16 %v5283
        %v5475 = vunpack.c.l.b16 %v5284
        %v5476 = vunpack.c.h.b16 %v5284
        %v5477 = vunpack.c.l.b16 %v5285
        %v5478 = vunpack.c.h.b16 %v5285
        %v5479 = vunpack.c.l.b16 %v5286
        %v5480 = vunpack.c.h.b16 %v5286
        %v5481 = vunpack.c.l.b16 %v5287
        %v5482 = vunpack.c.h.b16 %v5287
        %v5483 = vunpack.c.l.b16 %v5288
        %v5484 = vunpack.c.h.b16 %v5288
        %v5485 = vunpack.c.l.b16 %v5289
        %v5486 = vunpack.c.h.b16 %v5289
        %v5487 = vunpack.c.l.b16 %v5290
        %v5488 = vunpack.c.h.b16 %v5290
        %v5489 = vpack.c.b16 %v5363, %v5361
        %v5490 = vpack.c.b16 %v5364, %v5362
        %v5491 = vpack.c.b16 %v5367, %v5365
        %v5492 = vpack.c.b16 %v5368, %v5366
        %v5493 = vpack.c.b16 %v5371, %v5369
        %v5494 = vpack.c.b16 %v5372, %v5370
        %v5495 = vpack.c.b16 %v5375, %v5373
        %v5496 = vpack.c.b16 %v5376, %v5374
        %v5497 = vpack.c.b16 %v5379, %v5377
        %v5498 = vpack.c.b16 %v5380, %v5378
        %v5499 = vpack.c.b16 %v5383, %v5381
        %v5500 = vpack.c.b16 %v5384, %v5382
        %v5501 = vpack.c.b16 %v5387, %v5385
        %v5502 = vpack.c.b16 %v5388, %v5386
        %v5503 = vpack.c.b16 %v5391, %v5389
        %v5504 = vpack.c.b16 %v5392, %v5390
        %v5505 = vpack.c.b16 %v5395, %v5393
        %v5506 = vpack.c.b16 %v5396, %v5394
        %v5507 = vpack.c.b16 %v5399, %v5397
        %v5508 = vpack.c.b16 %v5400, %v5398
        %v5509 = vpack.c.b16 %v5403, %v5401
        %v5510 = vpack.c.b16 %v5404, %v5402
        %v5511 = vpack.c.b16 %v5407, %v5405
        %v5512 = vpack.c.b16 %v5408, %v5406
        %v5513 = vpack.c.b16 %v5411, %v5409
        %v5514 = vpack.c.b16 %v5412, %v5410
        %v5515 = vpack.c.b16 %v5415, %v5413
        %v5516 = vpack.c.b16 %v5416, %v5414
        %v5517 = vpack.c.b16 %v5419, %v5417
        %v5518 = vpack.c.b16 %v5420, %v5418
        %v5519 = vpack.c.b16 %v5423, %v5421
        %v5520 = vpack.c.b16 %v5424, %v5422
        %v5521 = vpack.c.b16 %v5427, %v5425
        %v5522 = vpack.c.b16 %v5428, %v5426
        %v5523 = vpack.c.b16 %v5431, %v5429
        %v5524 = vpack.c.b16 %v5432, %v5430
        %v5525 = vpack.c.b16 %v5435, %v5433
        %v5526 = vpack.c.b16 %v5436, %v5434
        %v5527 = vpack.c.b16 %v5439, %v5437
        %v5528 = vpack.c.b16 %v5440, %v5438
        %v5529 = vpack.c.b16 %v5443, %v5441
        %v5530 = vpack.c.b16 %v5444, %v5442
        %v5531 = vpack.c.b16 %v5447, %v5445
        %v5532 = vpack.c.b16 %v5448, %v5446
        %v5533 = vpack.c.b16 %v5451, %v5449
        %v5534 = vpack.c.b16 %v5452, %v5450
        %v5535 = vpack.c.b16 %v5455, %v5453
        %v5536 = vpack.c.b16 %v5456, %v5454
        %v5537 = vpack.c.b16 %v5459, %v5457
        %v5538 = vpack.c.b16 %v5460, %v5458
        %v5539 = vpack.c.b16 %v5463, %v5461
        %v5540 = vpack.c.b16 %v5464, %v5462
        %v5541 = vpack.c.b16 %v5467, %v5465
        %v5542 = vpack.c.b16 %v5468, %v5466
        %v5543 = vpack.c.b16 %v5471, %v5469
        %v5544 = vpack.c.b16 %v5472, %v5470
        %v5545 = vpack.c.b16 %v5475, %v5473
        %v5546 = vpack.c.b16 %v5476, %v5474
        %v5547 = vpack.c.b16 %v5479, %v5477
        %v5548 = vpack.c.b16 %v5480, %v5478
        %v5549 = vpack.c.b16 %v5483, %v5481
        %v5550 = vpack.c.b16 %v5484, %v5482
        %v5551 = vpack.c.b16 %v5487, %v5485
        %v5552 = vpack.c.b16 %v5488, %v5486
        %5617 = vmatpush.bf16.msra.mxu0 %v5503
        %5618 = vmatpush.bf16.msra.mxu0 %v5501
        %5619 = vmatpush.bf16.msra.mxu0 %v5499
        %5620 = vmatpush.bf16.msra.mxu0 %v5497
        %5621 = vmatpush.bf16.msra.mxu0 %v5495
        %5622 = vmatpush.bf16.msra.mxu0 %v5493
        %5623 = vmatpush.bf16.msra.mxu0 %v5491
        %5624 = vmatpush.bf16.msra.mxu0 %v5489
        %5625 = vmatmul.bf16.gmra.mxu0 %v5195
        %v5626 = vpop.f32.mrf.mxu0
        %v5627 = vadd.f32 %v5293, %v5626
        %v5628 = vpop.f32.mrf.mxu0
        %v5629 = vadd.f32 %v5293, %v5628
        %5630 = vmatmul.bf16.gmra.mxu0 %v5199
        %v5631 = vpop.f32.mrf.mxu0
        %v5632 = vadd.f32 %v5293, %v5631
        %v5633 = vpop.f32.mrf.mxu0
        %v5634 = vadd.f32 %v5293, %v5633
        %5635 = vmatmul.bf16.gmra.mxu0 %v5203
        %v5636 = vpop.f32.mrf.mxu0
        %v5637 = vadd.f32 %v5293, %v5636
        %v5638 = vpop.f32.mrf.mxu0
        %v5639 = vadd.f32 %v5293, %v5638
        %5640 = vmatmul.bf16.gmra.mxu0 %v5207
        %v5641 = vpop.f32.mrf.mxu0
        %v5642 = vadd.f32 %v5293, %v5641
        %v5643 = vpop.f32.mrf.mxu0
        %v5644 = vadd.f32 %v5293, %v5643
        %5645 = vmatmul.bf16.gmra.mxu0 %v5211
        %v5646 = vpop.f32.mrf.mxu0
        %v5647 = vadd.f32 %v5293, %v5646
        %v5648 = vpop.f32.mrf.mxu0
        %v5649 = vadd.f32 %v5293, %v5648
        %5650 = vmatmul.bf16.gmra.mxu0 %v5215
        %v5651 = vpop.f32.mrf.mxu0
        %v5652 = vadd.f32 %v5293, %v5651
        %v5653 = vpop.f32.mrf.mxu0
        %v5654 = vadd.f32 %v5293, %v5653
        %5655 = vmatmul.bf16.gmra.mxu0 %v5219
        %v5656 = vpop.f32.mrf.mxu0
        %v5657 = vadd.f32 %v5293, %v5656
        %v5658 = vpop.f32.mrf.mxu0
        %v5659 = vadd.f32 %v5293, %v5658
        %5660 = vmatmul.bf16.gmra.mxu0 %v5223
        %v5661 = vpop.f32.mrf.mxu0
        %v5662 = vadd.f32 %v5293, %v5661
        %v5663 = vpop.f32.mrf.mxu0
        %v5664 = vadd.f32 %v5293, %v5663
        %5665 = vdwg.mxu0
        %5666 = vmatpush.bf16.msra.mxu0 %v5519
        %5667 = vmatpush.bf16.msra.mxu0 %v5517
        %5668 = vmatpush.bf16.msra.mxu0 %v5515
        %5669 = vmatpush.bf16.msra.mxu0 %v5513
        %5670 = vmatpush.bf16.msra.mxu0 %v5511
        %5671 = vmatpush.bf16.msra.mxu0 %v5509
        %5672 = vmatpush.bf16.msra.mxu0 %v5507
        %5673 = vmatpush.bf16.msra.mxu0 %v5505
        %5674 = vmatmul.bf16.gmra.mxu0 %v5196
        %v5675 = vpop.f32.mrf.mxu0
        %v5676 = vadd.f32 %v5627, %v5675
        %v5677 = vpop.f32.mrf.mxu0
        %v5678 = vadd.f32 %v5629, %v5677
        %5679 = vmatmul.bf16.gmra.mxu0 %v5200
        %v5680 = vpop.f32.mrf.mxu0
        %v5681 = vadd.f32 %v5632, %v5680
        %v5682 = vpop.f32.mrf.mxu0
        %v5683 = vadd.f32 %v5634, %v5682
        %5684 = vmatmul.bf16.gmra.mxu0 %v5204
        %v5685 = vpop.f32.mrf.mxu0
        %v5686 = vadd.f32 %v5637, %v5685
        %v5687 = vpop.f32.mrf.mxu0
        %v5688 = vadd.f32 %v5639, %v5687
        %5689 = vmatmul.bf16.gmra.mxu0 %v5208
        %v5690 = vpop.f32.mrf.mxu0
        %v5691 = vadd.f32 %v5642, %v5690
        %v5692 = vpop.f32.mrf.mxu0
        %v5693 = vadd.f32 %v5644, %v5692
        %5694 = vmatmul.bf16.gmra.mxu0 %v5212
        %v5695 = vpop.f32.mrf.mxu0
        %v5696 = vadd.f32 %v5647, %v5695
        %v5697 = vpop.f32.mrf.mxu0
        %v5698 = vadd.f32 %v5649, %v5697
        %5699 = vmatmul.bf16.gmra.mxu0 %v5216
        %v5700 = vpop.f32.mrf.mxu0
        %v5701 = vadd.f32 %v5652, %v5700
        %v5702 = vpop.f32.mrf.mxu0
        %v5703 = vadd.f32 %v5654, %v5702
        %5704 = vmatmul.bf16.gmra.mxu0 %v5220
        %v5705 = vpop.f32.mrf.mxu0
        %v5706 = vadd.f32 %v5657, %v5705
        %v5707 = vpop.f32.mrf.mxu0
        %v5708 = vadd.f32 %v5659, %v5707
        %5709 = vmatmul.bf16.gmra.mxu0 %v5224
        %v5710 = vpop.f32.mrf.mxu0
        %v5711 = vadd.f32 %v5662, %v5710
        %v5712 = vpop.f32.mrf.mxu0
        %v5713 = vadd.f32 %v5664, %v5712
        %5714 = vdwg.mxu0
        %5715 = vmatpush.bf16.msra.mxu0 %v5535
        %5716 = vmatpush.bf16.msra.mxu0 %v5533
        %5717 = vmatpush.bf16.msra.mxu0 %v5531
        %5718 = vmatpush.bf16.msra.mxu0 %v5529
        %5719 = vmatpush.bf16.msra.mxu0 %v5527
        %5720 = vmatpush.bf16.msra.mxu0 %v5525
        %5721 = vmatpush.bf16.msra.mxu0 %v5523
        %5722 = vmatpush.bf16.msra.mxu0 %v5521
        %5723 = vmatmul.bf16.gmra.mxu0 %v5197
        %v5724 = vpop.f32.mrf.mxu0
        %v5725 = vadd.f32 %v5676, %v5724
        %v5726 = vpop.f32.mrf.mxu0
        %v5727 = vadd.f32 %v5678, %v5726
        %5728 = vmatmul.bf16.gmra.mxu0 %v5201
        %v5729 = vpop.f32.mrf.mxu0
        %v5730 = vadd.f32 %v5681, %v5729
        %v5731 = vpop.f32.mrf.mxu0
        %v5732 = vadd.f32 %v5683, %v5731
        %5733 = vmatmul.bf16.gmra.mxu0 %v5205
        %v5734 = vpop.f32.mrf.mxu0
        %v5735 = vadd.f32 %v5686, %v5734
        %v5736 = vpop.f32.mrf.mxu0
        %v5737 = vadd.f32 %v5688, %v5736
        %5738 = vmatmul.bf16.gmra.mxu0 %v5209
        %v5739 = vpop.f32.mrf.mxu0
        %v5740 = vadd.f32 %v5691, %v5739
        %v5741 = vpop.f32.mrf.mxu0
        %v5742 = vadd.f32 %v5693, %v5741
        %5743 = vmatmul.bf16.gmra.mxu0 %v5213
        %v5744 = vpop.f32.mrf.mxu0
        %v5745 = vadd.f32 %v5696, %v5744
        %v5746 = vpop.f32.mrf.mxu0
        %v5747 = vadd.f32 %v5698, %v5746
        %5748 = vmatmul.bf16.gmra.mxu0 %v5217
        %v5749 = vpop.f32.mrf.mxu0
        %v5750 = vadd.f32 %v5701, %v5749
        %v5751 = vpop.f32.mrf.mxu0
        %v5752 = vadd.f32 %v5703, %v5751
        %5753 = vmatmul.bf16.gmra.mxu0 %v5221
        %v5754 = vpop.f32.mrf.mxu0
        %v5755 = vadd.f32 %v5706, %v5754
        %v5756 = vpop.f32.mrf.mxu0
        %v5757 = vadd.f32 %v5708, %v5756
        %5758 = vmatmul.bf16.gmra.mxu0 %v5225
        %v5759 = vpop.f32.mrf.mxu0
        %v5760 = vadd.f32 %v5711, %v5759
        %v5761 = vpop.f32.mrf.mxu0
        %v5762 = vadd.f32 %v5713, %v5761
        %5763 = vdwg.mxu0
        %5764 = vmatpush.bf16.msra.mxu0 %v5551
        %5765 = vmatpush.bf16.msra.mxu0 %v5549
        %5766 = vmatpush.bf16.msra.mxu0 %v5547
        %5767 = vmatpush.bf16.msra.mxu0 %v5545
        %5768 = vmatpush.bf16.msra.mxu0 %v5543
        %5769 = vmatpush.bf16.msra.mxu0 %v5541
        %5770 = vmatpush.bf16.msra.mxu0 %v5539
        %5771 = vmatpush.bf16.msra.mxu0 %v5537
        %5772 = vmatmul.bf16.gmra.mxu0 %v5198
        %v5773 = vpop.f32.mrf.mxu0
        %v5774 = vadd.f32 %v5725, %v5773
        %v5775 = vpop.f32.mrf.mxu0
        %v5776 = vadd.f32 %v5727, %v5775
        %5777 = vmatmul.bf16.gmra.mxu0 %v5202
        %v5778 = vpop.f32.mrf.mxu0
        %v5779 = vadd.f32 %v5730, %v5778
        %v5780 = vpop.f32.mrf.mxu0
        %v5781 = vadd.f32 %v5732, %v5780
        %5782 = vmatmul.bf16.gmra.mxu0 %v5206
        %v5783 = vpop.f32.mrf.mxu0
        %v5784 = vadd.f32 %v5735, %v5783
        %v5785 = vpop.f32.mrf.mxu0
        %v5786 = vadd.f32 %v5737, %v5785
        %5787 = vmatmul.bf16.gmra.mxu0 %v5210
        %v5788 = vpop.f32.mrf.mxu0
        %v5789 = vadd.f32 %v5740, %v5788
        %v5790 = vpop.f32.mrf.mxu0
        %v5791 = vadd.f32 %v5742, %v5790
        %5792 = vmatmul.bf16.gmra.mxu0 %v5214
        %v5793 = vpop.f32.mrf.mxu0
        %v5794 = vadd.f32 %v5745, %v5793
        %v5795 = vpop.f32.mrf.mxu0
        %v5796 = vadd.f32 %v5747, %v5795
        %5797 = vmatmul.bf16.gmra.mxu0 %v5218
        %v5798 = vpop.f32.mrf.mxu0
        %v5799 = vadd.f32 %v5750, %v5798
        %v5800 = vpop.f32.mrf.mxu0
        %v5801 = vadd.f32 %v5752, %v5800
        %5802 = vmatmul.bf16.gmra.mxu0 %v5222
        %v5803 = vpop.f32.mrf.mxu0
        %v5804 = vadd.f32 %v5755, %v5803
        %v5805 = vpop.f32.mrf.mxu0
        %v5806 = vadd.f32 %v5757, %v5805
        %5807 = vmatmul.bf16.gmra.mxu0 %v5226
        %v5808 = vpop.f32.mrf.mxu0
        %v5809 = vadd.f32 %v5760, %v5808
        %v5810 = vpop.f32.mrf.mxu0
        %v5811 = vadd.f32 %v5762, %v5810
        %5812 = vdwg.mxu0
        %5813 = vmatpush.bf16.msra.mxu0 %v5504
        %5814 = vmatpush.bf16.msra.mxu0 %v5502
        %5815 = vmatpush.bf16.msra.mxu0 %v5500
        %5816 = vmatpush.bf16.msra.mxu0 %v5498
        %5817 = vmatpush.bf16.msra.mxu0 %v5496
        %5818 = vmatpush.bf16.msra.mxu0 %v5494
        %5819 = vmatpush.bf16.msra.mxu0 %v5492
        %5820 = vmatpush.bf16.msra.mxu0 %v5490
        %5821 = vmatmul.bf16.gmra.mxu0 %v5195
        %v5822 = vpop.f32.mrf.mxu0
        %v5823 = vadd.f32 %v5294, %v5822
        %v5824 = vpop.f32.mrf.mxu0
        %v5825 = vadd.f32 %v5294, %v5824
        %5826 = vmatmul.bf16.gmra.mxu0 %v5199
        %v5827 = vpop.f32.mrf.mxu0
        %v5828 = vadd.f32 %v5294, %v5827
        %v5829 = vpop.f32.mrf.mxu0
        %v5830 = vadd.f32 %v5294, %v5829
        %5831 = vmatmul.bf16.gmra.mxu0 %v5203
        %v5832 = vpop.f32.mrf.mxu0
        %v5833 = vadd.f32 %v5294, %v5832
        %v5834 = vpop.f32.mrf.mxu0
        %v5835 = vadd.f32 %v5294, %v5834
        %5836 = vmatmul.bf16.gmra.mxu0 %v5207
        %v5837 = vpop.f32.mrf.mxu0
        %v5838 = vadd.f32 %v5294, %v5837
        %v5839 = vpop.f32.mrf.mxu0
        %v5840 = vadd.f32 %v5294, %v5839
        %5841 = vmatmul.bf16.gmra.mxu0 %v5211
        %v5842 = vpop.f32.mrf.mxu0
        %v5843 = vadd.f32 %v5294, %v5842
        %v5844 = vpop.f32.mrf.mxu0
        %v5845 = vadd.f32 %v5294, %v5844
        %5846 = vmatmul.bf16.gmra.mxu0 %v5215
        %v5847 = vpop.f32.mrf.mxu0
        %v5848 = vadd.f32 %v5294, %v5847
        %v5849 = vpop.f32.mrf.mxu0
        %v5850 = vadd.f32 %v5294, %v5849
        %5851 = vmatmul.bf16.gmra.mxu0 %v5219
        %v5852 = vpop.f32.mrf.mxu0
        %v5853 = vadd.f32 %v5294, %v5852
        %v5854 = vpop.f32.mrf.mxu0
        %v5855 = vadd.f32 %v5294, %v5854
        %5856 = vmatmul.bf16.gmra.mxu0 %v5223
        %v5857 = vpop.f32.mrf.mxu0
        %v5858 = vadd.f32 %v5294, %v5857
        %v5859 = vpop.f32.mrf.mxu0
        %v5860 = vadd.f32 %v5294, %v5859
        %5861 = vdwg.mxu0
        %5862 = vmatpush.bf16.msra.mxu0 %v5520
        %5863 = vmatpush.bf16.msra.mxu0 %v5518
        %5864 = vmatpush.bf16.msra.mxu0 %v5516
        %5865 = vmatpush.bf16.msra.mxu0 %v5514
        %5866 = vmatpush.bf16.msra.mxu0 %v5512
        %5867 = vmatpush.bf16.msra.mxu0 %v5510
        %5868 = vmatpush.bf16.msra.mxu0 %v5508
        %5869 = vmatpush.bf16.msra.mxu0 %v5506
        %5870 = vmatmul.bf16.gmra.mxu0 %v5196
        %v5871 = vpop.f32.mrf.mxu0
        %v5872 = vadd.f32 %v5823, %v5871
        %v5873 = vpop.f32.mrf.mxu0
        %v5874 = vadd.f32 %v5825, %v5873
        %5875 = vmatmul.bf16.gmra.mxu0 %v5200
        %v5876 = vpop.f32.mrf.mxu0
        %v5877 = vadd.f32 %v5828, %v5876
        %v5878 = vpop.f32.mrf.mxu0
        %v5879 = vadd.f32 %v5830, %v5878
        %5880 = vmatmul.bf16.gmra.mxu0 %v5204
        %v5881 = vpop.f32.mrf.mxu0
        %v5882 = vadd.f32 %v5833, %v5881
        %v5883 = vpop.f32.mrf.mxu0
        %v5884 = vadd.f32 %v5835, %v5883
        %5885 = vmatmul.bf16.gmra.mxu0 %v5208
        %v5886 = vpop.f32.mrf.mxu0
        %v5887 = vadd.f32 %v5838, %v5886
        %v5888 = vpop.f32.mrf.mxu0
        %v5889 = vadd.f32 %v5840, %v5888
        %5890 = vmatmul.bf16.gmra.mxu0 %v5212
        %v5891 = vpop.f32.mrf.mxu0
        %v5892 = vadd.f32 %v5843, %v5891
        %v5893 = vpop.f32.mrf.mxu0
        %v5894 = vadd.f32 %v5845, %v5893
        %5895 = vmatmul.bf16.gmra.mxu0 %v5216
        %v5896 = vpop.f32.mrf.mxu0
        %v5897 = vadd.f32 %v5848, %v5896
        %v5898 = vpop.f32.mrf.mxu0
        %v5899 = vadd.f32 %v5850, %v5898
        %5900 = vmatmul.bf16.gmra.mxu0 %v5220
        %v5901 = vpop.f32.mrf.mxu0
        %v5902 = vadd.f32 %v5853, %v5901
        %v5903 = vpop.f32.mrf.mxu0
        %v5904 = vadd.f32 %v5855, %v5903
        %5905 = vmatmul.bf16.gmra.mxu0 %v5224
        %v5906 = vpop.f32.mrf.mxu0
        %v5907 = vadd.f32 %v5858, %v5906
        %v5908 = vpop.f32.mrf.mxu0
        %v5909 = vadd.f32 %v5860, %v5908
        %5910 = vdwg.mxu0
        %5911 = vmatpush.bf16.msra.mxu0 %v5536
        %5912 = vmatpush.bf16.msra.mxu0 %v5534
        %5913 = vmatpush.bf16.msra.mxu0 %v5532
        %5914 = vmatpush.bf16.msra.mxu0 %v5530
        %5915 = vmatpush.bf16.msra.mxu0 %v5528
        %5916 = vmatpush.bf16.msra.mxu0 %v5526
        %5917 = vmatpush.bf16.msra.mxu0 %v5524
        %5918 = vmatpush.bf16.msra.mxu0 %v5522
        %5919 = vmatmul.bf16.gmra.mxu0 %v5197
        %v5920 = vpop.f32.mrf.mxu0
        %v5921 = vadd.f32 %v5872, %v5920
        %v5922 = vpop.f32.mrf.mxu0
        %v5923 = vadd.f32 %v5874, %v5922
        %5924 = vmatmul.bf16.gmra.mxu0 %v5201
        %v5925 = vpop.f32.mrf.mxu0
        %v5926 = vadd.f32 %v5877, %v5925
        %v5927 = vpop.f32.mrf.mxu0
        %v5928 = vadd.f32 %v5879, %v5927
        %5929 = vmatmul.bf16.gmra.mxu0 %v5205
        %v5930 = vpop.f32.mrf.mxu0
        %v5931 = vadd.f32 %v5882, %v5930
        %v5932 = vpop.f32.mrf.mxu0
        %v5933 = vadd.f32 %v5884, %v5932
        %5934 = vmatmul.bf16.gmra.mxu0 %v5209
        %v5935 = vpop.f32.mrf.mxu0
        %v5936 = vadd.f32 %v5887, %v5935
        %v5937 = vpop.f32.mrf.mxu0
        %v5938 = vadd.f32 %v5889, %v5937
        %5939 = vmatmul.bf16.gmra.mxu0 %v5213
        %v5940 = vpop.f32.mrf.mxu0
        %v5941 = vadd.f32 %v5892, %v5940
        %v5942 = vpop.f32.mrf.mxu0
        %v5943 = vadd.f32 %v5894, %v5942
        %5944 = vmatmul.bf16.gmra.mxu0 %v5217
        %v5945 = vpop.f32.mrf.mxu0
        %v5946 = vadd.f32 %v5897, %v5945
        %v5947 = vpop.f32.mrf.mxu0
        %v5948 = vadd.f32 %v5899, %v5947
        %5949 = vmatmul.bf16.gmra.mxu0 %v5221
        %v5950 = vpop.f32.mrf.mxu0
        %v5951 = vadd.f32 %v5902, %v5950
        %v5952 = vpop.f32.mrf.mxu0
        %v5953 = vadd.f32 %v5904, %v5952
        %5954 = vmatmul.bf16.gmra.mxu0 %v5225
        %v5955 = vpop.f32.mrf.mxu0
        %v5956 = vadd.f32 %v5907, %v5955
        %v5957 = vpop.f32.mrf.mxu0
        %v5958 = vadd.f32 %v5909, %v5957
        %5959 = vdwg.mxu0
        %5960 = vmatpush.bf16.msra.mxu0 %v5552
        %5961 = vmatpush.bf16.msra.mxu0 %v5550
        %5962 = vmatpush.bf16.msra.mxu0 %v5548
        %5963 = vmatpush.bf16.msra.mxu0 %v5546
        %5964 = vmatpush.bf16.msra.mxu0 %v5544
        %5965 = vmatpush.bf16.msra.mxu0 %v5542
        %5966 = vmatpush.bf16.msra.mxu0 %v5540
        %5967 = vmatpush.bf16.msra.mxu0 %v5538
        %5968 = vmatmul.bf16.gmra.mxu0 %v5198
        %v5969 = vpop.f32.mrf.mxu0
        %v5970 = vadd.f32 %v5921, %v5969
        %v5971 = vpop.f32.mrf.mxu0
        %v5972 = vadd.f32 %v5923, %v5971
        %5973 = vmatmul.bf16.gmra.mxu0 %v5202
        %v5974 = vpop.f32.mrf.mxu0
        %v5975 = vadd.f32 %v5926, %v5974
        %v5976 = vpop.f32.mrf.mxu0
        %v5977 = vadd.f32 %v5928, %v5976
        %5978 = vmatmul.bf16.gmra.mxu0 %v5206
        %v5979 = vpop.f32.mrf.mxu0
        %v5980 = vadd.f32 %v5931, %v5979
        %v5981 = vpop.f32.mrf.mxu0
        %v5982 = vadd.f32 %v5933, %v5981
        %5983 = vmatmul.bf16.gmra.mxu0 %v5210
        %v5984 = vpop.f32.mrf.mxu0
        %v5985 = vadd.f32 %v5936, %v5984
        %v5986 = vpop.f32.mrf.mxu0
        %v5987 = vadd.f32 %v5938, %v5986
        %5988 = vmatmul.bf16.gmra.mxu0 %v5214
        %v5989 = vpop.f32.mrf.mxu0
        %v5990 = vadd.f32 %v5941, %v5989
        %v5991 = vpop.f32.mrf.mxu0
        %v5992 = vadd.f32 %v5943, %v5991
        %5993 = vmatmul.bf16.gmra.mxu0 %v5218
        %v5994 = vpop.f32.mrf.mxu0
        %v5995 = vadd.f32 %v5946, %v5994
        %v5996 = vpop.f32.mrf.mxu0
        %v5997 = vadd.f32 %v5948, %v5996
        %5998 = vmatmul.bf16.gmra.mxu0 %v5222
        %v5999 = vpop.f32.mrf.mxu0
        %v6000 = vadd.f32 %v5951, %v5999
        %v6001 = vpop.f32.mrf.mxu0
        %v6002 = vadd.f32 %v5953, %v6001
        %6003 = vmatmul.bf16.gmra.mxu0 %v5226
        %v6004 = vpop.f32.mrf.mxu0
        %v6005 = vadd.f32 %v5956, %v6004
        %v6006 = vpop.f32.mrf.mxu0
        %v6007 = vadd.f32 %v5958, %v6006
        %6008 = vdwg.mxu0
        %v6009 = vadd.f32 %v4297, %v5774
        %v6010 = vadd.f32 %v4298, %v5970
        %v6011 = vadd.f32 %v4299, %v5776
        %v6012 = vadd.f32 %v4300, %v5972
        %v6013 = vadd.f32 %v4301, %v5779
        %v6014 = vadd.f32 %v4302, %v5975
        %v6015 = vadd.f32 %v4303, %v5781
        %v6016 = vadd.f32 %v4304, %v5977
        %v6017 = vadd.f32 %v4305, %v5784
        %v6018 = vadd.f32 %v4306, %v5980
        %v6019 = vadd.f32 %v4307, %v5786
        %v6020 = vadd.f32 %v4308, %v5982
        %v6021 = vadd.f32 %v4309, %v5789
        %v6022 = vadd.f32 %v4310, %v5985
        %v6023 = vadd.f32 %v4311, %v5791
        %v6024 = vadd.f32 %v4312, %v5987
        %v6025 = vadd.f32 %v4313, %v5794
        %v6026 = vadd.f32 %v4314, %v5990
        %v6027 = vadd.f32 %v4315, %v5796
        %v6028 = vadd.f32 %v4316, %v5992
        %v6029 = vadd.f32 %v4317, %v5799
        %v6030 = vadd.f32 %v4318, %v5995
        %v6031 = vadd.f32 %v4319, %v5801
        %v6032 = vadd.f32 %v4320, %v5997
        %v6033 = vadd.f32 %v4321, %v5804
        %v6034 = vadd.f32 %v4322, %v6000
        %v6035 = vadd.f32 %v4323, %v5806
        %v6036 = vadd.f32 %v4324, %v6002
        %v6037 = vadd.f32 %v4325, %v5809
        %v6038 = vadd.f32 %v4326, %v6005
        %v6039 = vadd.f32 %v4327, %v5811
        %v6040 = vadd.f32 %v4328, %v6007
        %v6041 = vadd.f32 %v6009, %v6010
        %6042 = vadd.xlane.f32.xlu0 %v6041
        %v6043 = vpop.xlane.xlu0 %6042
        %v6044 = vadd.f32 %v6011, %v6012
        %6045 = vadd.xlane.f32.xlu0 %v6044
        %v6046 = vpop.xlane.xlu0 %6045
        %v6047 = vadd.f32 %v6013, %v6014
        %6048 = vadd.xlane.f32.xlu0 %v6047
        %v6049 = vpop.xlane.xlu0 %6048
        %v6050 = vadd.f32 %v6015, %v6016
        %6051 = vadd.xlane.f32.xlu0 %v6050
        %v6052 = vpop.xlane.xlu0 %6051
        %v6053 = vadd.f32 %v6017, %v6018
        %6054 = vadd.xlane.f32.xlu0 %v6053
        %v6055 = vpop.xlane.xlu0 %6054
        %v6056 = vadd.f32 %v6019, %v6020
        %6057 = vadd.xlane.f32.xlu0 %v6056
        %v6058 = vpop.xlane.xlu0 %6057
        %v6059 = vadd.f32 %v6021, %v6022
        %6060 = vadd.xlane.f32.xlu0 %v6059
        %v6061 = vpop.xlane.xlu0 %6060
        %v6062 = vadd.f32 %v6023, %v6024
        %6063 = vadd.xlane.f32.xlu0 %v6062
        %v6064 = vpop.xlane.xlu0 %6063
        %v6065 = vadd.f32 %v6025, %v6026
        %6066 = vadd.xlane.f32.xlu0 %v6065
        %v6067 = vpop.xlane.xlu0 %6066
        %v6068 = vadd.f32 %v6027, %v6028
        %6069 = vadd.xlane.f32.xlu0 %v6068
        %v6070 = vpop.xlane.xlu0 %6069
        %v6071 = vadd.f32 %v6029, %v6030
        %6072 = vadd.xlane.f32.xlu0 %v6071
        %v6073 = vpop.xlane.xlu0 %6072
        %v6074 = vadd.f32 %v6031, %v6032
        %6075 = vadd.xlane.f32.xlu0 %v6074
        %v6076 = vpop.xlane.xlu0 %6075
        %v6077 = vadd.f32 %v6033, %v6034
        %6078 = vadd.xlane.f32.xlu0 %v6077
        %v6079 = vpop.xlane.xlu0 %6078
        %v6080 = vadd.f32 %v6035, %v6036
        %6081 = vadd.xlane.f32.xlu0 %v6080
        %v6082 = vpop.xlane.xlu0 %6081
        %v6083 = vadd.f32 %v6037, %v6038
        %6084 = vadd.xlane.f32.xlu0 %v6083
        %v6085 = vpop.xlane.xlu0 %6084
        %v6086 = vadd.f32 %v6039, %v6040
        %6087 = vadd.xlane.f32.xlu0 %v6086
        %v6088 = vpop.xlane.xlu0 %6087
        %v6089 = vmul.f32 %v6043, %v3900
        %v6090 = vmul.f32 %v6046, %v3900
        %v6091 = vmul.f32 %v6049, %v3900
        %v6092 = vmul.f32 %v6052, %v3900
        %v6093 = vmul.f32 %v6055, %v3900
        %v6094 = vmul.f32 %v6058, %v3900
        %v6095 = vmul.f32 %v6061, %v3900
        %v6096 = vmul.f32 %v6064, %v3900
        %v6097 = vmul.f32 %v6067, %v3900
        %v6098 = vmul.f32 %v6070, %v3900
        %v6099 = vmul.f32 %v6073, %v3900
        %v6100 = vmul.f32 %v6076, %v3900
        %v6101 = vmul.f32 %v6079, %v3900
        %v6102 = vmul.f32 %v6082, %v3900
        %v6103 = vmul.f32 %v6085, %v3900
        %v6104 = vmul.f32 %v6088, %v3900
        %v6105 = vsub.f32 %v6009, %v6089
        %v6106 = vsub.f32 %v6010, %v6089
        %v6107 = vsub.f32 %v6011, %v6090
        %v6108 = vsub.f32 %v6012, %v6090
        %v6109 = vsub.f32 %v6013, %v6091
        %v6110 = vsub.f32 %v6014, %v6091
        %v6111 = vsub.f32 %v6015, %v6092
        %v6112 = vsub.f32 %v6016, %v6092
        %v6113 = vsub.f32 %v6017, %v6093
        %v6114 = vsub.f32 %v6018, %v6093
        %v6115 = vsub.f32 %v6019, %v6094
        %v6116 = vsub.f32 %v6020, %v6094
        %v6117 = vsub.f32 %v6021, %v6095
        %v6118 = vsub.f32 %v6022, %v6095
        %v6119 = vsub.f32 %v6023, %v6096
        %v6120 = vsub.f32 %v6024, %v6096
        %v6121 = vsub.f32 %v6025, %v6097
        %v6122 = vsub.f32 %v6026, %v6097
        %v6123 = vsub.f32 %v6027, %v6098
        %v6124 = vsub.f32 %v6028, %v6098
        %v6125 = vsub.f32 %v6029, %v6099
        %v6126 = vsub.f32 %v6030, %v6099
        %v6127 = vsub.f32 %v6031, %v6100
        %v6128 = vsub.f32 %v6032, %v6100
        %v6129 = vsub.f32 %v6033, %v6101
        %v6130 = vsub.f32 %v6034, %v6101
        %v6131 = vsub.f32 %v6035, %v6102
        %v6132 = vsub.f32 %v6036, %v6102
        %v6133 = vsub.f32 %v6037, %v6103
        %v6134 = vsub.f32 %v6038, %v6103
        %v6135 = vsub.f32 %v6039, %v6104
        %v6136 = vsub.f32 %v6040, %v6104
        %v6137 = vmul.f32 %v6105, %v6105
        %v6138 = vmul.f32 %v6106, %v6106
        %v6139 = vmul.f32 %v6107, %v6107
        %v6140 = vmul.f32 %v6108, %v6108
        %v6141 = vmul.f32 %v6109, %v6109
        %v6142 = vmul.f32 %v6110, %v6110
        %v6143 = vmul.f32 %v6111, %v6111
        %v6144 = vmul.f32 %v6112, %v6112
        %v6145 = vmul.f32 %v6113, %v6113
        %v6146 = vmul.f32 %v6114, %v6114
        %v6147 = vmul.f32 %v6115, %v6115
        %v6148 = vmul.f32 %v6116, %v6116
        %v6149 = vmul.f32 %v6117, %v6117
        %v6150 = vmul.f32 %v6118, %v6118
        %v6151 = vmul.f32 %v6119, %v6119
        %v6152 = vmul.f32 %v6120, %v6120
        %v6153 = vmul.f32 %v6121, %v6121
        %v6154 = vmul.f32 %v6122, %v6122
        %v6155 = vmul.f32 %v6123, %v6123
        %v6156 = vmul.f32 %v6124, %v6124
        %v6157 = vmul.f32 %v6125, %v6125
        %v6158 = vmul.f32 %v6126, %v6126
        %v6159 = vmul.f32 %v6127, %v6127
        %v6160 = vmul.f32 %v6128, %v6128
        %v6161 = vmul.f32 %v6129, %v6129
        %v6162 = vmul.f32 %v6130, %v6130
        %v6163 = vmul.f32 %v6131, %v6131
        %v6164 = vmul.f32 %v6132, %v6132
        %v6165 = vmul.f32 %v6133, %v6133
        %v6166 = vmul.f32 %v6134, %v6134
        %v6167 = vmul.f32 %v6135, %v6135
        %v6168 = vmul.f32 %v6136, %v6136
        %v6169 = vadd.f32 %v6137, %v6138
        %6170 = vadd.xlane.f32.xlu0 %v6169
        %v6171 = vpop.xlane.xlu0 %6170
        %v6172 = vadd.f32 %v6139, %v6140
        %6173 = vadd.xlane.f32.xlu0 %v6172
        %v6174 = vpop.xlane.xlu0 %6173
        %v6175 = vadd.f32 %v6141, %v6142
        %6176 = vadd.xlane.f32.xlu0 %v6175
        %v6177 = vpop.xlane.xlu0 %6176
        %v6178 = vadd.f32 %v6143, %v6144
        %6179 = vadd.xlane.f32.xlu0 %v6178
        %v6180 = vpop.xlane.xlu0 %6179
        %v6181 = vadd.f32 %v6145, %v6146
        %6182 = vadd.xlane.f32.xlu0 %v6181
        %v6183 = vpop.xlane.xlu0 %6182
        %v6184 = vadd.f32 %v6147, %v6148
        %6185 = vadd.xlane.f32.xlu0 %v6184
        %v6186 = vpop.xlane.xlu0 %6185
        %v6187 = vadd.f32 %v6149, %v6150
        %6188 = vadd.xlane.f32.xlu0 %v6187
        %v6189 = vpop.xlane.xlu0 %6188
        %v6190 = vadd.f32 %v6151, %v6152
        %6191 = vadd.xlane.f32.xlu0 %v6190
        %v6192 = vpop.xlane.xlu0 %6191
        %v6193 = vadd.f32 %v6153, %v6154
        %6194 = vadd.xlane.f32.xlu0 %v6193
        %v6195 = vpop.xlane.xlu0 %6194
        %v6196 = vadd.f32 %v6155, %v6156
        %6197 = vadd.xlane.f32.xlu0 %v6196
        %v6198 = vpop.xlane.xlu0 %6197
        %v6199 = vadd.f32 %v6157, %v6158
        %6200 = vadd.xlane.f32.xlu0 %v6199
        %v6201 = vpop.xlane.xlu0 %6200
        %v6202 = vadd.f32 %v6159, %v6160
        %6203 = vadd.xlane.f32.xlu0 %v6202
        %v6204 = vpop.xlane.xlu0 %6203
        %v6205 = vadd.f32 %v6161, %v6162
        %6206 = vadd.xlane.f32.xlu0 %v6205
        %v6207 = vpop.xlane.xlu0 %6206
        %v6208 = vadd.f32 %v6163, %v6164
        %6209 = vadd.xlane.f32.xlu0 %v6208
        %v6210 = vpop.xlane.xlu0 %6209
        %v6211 = vadd.f32 %v6165, %v6166
        %6212 = vadd.xlane.f32.xlu0 %v6211
        %v6213 = vpop.xlane.xlu0 %6212
        %v6214 = vadd.f32 %v6167, %v6168
        %6215 = vadd.xlane.f32.xlu0 %v6214
        %v6216 = vpop.xlane.xlu0 %6215
        %v6217 = vmul.f32 %v6171, %v3900
        %v6218 = vmul.f32 %v6174, %v3900
        %v6219 = vmul.f32 %v6177, %v3900
        %v6220 = vmul.f32 %v6180, %v3900
        %v6221 = vmul.f32 %v6183, %v3900
        %v6222 = vmul.f32 %v6186, %v3900
        %v6223 = vmul.f32 %v6189, %v3900
        %v6224 = vmul.f32 %v6192, %v3900
        %v6225 = vmul.f32 %v6195, %v3900
        %v6226 = vmul.f32 %v6198, %v3900
        %v6227 = vmul.f32 %v6201, %v3900
        %v6228 = vmul.f32 %v6204, %v3900
        %v6229 = vmul.f32 %v6207, %v3900
        %v6230 = vmul.f32 %v6210, %v3900
        %v6231 = vmul.f32 %v6213, %v3900
        %v6232 = vmul.f32 %v6216, %v3900
        %v6233 = vadd.f32 %v6217, 1e-05
        %v6234 = vadd.f32 %v6218, 1e-05
        %v6235 = vadd.f32 %v6219, 1e-05
        %v6236 = vadd.f32 %v6220, 1e-05
        %v6237 = vadd.f32 %v6221, 1e-05
        %v6238 = vadd.f32 %v6222, 1e-05
        %v6239 = vadd.f32 %v6223, 1e-05
        %v6240 = vadd.f32 %v6224, 1e-05
        %v6241 = vadd.f32 %v6225, 1e-05
        %v6242 = vadd.f32 %v6226, 1e-05
        %v6243 = vadd.f32 %v6227, 1e-05
        %v6244 = vadd.f32 %v6228, 1e-05
        %v6245 = vadd.f32 %v6229, 1e-05
        %v6246 = vadd.f32 %v6230, 1e-05
        %v6247 = vadd.f32 %v6231, 1e-05
        %v6248 = vadd.f32 %v6232, 1e-05
        %v6249 = vrsqrt.pop %v6233
        %v6250 = vmul.f32 %v6249, %v6233
        %v6251 = vmul.f32 %v6250, %v6249
        %v6252 = vmul.f32 0.5, %v6251
        %v6253 = vsub.f32 1.5, %v6252
        %v6254 = vmul.f32 %v6249, %v6253
        %vm6255 = vweird.f32 %v6233
        %vm6256 = vweird.f32 %v6249
        %vm6257 = vmor %vm6255, %vm6256
        %v6258 = vsel %vm6257, %v6249, %v6254
        %v6259 = vrsqrt.pop %v6234
        %v6260 = vmul.f32 %v6259, %v6234
        %v6261 = vmul.f32 %v6260, %v6259
        %v6262 = vmul.f32 0.5, %v6261
        %v6263 = vsub.f32 1.5, %v6262
        %v6264 = vmul.f32 %v6259, %v6263
        %vm6265 = vweird.f32 %v6234
        %vm6266 = vweird.f32 %v6259
        %vm6267 = vmor %vm6265, %vm6266
        %v6268 = vsel %vm6267, %v6259, %v6264
        %v6269 = vrsqrt.pop %v6235
        %v6270 = vmul.f32 %v6269, %v6235
        %v6271 = vmul.f32 %v6270, %v6269
        %v6272 = vmul.f32 0.5, %v6271
        %v6273 = vsub.f32 1.5, %v6272
        %v6274 = vmul.f32 %v6269, %v6273
        %vm6275 = vweird.f32 %v6235
        %vm6276 = vweird.f32 %v6269
        %vm6277 = vmor %vm6275, %vm6276
        %v6278 = vsel %vm6277, %v6269, %v6274
        %v6279 = vrsqrt.pop %v6236
        %v6280 = vmul.f32 %v6279, %v6236
        %v6281 = vmul.f32 %v6280, %v6279
        %v6282 = vmul.f32 0.5, %v6281
        %v6283 = vsub.f32 1.5, %v6282
        %v6284 = vmul.f32 %v6279, %v6283
        %vm6285 = vweird.f32 %v6236
        %vm6286 = vweird.f32 %v6279
        %vm6287 = vmor %vm6285, %vm6286
        %v6288 = vsel %vm6287, %v6279, %v6284
        %v6289 = vrsqrt.pop %v6237
        %v6290 = vmul.f32 %v6289, %v6237
        %v6291 = vmul.f32 %v6290, %v6289
        %v6292 = vmul.f32 0.5, %v6291
        %v6293 = vsub.f32 1.5, %v6292
        %v6294 = vmul.f32 %v6289, %v6293
        %vm6295 = vweird.f32 %v6237
        %vm6296 = vweird.f32 %v6289
        %vm6297 = vmor %vm6295, %vm6296
        %v6298 = vsel %vm6297, %v6289, %v6294
        %v6299 = vrsqrt.pop %v6238
        %v6300 = vmul.f32 %v6299, %v6238
        %v6301 = vmul.f32 %v6300, %v6299
        %v6302 = vmul.f32 0.5, %v6301
        %v6303 = vsub.f32 1.5, %v6302
        %v6304 = vmul.f32 %v6299, %v6303
        %vm6305 = vweird.f32 %v6238
        %vm6306 = vweird.f32 %v6299
        %vm6307 = vmor %vm6305, %vm6306
        %v6308 = vsel %vm6307, %v6299, %v6304
        %v6309 = vrsqrt.pop %v6239
        %v6310 = vmul.f32 %v6309, %v6239
        %v6311 = vmul.f32 %v6310, %v6309
        %v6312 = vmul.f32 0.5, %v6311
        %v6313 = vsub.f32 1.5, %v6312
        %v6314 = vmul.f32 %v6309, %v6313
        %vm6315 = vweird.f32 %v6239
        %vm6316 = vweird.f32 %v6309
        %vm6317 = vmor %vm6315, %vm6316
        %v6318 = vsel %vm6317, %v6309, %v6314
        %v6319 = vrsqrt.pop %v6240
        %v6320 = vmul.f32 %v6319, %v6240
        %v6321 = vmul.f32 %v6320, %v6319
        %v6322 = vmul.f32 0.5, %v6321
        %v6323 = vsub.f32 1.5, %v6322
        %v6324 = vmul.f32 %v6319, %v6323
        %vm6325 = vweird.f32 %v6240
        %vm6326 = vweird.f32 %v6319
        %vm6327 = vmor %vm6325, %vm6326
        %v6328 = vsel %vm6327, %v6319, %v6324
        %v6329 = vrsqrt.pop %v6241
        %v6330 = vmul.f32 %v6329, %v6241
        %v6331 = vmul.f32 %v6330, %v6329
        %v6332 = vmul.f32 0.5, %v6331
        %v6333 = vsub.f32 1.5, %v6332
        %v6334 = vmul.f32 %v6329, %v6333
        %vm6335 = vweird.f32 %v6241
        %vm6336 = vweird.f32 %v6329
        %vm6337 = vmor %vm6335, %vm6336
        %v6338 = vsel %vm6337, %v6329, %v6334
        %v6339 = vrsqrt.pop %v6242
        %v6340 = vmul.f32 %v6339, %v6242
        %v6341 = vmul.f32 %v6340, %v6339
        %v6342 = vmul.f32 0.5, %v6341
        %v6343 = vsub.f32 1.5, %v6342
        %v6344 = vmul.f32 %v6339, %v6343
        %vm6345 = vweird.f32 %v6242
        %vm6346 = vweird.f32 %v6339
        %vm6347 = vmor %vm6345, %vm6346
        %v6348 = vsel %vm6347, %v6339, %v6344
        %v6349 = vrsqrt.pop %v6243
        %v6350 = vmul.f32 %v6349, %v6243
        %v6351 = vmul.f32 %v6350, %v6349
        %v6352 = vmul.f32 0.5, %v6351
        %v6353 = vsub.f32 1.5, %v6352
        %v6354 = vmul.f32 %v6349, %v6353
        %vm6355 = vweird.f32 %v6243
        %vm6356 = vweird.f32 %v6349
        %vm6357 = vmor %vm6355, %vm6356
        %v6358 = vsel %vm6357, %v6349, %v6354
        %v6359 = vrsqrt.pop %v6244
        %v6360 = vmul.f32 %v6359, %v6244
        %v6361 = vmul.f32 %v6360, %v6359
        %v6362 = vmul.f32 0.5, %v6361
        %v6363 = vsub.f32 1.5, %v6362
        %v6364 = vmul.f32 %v6359, %v6363
        %vm6365 = vweird.f32 %v6244
        %vm6366 = vweird.f32 %v6359
        %vm6367 = vmor %vm6365, %vm6366
        %v6368 = vsel %vm6367, %v6359, %v6364
        %v6369 = vrsqrt.pop %v6245
        %v6370 = vmul.f32 %v6369, %v6245
        %v6371 = vmul.f32 %v6370, %v6369
        %v6372 = vmul.f32 0.5, %v6371
        %v6373 = vsub.f32 1.5, %v6372
        %v6374 = vmul.f32 %v6369, %v6373
        %vm6375 = vweird.f32 %v6245
        %vm6376 = vweird.f32 %v6369
        %vm6377 = vmor %vm6375, %vm6376
        %v6378 = vsel %vm6377, %v6369, %v6374
        %v6379 = vrsqrt.pop %v6246
        %v6380 = vmul.f32 %v6379, %v6246
        %v6381 = vmul.f32 %v6380, %v6379
        %v6382 = vmul.f32 0.5, %v6381
        %v6383 = vsub.f32 1.5, %v6382
        %v6384 = vmul.f32 %v6379, %v6383
        %vm6385 = vweird.f32 %v6246
        %vm6386 = vweird.f32 %v6379
        %vm6387 = vmor %vm6385, %vm6386
        %v6388 = vsel %vm6387, %v6379, %v6384
        %v6389 = vrsqrt.pop %v6247
        %v6390 = vmul.f32 %v6389, %v6247
        %v6391 = vmul.f32 %v6390, %v6389
        %v6392 = vmul.f32 0.5, %v6391
        %v6393 = vsub.f32 1.5, %v6392
        %v6394 = vmul.f32 %v6389, %v6393
        %vm6395 = vweird.f32 %v6247
        %vm6396 = vweird.f32 %v6389
        %vm6397 = vmor %vm6395, %vm6396
        %v6398 = vsel %vm6397, %v6389, %v6394
        %v6399 = vrsqrt.pop %v6248
        %v6400 = vmul.f32 %v6399, %v6248
        %v6401 = vmul.f32 %v6400, %v6399
        %v6402 = vmul.f32 0.5, %v6401
        %v6403 = vsub.f32 1.5, %v6402
        %v6404 = vmul.f32 %v6399, %v6403
        %vm6405 = vweird.f32 %v6248
        %vm6406 = vweird.f32 %v6399
        %vm6407 = vmor %vm6405, %vm6406
        %v6408 = vsel %vm6407, %v6399, %v6404
        %v6409 = vmul.f32 %v6105, %v6258
        %v6410 = vmul.f32 %v6106, %v6258
        %v6411 = vmul.f32 %v6107, %v6268
        %v6412 = vmul.f32 %v6108, %v6268
        %v6413 = vmul.f32 %v6109, %v6278
        %v6414 = vmul.f32 %v6110, %v6278
        %v6415 = vmul.f32 %v6111, %v6288
        %v6416 = vmul.f32 %v6112, %v6288
        %v6417 = vmul.f32 %v6113, %v6298
        %v6418 = vmul.f32 %v6114, %v6298
        %v6419 = vmul.f32 %v6115, %v6308
        %v6420 = vmul.f32 %v6116, %v6308
        %v6421 = vmul.f32 %v6117, %v6318
        %v6422 = vmul.f32 %v6118, %v6318
        %v6423 = vmul.f32 %v6119, %v6328
        %v6424 = vmul.f32 %v6120, %v6328
        %v6425 = vmul.f32 %v6121, %v6338
        %v6426 = vmul.f32 %v6122, %v6338
        %v6427 = vmul.f32 %v6123, %v6348
        %v6428 = vmul.f32 %v6124, %v6348
        %v6429 = vmul.f32 %v6125, %v6358
        %v6430 = vmul.f32 %v6126, %v6358
        %v6431 = vmul.f32 %v6127, %v6368
        %v6432 = vmul.f32 %v6128, %v6368
        %v6433 = vmul.f32 %v6129, %v6378
        %v6434 = vmul.f32 %v6130, %v6378
        %v6435 = vmul.f32 %v6131, %v6388
        %v6436 = vmul.f32 %v6132, %v6388
        %v6437 = vmul.f32 %v6133, %v6398
        %v6438 = vmul.f32 %v6134, %v6398
        %v6439 = vmul.f32 %v6135, %v6408
        %v6440 = vmul.f32 %v6136, %v6408
        %v6441 = vld [vmem:[%s1010] sm:$0x3]
        %v6443 = vperm.slane %v6441, 0
        %v6444 = vperm.slane %v6441, 1
        %v6447 = vmul.f32 %v6409, %v6443
        %v6448 = vmul.f32 %v6410, %v6444
        %v6449 = vmul.f32 %v6411, %v6443
        %v6450 = vmul.f32 %v6412, %v6444
        %v6451 = vmul.f32 %v6413, %v6443
        %v6452 = vmul.f32 %v6414, %v6444
        %v6453 = vmul.f32 %v6415, %v6443
        %v6454 = vmul.f32 %v6416, %v6444
        %v6455 = vmul.f32 %v6417, %v6443
        %v6456 = vmul.f32 %v6418, %v6444
        %v6457 = vmul.f32 %v6419, %v6443
        %v6458 = vmul.f32 %v6420, %v6444
        %v6459 = vmul.f32 %v6421, %v6443
        %v6460 = vmul.f32 %v6422, %v6444
        %v6461 = vmul.f32 %v6423, %v6443
        %v6462 = vmul.f32 %v6424, %v6444
        %v6463 = vmul.f32 %v6425, %v6443
        %v6464 = vmul.f32 %v6426, %v6444
        %v6465 = vmul.f32 %v6427, %v6443
        %v6466 = vmul.f32 %v6428, %v6444
        %v6467 = vmul.f32 %v6429, %v6443
        %v6468 = vmul.f32 %v6430, %v6444
        %v6469 = vmul.f32 %v6431, %v6443
        %v6470 = vmul.f32 %v6432, %v6444
        %v6471 = vmul.f32 %v6433, %v6443
        %v6472 = vmul.f32 %v6434, %v6444
        %v6473 = vmul.f32 %v6435, %v6443
        %v6474 = vmul.f32 %v6436, %v6444
        %v6475 = vmul.f32 %v6437, %v6443
        %v6476 = vmul.f32 %v6438, %v6444
        %v6477 = vmul.f32 %v6439, %v6443
        %v6478 = vmul.f32 %v6440, %v6444
        %v6479 = vld [vmem:[%s1020] sm:$0x3]
        %v6481 = vperm.slane %v6479, 0
        %v6482 = vperm.slane %v6479, 1
        %v6485 = vadd.f32 %v6447, %v6481
        %v6486 = vadd.f32 %v6448, %v6482
        %v6487 = vadd.f32 %v6449, %v6481
        %v6488 = vadd.f32 %v6450, %v6482
        %v6489 = vadd.f32 %v6451, %v6481
        %v6490 = vadd.f32 %v6452, %v6482
        %v6491 = vadd.f32 %v6453, %v6481
        %v6492 = vadd.f32 %v6454, %v6482
        %v6493 = vadd.f32 %v6455, %v6481
        %v6494 = vadd.f32 %v6456, %v6482
        %v6495 = vadd.f32 %v6457, %v6481
        %v6496 = vadd.f32 %v6458, %v6482
        %v6497 = vadd.f32 %v6459, %v6481
        %v6498 = vadd.f32 %v6460, %v6482
        %v6499 = vadd.f32 %v6461, %v6481
        %v6500 = vadd.f32 %v6462, %v6482
        %v6501 = vadd.f32 %v6463, %v6481
        %v6502 = vadd.f32 %v6464, %v6482
        %v6503 = vadd.f32 %v6465, %v6481
        %v6504 = vadd.f32 %v6466, %v6482
        %v6505 = vadd.f32 %v6467, %v6481
        %v6506 = vadd.f32 %v6468, %v6482
        %v6507 = vadd.f32 %v6469, %v6481
        %v6508 = vadd.f32 %v6470, %v6482
        %v6509 = vadd.f32 %v6471, %v6481
        %v6510 = vadd.f32 %v6472, %v6482
        %v6511 = vadd.f32 %v6473, %v6481
        %v6512 = vadd.f32 %v6474, %v6482
        %v6513 = vadd.f32 %v6475, %v6481
        %v6514 = vadd.f32 %v6476, %v6482
        %v6515 = vadd.f32 %v6477, %v6481
        %v6516 = vadd.f32 %v6478, %v6482
        %6517 = vst [vmem:[#allocation2] sm:$0xff] %v6485
        %6518 = vst [vmem:[#allocation2 + $0x8] sm:$0xff] %v6486
        %6519 = vst [vmem:[#allocation2 + $0x10] sm:$0xff] %v6487
        %6520 = vst [vmem:[#allocation2 + $0x18] sm:$0xff] %v6488
        %6521 = vst [vmem:[#allocation2 + $0x20] sm:$0xff] %v6489
        %6522 = vst [vmem:[#allocation2 + $0x28] sm:$0xff] %v6490
        %6523 = vst [vmem:[#allocation2 + $0x30] sm:$0xff] %v6491
        %6524 = vst [vmem:[#allocation2 + $0x38] sm:$0xff] %v6492
        %6525 = vst [vmem:[#allocation2 + $0x40] sm:$0xff] %v6493
        %6526 = vst [vmem:[#allocation2 + $0x48] sm:$0xff] %v6494
        %6527 = vst [vmem:[#allocation2 + $0x50] sm:$0xff] %v6495
        %6528 = vst [vmem:[#allocation2 + $0x58] sm:$0xff] %v6496
        %6529 = vst [vmem:[#allocation2 + $0x60] sm:$0xff] %v6497
        %6530 = vst [vmem:[#allocation2 + $0x68] sm:$0xff] %v6498
        %6531 = vst [vmem:[#allocation2 + $0x70] sm:$0xff] %v6499
        %6532 = vst [vmem:[#allocation2 + $0x78] sm:$0xff] %v6500
        %6533 = vst [vmem:[#allocation2 + $0x80] sm:$0xff] %v6501
        %6534 = vst [vmem:[#allocation2 + $0x88] sm:$0xff] %v6502
        %6535 = vst [vmem:[#allocation2 + $0x90] sm:$0xff] %v6503
        %6536 = vst [vmem:[#allocation2 + $0x98] sm:$0xff] %v6504
        %6537 = vst [vmem:[#allocation2 + $0xa0] sm:$0xff] %v6505
        %6538 = vst [vmem:[#allocation2 + $0xa8] sm:$0xff] %v6506
        %6539 = vst [vmem:[#allocation2 + $0xb0] sm:$0xff] %v6507
        %6540 = vst [vmem:[#allocation2 + $0xb8] sm:$0xff] %v6508
        %6541 = vst [vmem:[#allocation2 + $0xc0] sm:$0xff] %v6509
        %6542 = vst [vmem:[#allocation2 + $0xc8] sm:$0xff] %v6510
        %6543 = vst [vmem:[#allocation2 + $0xd0] sm:$0xff] %v6511
        %6544 = vst [vmem:[#allocation2 + $0xd8] sm:$0xff] %v6512
        %6545 = vst [vmem:[#allocation2 + $0xe0] sm:$0xff] %v6513
        %6546 = vst [vmem:[#allocation2 + $0xe8] sm:$0xff] %v6514
        %6547 = vst [vmem:[#allocation2 + $0xf0] sm:$0xff] %v6515
        %6548 = vst [vmem:[#allocation2 + $0xf8] sm:$0xff] %v6516
        %p6549 = scmp.eq.s32.totalorder %s60, 1
        // Predicated region
        $region153: #{tpu_custom_call.1} parent=87 // pred_check
          %p6550 = pneg %p6549
        $region154: #{tpu_custom_call.1} parent=87 // pred_check_branch
          %6552 = sbr.rel (%p6550) target = $region156
        $region155: #{tpu_custom_call.1} parent=87 // pred_region
          %v6553 = vpack.c.bf16 %v6486, %v6485
          %v6554 = vpack.c.bf16 %v6488, %v6487
          %v6555 = vpack.c.bf16 %v6490, %v6489
          %v6556 = vpack.c.bf16 %v6492, %v6491
          %v6557 = vpack.c.bf16 %v6494, %v6493
          %v6558 = vpack.c.bf16 %v6496, %v6495
          %v6559 = vpack.c.bf16 %v6498, %v6497
          %v6560 = vpack.c.bf16 %v6500, %v6499
          %v6561 = vpack.c.bf16 %v6502, %v6501
          %v6562 = vpack.c.bf16 %v6504, %v6503
          %v6563 = vpack.c.bf16 %v6506, %v6505
          %v6564 = vpack.c.bf16 %v6508, %v6507
          %v6565 = vpack.c.bf16 %v6510, %v6509
          %v6566 = vpack.c.bf16 %v6512, %v6511
          %v6567 = vpack.c.bf16 %v6514, %v6513
          %v6568 = vpack.c.bf16 %v6516, %v6515
          %6569 = vst [vmem:[%s1149] sm:$0xff] %v6553
          %6570 = vst [vmem:[%s1149 + $0x8] sm:$0xff] %v6554
          %6571 = vst [vmem:[%s1149 + $0x10] sm:$0xff] %v6555
          %6572 = vst [vmem:[%s1149 + $0x18] sm:$0xff] %v6556
          %6573 = vst [vmem:[%s1149 + $0x20] sm:$0xff] %v6557
          %6574 = vst [vmem:[%s1149 + $0x28] sm:$0xff] %v6558
          %6575 = vst [vmem:[%s1149 + $0x30] sm:$0xff] %v6559
          %6576 = vst [vmem:[%s1149 + $0x38] sm:$0xff] %v6560
          %6577 = vst [vmem:[%s1149 + $0x40] sm:$0xff] %v6561
          %6578 = vst [vmem:[%s1149 + $0x48] sm:$0xff] %v6562
          %6579 = vst [vmem:[%s1149 + $0x50] sm:$0xff] %v6563
          %6580 = vst [vmem:[%s1149 + $0x58] sm:$0xff] %v6564
          %6581 = vst [vmem:[%s1149 + $0x60] sm:$0xff] %v6565
          %6582 = vst [vmem:[%s1149 + $0x68] sm:$0xff] %v6566
          %6583 = vst [vmem:[%s1149 + $0x70] sm:$0xff] %v6567
          %6584 = vst [vmem:[%s1149 + $0x78] sm:$0xff] %v6568
        $region156: #{tpu_custom_call.1} parent=87 // pred_fallthru
          _
        %s6585 = sand.u32 %s517, 1
        %s6586 = scalar_lea.sflag [#allocation5], %s6585
        %s6587 = sand.u32 %s517, 1
        %s6588 = smul.addr %s6587, 128
        %s6589 = scalar_lea.vmem [#allocation27], %s6588
        // Predicated region
        $region157: #{tpu_custom_call.1} parent=87 // pred_check
          %p6590 = pneg %p527
        $region158: #{tpu_custom_call.1} parent=87 // pred_check_branch
          %6592 = sbr.rel (%p6590) target = $region160
        $region159: #{tpu_custom_call.1} parent=87 // pred_region
          %6594 = vsyncadd %s6586, 0
          %s6595 = smul.addr %s59, 32
          %s6596 = smul.addr %s6595, 4
          %s6597 = scalar_lea.hbm %s17, %s6596
          %s6598 = sshll.u32 %s6589, 4
          %s6599 = int_to_ptr.vmem [resolvable:$true] %s6598
          %s6600 = sshll.u32 %s6597, 4
          %s6601 = int_to_ptr.hbm [resolvable:$true] %s6600
          %6606 = dma.vmem_to_hbm [thread:$0]  %s6599, 2048, %s6601, %s6586, 128, 128, 8
        $region160: #{tpu_custom_call.1} parent=87 // pred_fallthru
          _
      $region88: #{tpu_custom_call.1} parent=5 // pred_fallthru
        _
      %p6607 = scmp.le.s32.totalorder 2, %s50
      // Predicated region
      $region161: #{tpu_custom_call.1} parent=5 // pred_check
        %p6608 = pneg %p6607
      $region162: #{tpu_custom_call.1} parent=5 // pred_check_branch
        %6610 = sbr.rel (%p6608) target = $region164
      $region163: #{tpu_custom_call.1} parent=5 // pred_region
        %s6611 = ssub.s32 %s50, 2
        // Predicated region
        $region165: #{tpu_custom_call.1} parent=163 // pred_check
          %p6612 = pneg %p533
        $region166: #{tpu_custom_call.1} parent=163 // pred_check_branch
          %6614 = sbr.rel (%p6612) target = $region168
        $region167: #{tpu_custom_call.1} parent=163 // pred_region
          %s6615 = sand.u32 %s518, 1
          %s6616 = scalar_lea.sflag [#allocation5], %s6615
          %s6617 = sand.u32 %s518, 1
          %s6618 = smul.addr %s6617, 128
          %s6619 = scalar_lea.vmem [#allocation27], %s6618
          %6621 = dma.done %s6616, 2048
        $region168: #{tpu_custom_call.1} parent=163 // pred_fallthru
          _
      $region164: #{tpu_custom_call.1} parent=5 // pred_fallthru
        _
    $region6: #{tpu_custom_call.1} parent=1 // loop_footer
      %s54 = sadd.s32 1, %s50
    $region7: #{tpu_custom_call.1} parent=1 // loop_footer_branch
      %49 = sbr.rel target = $region3
    $region8: #{tpu_custom_call.1} parent=1 // loop_exit
      _
    %6622 = vsyncpa [#allocation4], 1
    %s6623 = scalar_lea.sflag [#allocation4], 1
    %6624 = vsyncpa %s6623, 1
    %6625 = vsyncpa [#allocation7], 1
    %s6626 = scalar_lea.sflag [#allocation7], 1
    %6627 = vsyncpa %s6626, 1
    %6628 = vsyncpa [#allocation10], 1
    %s6629 = scalar_lea.sflag [#allocation10], 1
    %6630 = vsyncpa %s6629, 1
    %6631 = vsyncpa [#allocation13], 1
    %s6632 = scalar_lea.sflag [#allocation13], 1
    %6633 = vsyncpa %s6632, 1
    %6634 = vsyncpa [#allocation16], 1
    %s6635 = scalar_lea.sflag [#allocation16], 1
    %6636 = vsyncpa %s6635, 1
    %6637 = vsyncpa [#allocation19], 1
    %s6638 = scalar_lea.sflag [#allocation19], 1
    %6639 = vsyncpa %s6638, 1
    %6640 = vsyncpa [#allocation22], 1
    %s6641 = scalar_lea.sflag [#allocation22], 1
    %6642 = vsyncpa %s6641, 1
    %6643 = vsyncpa [#allocation25], 1
    %s6644 = scalar_lea.sflag [#allocation25], 1
    %6645 = vsyncpa %s6644, 1
    %6646 = vsyncpa [#allocation5], 1
    %s6647 = scalar_lea.sflag [#allocation5], 1
    %6648 = vsyncpa %s6647, 1

</llo_original>
